<compile_context>
chip_gen: v5e
topology: v5e:2x2
jax: 0.10.0
libtpu: 0.0.40
codegen_flags: <defaults>
</compile_context>

<pallas_src>
import jax
import jax.numpy as jnp
from jax import lax
from jax.experimental import pallas as pl
from jax.experimental.pallas import tpu as pltpu

LANE = 128
_VMEM_LIMIT = 40 * 1024 * 1024   # safe on v5e (128 MiB), v6e (128 MiB), v7x (64 MiB)
_EPS = 1e-5


def _round_up(x, m):
    return (x + m - 1) // m * m


# ----------------------------------------------------------------------------
# Pallas kernel 1: 3x3 "same" conv on a row-flattened, zero-padded image.
#   - 9 accumulated MXU matmuls (bf16 operands, f32 accumulation)
#   - fused bias
#   - optional fused input BatchNorm(scale/shift)+ReLU (+pad-ring mask)
#   - fused per-channel sum / sum-of-squares (for the following BatchNorm)
# ----------------------------------------------------------------------------
def _make_conv_kernel(M_out, taps, has_in_act):
    def kernel(*refs):
        if has_in_act:
            (x_ref, isc_ref, ish_ref, imask_ref, w_ref, b_ref, omask_ref,
             o_ref, ssum_ref, ssq_ref) = refs
            # BN(scale,shift)+ReLU fused on the conv input; the mask keeps the
            # conv's zero-pad ring at zero in the post-activation domain.
            xv = x_ref[0].astype(jnp.float32)            # (L_in, Cin)
            xv = jnp.maximum(xv * isc_ref[...] + ish_ref[...], 0.0)
            xv = (xv * imask_ref[...]).astype(jnp.bfloat16)   # cast once, not per tap
        else:
            (x_ref, w_ref, b_ref, omask_ref,
             o_ref, ssum_ref, ssq_ref) = refs
            xv = x_ref[0]                                # bf16 (L_in, Cin), no f32 trip

        # sum over the 9 filter taps: out[p] += x[p + dy*Wp + dx] @ W[dy,dx]
        acc = None
        for t, off in enumerate(taps):
            xs = xv[off:off + M_out, :]                  # bf16 (M_out, Cin)
            contrib = jnp.dot(xs, w_ref[t], preferred_element_type=jnp.float32)
            acc = contrib if acc is None else acc + contrib

        vals = acc + b_ref[...]                          # (M_out, Cp) f32
        o_ref[0] = vals                                  # single output store
        masked = vals * omask_ref[...]                   # drop row-wrap garbage cols
        ssum_ref[0] = jnp.sum(masked, axis=0, keepdims=True)
        ssq_ref[0] = jnp.sum(masked * masked, axis=0, keepdims=True)
    return kernel


def conv3x3(x_flat, w9, bias, out_mask, Wp, in_act=None):
    """x_flat: (N, L_in, Cin) bf16 row-flattened padded image (+tail slack).
    w9: (9, Cin, Cp) bf16. bias: (1, Cp) f32. out_mask: (M_out, 1) f32.
    in_act: optional (scale (1,Cin), shift (1,Cin), interior_mask (L_in,1)).
    Returns (out (N, M_out, Cp) f32, chan_sum (N,1,Cp), chan_sumsq (N,1,Cp))."""
    N, L_in, Cin = x_flat.shape
    Cp = w9.shape[2]
    M_out = out_mask.shape[0]
    taps = tuple(dy * Wp + dx for dy in range(3) for dx in range(3))
    has_in_act = in_act is not None

    in_specs = [pl.BlockSpec((1, L_in, Cin), lambda n: (n, 0, 0))]
    args = [x_flat]
    if has_in_act:
        isc, ish, imask = in_act
        in_specs += [pl.BlockSpec((1, Cin), lambda n: (0, 0)),
                     pl.BlockSpec((1, Cin), lambda n: (0, 0)),
                     pl.BlockSpec((L_in, 1), lambda n: (0, 0))]
        args += [isc, ish, imask]
    in_specs += [pl.BlockSpec((9, Cin, Cp), lambda n: (0, 0, 0)),
                 pl.BlockSpec((1, Cp), lambda n: (0, 0)),
                 pl.BlockSpec((M_out, 1), lambda n: (0, 0))]
    args += [w9, bias, out_mask]

    out_shape = (jax.ShapeDtypeStruct((N, M_out, Cp), jnp.float32),
                 jax.ShapeDtypeStruct((N, 1, Cp), jnp.float32),
                 jax.ShapeDtypeStruct((N, 1, Cp), jnp.float32))
    out_specs = [pl.BlockSpec((1, M_out, Cp), lambda n: (n, 0, 0)),
                 pl.BlockSpec((1, 1, Cp), lambda n: (n, 0, 0)),
                 pl.BlockSpec((1, 1, Cp), lambda n: (n, 0, 0))]

    return pl.pallas_call(
        _make_conv_kernel(M_out, taps, has_in_act),
        out_shape=out_shape,
        grid_spec=pltpu.PrefetchScalarGridSpec(
            num_scalar_prefetch=0, grid=(N,),
            in_specs=in_specs, out_specs=out_specs),
        compiler_params=pltpu.CompilerParams(
            dimension_semantics=("parallel",),
            vmem_limit_bytes=_VMEM_LIMIT),
    )(*args)


# ----------------------------------------------------------------------------
# Pallas kernel 2: y = relu(x*scale + shift)  (+ optional masked channel stats)
# ----------------------------------------------------------------------------
def _make_bn_kernel(with_stats):
    if with_stats:
        def kernel(x_ref, sc_ref, sh_ref, mask_ref, o_ref, ssum_ref, ssq_ref):
            y = jnp.maximum(x_ref[0] * sc_ref[...] + sh_ref[...], 0.0)   # f32
            o_ref[0] = y.astype(o_ref.dtype)
            ym = y * mask_ref[...]
            ssum_ref[0] = jnp.sum(ym, axis=0, keepdims=True)
            ssq_ref[0] = jnp.sum(ym * ym, axis=0, keepdims=True)
    else:
        def kernel(x_ref, sc_ref, sh_ref, o_ref):
            y = jnp.maximum(x_ref[0] * sc_ref[...] + sh_ref[...], 0.0)
            o_ref[0] = y.astype(o_ref.dtype)
    return kernel


def bn_relu(x, scale, shift, out_mask=None, out_dtype=jnp.float32):
    """x: (N, M, C) f32; scale/shift: (1, C) f32; out_mask: (M, 1) f32 or None."""
    N, M, C = x.shape
    with_stats = out_mask is not None
    in_specs = [pl.BlockSpec((1, M, C), lambda n: (n, 0, 0)),
                pl.BlockSpec((1, C), lambda n: (0, 0)),
                pl.BlockSpec((1, C), lambda n: (0, 0))]
    args = [x, scale, shift]
    if with_stats:
        in_specs.append(pl.BlockSpec((M, 1), lambda n: (0, 0)))
        args.append(out_mask)
        out_shape = (jax.ShapeDtypeStruct((N, M, C), out_dtype),
                     jax.ShapeDtypeStruct((N, 1, C), jnp.float32),
                     jax.ShapeDtypeStruct((N, 1, C), jnp.float32))
        out_specs = [pl.BlockSpec((1, M, C), lambda n: (n, 0, 0)),
                     pl.BlockSpec((1, 1, C), lambda n: (n, 0, 0)),
                     pl.BlockSpec((1, 1, C), lambda n: (n, 0, 0))]
    else:
        out_shape = jax.ShapeDtypeStruct((N, M, C), out_dtype)
        out_specs = pl.BlockSpec((1, M, C), lambda n: (n, 0, 0))

    return pl.pallas_call(
        _make_bn_kernel(with_stats),
        out_shape=out_shape,
        grid_spec=pltpu.PrefetchScalarGridSpec(
            num_scalar_prefetch=0, grid=(N,),
            in_specs=in_specs, out_specs=out_specs),
        compiler_params=pltpu.CompilerParams(
            dimension_semantics=("parallel",),
            vmem_limit_bytes=_VMEM_LIMIT),
    )(*args)


# ----------------------------------------------------------------------------
# Small JAX glue (geometry, masks, BN scale/shift from fused sums)
# ----------------------------------------------------------------------------
def _conv_geometry(H, W):
    Hp, Wp = H + 2, W + 2
    M_out = H * Wp                          # flat output rows (with 2 garbage cols/row)
    L_in = _round_up(Hp * Wp + 2, 8)        # flat input rows (+ slack for last tap)
    return Hp, Wp, M_out, L_in


def _flatten_padded(x_nhwc, L_in):
    N, H, W, C = x_nhwc.shape
    xp = jnp.pad(x_nhwc, ((0, 0), (1, 1), (1, 1), (0, 0)))
    xf = xp.reshape(N, (H + 2) * (W + 2), C)
    return jnp.pad(xf, ((0, 0), (0, L_in - (H + 2) * (W + 2)), (0, 0)))


def _valid_col_mask(H, Wp, W):
    col = jnp.arange(H * Wp, dtype=jnp.int32) % Wp
    return (col < W).astype(jnp.float32).reshape(H * Wp, 1)


def _interior_mask(H, W, L_in):
    m = jnp.zeros((H + 2, W + 2), jnp.float32).at[1:H + 1, 1:W + 1].set(1.0)
    m = jnp.pad(m.reshape((H + 2) * (W + 2)), (0, L_in - (H + 2) * (W + 2)))
    return m.reshape(L_in, 1)


def _bn_scale_shift(ssum, ssq, count, gamma, beta):
    s = jnp.sum(ssum[:, 0, :], axis=0)
    q = jnp.sum(ssq[:, 0, :], axis=0)
    mean = s / count
    var = jnp.maximum(q / count - mean * mean, 0.0)   # biased var (torch train mode)
    scale = gamma * lax.rsqrt(var + _EPS)
    shift = beta - mean * scale
    return scale.reshape(1, -1), shift.reshape(1, -1)


def _prep_conv_weights(w, b, Cp):
    c_out, c_in = w.shape[0], w.shape[1]
    w9 = jnp.transpose(w, (2, 3, 1, 0)).reshape(9, c_in, c_out)
    w9 = jnp.pad(w9, ((0, 0), (0, 0), (0, Cp - c_out))).astype(jnp.bfloat16)
    bm = jnp.pad(b, (0, Cp - c_out)).reshape(1, Cp)
    return w9, bm


# ----------------------------------------------------------------------------
# Forward pass (whole thing runs under a single jax.jit)
# ----------------------------------------------------------------------------
def decoder_block_forward(x_nchw, params):
    x = jnp.transpose(x_nchw, (0, 2, 3, 1)).astype(jnp.float32)   # NCHW -> NHWC
    N, H, W, _ = x.shape
    Cm = params["conv1"]["w"].shape[0]        # in_channels // 4
    Cout = params["conv3"]["w"].shape[0]      # n_filters
    Cmp = _round_up(Cm, LANE)
    Coutp = _round_up(Cout, LANE)

    # ---- conv1 (3x3, pad 1) + fused bias + fused BN1 statistics ------------
    _, Wp1, M1, L1 = _conv_geometry(H, W)
    x1 = _flatten_padded(x, L1).astype(jnp.bfloat16)
    w1m, b1m = _prep_conv_weights(params["conv1"]["w"], params["conv1"]["b"], Cmp)
    omask1 = _valid_col_mask(H, Wp1, W)
    t1, s1, q1 = conv3x3(x1, w1m, b1m, omask1, Wp1)

    # ---- BN1 + ReLU (kernel also emits stats of the activation for BN2) ----
    g1 = jnp.pad(params["norm1"]["gamma"], (0, Cmp - Cm))
    be1 = jnp.pad(params["norm1"]["beta"], (0, Cmp - Cm))
    sc1, sh1 = _bn_scale_shift(s1, q1, N * H * W, g1, be1)
    # a1 stored in bf16: it only feeds the bf16 conv3 matmul, so this is
    # numerics-equivalent to storing f32 and casting later, at half the traffic.
    a1, sa1, qa1 = bn_relu(t1, sc1, sh1, out_mask=omask1, out_dtype=jnp.bfloat16)

    # ---- Upsample(scale_factor=2, nearest) ----------------------------------
    # TODO(synk): the 2x nearest upsample / zero-pad / layout reshapes and the
    # NCHW<->NHWC transposes are pure data movement left to XLA (fused under
    # the single top-level jit) rather than a dedicated Pallas kernel.
    a1 = a1.reshape(N, H, Wp1, Cmp)[:, :, :W, :Cm]
    up = jnp.repeat(jnp.repeat(a1, 2, axis=1), 2, axis=2)         # (N, 2H, 2W, Cm) bf16
    H2, W2 = 2 * H, 2 * W

    # ---- BN2 + ReLU fused into conv3 + conv3 (3x3, pad 1) + BN3 stats -------
    # nearest-2x upsampling replicates every value 4x, so BN2's batch mean/var
    # over the upsampled tensor equal those of the pre-upsample activation:
    # reuse the stats emitted by the BN1 kernel.
    g2 = jnp.pad(params["norm2"]["gamma"], (0, Cmp - Cm))
    be2 = jnp.pad(params["norm2"]["beta"], (0, Cmp - Cm))
    sc2, sh2 = _bn_scale_shift(sa1, qa1, N * H * W, g2, be2)
    sc2, sh2 = sc2[:, :Cm], sh2[:, :Cm]

    _, Wp2, M2, L2 = _conv_geometry(H2, W2)
    x2 = _flatten_padded(up, L2)                                   # bf16
    imask2 = _interior_mask(H2, W2, L2)
    w3m, b3m = _prep_conv_weights(params["conv3"]["w"], params["conv3"]["b"], Coutp)
    omask2 = _valid_col_mask(H2, Wp2, W2)
    t3, s3, q3 = conv3x3(x2, w3m, b3m, omask2, Wp2, in_act=(sc2, sh2, imask2))

    # ---- BN3 + ReLU ----------------------------------------------------------
    g3 = jnp.pad(params["norm3"]["gamma"], (0, Coutp - Cout))
    be3 = jnp.pad(params["norm3"]["beta"], (0, Coutp - Cout))
    sc3, sh3 = _bn_scale_shift(s3, q3, N * H2 * W2, g3, be3)
    y = bn_relu(t3, sc3, sh3)

    y = y.reshape(N, H2, Wp2, Coutp)[:, :, :W2, :Cout]
    return jnp.transpose(y, (0, 3, 1, 2))                          # NHWC -> NCHW


# ----------------------------------------------------------------------------
# Deterministic synthetic parameters (PyTorch layouts)
# ----------------------------------------------------------------------------
def init_decoder_block(key, in_channels=512, n_filters=256):
    mid = in_channels // 4
    ks = jax.random.split(key, 10)

    def conv_init(kw, kb, c_out, c_in):
        fan_in = c_in * 9
        return {"w": jax.random.normal(kw, (c_out, c_in, 3, 3), jnp.float32) / fan_in ** 0.5,
                "b": 0.01 * jax.random.normal(kb, (c_out,), jnp.float32)}

    def bn_init(kg, kb, c):
        return {"gamma": 1.0 + 0.1 * jax.random.normal(kg, (c,), jnp.float32),
                "beta": 0.1 * jax.random.normal(kb, (c,), jnp.float32)}

    return {"conv1": conv_init(ks[0], ks[1], mid, in_channels),
            "norm1": bn_init(ks[2], ks[3], mid),
            "norm2": bn_init(ks[4], ks[5], mid),
            "conv3": conv_init(ks[6], ks[7], n_filters, mid),
            "norm3": bn_init(ks[8], ks[9], n_filters)}


if __name__ == "__main__":
    key = jax.random.PRNGKey(0)
    pkey, xkey = jax.random.split(key)
    in_channels, n_filters = 512, 256      # DecoderBlock defaults
    N, H, W = 2, 8, 8                      # small spatial test size
    params = init_decoder_block(pkey, in_channels, n_filters)
    x = jax.random.normal(xkey, (N, in_channels, H, W), jnp.float32)   # NCHW

    fwd = jax.jit(decoder_block_forward)
    out = jax.block_until_ready(fwd(x, params))

    assert out.shape == (N, n_filters, 2 * H, 2 * W), out.shape
    assert bool(jnp.all(jnp.isfinite(out)))
    print("KERNEL_OK")
</pallas_src>

<mosaic_0001>
module attributes {stable_mosaic.version = 11 : i64} {
  func.func @kernel(%arg0: i32, %arg1: memref<1x104x512xbf16, #tpu.memory_space<vmem>>, %arg2: memref<9x512x128xbf16, #tpu.memory_space<vmem>>, %arg3: memref<1x128xf32, #tpu.memory_space<vmem>>, %arg4: memref<80x1xf32, #tpu.memory_space<vmem>>, %arg5: memref<1x80x128xf32, #tpu.memory_space<vmem>>, %arg6: memref<1x1x128xf32, #tpu.memory_space<vmem>>, %arg7: memref<1x1x128xf32, #tpu.memory_space<vmem>>) attributes {dimension_semantics = [#tpu.dimension_semantics<parallel>], iteration_bounds = array<i64: 2>, scalar_prefetch = 0 : i64, scratch_operands = 0 : i64, tpu.core_type = #tpu.core_type<tc>, window_params = [{transform_indices = @transform_0, window_bounds = array<i64: 1, 104, 512>}, {pipeline_mode = #tpu.pipeline_mode<synchronous>, transform_indices = @transform_1, window_bounds = array<i64: 9, 512, 128>}, {pipeline_mode = #tpu.pipeline_mode<synchronous>, transform_indices = @transform_2, window_bounds = array<i64: 1, 128>}, {pipeline_mode = #tpu.pipeline_mode<synchronous>, transform_indices = @transform_3, window_bounds = array<i64: 80, 1>}, {transform_indices = @transform_4, window_bounds = array<i64: 1, 80, 128>}, {transform_indices = @transform_5, window_bounds = array<i64: 1, 1, 128>}, {transform_indices = @transform_6, window_bounds = array<i64: 1, 1, 128>}]} {
    %c0 = arith.constant 0 : index
    %c0_0 = arith.constant 0 : index
    %c0_1 = arith.constant 0 : index
    %0 = vector.load %arg1[%c0, %c0_0, %c0_1] : memref<1x104x512xbf16, #tpu.memory_space<vmem>>, vector<1x104x512xbf16>
    %1 = vector.shape_cast %0 : vector<1x104x512xbf16> to vector<104x512xbf16>
    %2 = vector.extract_strided_slice %1 {offsets = [0, 0], sizes = [80, 512], strides = [1, 1]} : vector<104x512xbf16> to vector<80x512xbf16>
    %c0_2 = arith.constant 0 : index
    %c0_3 = arith.constant 0 : index
    %c0_4 = arith.constant 0 : index
    %3 = vector.load %arg2[%c0_2, %c0_3, %c0_4] : memref<9x512x128xbf16, #tpu.memory_space<vmem>>, vector<1x512x128xbf16>
    %4 = vector.shape_cast %3 : vector<1x512x128xbf16> to vector<512x128xbf16>
    %cst = arith.constant dense<0.000000e+00> : vector<80x128xf32>
    %5 = tpu.matmul %2, %4, %cst {dimension_numbers = #tpu.dot_dimension_numbers<[1], [0], [0], [1], [0, 0, 1, 1], [], []>} : vector<80x512xbf16>, vector<512x128xbf16>, vector<80x128xf32> -> vector<80x128xf32>
    %6 = vector.extract_strided_slice %1 {offsets = [1, 0], sizes = [80, 512], strides = [1, 1]} : vector<104x512xbf16> to vector<80x512xbf16>
    %c1 = arith.constant 1 : index
    %c0_5 = arith.constant 0 : index
    %c0_6 = arith.constant 0 : index
    %7 = vector.load %arg2[%c1, %c0_5, %c0_6] : memref<9x512x128xbf16, #tpu.memory_space<vmem>>, vector<1x512x128xbf16>
    %8 = vector.shape_cast %7 : vector<1x512x128xbf16> to vector<512x128xbf16>
    %cst_7 = arith.constant dense<0.000000e+00> : vector<80x128xf32>
    %9 = tpu.matmul %6, %8, %cst_7 {dimension_numbers = #tpu.dot_dimension_numbers<[1], [0], [0], [1], [0, 0, 1, 1], [], []>} : vector<80x512xbf16>, vector<512x128xbf16>, vector<80x128xf32> -> vector<80x128xf32>
    %10 = arith.addf %5, %9 : vector<80x128xf32>
    %11 = vector.extract_strided_slice %1 {offsets = [2, 0], sizes = [80, 512], strides = [1, 1]} : vector<104x512xbf16> to vector<80x512xbf16>
    %c2 = arith.constant 2 : index
    %c0_8 = arith.constant 0 : index
    %c0_9 = arith.constant 0 : index
    %12 = vector.load %arg2[%c2, %c0_8, %c0_9] : memref<9x512x128xbf16, #tpu.memory_space<vmem>>, vector<1x512x128xbf16>
    %13 = vector.shape_cast %12 : vector<1x512x128xbf16> to vector<512x128xbf16>
    %cst_10 = arith.constant dense<0.000000e+00> : vector<80x128xf32>
    %14 = tpu.matmul %11, %13, %cst_10 {dimension_numbers = #tpu.dot_dimension_numbers<[1], [0], [0], [1], [0, 0, 1, 1], [], []>} : vector<80x512xbf16>, vector<512x128xbf16>, vector<80x128xf32> -> vector<80x128xf32>
    %15 = arith.addf %10, %14 : vector<80x128xf32>
    %16 = vector.extract_strided_slice %1 {offsets = [10, 0], sizes = [80, 512], strides = [1, 1]} : vector<104x512xbf16> to vector<80x512xbf16>
    %c3 = arith.constant 3 : index
    %c0_11 = arith.constant 0 : index
    %c0_12 = arith.constant 0 : index
    %17 = vector.load %arg2[%c3, %c0_11, %c0_12] : memref<9x512x128xbf16, #tpu.memory_space<vmem>>, vector<1x512x128xbf16>
    %18 = vector.shape_cast %17 : vector<1x512x128xbf16> to vector<512x128xbf16>
    %cst_13 = arith.constant dense<0.000000e+00> : vector<80x128xf32>
    %19 = tpu.matmul %16, %18, %cst_13 {dimension_numbers = #tpu.dot_dimension_numbers<[1], [0], [0], [1], [0, 0, 1, 1], [], []>} : vector<80x512xbf16>, vector<512x128xbf16>, vector<80x128xf32> -> vector<80x128xf32>
    %20 = arith.addf %15, %19 : vector<80x128xf32>
    %21 = vector.extract_strided_slice %1 {offsets = [11, 0], sizes = [80, 512], strides = [1, 1]} : vector<104x512xbf16> to vector<80x512xbf16>
    %c4 = arith.constant 4 : index
    %c0_14 = arith.constant 0 : index
    %c0_15 = arith.constant 0 : index
    %22 = vector.load %arg2[%c4, %c0_14, %c0_15] : memref<9x512x128xbf16, #tpu.memory_space<vmem>>, vector<1x512x128xbf16>
    %23 = vector.shape_cast %22 : vector<1x512x128xbf16> to vector<512x128xbf16>
    %cst_16 = arith.constant dense<0.000000e+00> : vector<80x128xf32>
    %24 = tpu.matmul %21, %23, %cst_16 {dimension_numbers = #tpu.dot_dimension_numbers<[1], [0], [0], [1], [0, 0, 1, 1], [], []>} : vector<80x512xbf16>, vector<512x128xbf16>, vector<80x128xf32> -> vector<80x128xf32>
    %25 = arith.addf %20, %24 : vector<80x128xf32>
    %26 = vector.extract_strided_slice %1 {offsets = [12, 0], sizes = [80, 512], strides = [1, 1]} : vector<104x512xbf16> to vector<80x512xbf16>
    %c5 = arith.constant 5 : index
    %c0_17 = arith.constant 0 : index
    %c0_18 = arith.constant 0 : index
    %27 = vector.load %arg2[%c5, %c0_17, %c0_18] : memref<9x512x128xbf16, #tpu.memory_space<vmem>>, vector<1x512x128xbf16>
    %28 = vector.shape_cast %27 : vector<1x512x128xbf16> to vector<512x128xbf16>
    %cst_19 = arith.constant dense<0.000000e+00> : vector<80x128xf32>
    %29 = tpu.matmul %26, %28, %cst_19 {dimension_numbers = #tpu.dot_dimension_numbers<[1], [0], [0], [1], [0, 0, 1, 1], [], []>} : vector<80x512xbf16>, vector<512x128xbf16>, vector<80x128xf32> -> vector<80x128xf32>
    %30 = arith.addf %25, %29 : vector<80x128xf32>
    %31 = vector.extract_strided_slice %1 {offsets = [20, 0], sizes = [80, 512], strides = [1, 1]} : vector<104x512xbf16> to vector<80x512xbf16>
    %c6 = arith.constant 6 : index
    %c0_20 = arith.constant 0 : index
    %c0_21 = arith.constant 0 : index
    %32 = vector.load %arg2[%c6, %c0_20, %c0_21] : memref<9x512x128xbf16, #tpu.memory_space<vmem>>, vector<1x512x128xbf16>
    %33 = vector.shape_cast %32 : vector<1x512x128xbf16> to vector<512x128xbf16>
    %cst_22 = arith.constant dense<0.000000e+00> : vector<80x128xf32>
    %34 = tpu.matmul %31, %33, %cst_22 {dimension_numbers = #tpu.dot_dimension_numbers<[1], [0], [0], [1], [0, 0, 1, 1], [], []>} : vector<80x512xbf16>, vector<512x128xbf16>, vector<80x128xf32> -> vector<80x128xf32>
    %35 = arith.addf %30, %34 : vector<80x128xf32>
    %36 = vector.extract_strided_slice %1 {offsets = [21, 0], sizes = [80, 512], strides = [1, 1]} : vector<104x512xbf16> to vector<80x512xbf16>
    %c7 = arith.constant 7 : index
    %c0_23 = arith.constant 0 : index
    %c0_24 = arith.constant 0 : index
    %37 = vector.load %arg2[%c7, %c0_23, %c0_24] : memref<9x512x128xbf16, #tpu.memory_space<vmem>>, vector<1x512x128xbf16>
    %38 = vector.shape_cast %37 : vector<1x512x128xbf16> to vector<512x128xbf16>
    %cst_25 = arith.constant dense<0.000000e+00> : vector<80x128xf32>
    %39 = tpu.matmul %36, %38, %cst_25 {dimension_numbers = #tpu.dot_dimension_numbers<[1], [0], [0], [1], [0, 0, 1, 1], [], []>} : vector<80x512xbf16>, vector<512x128xbf16>, vector<80x128xf32> -> vector<80x128xf32>
    %40 = arith.addf %35, %39 : vector<80x128xf32>
    %41 = vector.extract_strided_slice %1 {offsets = [22, 0], sizes = [80, 512], strides = [1, 1]} : vector<104x512xbf16> to vector<80x512xbf16>
    %c8 = arith.constant 8 : index
    %c0_26 = arith.constant 0 : index
    %c0_27 = arith.constant 0 : index
    %42 = vector.load %arg2[%c8, %c0_26, %c0_27] : memref<9x512x128xbf16, #tpu.memory_space<vmem>>, vector<1x512x128xbf16>
    %43 = vector.shape_cast %42 : vector<1x512x128xbf16> to vector<512x128xbf16>
    %cst_28 = arith.constant dense<0.000000e+00> : vector<80x128xf32>
    %44 = tpu.matmul %41, %43, %cst_28 {dimension_numbers = #tpu.dot_dimension_numbers<[1], [0], [0], [1], [0, 0, 1, 1], [], []>} : vector<80x512xbf16>, vector<512x128xbf16>, vector<80x128xf32> -> vector<80x128xf32>
    %45 = arith.addf %40, %44 : vector<80x128xf32>
    %c0_29 = arith.constant 0 : index
    %c0_30 = arith.constant 0 : index
    %46 = vector.load %arg3[%c0_29, %c0_30] : memref<1x128xf32, #tpu.memory_space<vmem>>, vector<1x128xf32>
    %47 = vector.broadcast %46 : vector<1x128xf32> to vector<80x128xf32>
    %48 = arith.addf %45, %47 : vector<80x128xf32>
    %c0_31 = arith.constant 0 : index
    %c0_32 = arith.constant 0 : index
    %c0_33 = arith.constant 0 : index
    %49 = vector.load %arg5[%c0_31, %c0_32, %c0_33] : memref<1x80x128xf32, #tpu.memory_space<vmem>>, vector<1x80x128xf32>
    %50 = vector.shape_cast %49 : vector<1x80x128xf32> to vector<80x128xf32>
    %51 = vector.shape_cast %48 : vector<80x128xf32> to vector<1x80x128xf32>
    tpu.vector_store %arg5[%c0_31, %c0_32, %c0_33], %51 {strides = array<i32>} : memref<1x80x128xf32, #tpu.memory_space<vmem>>, vector<1x80x128xf32>,
    %c0_34 = arith.constant 0 : index
    %c0_35 = arith.constant 0 : index
    %52 = vector.load %arg4[%c0_34, %c0_35] : memref<80x1xf32, #tpu.memory_space<vmem>>, vector<80x1xf32>
    %53 = vector.broadcast %52 : vector<80x1xf32> to vector<80x128xf32>
    %54 = arith.mulf %48, %53 : vector<80x128xf32>
    %cst_36 = arith.constant dense<0.000000e+00> : vector<128xf32>
    %55 = vector.multi_reduction <add>, %54, %cst_36 [0] : vector<80x128xf32> to vector<128xf32>
    %56 = vector.shape_cast %55 : vector<128xf32> to vector<1x128xf32>
    %c0_37 = arith.constant 0 : index
    %c0_38 = arith.constant 0 : index
    %c0_39 = arith.constant 0 : index
    %57 = vector.load %arg6[%c0_37, %c0_38, %c0_39] : memref<1x1x128xf32, #tpu.memory_space<vmem>>, vector<1x1x128xf32>
    %58 = vector.shape_cast %57 : vector<1x1x128xf32> to vector<1x128xf32>
    %59 = vector.shape_cast %56 : vector<1x128xf32> to vector<1x1x128xf32>
    tpu.vector_store %arg6[%c0_37, %c0_38, %c0_39], %59 {strides = array<i32>} : memref<1x1x128xf32, #tpu.memory_space<vmem>>, vector<1x1x128xf32>,
    %60 = arith.mulf %54, %54 : vector<80x128xf32>
    %cst_40 = arith.constant dense<0.000000e+00> : vector<128xf32>
    %61 = vector.multi_reduction <add>, %60, %cst_40 [0] : vector<80x128xf32> to vector<128xf32>
    %62 = vector.shape_cast %61 : vector<128xf32> to vector<1x128xf32>
    %c0_41 = arith.constant 0 : index
    %c0_42 = arith.constant 0 : index
    %c0_43 = arith.constant 0 : index
    %63 = vector.load %arg7[%c0_41, %c0_42, %c0_43] : memref<1x1x128xf32, #tpu.memory_space<vmem>>, vector<1x1x128xf32>
    %64 = vector.shape_cast %63 : vector<1x1x128xf32> to vector<1x128xf32>
    %65 = vector.shape_cast %62 : vector<1x128xf32> to vector<1x1x128xf32>
    tpu.vector_store %arg7[%c0_41, %c0_42, %c0_43], %65 {strides = array<i32>} : memref<1x1x128xf32, #tpu.memory_space<vmem>>, vector<1x1x128xf32>,
    return
  }
  func.func @transform_0(%arg0: i32) -> (i32, i32, i32) {
    %c0_i32 = arith.constant 0 : i32
    %c0_i32_0 = arith.constant 0 : i32
    %c0_i32_1 = arith.constant 0 : i32
    return %arg0, %c0_i32, %c0_i32_0 : i32, i32, i32
  }
  func.func @transform_1(%arg0: i32) -> (i32, i32, i32) {
    %c0_i32 = arith.constant 0 : i32
    %c0_i32_0 = arith.constant 0 : i32
    %c0_i32_1 = arith.constant 0 : i32
    %c0_i32_2 = arith.constant 0 : i32
    return %c0_i32, %c0_i32_0, %c0_i32_1 : i32, i32, i32
  }
  func.func @transform_2(%arg0: i32) -> (i32, i32) {
    %c0_i32 = arith.constant 0 : i32
    %c0_i32_0 = arith.constant 0 : i32
    %c0_i32_1 = arith.constant 0 : i32
    return %c0_i32, %c0_i32_0 : i32, i32
  }
  func.func @transform_3(%arg0: i32) -> (i32, i32) {
    %c0_i32 = arith.constant 0 : i32
    %c0_i32_0 = arith.constant 0 : i32
    %c0_i32_1 = arith.constant 0 : i32
    return %c0_i32, %c0_i32_0 : i32, i32
  }
  func.func @transform_4(%arg0: i32) -> (i32, i32, i32) {
    %c0_i32 = arith.constant 0 : i32
    %c0_i32_0 = arith.constant 0 : i32
    %c0_i32_1 = arith.constant 0 : i32
    return %arg0, %c0_i32, %c0_i32_0 : i32, i32, i32
  }
  func.func @transform_5(%arg0: i32) -> (i32, i32, i32) {
    %c0_i32 = arith.constant 0 : i32
    %c0_i32_0 = arith.constant 0 : i32
    %c0_i32_1 = arith.constant 0 : i32
    return %arg0, %c0_i32, %c0_i32_0 : i32, i32, i32
  }
  func.func @transform_6(%arg0: i32) -> (i32, i32, i32) {
    %c0_i32 = arith.constant 0 : i32
    %c0_i32_0 = arith.constant 0 : i32
    %c0_i32_1 = arith.constant 0 : i32
    return %arg0, %c0_i32, %c0_i32_0 : i32, i32, i32
  }
}

module attributes {stable_mosaic.version = 11 : i64} {
  func.func @kernel(%arg0: i32, %arg1: memref<1x80x128xf32, #tpu.memory_space<vmem>>, %arg2: memref<1x128xf32, #tpu.memory_space<vmem>>, %arg3: memref<1x128xf32, #tpu.memory_space<vmem>>, %arg4: memref<80x1xf32, #tpu.memory_space<vmem>>, %arg5: memref<1x80x128xbf16, #tpu.memory_space<vmem>>, %arg6: memref<1x1x128xf32, #tpu.memory_space<vmem>>, %arg7: memref<1x1x128xf32, #tpu.memory_space<vmem>>) attributes {dimension_semantics = [#tpu.dimension_semantics<parallel>], iteration_bounds = array<i64: 2>, scalar_prefetch = 0 : i64, scratch_operands = 0 : i64, tpu.core_type = #tpu.core_type<tc>, window_params = [{transform_indices = @transform_0, window_bounds = array<i64: 1, 80, 128>}, {pipeline_mode = #tpu.pipeline_mode<synchronous>, transform_indices = @transform_1, window_bounds = array<i64: 1, 128>}, {pipeline_mode = #tpu.pipeline_mode<synchronous>, transform_indices = @transform_2, window_bounds = array<i64: 1, 128>}, {pipeline_mode = #tpu.pipeline_mode<synchronous>, transform_indices = @transform_3, window_bounds = array<i64: 80, 1>}, {transform_indices = @transform_4, window_bounds = array<i64: 1, 80, 128>}, {transform_indices = @transform_5, window_bounds = array<i64: 1, 1, 128>}, {transform_indices = @transform_6, window_bounds = array<i64: 1, 1, 128>}]} {
    %c0 = arith.constant 0 : index
    %c0_0 = arith.constant 0 : index
    %c0_1 = arith.constant 0 : index
    %0 = vector.load %arg1[%c0, %c0_0, %c0_1] : memref<1x80x128xf32, #tpu.memory_space<vmem>>, vector<1x80x128xf32>
    %1 = vector.shape_cast %0 : vector<1x80x128xf32> to vector<80x128xf32>
    %c0_2 = arith.constant 0 : index
    %c0_3 = arith.constant 0 : index
    %2 = vector.load %arg2[%c0_2, %c0_3] : memref<1x128xf32, #tpu.memory_space<vmem>>, vector<1x128xf32>
    %3 = vector.broadcast %2 : vector<1x128xf32> to vector<80x128xf32>
    %4 = arith.mulf %1, %3 : vector<80x128xf32>
    %c0_4 = arith.constant 0 : index
    %c0_5 = arith.constant 0 : index
    %5 = vector.load %arg3[%c0_4, %c0_5] : memref<1x128xf32, #tpu.memory_space<vmem>>, vector<1x128xf32>
    %6 = vector.broadcast %5 : vector<1x128xf32> to vector<80x128xf32>
    %7 = arith.addf %4, %6 : vector<80x128xf32>
    %cst = arith.constant 0.000000e+00 : f32
    %8 = vector.broadcast %cst : f32 to vector<80x128xf32>
    %9 = arith.maximumf %7, %8 : vector<80x128xf32>
    %10 = arith.truncf %9 : vector<80x128xf32> to vector<80x128xbf16>
    %c0_6 = arith.constant 0 : index
    %c0_7 = arith.constant 0 : index
    %c0_8 = arith.constant 0 : index
    %11 = vector.load %arg5[%c0_6, %c0_7, %c0_8] : memref<1x80x128xbf16, #tpu.memory_space<vmem>>, vector<1x80x128xbf16>
    %12 = vector.shape_cast %11 : vector<1x80x128xbf16> to vector<80x128xbf16>
    %13 = vector.shape_cast %10 : vector<80x128xbf16> to vector<1x80x128xbf16>
    tpu.vector_store %arg5[%c0_6, %c0_7, %c0_8], %13 {strides = array<i32>} : memref<1x80x128xbf16, #tpu.memory_space<vmem>>, vector<1x80x128xbf16>,
    %c0_9 = arith.constant 0 : index
    %c0_10 = arith.constant 0 : index
    %14 = vector.load %arg4[%c0_9, %c0_10] : memref<80x1xf32, #tpu.memory_space<vmem>>, vector<80x1xf32>
    %15 = vector.broadcast %14 : vector<80x1xf32> to vector<80x128xf32>
    %16 = arith.mulf %9, %15 : vector<80x128xf32>
    %cst_11 = arith.constant dense<0.000000e+00> : vector<128xf32>
    %17 = vector.multi_reduction <add>, %16, %cst_11 [0] : vector<80x128xf32> to vector<128xf32>
    %18 = vector.shape_cast %17 : vector<128xf32> to vector<1x128xf32>
    %c0_12 = arith.constant 0 : index
    %c0_13 = arith.constant 0 : index
    %c0_14 = arith.constant 0 : index
    %19 = vector.load %arg6[%c0_12, %c0_13, %c0_14] : memref<1x1x128xf32, #tpu.memory_space<vmem>>, vector<1x1x128xf32>
    %20 = vector.shape_cast %19 : vector<1x1x128xf32> to vector<1x128xf32>
    %21 = vector.shape_cast %18 : vector<1x128xf32> to vector<1x1x128xf32>
    tpu.vector_store %arg6[%c0_12, %c0_13, %c0_14], %21 {strides = array<i32>} : memref<1x1x128xf32, #tpu.memory_space<vmem>>, vector<1x1x128xf32>,
    %22 = arith.mulf %16, %16 : vector<80x128xf32>
    %cst_15 = arith.constant dense<0.000000e+00> : vector<128xf32>
    %23 = vector.multi_reduction <add>, %22, %cst_15 [0] : vector<80x128xf32> to vector<128xf32>
    %24 = vector.shape_cast %23 : vector<128xf32> to vector<1x128xf32>
    %c0_16 = arith.constant 0 : index
    %c0_17 = arith.constant 0 : index
    %c0_18 = arith.constant 0 : index
    %25 = vector.load %arg7[%c0_16, %c0_17, %c0_18] : memref<1x1x128xf32, #tpu.memory_space<vmem>>, vector<1x1x128xf32>
    %26 = vector.shape_cast %25 : vector<1x1x128xf32> to vector<1x128xf32>
    %27 = vector.shape_cast %24 : vector<1x128xf32> to vector<1x1x128xf32>
    tpu.vector_store %arg7[%c0_16, %c0_17, %c0_18], %27 {strides = array<i32>} : memref<1x1x128xf32, #tpu.memory_space<vmem>>, vector<1x1x128xf32>,
    return
  }
  func.func @transform_0(%arg0: i32) -> (i32, i32, i32) {
    %c0_i32 = arith.constant 0 : i32
    %c0_i32_0 = arith.constant 0 : i32
    %c0_i32_1 = arith.constant 0 : i32
    return %arg0, %c0_i32, %c0_i32_0 : i32, i32, i32
  }
  func.func @transform_1(%arg0: i32) -> (i32, i32) {
    %c0_i32 = arith.constant 0 : i32
    %c0_i32_0 = arith.constant 0 : i32
    %c0_i32_1 = arith.constant 0 : i32
    return %c0_i32, %c0_i32_0 : i32, i32
  }
  func.func @transform_2(%arg0: i32) -> (i32, i32) {
    %c0_i32 = arith.constant 0 : i32
    %c0_i32_0 = arith.constant 0 : i32
    %c0_i32_1 = arith.constant 0 : i32
    return %c0_i32, %c0_i32_0 : i32, i32
  }
  func.func @transform_3(%arg0: i32) -> (i32, i32) {
    %c0_i32 = arith.constant 0 : i32
    %c0_i32_0 = arith.constant 0 : i32
    %c0_i32_1 = arith.constant 0 : i32
    return %c0_i32, %c0_i32_0 : i32, i32
  }
  func.func @transform_4(%arg0: i32) -> (i32, i32, i32) {
    %c0_i32 = arith.constant 0 : i32
    %c0_i32_0 = arith.constant 0 : i32
    %c0_i32_1 = arith.constant 0 : i32
    return %arg0, %c0_i32, %c0_i32_0 : i32, i32, i32
  }
  func.func @transform_5(%arg0: i32) -> (i32, i32, i32) {
    %c0_i32 = arith.constant 0 : i32
    %c0_i32_0 = arith.constant 0 : i32
    %c0_i32_1 = arith.constant 0 : i32
    return %arg0, %c0_i32, %c0_i32_0 : i32, i32, i32
  }
  func.func @transform_6(%arg0: i32) -> (i32, i32, i32) {
    %c0_i32 = arith.constant 0 : i32
    %c0_i32_0 = arith.constant 0 : i32
    %c0_i32_1 = arith.constant 0 : i32
    return %arg0, %c0_i32, %c0_i32_0 : i32, i32, i32
  }
}

module attributes {stable_mosaic.version = 11 : i64} {
  func.func @kernel(%arg0: i32, %arg1: memref<1x328x128xbf16, #tpu.memory_space<vmem>>, %arg2: memref<1x128xf32, #tpu.memory_space<vmem>>, %arg3: memref<1x128xf32, #tpu.memory_space<vmem>>, %arg4: memref<328x1xf32, #tpu.memory_space<vmem>>, %arg5: memref<9x128x256xbf16, #tpu.memory_space<vmem>>, %arg6: memref<1x256xf32, #tpu.memory_space<vmem>>, %arg7: memref<288x1xf32, #tpu.memory_space<vmem>>, %arg8: memref<1x288x256xf32, #tpu.memory_space<vmem>>, %arg9: memref<1x1x256xf32, #tpu.memory_space<vmem>>, %arg10: memref<1x1x256xf32, #tpu.memory_space<vmem>>) attributes {dimension_semantics = [#tpu.dimension_semantics<parallel>], iteration_bounds = array<i64: 2>, scalar_prefetch = 0 : i64, scratch_operands = 0 : i64, tpu.core_type = #tpu.core_type<tc>, window_params = [{transform_indices = @transform_0, window_bounds = array<i64: 1, 328, 128>}, {pipeline_mode = #tpu.pipeline_mode<synchronous>, transform_indices = @transform_1, window_bounds = array<i64: 1, 128>}, {pipeline_mode = #tpu.pipeline_mode<synchronous>, transform_indices = @transform_2, window_bounds = array<i64: 1, 128>}, {pipeline_mode = #tpu.pipeline_mode<synchronous>, transform_indices = @transform_3, window_bounds = array<i64: 328, 1>}, {pipeline_mode = #tpu.pipeline_mode<synchronous>, transform_indices = @transform_4, window_bounds = array<i64: 9, 128, 256>}, {pipeline_mode = #tpu.pipeline_mode<synchronous>, transform_indices = @transform_5, window_bounds = array<i64: 1, 256>}, {pipeline_mode = #tpu.pipeline_mode<synchronous>, transform_indices = @transform_6, window_bounds = array<i64: 288, 1>}, {transform_indices = @transform_7, window_bounds = array<i64: 1, 288, 256>}, {transform_indices = @transform_8, window_bounds = array<i64: 1, 1, 256>}, {transform_indices = @transform_9, window_bounds = array<i64: 1, 1, 256>}]} {
    %c0 = arith.constant 0 : index
    %c0_0 = arith.constant 0 : index
    %c0_1 = arith.constant 0 : index
    %0 = vector.load %arg1[%c0, %c0_0, %c0_1] : memref<1x328x128xbf16, #tpu.memory_space<vmem>>, vector<1x328x128xbf16>
    %1 = vector.shape_cast %0 : vector<1x328x128xbf16> to vector<328x128xbf16>
    %2 = arith.extf %1 : vector<328x128xbf16> to vector<328x128xf32>
    %c0_2 = arith.constant 0 : index
    %c0_3 = arith.constant 0 : index
    %3 = vector.load %arg2[%c0_2, %c0_3] : memref<1x128xf32, #tpu.memory_space<vmem>>, vector<1x128xf32>
    %4 = vector.broadcast %3 : vector<1x128xf32> to vector<328x128xf32>
    %5 = arith.mulf %2, %4 : vector<328x128xf32>
    %c0_4 = arith.constant 0 : index
    %c0_5 = arith.constant 0 : index
    %6 = vector.load %arg3[%c0_4, %c0_5] : memref<1x128xf32, #tpu.memory_space<vmem>>, vector<1x128xf32>
    %7 = vector.broadcast %6 : vector<1x128xf32> to vector<328x128xf32>
    %8 = arith.addf %5, %7 : vector<328x128xf32>
    %cst = arith.constant 0.000000e+00 : f32
    %9 = vector.broadcast %cst : f32 to vector<328x128xf32>
    %10 = arith.maximumf %8, %9 : vector<328x128xf32>
    %c0_6 = arith.constant 0 : index
    %c0_7 = arith.constant 0 : index
    %11 = vector.load %arg4[%c0_6, %c0_7] : memref<328x1xf32, #tpu.memory_space<vmem>>, vector<328x1xf32>
    %12 = vector.broadcast %11 : vector<328x1xf32> to vector<328x128xf32>
    %13 = arith.mulf %10, %12 : vector<328x128xf32>
    %14 = arith.truncf %13 : vector<328x128xf32> to vector<328x128xbf16>
    %15 = vector.extract_strided_slice %14 {offsets = [0, 0], sizes = [288, 128], strides = [1, 1]} : vector<328x128xbf16> to vector<288x128xbf16>
    %c0_8 = arith.constant 0 : index
    %c0_9 = arith.constant 0 : index
    %c0_10 = arith.constant 0 : index
    %16 = vector.load %arg5[%c0_8, %c0_9, %c0_10] : memref<9x128x256xbf16, #tpu.memory_space<vmem>>, vector<1x128x256xbf16>
    %17 = vector.shape_cast %16 : vector<1x128x256xbf16> to vector<128x256xbf16>
    %cst_11 = arith.constant dense<0.000000e+00> : vector<288x256xf32>
    %18 = tpu.matmul %15, %17, %cst_11 {dimension_numbers = #tpu.dot_dimension_numbers<[1], [0], [0], [1], [0, 0, 1, 1], [], []>} : vector<288x128xbf16>, vector<128x256xbf16>, vector<288x256xf32> -> vector<288x256xf32>
    %19 = vector.extract_strided_slice %14 {offsets = [1, 0], sizes = [288, 128], strides = [1, 1]} : vector<328x128xbf16> to vector<288x128xbf16>
    %c1 = arith.constant 1 : index
    %c0_12 = arith.constant 0 : index
    %c0_13 = arith.constant 0 : index
    %20 = vector.load %arg5[%c1, %c0_12, %c0_13] : memref<9x128x256xbf16, #tpu.memory_space<vmem>>, vector<1x128x256xbf16>
    %21 = vector.shape_cast %20 : vector<1x128x256xbf16> to vector<128x256xbf16>
    %cst_14 = arith.constant dense<0.000000e+00> : vector<288x256xf32>
    %22 = tpu.matmul %19, %21, %cst_14 {dimension_numbers = #tpu.dot_dimension_numbers<[1], [0], [0], [1], [0, 0, 1, 1], [], []>} : vector<288x128xbf16>, vector<128x256xbf16>, vector<288x256xf32> -> vector<288x256xf32>
    %23 = arith.addf %18, %22 : vector<288x256xf32>
    %24 = vector.extract_strided_slice %14 {offsets = [2, 0], sizes = [288, 128], strides = [1, 1]} : vector<328x128xbf16> to vector<288x128xbf16>
    %c2 = arith.constant 2 : index
    %c0_15 = arith.constant 0 : index
    %c0_16 = arith.constant 0 : index
    %25 = vector.load %arg5[%c2, %c0_15, %c0_16] : memref<9x128x256xbf16, #tpu.memory_space<vmem>>, vector<1x128x256xbf16>
    %26 = vector.shape_cast %25 : vector<1x128x256xbf16> to vector<128x256xbf16>
    %cst_17 = arith.constant dense<0.000000e+00> : vector<288x256xf32>
    %27 = tpu.matmul %24, %26, %cst_17 {dimension_numbers = #tpu.dot_dimension_numbers<[1], [0], [0], [1], [0, 0, 1, 1], [], []>} : vector<288x128xbf16>, vector<128x256xbf16>, vector<288x256xf32> -> vector<288x256xf32>
    %28 = arith.addf %23, %27 : vector<288x256xf32>
    %29 = vector.extract_strided_slice %14 {offsets = [18, 0], sizes = [288, 128], strides = [1, 1]} : vector<328x128xbf16> to vector<288x128xbf16>
    %c3 = arith.constant 3 : index
    %c0_18 = arith.constant 0 : index
    %c0_19 = arith.constant 0 : index
    %30 = vector.load %arg5[%c3, %c0_18, %c0_19] : memref<9x128x256xbf16, #tpu.memory_space<vmem>>, vector<1x128x256xbf16>
    %31 = vector.shape_cast %30 : vector<1x128x256xbf16> to vector<128x256xbf16>
    %cst_20 = arith.constant dense<0.000000e+00> : vector<288x256xf32>
    %32 = tpu.matmul %29, %31, %cst_20 {dimension_numbers = #tpu.dot_dimension_numbers<[1], [0], [0], [1], [0, 0, 1, 1], [], []>} : vector<288x128xbf16>, vector<128x256xbf16>, vector<288x256xf32> -> vector<288x256xf32>
    %33 = arith.addf %28, %32 : vector<288x256xf32>
    %34 = vector.extract_strided_slice %14 {offsets = [19, 0], sizes = [288, 128], strides = [1, 1]} : vector<328x128xbf16> to vector<288x128xbf16>
    %c4 = arith.constant 4 : index
    %c0_21 = arith.constant 0 : index
    %c0_22 = arith.constant 0 : index
    %35 = vector.load %arg5[%c4, %c0_21, %c0_22] : memref<9x128x256xbf16, #tpu.memory_space<vmem>>, vector<1x128x256xbf16>
    %36 = vector.shape_cast %35 : vector<1x128x256xbf16> to vector<128x256xbf16>
    %cst_23 = arith.constant dense<0.000000e+00> : vector<288x256xf32>
    %37 = tpu.matmul %34, %36, %cst_23 {dimension_numbers = #tpu.dot_dimension_numbers<[1], [0], [0], [1], [0, 0, 1, 1], [], []>} : vector<288x128xbf16>, vector<128x256xbf16>, vector<288x256xf32> -> vector<288x256xf32>
    %38 = arith.addf %33, %37 : vector<288x256xf32>
    %39 = vector.extract_strided_slice %14 {offsets = [20, 0], sizes = [288, 128], strides = [1, 1]} : vector<328x128xbf16> to vector<288x128xbf16>
    %c5 = arith.constant 5 : index
    %c0_24 = arith.constant 0 : index
    %c0_25 = arith.constant 0 : index
    %40 = vector.load %arg5[%c5, %c0_24, %c0_25] : memref<9x128x256xbf16, #tpu.memory_space<vmem>>, vector<1x128x256xbf16>
    %41 = vector.shape_cast %40 : vector<1x128x256xbf16> to vector<128x256xbf16>
    %cst_26 = arith.constant dense<0.000000e+00> : vector<288x256xf32>
    %42 = tpu.matmul %39, %41, %cst_26 {dimension_numbers = #tpu.dot_dimension_numbers<[1], [0], [0], [1], [0, 0, 1, 1], [], []>} : vector<288x128xbf16>, vector<128x256xbf16>, vector<288x256xf32> -> vector<288x256xf32>
    %43 = arith.addf %38, %42 : vector<288x256xf32>
    %44 = vector.extract_strided_slice %14 {offsets = [36, 0], sizes = [288, 128], strides = [1, 1]} : vector<328x128xbf16> to vector<288x128xbf16>
    %c6 = arith.constant 6 : index
    %c0_27 = arith.constant 0 : index
    %c0_28 = arith.constant 0 : index
    %45 = vector.load %arg5[%c6, %c0_27, %c0_28] : memref<9x128x256xbf16, #tpu.memory_space<vmem>>, vector<1x128x256xbf16>
    %46 = vector.shape_cast %45 : vector<1x128x256xbf16> to vector<128x256xbf16>
    %cst_29 = arith.constant dense<0.000000e+00> : vector<288x256xf32>
    %47 = tpu.matmul %44, %46, %cst_29 {dimension_numbers = #tpu.dot_dimension_numbers<[1], [0], [0], [1], [0, 0, 1, 1], [], []>} : vector<288x128xbf16>, vector<128x256xbf16>, vector<288x256xf32> -> vector<288x256xf32>
    %48 = arith.addf %43, %47 : vector<288x256xf32>
    %49 = vector.extract_strided_slice %14 {offsets = [37, 0], sizes = [288, 128], strides = [1, 1]} : vector<328x128xbf16> to vector<288x128xbf16>
    %c7 = arith.constant 7 : index
    %c0_30 = arith.constant 0 : index
    %c0_31 = arith.constant 0 : index
    %50 = vector.load %arg5[%c7, %c0_30, %c0_31] : memref<9x128x256xbf16, #tpu.memory_space<vmem>>, vector<1x128x256xbf16>
    %51 = vector.shape_cast %50 : vector<1x128x256xbf16> to vector<128x256xbf16>
    %cst_32 = arith.constant dense<0.000000e+00> : vector<288x256xf32>
    %52 = tpu.matmul %49, %51, %cst_32 {dimension_numbers = #tpu.dot_dimension_numbers<[1], [0], [0], [1], [0, 0, 1, 1], [], []>} : vector<288x128xbf16>, vector<128x256xbf16>, vector<288x256xf32> -> vector<288x256xf32>
    %53 = arith.addf %48, %52 : vector<288x256xf32>
    %54 = vector.extract_strided_slice %14 {offsets = [38, 0], sizes = [288, 128], strides = [1, 1]} : vector<328x128xbf16> to vector<288x128xbf16>
    %c8 = arith.constant 8 : index
    %c0_33 = arith.constant 0 : index
    %c0_34 = arith.constant 0 : index
    %55 = vector.load %arg5[%c8, %c0_33, %c0_34] : memref<9x128x256xbf16, #tpu.memory_space<vmem>>, vector<1x128x256xbf16>
    %56 = vector.shape_cast %55 : vector<1x128x256xbf16> to vector<128x256xbf16>
    %cst_35 = arith.constant dense<0.000000e+00> : vector<288x256xf32>
    %57 = tpu.matmul %54, %56, %cst_35 {dimension_numbers = #tpu.dot_dimension_numbers<[1], [0], [0], [1], [0, 0, 1, 1], [], []>} : vector<288x128xbf16>, vector<128x256xbf16>, vector<288x256xf32> -> vector<288x256xf32>
    %58 = arith.addf %53, %57 : vector<288x256xf32>
    %c0_36 = arith.constant 0 : index
    %c0_37 = arith.constant 0 : index
    %59 = vector.load %arg6[%c0_36, %c0_37] : memref<1x256xf32, #tpu.memory_space<vmem>>, vector<1x256xf32>
    %60 = vector.broadcast %59 : vector<1x256xf32> to vector<288x256xf32>
    %61 = arith.addf %58, %60 : vector<288x256xf32>
    %c0_38 = arith.constant 0 : index
    %c0_39 = arith.constant 0 : index
    %c0_40 = arith.constant 0 : index
    %62 = vector.load %arg8[%c0_38, %c0_39, %c0_40] : memref<1x288x256xf32, #tpu.memory_space<vmem>>, vector<1x288x256xf32>
    %63 = vector.shape_cast %62 : vector<1x288x256xf32> to vector<288x256xf32>
    %64 = vector.shape_cast %61 : vector<288x256xf32> to vector<1x288x256xf32>
    tpu.vector_store %arg8[%c0_38, %c0_39, %c0_40], %64 {strides = array<i32>} : memref<1x288x256xf32, #tpu.memory_space<vmem>>, vector<1x288x256xf32>,
    %c0_41 = arith.constant 0 : index
    %c0_42 = arith.constant 0 : index
    %65 = vector.load %arg7[%c0_41, %c0_42] : memref<288x1xf32, #tpu.memory_space<vmem>>, vector<288x1xf32>
    %66 = vector.broadcast %65 : vector<288x1xf32> to vector<288x256xf32>
    %67 = arith.mulf %61, %66 : vector<288x256xf32>
    %cst_43 = arith.constant dense<0.000000e+00> : vector<256xf32>
    %68 = vector.multi_reduction <add>, %67, %cst_43 [0] : vector<288x256xf32> to vector<256xf32>
    %69 = vector.shape_cast %68 : vector<256xf32> to vector<1x256xf32>
    %c0_44 = arith.constant 0 : index
    %c0_45 = arith.constant 0 : index
    %c0_46 = arith.constant 0 : index
    %70 = vector.load %arg9[%c0_44, %c0_45, %c0_46] : memref<1x1x256xf32, #tpu.memory_space<vmem>>, vector<1x1x256xf32>
    %71 = vector.shape_cast %70 : vector<1x1x256xf32> to vector<1x256xf32>
    %72 = vector.shape_cast %69 : vector<1x256xf32> to vector<1x1x256xf32>
    tpu.vector_store %arg9[%c0_44, %c0_45, %c0_46], %72 {strides = array<i32>} : memref<1x1x256xf32, #tpu.memory_space<vmem>>, vector<1x1x256xf32>,
    %73 = arith.mulf %67, %67 : vector<288x256xf32>
    %cst_47 = arith.constant dense<0.000000e+00> : vector<256xf32>
    %74 = vector.multi_reduction <add>, %73, %cst_47 [0] : vector<288x256xf32> to vector<256xf32>
    %75 = vector.shape_cast %74 : vector<256xf32> to vector<1x256xf32>
    %c0_48 = arith.constant 0 : index
    %c0_49 = arith.constant 0 : index
    %c0_50 = arith.constant 0 : index
    %76 = vector.load %arg10[%c0_48, %c0_49, %c0_50] : memref<1x1x256xf32, #tpu.memory_space<vmem>>, vector<1x1x256xf32>
    %77 = vector.shape_cast %76 : vector<1x1x256xf32> to vector<1x256xf32>
    %78 = vector.shape_cast %75 : vector<1x256xf32> to vector<1x1x256xf32>
    tpu.vector_store %arg10[%c0_48, %c0_49, %c0_50], %78 {strides = array<i32>} : memref<1x1x256xf32, #tpu.memory_space<vmem>>, vector<1x1x256xf32>,
    return
  }
  func.func @transform_0(%arg0: i32) -> (i32, i32, i32) {
    %c0_i32 = arith.constant 0 : i32
    %c0_i32_0 = arith.constant 0 : i32
    %c0_i32_1 = arith.constant 0 : i32
    return %arg0, %c0_i32, %c0_i32_0 : i32, i32, i32
  }
  func.func @transform_1(%arg0: i32) -> (i32, i32) {
    %c0_i32 = arith.constant 0 : i32
    %c0_i32_0 = arith.constant 0 : i32
    %c0_i32_1 = arith.constant 0 : i32
    return %c0_i32, %c0_i32_0 : i32, i32
  }
  func.func @transform_2(%arg0: i32) -> (i32, i32) {
    %c0_i32 = arith.constant 0 : i32
    %c0_i32_0 = arith.constant 0 : i32
    %c0_i32_1 = arith.constant 0 : i32
    return %c0_i32, %c0_i32_0 : i32, i32
  }
  func.func @transform_3(%arg0: i32) -> (i32, i32) {
    %c0_i32 = arith.constant 0 : i32
    %c0_i32_0 = arith.constant 0 : i32
    %c0_i32_1 = arith.constant 0 : i32
    return %c0_i32, %c0_i32_0 : i32, i32
  }
  func.func @transform_4(%arg0: i32) -> (i32, i32, i32) {
    %c0_i32 = arith.constant 0 : i32
    %c0_i32_0 = arith.constant 0 : i32
    %c0_i32_1 = arith.constant 0 : i32
    %c0_i32_2 = arith.constant 0 : i32
    return %c0_i32, %c0_i32_0, %c0_i32_1 : i32, i32, i32
  }
  func.func @transform_5(%arg0: i32) -> (i32, i32) {
    %c0_i32 = arith.constant 0 : i32
    %c0_i32_0 = arith.constant 0 : i32
    %c0_i32_1 = arith.constant 0 : i32
    return %c0_i32, %c0_i32_0 : i32, i32
  }
  func.func @transform_6(%arg0: i32) -> (i32, i32) {
    %c0_i32 = arith.constant 0 : i32
    %c0_i32_0 = arith.constant 0 : i32
    %c0_i32_1 = arith.constant 0 : i32
    return %c0_i32, %c0_i32_0 : i32, i32
  }
  func.func @transform_7(%arg0: i32) -> (i32, i32, i32) {
    %c0_i32 = arith.constant 0 : i32
    %c0_i32_0 = arith.constant 0 : i32
    %c0_i32_1 = arith.constant 0 : i32
    return %arg0, %c0_i32, %c0_i32_0 : i32, i32, i32
  }
  func.func @transform_8(%arg0: i32) -> (i32, i32, i32) {
    %c0_i32 = arith.constant 0 : i32
    %c0_i32_0 = arith.constant 0 : i32
    %c0_i32_1 = arith.constant 0 : i32
    return %arg0, %c0_i32, %c0_i32_0 : i32, i32, i32
  }
  func.func @transform_9(%arg0: i32) -> (i32, i32, i32) {
    %c0_i32 = arith.constant 0 : i32
    %c0_i32_0 = arith.constant 0 : i32
    %c0_i32_1 = arith.constant 0 : i32
    return %arg0, %c0_i32, %c0_i32_0 : i32, i32, i32
  }
}

module attributes {stable_mosaic.version = 11 : i64} {
  func.func @kernel(%arg0: i32, %arg1: memref<1x288x256xf32, #tpu.memory_space<vmem>>, %arg2: memref<1x256xf32, #tpu.memory_space<vmem>>, %arg3: memref<1x256xf32, #tpu.memory_space<vmem>>, %arg4: memref<1x288x256xf32, #tpu.memory_space<vmem>>) attributes {dimension_semantics = [#tpu.dimension_semantics<parallel>], iteration_bounds = array<i64: 2>, scalar_prefetch = 0 : i64, scratch_operands = 0 : i64, tpu.core_type = #tpu.core_type<tc>, window_params = [{transform_indices = @transform_0, window_bounds = array<i64: 1, 288, 256>}, {pipeline_mode = #tpu.pipeline_mode<synchronous>, transform_indices = @transform_1, window_bounds = array<i64: 1, 256>}, {pipeline_mode = #tpu.pipeline_mode<synchronous>, transform_indices = @transform_2, window_bounds = array<i64: 1, 256>}, {transform_indices = @transform_3, window_bounds = array<i64: 1, 288, 256>}]} {
    %c0 = arith.constant 0 : index
    %c0_0 = arith.constant 0 : index
    %c0_1 = arith.constant 0 : index
    %0 = vector.load %arg1[%c0, %c0_0, %c0_1] : memref<1x288x256xf32, #tpu.memory_space<vmem>>, vector<1x288x256xf32>
    %1 = vector.shape_cast %0 : vector<1x288x256xf32> to vector<288x256xf32>
    %c0_2 = arith.constant 0 : index
    %c0_3 = arith.constant 0 : index
    %2 = vector.load %arg2[%c0_2, %c0_3] : memref<1x256xf32, #tpu.memory_space<vmem>>, vector<1x256xf32>
    %3 = vector.broadcast %2 : vector<1x256xf32> to vector<288x256xf32>
    %4 = arith.mulf %1, %3 : vector<288x256xf32>
    %c0_4 = arith.constant 0 : index
    %c0_5 = arith.constant 0 : index
    %5 = vector.load %arg3[%c0_4, %c0_5] : memref<1x256xf32, #tpu.memory_space<vmem>>, vector<1x256xf32>
    %6 = vector.broadcast %5 : vector<1x256xf32> to vector<288x256xf32>
    %7 = arith.addf %4, %6 : vector<288x256xf32>
    %cst = arith.constant 0.000000e+00 : f32
    %8 = vector.broadcast %cst : f32 to vector<288x256xf32>
    %9 = arith.maximumf %7, %8 : vector<288x256xf32>
    %c0_6 = arith.constant 0 : index
    %c0_7 = arith.constant 0 : index
    %c0_8 = arith.constant 0 : index
    %10 = vector.load %arg4[%c0_6, %c0_7, %c0_8] : memref<1x288x256xf32, #tpu.memory_space<vmem>>, vector<1x288x256xf32>
    %11 = vector.shape_cast %10 : vector<1x288x256xf32> to vector<288x256xf32>
    %12 = vector.shape_cast %9 : vector<288x256xf32> to vector<1x288x256xf32>
    tpu.vector_store %arg4[%c0_6, %c0_7, %c0_8], %12 {strides = array<i32>} : memref<1x288x256xf32, #tpu.memory_space<vmem>>, vector<1x288x256xf32>,
    return
  }
  func.func @transform_0(%arg0: i32) -> (i32, i32, i32) {
    %c0_i32 = arith.constant 0 : i32
    %c0_i32_0 = arith.constant 0 : i32
    %c0_i32_1 = arith.constant 0 : i32
    return %arg0, %c0_i32, %c0_i32_0 : i32, i32, i32
  }
  func.func @transform_1(%arg0: i32) -> (i32, i32) {
    %c0_i32 = arith.constant 0 : i32
    %c0_i32_0 = arith.constant 0 : i32
    %c0_i32_1 = arith.constant 0 : i32
    return %c0_i32, %c0_i32_0 : i32, i32
  }
  func.func @transform_2(%arg0: i32) -> (i32, i32) {
    %c0_i32 = arith.constant 0 : i32
    %c0_i32_0 = arith.constant 0 : i32
    %c0_i32_1 = arith.constant 0 : i32
    return %c0_i32, %c0_i32_0 : i32, i32
  }
  func.func @transform_3(%arg0: i32) -> (i32, i32, i32) {
    %c0_i32 = arith.constant 0 : i32
    %c0_i32_0 = arith.constant 0 : i32
    %c0_i32_1 = arith.constant 0 : i32
    return %arg0, %c0_i32, %c0_i32_0 : i32, i32, i32
  }
}

</mosaic_0001>

<llo_original>
// kernel: decoder_block_forward.5
$region0: #{decoder_block_forward.5}
  #allocation0 [shape = 'u32[]', space=smem, size = 0x4, offset = 0x4, fixed_abs, tag = 'smem constant byte address 0x4 - core index']
  #allocation1 [shape = 'u32[72,128]{1,0:T(1,128)}', space=vmem, size = 0x9000, scoped, tag = 'internal scratch']
  %s0 = inlined_call_operand.vmem [shape: f32[2,80,128], index: 0, kind: input, shape index: {}]
  %s1 = inlined_call_operand.vmem [shape: f32[1,128], index: 1, kind: input, shape index: {}]
  %s2 = inlined_call_operand.vmem [shape: f32[1,128], index: 2, kind: input, shape index: {}]
  %s3 = inlined_call_operand.vmem [shape: f32[80,1], index: 3, kind: input, shape index: {}]
  %s4 = inlined_call_operand.vmem [shape: bf16[2,80,128], index: 4, kind: output, shape index: {0}]
  %s5 = inlined_call_operand.vmem [shape: f32[2,1,128], index: 5, kind: output, shape index: {1}]
  %s6 = inlined_call_operand.vmem [shape: f32[2,1,128], index: 6, kind: output, shape index: {2}]
  %7 = xla_tuple %s4, %s5, %s6
  %s8 = sld [smem:[#allocation0]]
  $region65: #{decoder_block_forward.5} parent=0
    _
  %s10 = ssub.s32 1, %s8
  %s11 = scalar_select 0, %s10, %s8
  loop: start=0, step=1, limit=4
  $region2: #{decoder_block_forward.5} parent=0 // loop_pre_header
    _
  $region3: #{decoder_block_forward.5} parent=0 // loop_header
    %s13 = sphi 0, %s17
    %p14 = scmp.ge.s32.totalorder %s13, 4
    %s23 = sphi 0, %s25
    %s26 = sphi 0, %s23
    %s27 = sphi 0, %s26
    %s43 = sphi 0, %s27
    %s47 = sphi 0, %s47
    %s49 = sphi 0, %s47
    %s50 = sphi 0, %s49
    %s64 = sphi 0, %s50
    %s68 = sphi 0, %s68
    %s70 = sphi 0, %s68
    %s71 = sphi 0, %s70
    %s85 = sphi 0, %s71
    %s89 = sphi 0, %s89
    %s91 = sphi 0, %s89
    %s92 = sphi 0, %s91
    %s106 = sphi 0, %s92
    %s112 = sphi 0, %s114
    %s115 = sphi 0, %s112
    %s116 = sphi 0, %s115
    %s132 = sphi 0, %s116
    %s138 = sphi 0, %s140
    %s141 = sphi 0, %s138
    %s142 = sphi 0, %s141
    %s158 = sphi 0, %s142
    %s164 = sphi 0, %s166
    %s167 = sphi 0, %s164
    %s168 = sphi 0, %s167
    %s184 = sphi 0, %s168
  $region4: #{decoder_block_forward.5} parent=0 // loop_header_branch
    %16 = sbr.rel (%p14) target = $region8
  $region5: #{decoder_block_forward.5} parent=0 // loop_body
    %s18 = ssub.s32 %s13, 1
    %s19 = ssub.s32 %s13, 2
    %s20 = sadd.s32 %s13, 1
    %s21 = ssub.s32 %s13, %s20
    %p22 = scmp.eq.s32.totalorder %s21, 0
    %s24 = sadd.s32 %s23, 1
    %s25 = scalar_select %p22, %s23, %s24
    %p28 = pneg %p22
    %p29 = scmp.eq.s32.totalorder %s13, 1
    %p30 = por %p28, %p29
    %p31 = scmp.ne.s32.totalorder %s23, %s26
    %p32 = scmp.eq.s32.totalorder %s13, 0
    %p33 = por %p31, %p32
    %p34 = scmp.ne.s32.totalorder %s23, %s26
    %p35 = scmp.eq.s32.totalorder %s18, 1
    %p36 = por %p34, %p35
    %p37 = scmp.ne.s32.totalorder %s26, %s27
    %p38 = scmp.eq.s32.totalorder %s18, 0
    %p39 = por %p37, %p38
    %p40 = scmp.ne.s32.totalorder %s26, %s27
    %p41 = scmp.eq.s32.totalorder %s19, 1
    %p42 = por %p40, %p41
    %p44 = scmp.ne.s32.totalorder %s27, %s43
    %p45 = scmp.eq.s32.totalorder %s19, 0
    %p46 = por %p44, %p45
    %s48 = sadd.s32 %s47, 1
    %p51 = scmp.eq.s32.totalorder %s13, 1
    %p52 = scmp.ne.s32.totalorder %s47, %s49
    %p53 = scmp.eq.s32.totalorder %s13, 0
    %p54 = por %p52, %p53
    %p55 = scmp.ne.s32.totalorder %s47, %s49
    %p56 = scmp.eq.s32.totalorder %s18, 1
    %p57 = por %p55, %p56
    %p58 = scmp.ne.s32.totalorder %s49, %s50
    %p59 = scmp.eq.s32.totalorder %s18, 0
    %p60 = por %p58, %p59
    %p61 = scmp.ne.s32.totalorder %s49, %s50
    %p62 = scmp.eq.s32.totalorder %s19, 1
    %p63 = por %p61, %p62
    %p65 = scmp.ne.s32.totalorder %s50, %s64
    %p66 = scmp.eq.s32.totalorder %s19, 0
    %p67 = por %p65, %p66
    %s69 = sadd.s32 %s68, 1
    %p72 = scmp.eq.s32.totalorder %s13, 1
    %p73 = scmp.ne.s32.totalorder %s68, %s70
    %p74 = scmp.eq.s32.totalorder %s13, 0
    %p75 = por %p73, %p74
    %p76 = scmp.ne.s32.totalorder %s68, %s70
    %p77 = scmp.eq.s32.totalorder %s18, 1
    %p78 = por %p76, %p77
    %p79 = scmp.ne.s32.totalorder %s70, %s71
    %p80 = scmp.eq.s32.totalorder %s18, 0
    %p81 = por %p79, %p80
    %p82 = scmp.ne.s32.totalorder %s70, %s71
    %p83 = scmp.eq.s32.totalorder %s19, 1
    %p84 = por %p82, %p83
    %p86 = scmp.ne.s32.totalorder %s71, %s85
    %p87 = scmp.eq.s32.totalorder %s19, 0
    %p88 = por %p86, %p87
    %s90 = sadd.s32 %s89, 1
    %p93 = scmp.eq.s32.totalorder %s13, 1
    %p94 = scmp.ne.s32.totalorder %s89, %s91
    %p95 = scmp.eq.s32.totalorder %s13, 0
    %p96 = por %p94, %p95
    %p97 = scmp.ne.s32.totalorder %s89, %s91
    %p98 = scmp.eq.s32.totalorder %s18, 1
    %p99 = por %p97, %p98
    %p100 = scmp.ne.s32.totalorder %s91, %s92
    %p101 = scmp.eq.s32.totalorder %s18, 0
    %p102 = por %p100, %p101
    %p103 = scmp.ne.s32.totalorder %s91, %s92
    %p104 = scmp.eq.s32.totalorder %s19, 1
    %p105 = por %p103, %p104
    %p107 = scmp.ne.s32.totalorder %s92, %s106
    %p108 = scmp.eq.s32.totalorder %s19, 0
    %p109 = por %p107, %p108
    %s110 = ssub.s32 %s13, %s20
    %p111 = scmp.eq.s32.totalorder %s110, 0
    %s113 = sadd.s32 %s112, 1
    %s114 = scalar_select %p111, %s112, %s113
    %p117 = pneg %p111
    %p118 = scmp.eq.s32.totalorder %s13, 1
    %p119 = por %p117, %p118
    %p120 = scmp.ne.s32.totalorder %s112, %s115
    %p121 = scmp.eq.s32.totalorder %s13, 0
    %p122 = por %p120, %p121
    %p123 = scmp.ne.s32.totalorder %s112, %s115
    %p124 = scmp.eq.s32.totalorder %s18, 1
    %p125 = por %p123, %p124
    %p126 = scmp.ne.s32.totalorder %s115, %s116
    %p127 = scmp.eq.s32.totalorder %s18, 0
    %p128 = por %p126, %p127
    %p129 = scmp.ne.s32.totalorder %s115, %s116
    %p130 = scmp.eq.s32.totalorder %s19, 1
    %p131 = por %p129, %p130
    %p133 = scmp.ne.s32.totalorder %s116, %s132
    %p134 = scmp.eq.s32.totalorder %s19, 0
    %p135 = por %p133, %p134
    %s136 = ssub.s32 %s13, %s20
    %p137 = scmp.eq.s32.totalorder %s136, 0
    %s139 = sadd.s32 %s138, 1
    %s140 = scalar_select %p137, %s138, %s139
    %p143 = pneg %p137
    %p144 = scmp.eq.s32.totalorder %s13, 1
    %p145 = por %p143, %p144
    %p146 = scmp.ne.s32.totalorder %s138, %s141
    %p147 = scmp.eq.s32.totalorder %s13, 0
    %p148 = por %p146, %p147
    %p149 = scmp.ne.s32.totalorder %s138, %s141
    %p150 = scmp.eq.s32.totalorder %s18, 1
    %p151 = por %p149, %p150
    %p152 = scmp.ne.s32.totalorder %s141, %s142
    %p153 = scmp.eq.s32.totalorder %s18, 0
    %p154 = por %p152, %p153
    %p155 = scmp.ne.s32.totalorder %s141, %s142
    %p156 = scmp.eq.s32.totalorder %s19, 1
    %p157 = por %p155, %p156
    %p159 = scmp.ne.s32.totalorder %s142, %s158
    %p160 = scmp.eq.s32.totalorder %s19, 0
    %p161 = por %p159, %p160
    %s162 = ssub.s32 %s13, %s20
    %p163 = scmp.eq.s32.totalorder %s162, 0
    %s165 = sadd.s32 %s164, 1
    %s166 = scalar_select %p163, %s164, %s165
    %p169 = pneg %p163
    %p170 = scmp.eq.s32.totalorder %s13, 1
    %p171 = por %p169, %p170
    %p172 = scmp.ne.s32.totalorder %s164, %s167
    %p173 = scmp.eq.s32.totalorder %s13, 0
    %p174 = por %p172, %p173
    %p175 = scmp.ne.s32.totalorder %s164, %s167
    %p176 = scmp.eq.s32.totalorder %s18, 1
    %p177 = por %p175, %p176
    %p178 = scmp.ne.s32.totalorder %s167, %s168
    %p179 = scmp.eq.s32.totalorder %s18, 0
    %p180 = por %p178, %p179
    %p181 = scmp.ne.s32.totalorder %s167, %s168
    %p182 = scmp.eq.s32.totalorder %s19, 1
    %p183 = por %p181, %p182
    %p185 = scmp.ne.s32.totalorder %s168, %s184
    %p186 = scmp.eq.s32.totalorder %s19, 0
    %p187 = por %p185, %p186
    %p188 = scmp.le.s32.totalorder 1, %s13
    %p189 = scmp.lt.s32.totalorder %s13, 3
    %p190 = pnand %p188, %p189
    %p191 = pneg %p190
    // Predicated region
    $region9: #{decoder_block_forward.5} parent=5 // pred_check
      _
    $region10: #{decoder_block_forward.5} parent=5 // pred_check_branch
      %193 = sbr.rel (%p190) target = $region12
    $region11: #{decoder_block_forward.5} parent=5 // pred_region
      %s194 = ssub.s32 %s13, 1
      // Predicated region
      $region13: #{decoder_block_forward.5} parent=11 // pred_check
        %p195 = pneg %p60
      $region14: #{decoder_block_forward.5} parent=11 // pred_check_branch
        %197 = sbr.rel (%p195) target = $region16
      $region15: #{decoder_block_forward.5} parent=11 // pred_region
        _
      $region16: #{decoder_block_forward.5} parent=11 // pred_fallthru
        _
      // Predicated region
      $region17: #{decoder_block_forward.5} parent=11 // pred_check
        %p198 = pneg %p81
      $region18: #{decoder_block_forward.5} parent=11 // pred_check_branch
        %200 = sbr.rel (%p198) target = $region20
      $region19: #{decoder_block_forward.5} parent=11 // pred_region
        _
      $region20: #{decoder_block_forward.5} parent=11 // pred_fallthru
        _
      // Predicated region
      $region21: #{decoder_block_forward.5} parent=11 // pred_check
        %p201 = pneg %p102
      $region22: #{decoder_block_forward.5} parent=11 // pred_check_branch
        %203 = sbr.rel (%p201) target = $region24
      $region23: #{decoder_block_forward.5} parent=11 // pred_region
        _
      $region24: #{decoder_block_forward.5} parent=11 // pred_fallthru
        _
    $region12: #{decoder_block_forward.5} parent=5 // pred_fallthru
      _
    %p204 = scmp.lt.s32.totalorder %s13, 2
    // Predicated region
    $region25: #{decoder_block_forward.5} parent=5 // pred_check
      %p205 = pneg %p204
    $region26: #{decoder_block_forward.5} parent=5 // pred_check_branch
      %207 = sbr.rel (%p205) target = $region28
    $region27: #{decoder_block_forward.5} parent=5 // pred_region
      // Predicated region
      $region29: #{decoder_block_forward.5} parent=27 // pred_check
        %p208 = pneg %p33
      $region30: #{decoder_block_forward.5} parent=27 // pred_check_branch
        %210 = sbr.rel (%p208) target = $region32
      $region31: #{decoder_block_forward.5} parent=27 // pred_region
        %p211 = scmp.lt.s32.totalorder %s13, 1
        %s212 = scalar_select %p211, %s13, 1
        %s213 = smul.addr %s212, 10
        %s214 = smul.addr %s213, 8
        %s215 = scalar_lea.vmem %s0, %s214
      $region32: #{decoder_block_forward.5} parent=27 // pred_fallthru
        _
    $region28: #{decoder_block_forward.5} parent=5 // pred_fallthru
      _
    %p216 = scmp.le.s32.totalorder 1, %s13
    %p217 = scmp.lt.s32.totalorder %s13, 3
    %p218 = pnand %p216, %p217
    %p219 = pneg %p218
    // Predicated region
    $region33: #{decoder_block_forward.5} parent=5 // pred_check
      _
    $region34: #{decoder_block_forward.5} parent=5 // pred_check_branch
      %221 = sbr.rel (%p218) target = $region36
    $region35: #{decoder_block_forward.5} parent=5 // pred_region
      %s222 = ssub.s32 %s13, 1
      %p223 = scmp.lt.s32.totalorder %s18, 1
      %s224 = scalar_select %p223, %s18, 1
      %s225 = smul.addr %s224, 10
      %s226 = smul.addr %s225, 8
      %s227 = scalar_lea.vmem %s0, %s226
      %p228 = pneg %p39
      %p229 = pneg %p36
      %p230 = pneg %p60
      %p231 = pneg %p57
      %p232 = pneg %p81
      %p233 = pneg %p78
      %p234 = pneg %p102
      %p235 = pneg %p99
      %p236 = pneg %p128
      %p237 = pneg %p125
      %p238 = scmp.lt.s32.totalorder %s18, 1
      %s239 = scalar_select %p238, %s18, 1
      %s240 = smul.addr %s239, 10
      %s241 = smul.addr %s240, 4
      %s242 = scalar_lea.vmem %s4, %s241
      %p243 = pneg %p154
      %p244 = pneg %p151
      %p245 = scmp.lt.s32.totalorder %s18, 1
      %s246 = scalar_select %p245, %s18, 1
      %s247 = scalar_lea.vmem %s5, %s246
      %p248 = pneg %p180
      %p249 = pneg %p177
      %p250 = scmp.lt.s32.totalorder %s18, 1
      %s251 = scalar_select %p250, %s18, 1
      %s252 = scalar_lea.vmem %s6, %s251
      %p253 = scmp.lt.s32.totalorder %s18, 1
      %s254 = scalar_select %p253, %s18, 1
      %s255 = smul.addr %s254, 10
      %s256 = smul.addr %s255, 8
      %s257 = scalar_lea.vmem %s0, %s256
      %p258 = scmp.lt.s32.totalorder %s18, 1
      %s259 = scalar_select %p258, %s18, 1
      %s260 = smul.addr %s259, 10
      %s261 = smul.addr %s260, 4
      %s262 = scalar_lea.vmem %s4, %s261
      %p263 = scmp.lt.s32.totalorder %s18, 1
      %s264 = scalar_select %p263, %s18, 1
      %s265 = scalar_lea.vmem %s5, %s264
      %p266 = scmp.lt.s32.totalorder %s18, 1
      %s267 = scalar_select %p266, %s18, 1
      %s268 = scalar_lea.vmem %s6, %s267
      %v269 = vld [vmem:[%s257] sm:$0xff]
      %v270 = vld [vmem:[%s257 + $0x8] sm:$0xff]
      %v271 = vld [vmem:[%s257 + $0x10] sm:$0xff]
      %v272 = vld [vmem:[%s257 + $0x18] sm:$0xff]
      %v273 = vld [vmem:[%s257 + $0x20] sm:$0xff]
      %v274 = vld [vmem:[%s257 + $0x28] sm:$0xff]
      %v275 = vld [vmem:[%s257 + $0x30] sm:$0xff]
      %v276 = vld [vmem:[%s257 + $0x38] sm:$0xff]
      %v277 = vld [vmem:[%s257 + $0x40] sm:$0xff]
      %v278 = vld [vmem:[%s257 + $0x48] sm:$0xff]
      %v279 = vld [vmem:[%s1] sm:$0x1]
      %v281 = vperm.slane %v279, 0
      %v283 = vmul.f32 %v269, %v281
      %v284 = vmul.f32 %v270, %v281
      %v285 = vmul.f32 %v271, %v281
      %v286 = vmul.f32 %v272, %v281
      %v287 = vmul.f32 %v273, %v281
      %v288 = vmul.f32 %v274, %v281
      %v289 = vmul.f32 %v275, %v281
      %v290 = vmul.f32 %v276, %v281
      %v291 = vmul.f32 %v277, %v281
      %v292 = vmul.f32 %v278, %v281
      %v293 = vld [vmem:[%s2] sm:$0x1]
      %v295 = vperm.slane %v293, 0
      %v297 = vadd.f32 %v283, %v295
      %v298 = vadd.f32 %v284, %v295
      %v299 = vadd.f32 %v285, %v295
      %v300 = vadd.f32 %v286, %v295
      %v301 = vadd.f32 %v287, %v295
      %v302 = vadd.f32 %v288, %v295
      %v303 = vadd.f32 %v289, %v295
      %v304 = vadd.f32 %v290, %v295
      %v305 = vadd.f32 %v291, %v295
      %v306 = vadd.f32 %v292, %v295
      %v307 = vmax.f32 %v297, 0.0
      %v308 = vmax.f32 %v298, 0.0
      %v309 = vmax.f32 %v299, 0.0
      %v310 = vmax.f32 %v300, 0.0
      %v311 = vmax.f32 %v301, 0.0
      %v312 = vmax.f32 %v302, 0.0
      %v313 = vmax.f32 %v303, 0.0
      %v314 = vmax.f32 %v304, 0.0
      %v315 = vmax.f32 %v305, 0.0
      %v316 = vmax.f32 %v306, 0.0
      %v317 = vpack.c.bf16 %v307, %v307
      %v318 = vpack.c.bf16 %v308, %v308
      %v319 = vpack.c.bf16 %v309, %v309
      %v320 = vpack.c.bf16 %v310, %v310
      %v321 = vpack.c.bf16 %v311, %v311
      %v322 = vpack.c.bf16 %v312, %v312
      %v323 = vpack.c.bf16 %v313, %v313
      %v324 = vpack.c.bf16 %v314, %v314
      %v325 = vpack.c.bf16 %v315, %v315
      %v326 = vpack.c.bf16 %v316, %v316
      %327 = vst [vmem:[%s262] sm:$0xf] %v317
      %328 = vst [vmem:[%s262 + $0x4] sm:$0xf] %v318
      %329 = vst [vmem:[%s262 + $0x8] sm:$0xf] %v319
      %330 = vst [vmem:[%s262 + $0xc] sm:$0xf] %v320
      %331 = vst [vmem:[%s262 + $0x10] sm:$0xf] %v321
      %332 = vst [vmem:[%s262 + $0x14] sm:$0xf] %v322
      %333 = vst [vmem:[%s262 + $0x18] sm:$0xf] %v323
      %334 = vst [vmem:[%s262 + $0x1c] sm:$0xf] %v324
      %335 = vst [vmem:[%s262 + $0x20] sm:$0xf] %v325
      %336 = vst [vmem:[%s262 + $0x24] sm:$0xf] %v326
      %v337 = vld [vmem:[%s3] sm:$0xff]
      %v338 = vld [vmem:[%s3 + $0x8] sm:$0xff]
      %v339 = vld [vmem:[%s3 + $0x10] sm:$0xff]
      %v340 = vld [vmem:[%s3 + $0x18] sm:$0xff]
      %v341 = vld [vmem:[%s3 + $0x20] sm:$0xff]
      %v342 = vld [vmem:[%s3 + $0x28] sm:$0xff]
      %v343 = vld [vmem:[%s3 + $0x30] sm:$0xff]
      %v344 = vld [vmem:[%s3 + $0x38] sm:$0xff]
      %v345 = vld [vmem:[%s3 + $0x40] sm:$0xff]
      %v346 = vld [vmem:[%s3 + $0x48] sm:$0xff]
      %348 = vset.pattern.permute.xlu0 0
      %349 = vperm.xlu0 %348, %v337
      %v350 = vpop.permute.xlu0 %349
      %353 = vset.pattern.permute.xlu0 0
      %354 = vperm.xlu0 %353, %v338
      %v355 = vpop.permute.xlu0 %354
      %358 = vset.pattern.permute.xlu0 0
      %359 = vperm.xlu0 %358, %v339
      %v360 = vpop.permute.xlu0 %359
      %363 = vset.pattern.permute.xlu0 0
      %364 = vperm.xlu0 %363, %v340
      %v365 = vpop.permute.xlu0 %364
      %368 = vset.pattern.permute.xlu0 0
      %369 = vperm.xlu0 %368, %v341
      %v370 = vpop.permute.xlu0 %369
      %373 = vset.pattern.permute.xlu0 0
      %374 = vperm.xlu0 %373, %v342
      %v375 = vpop.permute.xlu0 %374
      %378 = vset.pattern.permute.xlu0 0
      %379 = vperm.xlu0 %378, %v343
      %v380 = vpop.permute.xlu0 %379
      %383 = vset.pattern.permute.xlu0 0
      %384 = vperm.xlu0 %383, %v344
      %v385 = vpop.permute.xlu0 %384
      %388 = vset.pattern.permute.xlu0 0
      %389 = vperm.xlu0 %388, %v345
      %v390 = vpop.permute.xlu0 %389
      %393 = vset.pattern.permute.xlu0 0
      %394 = vperm.xlu0 %393, %v346
      %v395 = vpop.permute.xlu0 %394
      %v397 = vmul.f32 %v307, %v350
      %v398 = vmul.f32 %v308, %v355
      %v399 = vmul.f32 %v309, %v360
      %v400 = vmul.f32 %v310, %v365
      %v401 = vmul.f32 %v311, %v370
      %v402 = vmul.f32 %v312, %v375
      %v403 = vmul.f32 %v313, %v380
      %v404 = vmul.f32 %v314, %v385
      %v405 = vmul.f32 %v315, %v390
      %v406 = vmul.f32 %v316, %v395
      %v407 = vadd.f32 %v397, %v398
      %v408 = vadd.f32 %v407, %v399
      %v409 = vadd.f32 %v408, %v400
      %v410 = vadd.f32 %v409, %v401
      %v411 = vadd.f32 %v410, %v402
      %v412 = vadd.f32 %v411, %v403
      %v413 = vadd.f32 %v412, %v404
      %v414 = vadd.f32 %v413, %v405
      %v415 = vadd.f32 %v414, %v406
      %v416 = vrot.slane %v415, 4
      %v417 = vadd.f32 %v415, %v416
      %v418 = vrot.slane %v417, 2
      %v419 = vadd.f32 %v417, %v418
      %v420 = vrot.slane %v419, 1
      %v421 = vadd.f32 %v419, %v420
      %422 = vst [vmem:[%s265] sm:$0x1] %v421
      %v423 = vmul.f32 %v397, %v397
      %v424 = vmul.f32 %v398, %v398
      %v425 = vmul.f32 %v399, %v399
      %v426 = vmul.f32 %v400, %v400
      %v427 = vmul.f32 %v401, %v401
      %v428 = vmul.f32 %v402, %v402
      %v429 = vmul.f32 %v403, %v403
      %v430 = vmul.f32 %v404, %v404
      %v431 = vmul.f32 %v405, %v405
      %v432 = vmul.f32 %v406, %v406
      %v433 = vadd.f32 %v423, %v424
      %v434 = vadd.f32 %v433, %v425
      %v435 = vadd.f32 %v434, %v426
      %v436 = vadd.f32 %v435, %v427
      %v437 = vadd.f32 %v436, %v428
      %v438 = vadd.f32 %v437, %v429
      %v439 = vadd.f32 %v438, %v430
      %v440 = vadd.f32 %v439, %v431
      %v441 = vadd.f32 %v440, %v432
      %v442 = vrot.slane %v441, 4
      %v443 = vadd.f32 %v441, %v442
      %v444 = vrot.slane %v443, 2
      %v445 = vadd.f32 %v443, %v444
      %v446 = vrot.slane %v445, 1
      %v447 = vadd.f32 %v445, %v446
      %448 = vst [vmem:[%s268] sm:$0x1] %v447
      %p449 = scmp.lt.s32.totalorder %s18, 1
      %s450 = scalar_select %p449, %s18, 1
      %s451 = smul.addr %s450, 10
      %s452 = smul.addr %s451, 4
      %s453 = scalar_lea.vmem %s4, %s452
      %p454 = scmp.lt.s32.totalorder %s18, 1
      %s455 = scalar_select %p454, %s18, 1
      %s456 = scalar_lea.vmem %s5, %s455
      %p457 = scmp.lt.s32.totalorder %s18, 1
      %s458 = scalar_select %p457, %s18, 1
      %s459 = scalar_lea.vmem %s6, %s458
      // Predicated region
      $region37: #{decoder_block_forward.5} parent=35 // pred_check
        %p460 = pneg %p125
      $region38: #{decoder_block_forward.5} parent=35 // pred_check_branch
        %462 = sbr.rel (%p460) target = $region40
      $region39: #{decoder_block_forward.5} parent=35 // pred_region
        _
      $region40: #{decoder_block_forward.5} parent=35 // pred_fallthru
        _
      // Predicated region
      $region41: #{decoder_block_forward.5} parent=35 // pred_check
        %p463 = pneg %p151
      $region42: #{decoder_block_forward.5} parent=35 // pred_check_branch
        %465 = sbr.rel (%p463) target = $region44
      $region43: #{decoder_block_forward.5} parent=35 // pred_region
        _
      $region44: #{decoder_block_forward.5} parent=35 // pred_fallthru
        _
      // Predicated region
      $region45: #{decoder_block_forward.5} parent=35 // pred_check
        %p466 = pneg %p177
      $region46: #{decoder_block_forward.5} parent=35 // pred_check_branch
        %468 = sbr.rel (%p466) target = $region48
      $region47: #{decoder_block_forward.5} parent=35 // pred_region
        _
      $region48: #{decoder_block_forward.5} parent=35 // pred_fallthru
        _
    $region36: #{decoder_block_forward.5} parent=5 // pred_fallthru
      _
    %p469 = scmp.le.s32.totalorder 2, %s13
    // Predicated region
    $region49: #{decoder_block_forward.5} parent=5 // pred_check
      %p470 = pneg %p469
    $region50: #{decoder_block_forward.5} parent=5 // pred_check_branch
      %472 = sbr.rel (%p470) target = $region52
    $region51: #{decoder_block_forward.5} parent=5 // pred_region
      %s473 = ssub.s32 %s13, 2
      // Predicated region
      $region53: #{decoder_block_forward.5} parent=51 // pred_check
        %p474 = pneg %p131
      $region54: #{decoder_block_forward.5} parent=51 // pred_check_branch
        %476 = sbr.rel (%p474) target = $region56
      $region55: #{decoder_block_forward.5} parent=51 // pred_region
        %p477 = scmp.lt.s32.totalorder %s19, 1
        %s478 = scalar_select %p477, %s19, 1
        %s479 = smul.addr %s478, 10
        %s480 = smul.addr %s479, 4
        %s481 = scalar_lea.vmem %s4, %s480
      $region56: #{decoder_block_forward.5} parent=51 // pred_fallthru
        _
      // Predicated region
      $region57: #{decoder_block_forward.5} parent=51 // pred_check
        %p482 = pneg %p157
      $region58: #{decoder_block_forward.5} parent=51 // pred_check_branch
        %484 = sbr.rel (%p482) target = $region60
      $region59: #{decoder_block_forward.5} parent=51 // pred_region
        %p485 = scmp.lt.s32.totalorder %s19, 1
        %s486 = scalar_select %p485, %s19, 1
        %s487 = scalar_lea.vmem %s5, %s486
      $region60: #{decoder_block_forward.5} parent=51 // pred_fallthru
        _
      // Predicated region
      $region61: #{decoder_block_forward.5} parent=51 // pred_check
        %p488 = pneg %p183
      $region62: #{decoder_block_forward.5} parent=51 // pred_check_branch
        %490 = sbr.rel (%p488) target = $region64
      $region63: #{decoder_block_forward.5} parent=51 // pred_region
        %p491 = scmp.lt.s32.totalorder %s19, 1
        %s492 = scalar_select %p491, %s19, 1
        %s493 = scalar_lea.vmem %s6, %s492
      $region64: #{decoder_block_forward.5} parent=51 // pred_fallthru
        _
    $region52: #{decoder_block_forward.5} parent=5 // pred_fallthru
      _
  $region6: #{decoder_block_forward.5} parent=0 // loop_footer
    %s17 = sadd.s32 1, %s13
  $region7: #{decoder_block_forward.5} parent=0 // loop_footer_branch
    %12 = sbr.rel target = $region3
  $region8: #{decoder_block_forward.5} parent=0 // loop_exit
    _

// kernel: decoder_block_forward.4
$region0: #{decoder_block_forward.4}
  #allocation0 [shape = 'u32[]', space=smem, size = 0x4, offset = 0x4, fixed_abs, tag = 'smem constant byte address 0x4 - core index']
  #allocation1 [shape = 'u32[72,128]{1,0:T(1,128)}', space=vmem, size = 0x9000, scoped, tag = 'internal scratch']
  %s0 = inlined_call_operand.vmem [shape: bf16[2,104,512], index: 0, kind: input, shape index: {}]
  %s1 = inlined_call_operand.vmem [shape: bf16[9,512,128], index: 1, kind: input, shape index: {}]
  %s2 = inlined_call_operand.vmem [shape: f32[1,128], index: 2, kind: input, shape index: {}]
  %s3 = inlined_call_operand.vmem [shape: f32[80,1], index: 3, kind: input, shape index: {}]
  %s4 = inlined_call_operand.vmem [shape: f32[2,80,128], index: 4, kind: output, shape index: {0}]
  %s5 = inlined_call_operand.vmem [shape: f32[2,1,128], index: 5, kind: output, shape index: {1}]
  %s6 = inlined_call_operand.vmem [shape: f32[2,1,128], index: 6, kind: output, shape index: {2}]
  %7 = xla_tuple %s4, %s5, %s6
  %s8 = sld [smem:[#allocation0]]
  $region65: #{decoder_block_forward.4} parent=0
    _
  %s10 = ssub.s32 1, %s8
  %s11 = scalar_select 0, %s10, %s8
  loop: start=0, step=1, limit=4
  $region2: #{decoder_block_forward.4} parent=0 // loop_pre_header
    _
  $region3: #{decoder_block_forward.4} parent=0 // loop_header
    %s13 = sphi 0, %s17
    %p14 = scmp.ge.s32.totalorder %s13, 4
    %s23 = sphi 0, %s25
    %s26 = sphi 0, %s23
    %s27 = sphi 0, %s26
    %s43 = sphi 0, %s27
    %s47 = sphi 0, %s47
    %s49 = sphi 0, %s47
    %s50 = sphi 0, %s49
    %s64 = sphi 0, %s50
    %s68 = sphi 0, %s68
    %s70 = sphi 0, %s68
    %s71 = sphi 0, %s70
    %s85 = sphi 0, %s71
    %s89 = sphi 0, %s89
    %s91 = sphi 0, %s89
    %s92 = sphi 0, %s91
    %s106 = sphi 0, %s92
    %s112 = sphi 0, %s114
    %s115 = sphi 0, %s112
    %s116 = sphi 0, %s115
    %s132 = sphi 0, %s116
    %s138 = sphi 0, %s140
    %s141 = sphi 0, %s138
    %s142 = sphi 0, %s141
    %s158 = sphi 0, %s142
    %s164 = sphi 0, %s166
    %s167 = sphi 0, %s164
    %s168 = sphi 0, %s167
    %s184 = sphi 0, %s168
  $region4: #{decoder_block_forward.4} parent=0 // loop_header_branch
    %16 = sbr.rel (%p14) target = $region8
  $region5: #{decoder_block_forward.4} parent=0 // loop_body
    %s18 = ssub.s32 %s13, 1
    %s19 = ssub.s32 %s13, 2
    %s20 = sadd.s32 %s13, 1
    %s21 = ssub.s32 %s13, %s20
    %p22 = scmp.eq.s32.totalorder %s21, 0
    %s24 = sadd.s32 %s23, 1
    %s25 = scalar_select %p22, %s23, %s24
    %p28 = pneg %p22
    %p29 = scmp.eq.s32.totalorder %s13, 1
    %p30 = por %p28, %p29
    %p31 = scmp.ne.s32.totalorder %s23, %s26
    %p32 = scmp.eq.s32.totalorder %s13, 0
    %p33 = por %p31, %p32
    %p34 = scmp.ne.s32.totalorder %s23, %s26
    %p35 = scmp.eq.s32.totalorder %s18, 1
    %p36 = por %p34, %p35
    %p37 = scmp.ne.s32.totalorder %s26, %s27
    %p38 = scmp.eq.s32.totalorder %s18, 0
    %p39 = por %p37, %p38
    %p40 = scmp.ne.s32.totalorder %s26, %s27
    %p41 = scmp.eq.s32.totalorder %s19, 1
    %p42 = por %p40, %p41
    %p44 = scmp.ne.s32.totalorder %s27, %s43
    %p45 = scmp.eq.s32.totalorder %s19, 0
    %p46 = por %p44, %p45
    %s48 = sadd.s32 %s47, 1
    %p51 = scmp.eq.s32.totalorder %s13, 1
    %p52 = scmp.ne.s32.totalorder %s47, %s49
    %p53 = scmp.eq.s32.totalorder %s13, 0
    %p54 = por %p52, %p53
    %p55 = scmp.ne.s32.totalorder %s47, %s49
    %p56 = scmp.eq.s32.totalorder %s18, 1
    %p57 = por %p55, %p56
    %p58 = scmp.ne.s32.totalorder %s49, %s50
    %p59 = scmp.eq.s32.totalorder %s18, 0
    %p60 = por %p58, %p59
    %p61 = scmp.ne.s32.totalorder %s49, %s50
    %p62 = scmp.eq.s32.totalorder %s19, 1
    %p63 = por %p61, %p62
    %p65 = scmp.ne.s32.totalorder %s50, %s64
    %p66 = scmp.eq.s32.totalorder %s19, 0
    %p67 = por %p65, %p66
    %s69 = sadd.s32 %s68, 1
    %p72 = scmp.eq.s32.totalorder %s13, 1
    %p73 = scmp.ne.s32.totalorder %s68, %s70
    %p74 = scmp.eq.s32.totalorder %s13, 0
    %p75 = por %p73, %p74
    %p76 = scmp.ne.s32.totalorder %s68, %s70
    %p77 = scmp.eq.s32.totalorder %s18, 1
    %p78 = por %p76, %p77
    %p79 = scmp.ne.s32.totalorder %s70, %s71
    %p80 = scmp.eq.s32.totalorder %s18, 0
    %p81 = por %p79, %p80
    %p82 = scmp.ne.s32.totalorder %s70, %s71
    %p83 = scmp.eq.s32.totalorder %s19, 1
    %p84 = por %p82, %p83
    %p86 = scmp.ne.s32.totalorder %s71, %s85
    %p87 = scmp.eq.s32.totalorder %s19, 0
    %p88 = por %p86, %p87
    %s90 = sadd.s32 %s89, 1
    %p93 = scmp.eq.s32.totalorder %s13, 1
    %p94 = scmp.ne.s32.totalorder %s89, %s91
    %p95 = scmp.eq.s32.totalorder %s13, 0
    %p96 = por %p94, %p95
    %p97 = scmp.ne.s32.totalorder %s89, %s91
    %p98 = scmp.eq.s32.totalorder %s18, 1
    %p99 = por %p97, %p98
    %p100 = scmp.ne.s32.totalorder %s91, %s92
    %p101 = scmp.eq.s32.totalorder %s18, 0
    %p102 = por %p100, %p101
    %p103 = scmp.ne.s32.totalorder %s91, %s92
    %p104 = scmp.eq.s32.totalorder %s19, 1
    %p105 = por %p103, %p104
    %p107 = scmp.ne.s32.totalorder %s92, %s106
    %p108 = scmp.eq.s32.totalorder %s19, 0
    %p109 = por %p107, %p108
    %s110 = ssub.s32 %s13, %s20
    %p111 = scmp.eq.s32.totalorder %s110, 0
    %s113 = sadd.s32 %s112, 1
    %s114 = scalar_select %p111, %s112, %s113
    %p117 = pneg %p111
    %p118 = scmp.eq.s32.totalorder %s13, 1
    %p119 = por %p117, %p118
    %p120 = scmp.ne.s32.totalorder %s112, %s115
    %p121 = scmp.eq.s32.totalorder %s13, 0
    %p122 = por %p120, %p121
    %p123 = scmp.ne.s32.totalorder %s112, %s115
    %p124 = scmp.eq.s32.totalorder %s18, 1
    %p125 = por %p123, %p124
    %p126 = scmp.ne.s32.totalorder %s115, %s116
    %p127 = scmp.eq.s32.totalorder %s18, 0
    %p128 = por %p126, %p127
    %p129 = scmp.ne.s32.totalorder %s115, %s116
    %p130 = scmp.eq.s32.totalorder %s19, 1
    %p131 = por %p129, %p130
    %p133 = scmp.ne.s32.totalorder %s116, %s132
    %p134 = scmp.eq.s32.totalorder %s19, 0
    %p135 = por %p133, %p134
    %s136 = ssub.s32 %s13, %s20
    %p137 = scmp.eq.s32.totalorder %s136, 0
    %s139 = sadd.s32 %s138, 1
    %s140 = scalar_select %p137, %s138, %s139
    %p143 = pneg %p137
    %p144 = scmp.eq.s32.totalorder %s13, 1
    %p145 = por %p143, %p144
    %p146 = scmp.ne.s32.totalorder %s138, %s141
    %p147 = scmp.eq.s32.totalorder %s13, 0
    %p148 = por %p146, %p147
    %p149 = scmp.ne.s32.totalorder %s138, %s141
    %p150 = scmp.eq.s32.totalorder %s18, 1
    %p151 = por %p149, %p150
    %p152 = scmp.ne.s32.totalorder %s141, %s142
    %p153 = scmp.eq.s32.totalorder %s18, 0
    %p154 = por %p152, %p153
    %p155 = scmp.ne.s32.totalorder %s141, %s142
    %p156 = scmp.eq.s32.totalorder %s19, 1
    %p157 = por %p155, %p156
    %p159 = scmp.ne.s32.totalorder %s142, %s158
    %p160 = scmp.eq.s32.totalorder %s19, 0
    %p161 = por %p159, %p160
    %s162 = ssub.s32 %s13, %s20
    %p163 = scmp.eq.s32.totalorder %s162, 0
    %s165 = sadd.s32 %s164, 1
    %s166 = scalar_select %p163, %s164, %s165
    %p169 = pneg %p163
    %p170 = scmp.eq.s32.totalorder %s13, 1
    %p171 = por %p169, %p170
    %p172 = scmp.ne.s32.totalorder %s164, %s167
    %p173 = scmp.eq.s32.totalorder %s13, 0
    %p174 = por %p172, %p173
    %p175 = scmp.ne.s32.totalorder %s164, %s167
    %p176 = scmp.eq.s32.totalorder %s18, 1
    %p177 = por %p175, %p176
    %p178 = scmp.ne.s32.totalorder %s167, %s168
    %p179 = scmp.eq.s32.totalorder %s18, 0
    %p180 = por %p178, %p179
    %p181 = scmp.ne.s32.totalorder %s167, %s168
    %p182 = scmp.eq.s32.totalorder %s19, 1
    %p183 = por %p181, %p182
    %p185 = scmp.ne.s32.totalorder %s168, %s184
    %p186 = scmp.eq.s32.totalorder %s19, 0
    %p187 = por %p185, %p186
    %p188 = scmp.le.s32.totalorder 1, %s13
    %p189 = scmp.lt.s32.totalorder %s13, 3
    %p190 = pnand %p188, %p189
    %p191 = pneg %p190
    // Predicated region
    $region9: #{decoder_block_forward.4} parent=5 // pred_check
      _
    $region10: #{decoder_block_forward.4} parent=5 // pred_check_branch
      %193 = sbr.rel (%p190) target = $region12
    $region11: #{decoder_block_forward.4} parent=5 // pred_region
      %s194 = ssub.s32 %s13, 1
      // Predicated region
      $region13: #{decoder_block_forward.4} parent=11 // pred_check
        %p195 = pneg %p60
      $region14: #{decoder_block_forward.4} parent=11 // pred_check_branch
        %197 = sbr.rel (%p195) target = $region16
      $region15: #{decoder_block_forward.4} parent=11 // pred_region
        _
      $region16: #{decoder_block_forward.4} parent=11 // pred_fallthru
        _
      // Predicated region
      $region17: #{decoder_block_forward.4} parent=11 // pred_check
        %p198 = pneg %p81
      $region18: #{decoder_block_forward.4} parent=11 // pred_check_branch
        %200 = sbr.rel (%p198) target = $region20
      $region19: #{decoder_block_forward.4} parent=11 // pred_region
        _
      $region20: #{decoder_block_forward.4} parent=11 // pred_fallthru
        _
      // Predicated region
      $region21: #{decoder_block_forward.4} parent=11 // pred_check
        %p201 = pneg %p102
      $region22: #{decoder_block_forward.4} parent=11 // pred_check_branch
        %203 = sbr.rel (%p201) target = $region24
      $region23: #{decoder_block_forward.4} parent=11 // pred_region
        _
      $region24: #{decoder_block_forward.4} parent=11 // pred_fallthru
        _
    $region12: #{decoder_block_forward.4} parent=5 // pred_fallthru
      _
    %p204 = scmp.lt.s32.totalorder %s13, 2
    // Predicated region
    $region25: #{decoder_block_forward.4} parent=5 // pred_check
      %p205 = pneg %p204
    $region26: #{decoder_block_forward.4} parent=5 // pred_check_branch
      %207 = sbr.rel (%p205) target = $region28
    $region27: #{decoder_block_forward.4} parent=5 // pred_region
      // Predicated region
      $region29: #{decoder_block_forward.4} parent=27 // pred_check
        %p208 = pneg %p33
      $region30: #{decoder_block_forward.4} parent=27 // pred_check_branch
        %210 = sbr.rel (%p208) target = $region32
      $region31: #{decoder_block_forward.4} parent=27 // pred_region
        %p211 = scmp.lt.s32.totalorder %s13, 1
        %s212 = scalar_select %p211, %s13, 1
        %s213 = smul.addr %s212, 52
        %s214 = smul.addr %s213, 4
        %s215 = scalar_lea.vmem %s0, %s214
      $region32: #{decoder_block_forward.4} parent=27 // pred_fallthru
        _
    $region28: #{decoder_block_forward.4} parent=5 // pred_fallthru
      _
    %p216 = scmp.le.s32.totalorder 1, %s13
    %p217 = scmp.lt.s32.totalorder %s13, 3
    %p218 = pnand %p216, %p217
    %p219 = pneg %p218
    // Predicated region
    $region33: #{decoder_block_forward.4} parent=5 // pred_check
      _
    $region34: #{decoder_block_forward.4} parent=5 // pred_check_branch
      %221 = sbr.rel (%p218) target = $region36
    $region35: #{decoder_block_forward.4} parent=5 // pred_region
      %s222 = ssub.s32 %s13, 1
      %p223 = scmp.lt.s32.totalorder %s18, 1
      %s224 = scalar_select %p223, %s18, 1
      %s225 = smul.addr %s224, 52
      %s226 = smul.addr %s225, 4
      %s227 = scalar_lea.vmem %s0, %s226
      %p228 = pneg %p39
      %p229 = pneg %p36
      %p230 = pneg %p60
      %p231 = pneg %p57
      %p232 = pneg %p81
      %p233 = pneg %p78
      %p234 = pneg %p102
      %p235 = pneg %p99
      %p236 = pneg %p128
      %p237 = pneg %p125
      %p238 = scmp.lt.s32.totalorder %s18, 1
      %s239 = scalar_select %p238, %s18, 1
      %s240 = smul.addr %s239, 10
      %s241 = smul.addr %s240, 8
      %s242 = scalar_lea.vmem %s4, %s241
      %p243 = pneg %p154
      %p244 = pneg %p151
      %p245 = scmp.lt.s32.totalorder %s18, 1
      %s246 = scalar_select %p245, %s18, 1
      %s247 = scalar_lea.vmem %s5, %s246
      %p248 = pneg %p180
      %p249 = pneg %p177
      %p250 = scmp.lt.s32.totalorder %s18, 1
      %s251 = scalar_select %p250, %s18, 1
      %s252 = scalar_lea.vmem %s6, %s251
      %p253 = scmp.lt.s32.totalorder %s18, 1
      %s254 = scalar_select %p253, %s18, 1
      %s255 = smul.addr %s254, 52
      %s256 = smul.addr %s255, 4
      %s257 = scalar_lea.vmem %s0, %s256
      %p258 = scmp.lt.s32.totalorder %s18, 1
      %s259 = scalar_select %p258, %s18, 1
      %s260 = smul.addr %s259, 10
      %s261 = smul.addr %s260, 8
      %s262 = scalar_lea.vmem %s4, %s261
      %p263 = scmp.lt.s32.totalorder %s18, 1
      %s264 = scalar_select %p263, %s18, 1
      %s265 = scalar_lea.vmem %s5, %s264
      %p266 = scmp.lt.s32.totalorder %s18, 1
      %s267 = scalar_select %p266, %s18, 1
      %s268 = scalar_lea.vmem %s6, %s267
      %v269 = vld [vmem:[%s257] sm:$0xff]
      %v270 = vld [vmem:[%s257 + $0x8] sm:$0xff]
      %v271 = vld [vmem:[%s257 + $0x10] sm:$0xff]
      %v272 = vld [vmem:[%s257 + $0x18] sm:$0xff]
      %v273 = vld [vmem:[%s257 + $0x20] sm:$0xff]
      %v274 = vld [vmem:[%s257 + $0x28] sm:$0xff]
      %v275 = vld [vmem:[%s257 + $0x30] sm:$0xff]
      %v276 = vld [vmem:[%s257 + $0x38] sm:$0xff]
      %v277 = vld [vmem:[%s257 + $0x40] sm:$0xff]
      %v278 = vld [vmem:[%s257 + $0x48] sm:$0xff]
      %v279 = vld [vmem:[%s257 + $0x50] sm:$0xff]
      %v280 = vld [vmem:[%s257 + $0x58] sm:$0xff]
      %v281 = vld [vmem:[%s257 + $0x60] sm:$0xff]
      %v282 = vld [vmem:[%s257 + $0x68] sm:$0xff]
      %v283 = vld [vmem:[%s257 + $0x70] sm:$0xff]
      %v284 = vld [vmem:[%s257 + $0x78] sm:$0xff]
      %v285 = vld [vmem:[%s257 + $0x80] sm:$0xff]
      %v286 = vld [vmem:[%s257 + $0x88] sm:$0xff]
      %v287 = vld [vmem:[%s257 + $0x90] sm:$0xff]
      %v288 = vld [vmem:[%s257 + $0x98] sm:$0xff]
      %v289 = vld [vmem:[%s257 + $0xa0] sm:$0xff]
      %v290 = vld [vmem:[%s257 + $0xa8] sm:$0xff]
      %v291 = vld [vmem:[%s257 + $0xb0] sm:$0xff]
      %v292 = vld [vmem:[%s257 + $0xb8] sm:$0xff]
      %v293 = vld [vmem:[%s257 + $0xc0] sm:$0xff]
      %v294 = vld [vmem:[%s257 + $0xc8] sm:$0xff]
      %v295 = vld [vmem:[%s1] sm:$0xf]
      %v296 = vld [vmem:[%s1 + $0x4] sm:$0xf]
      %v297 = vld [vmem:[%s1 + $0x8] sm:$0xf]
      %v298 = vld [vmem:[%s1 + $0xc] sm:$0xf]
      %v299 = vld [vmem:[%s1 + $0x10] sm:$0xf]
      %v300 = vld [vmem:[%s1 + $0x14] sm:$0xf]
      %v301 = vld [vmem:[%s1 + $0x18] sm:$0xf]
      %v302 = vld [vmem:[%s1 + $0x1c] sm:$0xf]
      %v303 = vld [vmem:[%s1 + $0x20] sm:$0xf]
      %v304 = vld [vmem:[%s1 + $0x24] sm:$0xf]
      %v305 = vld [vmem:[%s1 + $0x28] sm:$0xf]
      %v306 = vld [vmem:[%s1 + $0x2c] sm:$0xf]
      %v307 = vld [vmem:[%s1 + $0x30] sm:$0xf]
      %v308 = vld [vmem:[%s1 + $0x34] sm:$0xf]
      %v309 = vld [vmem:[%s1 + $0x38] sm:$0xf]
      %v310 = vld [vmem:[%s1 + $0x3c] sm:$0xf]
      %v311 = vld [vmem:[%s1 + $0x40] sm:$0xf]
      %v312 = vld [vmem:[%s1 + $0x44] sm:$0xf]
      %v313 = vld [vmem:[%s1 + $0x48] sm:$0xf]
      %v314 = vld [vmem:[%s1 + $0x4c] sm:$0xf]
      %v315 = vld [vmem:[%s1 + $0x50] sm:$0xf]
      %v316 = vld [vmem:[%s1 + $0x54] sm:$0xf]
      %v317 = vld [vmem:[%s1 + $0x58] sm:$0xf]
      %v318 = vld [vmem:[%s1 + $0x5c] sm:$0xf]
      %v319 = vld [vmem:[%s1 + $0x60] sm:$0xf]
      %v320 = vld [vmem:[%s1 + $0x64] sm:$0xf]
      %v321 = vld [vmem:[%s1 + $0x68] sm:$0xf]
      %v322 = vld [vmem:[%s1 + $0x6c] sm:$0xf]
      %v323 = vld [vmem:[%s1 + $0x70] sm:$0xf]
      %v324 = vld [vmem:[%s1 + $0x74] sm:$0xf]
      %v325 = vld [vmem:[%s1 + $0x78] sm:$0xf]
      %v326 = vld [vmem:[%s1 + $0x7c] sm:$0xf]
      %v327 = vld [vmem:[%s1 + $0x80] sm:$0xf]
      %v328 = vld [vmem:[%s1 + $0x84] sm:$0xf]
      %v329 = vld [vmem:[%s1 + $0x88] sm:$0xf]
      %v330 = vld [vmem:[%s1 + $0x8c] sm:$0xf]
      %v331 = vld [vmem:[%s1 + $0x90] sm:$0xf]
      %v332 = vld [vmem:[%s1 + $0x94] sm:$0xf]
      %v333 = vld [vmem:[%s1 + $0x98] sm:$0xf]
      %v334 = vld [vmem:[%s1 + $0x9c] sm:$0xf]
      %v335 = vld [vmem:[%s1 + $0xa0] sm:$0xf]
      %v336 = vld [vmem:[%s1 + $0xa4] sm:$0xf]
      %v337 = vld [vmem:[%s1 + $0xa8] sm:$0xf]
      %v338 = vld [vmem:[%s1 + $0xac] sm:$0xf]
      %v339 = vld [vmem:[%s1 + $0xb0] sm:$0xf]
      %v340 = vld [vmem:[%s1 + $0xb4] sm:$0xf]
      %v341 = vld [vmem:[%s1 + $0xb8] sm:$0xf]
      %v342 = vld [vmem:[%s1 + $0xbc] sm:$0xf]
      %v343 = vld [vmem:[%s1 + $0xc0] sm:$0xf]
      %v344 = vld [vmem:[%s1 + $0xc4] sm:$0xf]
      %v345 = vld [vmem:[%s1 + $0xc8] sm:$0xf]
      %v346 = vld [vmem:[%s1 + $0xcc] sm:$0xf]
      %v347 = vld [vmem:[%s1 + $0xd0] sm:$0xf]
      %v348 = vld [vmem:[%s1 + $0xd4] sm:$0xf]
      %v349 = vld [vmem:[%s1 + $0xd8] sm:$0xf]
      %v350 = vld [vmem:[%s1 + $0xdc] sm:$0xf]
      %v351 = vld [vmem:[%s1 + $0xe0] sm:$0xf]
      %v352 = vld [vmem:[%s1 + $0xe4] sm:$0xf]
      %v353 = vld [vmem:[%s1 + $0xe8] sm:$0xf]
      %v354 = vld [vmem:[%s1 + $0xec] sm:$0xf]
      %v355 = vld [vmem:[%s1 + $0xf0] sm:$0xf]
      %v356 = vld [vmem:[%s1 + $0xf4] sm:$0xf]
      %v357 = vld [vmem:[%s1 + $0xf8] sm:$0xf]
      %v358 = vld [vmem:[%s1 + $0xfc] sm:$0xf]
      %s359 = scalar_lea.vmem %s1, 256
      %v360 = vld [vmem:[%s359] sm:$0xf]
      %v361 = vld [vmem:[%s359 + $0x4] sm:$0xf]
      %v362 = vld [vmem:[%s359 + $0x8] sm:$0xf]
      %v363 = vld [vmem:[%s359 + $0xc] sm:$0xf]
      %v364 = vld [vmem:[%s359 + $0x10] sm:$0xf]
      %v365 = vld [vmem:[%s359 + $0x14] sm:$0xf]
      %v366 = vld [vmem:[%s359 + $0x18] sm:$0xf]
      %v367 = vld [vmem:[%s359 + $0x1c] sm:$0xf]
      %v368 = vld [vmem:[%s359 + $0x20] sm:$0xf]
      %v369 = vld [vmem:[%s359 + $0x24] sm:$0xf]
      %v370 = vld [vmem:[%s359 + $0x28] sm:$0xf]
      %v371 = vld [vmem:[%s359 + $0x2c] sm:$0xf]
      %v372 = vld [vmem:[%s359 + $0x30] sm:$0xf]
      %v373 = vld [vmem:[%s359 + $0x34] sm:$0xf]
      %v374 = vld [vmem:[%s359 + $0x38] sm:$0xf]
      %v375 = vld [vmem:[%s359 + $0x3c] sm:$0xf]
      %v376 = vld [vmem:[%s359 + $0x40] sm:$0xf]
      %v377 = vld [vmem:[%s359 + $0x44] sm:$0xf]
      %v378 = vld [vmem:[%s359 + $0x48] sm:$0xf]
      %v379 = vld [vmem:[%s359 + $0x4c] sm:$0xf]
      %v380 = vld [vmem:[%s359 + $0x50] sm:$0xf]
      %v381 = vld [vmem:[%s359 + $0x54] sm:$0xf]
      %v382 = vld [vmem:[%s359 + $0x58] sm:$0xf]
      %v383 = vld [vmem:[%s359 + $0x5c] sm:$0xf]
      %v384 = vld [vmem:[%s359 + $0x60] sm:$0xf]
      %v385 = vld [vmem:[%s359 + $0x64] sm:$0xf]
      %v386 = vld [vmem:[%s359 + $0x68] sm:$0xf]
      %v387 = vld [vmem:[%s359 + $0x6c] sm:$0xf]
      %v388 = vld [vmem:[%s359 + $0x70] sm:$0xf]
      %v389 = vld [vmem:[%s359 + $0x74] sm:$0xf]
      %v390 = vld [vmem:[%s359 + $0x78] sm:$0xf]
      %v391 = vld [vmem:[%s359 + $0x7c] sm:$0xf]
      %v392 = vld [vmem:[%s359 + $0x80] sm:$0xf]
      %v393 = vld [vmem:[%s359 + $0x84] sm:$0xf]
      %v394 = vld [vmem:[%s359 + $0x88] sm:$0xf]
      %v395 = vld [vmem:[%s359 + $0x8c] sm:$0xf]
      %v396 = vld [vmem:[%s359 + $0x90] sm:$0xf]
      %v397 = vld [vmem:[%s359 + $0x94] sm:$0xf]
      %v398 = vld [vmem:[%s359 + $0x98] sm:$0xf]
      %v399 = vld [vmem:[%s359 + $0x9c] sm:$0xf]
      %v400 = vld [vmem:[%s359 + $0xa0] sm:$0xf]
      %v401 = vld [vmem:[%s359 + $0xa4] sm:$0xf]
      %v402 = vld [vmem:[%s359 + $0xa8] sm:$0xf]
      %v403 = vld [vmem:[%s359 + $0xac] sm:$0xf]
      %v404 = vld [vmem:[%s359 + $0xb0] sm:$0xf]
      %v405 = vld [vmem:[%s359 + $0xb4] sm:$0xf]
      %v406 = vld [vmem:[%s359 + $0xb8] sm:$0xf]
      %v407 = vld [vmem:[%s359 + $0xbc] sm:$0xf]
      %v408 = vld [vmem:[%s359 + $0xc0] sm:$0xf]
      %v409 = vld [vmem:[%s359 + $0xc4] sm:$0xf]
      %v410 = vld [vmem:[%s359 + $0xc8] sm:$0xf]
      %v411 = vld [vmem:[%s359 + $0xcc] sm:$0xf]
      %v412 = vld [vmem:[%s359 + $0xd0] sm:$0xf]
      %v413 = vld [vmem:[%s359 + $0xd4] sm:$0xf]
      %v414 = vld [vmem:[%s359 + $0xd8] sm:$0xf]
      %v415 = vld [vmem:[%s359 + $0xdc] sm:$0xf]
      %v416 = vld [vmem:[%s359 + $0xe0] sm:$0xf]
      %v417 = vld [vmem:[%s359 + $0xe4] sm:$0xf]
      %v418 = vld [vmem:[%s359 + $0xe8] sm:$0xf]
      %v419 = vld [vmem:[%s359 + $0xec] sm:$0xf]
      %v420 = vld [vmem:[%s359 + $0xf0] sm:$0xf]
      %v421 = vld [vmem:[%s359 + $0xf4] sm:$0xf]
      %v422 = vld [vmem:[%s359 + $0xf8] sm:$0xf]
      %v423 = vld [vmem:[%s359 + $0xfc] sm:$0xf]
      %v446 = vunpack.c.l.b16 %v269
      %v447 = vunpack.c.h.b16 %v269
      %v448 = vunpack.c.l.b16 %v270
      %v449 = vunpack.c.h.b16 %v270
      %v450 = vunpack.c.l.b16 %v271
      %v451 = vunpack.c.h.b16 %v271
      %v452 = vunpack.c.l.b16 %v272
      %v453 = vunpack.c.h.b16 %v272
      %v454 = vunpack.c.l.b16 %v273
      %v455 = vunpack.c.h.b16 %v273
      %v456 = vunpack.c.l.b16 %v274
      %v457 = vunpack.c.h.b16 %v274
      %v458 = vunpack.c.l.b16 %v275
      %v459 = vunpack.c.h.b16 %v275
      %v460 = vunpack.c.l.b16 %v276
      %v461 = vunpack.c.h.b16 %v276
      %v462 = vunpack.c.l.b16 %v277
      %v463 = vunpack.c.h.b16 %v277
      %v464 = vunpack.c.l.b16 %v278
      %v465 = vunpack.c.h.b16 %v278
      %v466 = vunpack.c.l.b16 %v279
      %v467 = vunpack.c.h.b16 %v279
      %v468 = vunpack.c.l.b16 %v280
      %v469 = vunpack.c.h.b16 %v280
      %v470 = vunpack.c.l.b16 %v281
      %v471 = vunpack.c.h.b16 %v281
      %v472 = vunpack.c.l.b16 %v282
      %v473 = vunpack.c.h.b16 %v282
      %v474 = vunpack.c.l.b16 %v283
      %v475 = vunpack.c.h.b16 %v283
      %v476 = vunpack.c.l.b16 %v284
      %v477 = vunpack.c.h.b16 %v284
      %v478 = vunpack.c.l.b16 %v285
      %v479 = vunpack.c.h.b16 %v285
      %v480 = vunpack.c.l.b16 %v286
      %v481 = vunpack.c.h.b16 %v286
      %v482 = vunpack.c.l.b16 %v287
      %v483 = vunpack.c.h.b16 %v287
      %v484 = vunpack.c.l.b16 %v288
      %v485 = vunpack.c.h.b16 %v288
      %v486 = vunpack.c.l.b16 %v289
      %v487 = vunpack.c.h.b16 %v289
      %v488 = vunpack.c.l.b16 %v290
      %v489 = vunpack.c.h.b16 %v290
      %v490 = vpack.c.b16 %v450, %v446
      %v491 = vpack.c.b16 %v451, %v447
      %v492 = vpack.c.b16 %v452, %v448
      %v493 = vpack.c.b16 %v453, %v449
      %v494 = vpack.c.b16 %v458, %v454
      %v495 = vpack.c.b16 %v459, %v455
      %v496 = vpack.c.b16 %v460, %v456
      %v497 = vpack.c.b16 %v461, %v457
      %v498 = vpack.c.b16 %v466, %v462
      %v499 = vpack.c.b16 %v467, %v463
      %v500 = vpack.c.b16 %v468, %v464
      %v501 = vpack.c.b16 %v469, %v465
      %v502 = vpack.c.b16 %v474, %v470
      %v503 = vpack.c.b16 %v475, %v471
      %v504 = vpack.c.b16 %v476, %v472
      %v505 = vpack.c.b16 %v477, %v473
      %v506 = vpack.c.b16 %v482, %v478
      %v507 = vpack.c.b16 %v483, %v479
      %v508 = vpack.c.b16 %v484, %v480
      %v509 = vpack.c.b16 %v485, %v481
      %v510 = vpack.c.b16 %v486, %v486
      %v511 = vpack.c.b16 %v487, %v487
      %v512 = vpack.c.b16 %v488, %v488
      %v513 = vpack.c.b16 %v489, %v489
      %vm514 = vsmask.f32 7424
      %v516 = vshrl.u32 %v490, 16
      %v518 = vshll.u32 %v490, 16
      %v520 = vrot.slane %v518, 1
      %v521 = vor.u32 %v516, %v520
      %v523 = vshll.u32 %v494, 16
      %v525 = vrot.slane %v523, 1
      %v526 = vsel %vm514, %v521, %v525
      %v528 = vshrl.u32 %v491, 16
      %v530 = vshll.u32 %v491, 16
      %v532 = vrot.slane %v530, 1
      %v533 = vor.u32 %v528, %v532
      %v535 = vshll.u32 %v495, 16
      %v537 = vrot.slane %v535, 1
      %v538 = vsel %vm514, %v533, %v537
      %v540 = vshrl.u32 %v492, 16
      %v542 = vshll.u32 %v492, 16
      %v544 = vrot.slane %v542, 1
      %v545 = vor.u32 %v540, %v544
      %v547 = vshll.u32 %v496, 16
      %v549 = vrot.slane %v547, 1
      %v550 = vsel %vm514, %v545, %v549
      %v552 = vshrl.u32 %v493, 16
      %v554 = vshll.u32 %v493, 16
      %v556 = vrot.slane %v554, 1
      %v557 = vor.u32 %v552, %v556
      %v559 = vshll.u32 %v497, 16
      %v561 = vrot.slane %v559, 1
      %v562 = vsel %vm514, %v557, %v561
      %v563 = vshrl.u32 %v494, 16
      %v565 = vor.u32 %v563, %v525
      %v567 = vshll.u32 %v498, 16
      %v569 = vrot.slane %v567, 1
      %v570 = vsel %vm514, %v565, %v569
      %v571 = vshrl.u32 %v495, 16
      %v573 = vor.u32 %v571, %v537
      %v575 = vshll.u32 %v499, 16
      %v577 = vrot.slane %v575, 1
      %v578 = vsel %vm514, %v573, %v577
      %v579 = vshrl.u32 %v496, 16
      %v581 = vor.u32 %v579, %v549
      %v583 = vshll.u32 %v500, 16
      %v585 = vrot.slane %v583, 1
      %v586 = vsel %vm514, %v581, %v585
      %v587 = vshrl.u32 %v497, 16
      %v589 = vor.u32 %v587, %v561
      %v591 = vshll.u32 %v501, 16
      %v593 = vrot.slane %v591, 1
      %v594 = vsel %vm514, %v589, %v593
      %v595 = vshrl.u32 %v498, 16
      %v597 = vor.u32 %v595, %v569
      %v599 = vshll.u32 %v502, 16
      %v601 = vrot.slane %v599, 1
      %v602 = vsel %vm514, %v597, %v601
      %v603 = vshrl.u32 %v499, 16
      %v605 = vor.u32 %v603, %v577
      %v607 = vshll.u32 %v503, 16
      %v609 = vrot.slane %v607, 1
      %v610 = vsel %vm514, %v605, %v609
      %v611 = vshrl.u32 %v500, 16
      %v613 = vor.u32 %v611, %v585
      %v615 = vshll.u32 %v504, 16
      %v617 = vrot.slane %v615, 1
      %v618 = vsel %vm514, %v613, %v617
      %v619 = vshrl.u32 %v501, 16
      %v621 = vor.u32 %v619, %v593
      %v623 = vshll.u32 %v505, 16
      %v625 = vrot.slane %v623, 1
      %v626 = vsel %vm514, %v621, %v625
      %v627 = vshrl.u32 %v502, 16
      %v629 = vor.u32 %v627, %v601
      %v631 = vshll.u32 %v506, 16
      %v633 = vrot.slane %v631, 1
      %v634 = vsel %vm514, %v629, %v633
      %v635 = vshrl.u32 %v503, 16
      %v637 = vor.u32 %v635, %v609
      %v639 = vshll.u32 %v507, 16
      %v641 = vrot.slane %v639, 1
      %v642 = vsel %vm514, %v637, %v641
      %v643 = vshrl.u32 %v504, 16
      %v645 = vor.u32 %v643, %v617
      %v647 = vshll.u32 %v508, 16
      %v649 = vrot.slane %v647, 1
      %v650 = vsel %vm514, %v645, %v649
      %v651 = vshrl.u32 %v505, 16
      %v653 = vor.u32 %v651, %v625
      %v655 = vshll.u32 %v509, 16
      %v657 = vrot.slane %v655, 1
      %v658 = vsel %vm514, %v653, %v657
      %v659 = vshrl.u32 %v506, 16
      %v661 = vor.u32 %v659, %v633
      %v663 = vshll.u32 %v510, 16
      %v665 = vrot.slane %v663, 1
      %v666 = vsel %vm514, %v661, %v665
      %v667 = vshrl.u32 %v507, 16
      %v669 = vor.u32 %v667, %v641
      %v671 = vshll.u32 %v511, 16
      %v673 = vrot.slane %v671, 1
      %v674 = vsel %vm514, %v669, %v673
      %v675 = vshrl.u32 %v508, 16
      %v677 = vor.u32 %v675, %v649
      %v679 = vshll.u32 %v512, 16
      %v681 = vrot.slane %v679, 1
      %v682 = vsel %vm514, %v677, %v681
      %v683 = vshrl.u32 %v509, 16
      %v685 = vor.u32 %v683, %v657
      %v687 = vshll.u32 %v513, 16
      %v689 = vrot.slane %v687, 1
      %v690 = vsel %vm514, %v685, %v689
      %v775 = vunpack.c.l.b16 %v360
      %v776 = vunpack.c.l.b16 %v361
      %v777 = vunpack.c.l.b16 %v362
      %v778 = vunpack.c.l.b16 %v363
      %v779 = vunpack.c.l.b16 %v364
      %v780 = vunpack.c.l.b16 %v365
      %v781 = vunpack.c.l.b16 %v366
      %v782 = vunpack.c.l.b16 %v367
      %v783 = vunpack.c.l.b16 %v368
      %v784 = vunpack.c.l.b16 %v369
      %v785 = vunpack.c.l.b16 %v370
      %v786 = vunpack.c.l.b16 %v371
      %v787 = vunpack.c.l.b16 %v372
      %v788 = vunpack.c.l.b16 %v373
      %v789 = vunpack.c.l.b16 %v374
      %v790 = vunpack.c.l.b16 %v375
      %v791 = vunpack.c.l.b16 %v376
      %v792 = vunpack.c.l.b16 %v377
      %v793 = vunpack.c.l.b16 %v378
      %v794 = vunpack.c.l.b16 %v379
      %v795 = vunpack.c.l.b16 %v380
      %v796 = vunpack.c.l.b16 %v381
      %v797 = vunpack.c.l.b16 %v382
      %v798 = vunpack.c.l.b16 %v383
      %v799 = vunpack.c.l.b16 %v384
      %v800 = vunpack.c.l.b16 %v385
      %v801 = vunpack.c.l.b16 %v386
      %v802 = vunpack.c.l.b16 %v387
      %v803 = vunpack.c.l.b16 %v388
      %v804 = vunpack.c.l.b16 %v389
      %v805 = vunpack.c.l.b16 %v390
      %v806 = vunpack.c.l.b16 %v391
      %v807 = vunpack.c.l.b16 %v392
      %v808 = vunpack.c.l.b16 %v393
      %v809 = vunpack.c.l.b16 %v394
      %v810 = vunpack.c.l.b16 %v395
      %v811 = vunpack.c.l.b16 %v396
      %v812 = vunpack.c.l.b16 %v397
      %v813 = vunpack.c.l.b16 %v398
      %v814 = vunpack.c.l.b16 %v399
      %v815 = vunpack.c.l.b16 %v400
      %v816 = vunpack.c.l.b16 %v401
      %v817 = vunpack.c.l.b16 %v402
      %v818 = vunpack.c.l.b16 %v403
      %v819 = vunpack.c.l.b16 %v404
      %v820 = vunpack.c.l.b16 %v405
      %v821 = vunpack.c.l.b16 %v406
      %v822 = vunpack.c.l.b16 %v407
      %v823 = vunpack.c.l.b16 %v408
      %v824 = vunpack.c.l.b16 %v409
      %v825 = vunpack.c.l.b16 %v410
      %v826 = vunpack.c.l.b16 %v411
      %v827 = vunpack.c.l.b16 %v412
      %v828 = vunpack.c.l.b16 %v413
      %v829 = vunpack.c.l.b16 %v414
      %v830 = vunpack.c.l.b16 %v415
      %v831 = vunpack.c.l.b16 %v416
      %v832 = vunpack.c.l.b16 %v417
      %v833 = vunpack.c.l.b16 %v418
      %v834 = vunpack.c.l.b16 %v419
      %v835 = vunpack.c.l.b16 %v420
      %v836 = vunpack.c.l.b16 %v421
      %v837 = vunpack.c.l.b16 %v422
      %v838 = vunpack.c.l.b16 %v423
      %v839 = vpack.c.b16 %v776, %v775
      %v840 = vpack.c.b16 %v778, %v777
      %v841 = vpack.c.b16 %v780, %v779
      %v842 = vpack.c.b16 %v782, %v781
      %v843 = vpack.c.b16 %v784, %v783
      %v844 = vpack.c.b16 %v786, %v785
      %v845 = vpack.c.b16 %v788, %v787
      %v846 = vpack.c.b16 %v790, %v789
      %v847 = vpack.c.b16 %v792, %v791
      %v848 = vpack.c.b16 %v794, %v793
      %v849 = vpack.c.b16 %v796, %v795
      %v850 = vpack.c.b16 %v798, %v797
      %v851 = vpack.c.b16 %v800, %v799
      %v852 = vpack.c.b16 %v802, %v801
      %v853 = vpack.c.b16 %v804, %v803
      %v854 = vpack.c.b16 %v806, %v805
      %v855 = vpack.c.b16 %v808, %v807
      %v856 = vpack.c.b16 %v810, %v809
      %v857 = vpack.c.b16 %v812, %v811
      %v858 = vpack.c.b16 %v814, %v813
      %v859 = vpack.c.b16 %v816, %v815
      %v860 = vpack.c.b16 %v818, %v817
      %v861 = vpack.c.b16 %v820, %v819
      %v862 = vpack.c.b16 %v822, %v821
      %v863 = vpack.c.b16 %v824, %v823
      %v864 = vpack.c.b16 %v826, %v825
      %v865 = vpack.c.b16 %v828, %v827
      %v866 = vpack.c.b16 %v830, %v829
      %v867 = vpack.c.b16 %v832, %v831
      %v868 = vpack.c.b16 %v834, %v833
      %v869 = vpack.c.b16 %v836, %v835
      %v870 = vpack.c.b16 %v838, %v837
      %903 = vmatpush.bf16.msra.mxu0 %v846
      %904 = vmatpush.bf16.msra.mxu0 %v845
      %905 = vmatpush.bf16.msra.mxu0 %v844
      %906 = vmatpush.bf16.msra.mxu0 %v843
      %907 = vmatpush.bf16.msra.mxu0 %v842
      %908 = vmatpush.bf16.msra.mxu0 %v841
      %909 = vmatpush.bf16.msra.mxu0 %v840
      %910 = vmatpush.bf16.msra.mxu0 %v839
      %911 = vmatmul.bf16.gmra.mxu0 %v526
      %v912 = vpop.f32.mrf.mxu0
      %v913 = vadd.f32 0.0, %v912
      %v914 = vpop.f32.mrf.mxu0
      %v915 = vadd.f32 0.0, %v914
      %916 = vmatmul.bf16.gmra.mxu0 %v570
      %v917 = vpop.f32.mrf.mxu0
      %v918 = vadd.f32 0.0, %v917
      %v919 = vpop.f32.mrf.mxu0
      %v920 = vadd.f32 0.0, %v919
      %921 = vmatmul.bf16.gmra.mxu0 %v602
      %v922 = vpop.f32.mrf.mxu0
      %v923 = vadd.f32 0.0, %v922
      %v924 = vpop.f32.mrf.mxu0
      %v925 = vadd.f32 0.0, %v924
      %926 = vmatmul.bf16.gmra.mxu0 %v634
      %v927 = vpop.f32.mrf.mxu0
      %v928 = vadd.f32 0.0, %v927
      %v929 = vpop.f32.mrf.mxu0
      %v930 = vadd.f32 0.0, %v929
      %931 = vmatmul.bf16.gmra.mxu0 %v666
      %v932 = vpop.f32.mrf.mxu0
      %v933 = vadd.f32 0.0, %v932
      %v934 = vpop.f32.mrf.mxu0
      %v935 = vadd.f32 0.0, %v934
      %936 = vdwg.mxu0
      %937 = vmatpush.bf16.msra.mxu0 %v854
      %938 = vmatpush.bf16.msra.mxu0 %v853
      %939 = vmatpush.bf16.msra.mxu0 %v852
      %940 = vmatpush.bf16.msra.mxu0 %v851
      %941 = vmatpush.bf16.msra.mxu0 %v850
      %942 = vmatpush.bf16.msra.mxu0 %v849
      %943 = vmatpush.bf16.msra.mxu0 %v848
      %944 = vmatpush.bf16.msra.mxu0 %v847
      %945 = vmatmul.bf16.gmra.mxu0 %v538
      %v946 = vpop.f32.mrf.mxu0
      %v947 = vadd.f32 %v913, %v946
      %v948 = vpop.f32.mrf.mxu0
      %v949 = vadd.f32 %v915, %v948
      %950 = vmatmul.bf16.gmra.mxu0 %v578
      %v951 = vpop.f32.mrf.mxu0
      %v952 = vadd.f32 %v918, %v951
      %v953 = vpop.f32.mrf.mxu0
      %v954 = vadd.f32 %v920, %v953
      %955 = vmatmul.bf16.gmra.mxu0 %v610
      %v956 = vpop.f32.mrf.mxu0
      %v957 = vadd.f32 %v923, %v956
      %v958 = vpop.f32.mrf.mxu0
      %v959 = vadd.f32 %v925, %v958
      %960 = vmatmul.bf16.gmra.mxu0 %v642
      %v961 = vpop.f32.mrf.mxu0
      %v962 = vadd.f32 %v928, %v961
      %v963 = vpop.f32.mrf.mxu0
      %v964 = vadd.f32 %v930, %v963
      %965 = vmatmul.bf16.gmra.mxu0 %v674
      %v966 = vpop.f32.mrf.mxu0
      %v967 = vadd.f32 %v933, %v966
      %v968 = vpop.f32.mrf.mxu0
      %v969 = vadd.f32 %v935, %v968
      %970 = vdwg.mxu0
      %971 = vmatpush.bf16.msra.mxu0 %v862
      %972 = vmatpush.bf16.msra.mxu0 %v861
      %973 = vmatpush.bf16.msra.mxu0 %v860
      %974 = vmatpush.bf16.msra.mxu0 %v859
      %975 = vmatpush.bf16.msra.mxu0 %v858
      %976 = vmatpush.bf16.msra.mxu0 %v857
      %977 = vmatpush.bf16.msra.mxu0 %v856
      %978 = vmatpush.bf16.msra.mxu0 %v855
      %979 = vmatmul.bf16.gmra.mxu0 %v550
      %v980 = vpop.f32.mrf.mxu0
      %v981 = vadd.f32 %v947, %v980
      %v982 = vpop.f32.mrf.mxu0
      %v983 = vadd.f32 %v949, %v982
      %984 = vmatmul.bf16.gmra.mxu0 %v586
      %v985 = vpop.f32.mrf.mxu0
      %v986 = vadd.f32 %v952, %v985
      %v987 = vpop.f32.mrf.mxu0
      %v988 = vadd.f32 %v954, %v987
      %989 = vmatmul.bf16.gmra.mxu0 %v618
      %v990 = vpop.f32.mrf.mxu0
      %v991 = vadd.f32 %v957, %v990
      %v992 = vpop.f32.mrf.mxu0
      %v993 = vadd.f32 %v959, %v992
      %994 = vmatmul.bf16.gmra.mxu0 %v650
      %v995 = vpop.f32.mrf.mxu0
      %v996 = vadd.f32 %v962, %v995
      %v997 = vpop.f32.mrf.mxu0
      %v998 = vadd.f32 %v964, %v997
      %999 = vmatmul.bf16.gmra.mxu0 %v682
      %v1000 = vpop.f32.mrf.mxu0
      %v1001 = vadd.f32 %v967, %v1000
      %v1002 = vpop.f32.mrf.mxu0
      %v1003 = vadd.f32 %v969, %v1002
      %1004 = vdwg.mxu0
      %1005 = vmatpush.bf16.msra.mxu0 %v870
      %1006 = vmatpush.bf16.msra.mxu0 %v869
      %1007 = vmatpush.bf16.msra.mxu0 %v868
      %1008 = vmatpush.bf16.msra.mxu0 %v867
      %1009 = vmatpush.bf16.msra.mxu0 %v866
      %1010 = vmatpush.bf16.msra.mxu0 %v865
      %1011 = vmatpush.bf16.msra.mxu0 %v864
      %1012 = vmatpush.bf16.msra.mxu0 %v863
      %1013 = vmatmul.bf16.gmra.mxu0 %v562
      %v1014 = vpop.f32.mrf.mxu0
      %v1015 = vadd.f32 %v981, %v1014
      %v1016 = vpop.f32.mrf.mxu0
      %v1017 = vadd.f32 %v983, %v1016
      %1018 = vmatmul.bf16.gmra.mxu0 %v594
      %v1019 = vpop.f32.mrf.mxu0
      %v1020 = vadd.f32 %v986, %v1019
      %v1021 = vpop.f32.mrf.mxu0
      %v1022 = vadd.f32 %v988, %v1021
      %1023 = vmatmul.bf16.gmra.mxu0 %v626
      %v1024 = vpop.f32.mrf.mxu0
      %v1025 = vadd.f32 %v991, %v1024
      %v1026 = vpop.f32.mrf.mxu0
      %v1027 = vadd.f32 %v993, %v1026
      %1028 = vmatmul.bf16.gmra.mxu0 %v658
      %v1029 = vpop.f32.mrf.mxu0
      %v1030 = vadd.f32 %v996, %v1029
      %v1031 = vpop.f32.mrf.mxu0
      %v1032 = vadd.f32 %v998, %v1031
      %1033 = vmatmul.bf16.gmra.mxu0 %v690
      %v1034 = vpop.f32.mrf.mxu0
      %v1035 = vadd.f32 %v1001, %v1034
      %v1036 = vpop.f32.mrf.mxu0
      %v1037 = vadd.f32 %v1003, %v1036
      %1038 = vdwg.mxu0
      %v1123 = vunpack.c.l.b16 %v295
      %v1124 = vunpack.c.l.b16 %v296
      %v1125 = vunpack.c.l.b16 %v297
      %v1126 = vunpack.c.l.b16 %v298
      %v1127 = vunpack.c.l.b16 %v299
      %v1128 = vunpack.c.l.b16 %v300
      %v1129 = vunpack.c.l.b16 %v301
      %v1130 = vunpack.c.l.b16 %v302
      %v1131 = vunpack.c.l.b16 %v303
      %v1132 = vunpack.c.l.b16 %v304
      %v1133 = vunpack.c.l.b16 %v305
      %v1134 = vunpack.c.l.b16 %v306
      %v1135 = vunpack.c.l.b16 %v307
      %v1136 = vunpack.c.l.b16 %v308
      %v1137 = vunpack.c.l.b16 %v309
      %v1138 = vunpack.c.l.b16 %v310
      %v1139 = vunpack.c.l.b16 %v311
      %v1140 = vunpack.c.l.b16 %v312
      %v1141 = vunpack.c.l.b16 %v313
      %v1142 = vunpack.c.l.b16 %v314
      %v1143 = vunpack.c.l.b16 %v315
      %v1144 = vunpack.c.l.b16 %v316
      %v1145 = vunpack.c.l.b16 %v317
      %v1146 = vunpack.c.l.b16 %v318
      %v1147 = vunpack.c.l.b16 %v319
      %v1148 = vunpack.c.l.b16 %v320
      %v1149 = vunpack.c.l.b16 %v321
      %v1150 = vunpack.c.l.b16 %v322
      %v1151 = vunpack.c.l.b16 %v323
      %v1152 = vunpack.c.l.b16 %v324
      %v1153 = vunpack.c.l.b16 %v325
      %v1154 = vunpack.c.l.b16 %v326
      %v1155 = vunpack.c.l.b16 %v327
      %v1156 = vunpack.c.l.b16 %v328
      %v1157 = vunpack.c.l.b16 %v329
      %v1158 = vunpack.c.l.b16 %v330
      %v1159 = vunpack.c.l.b16 %v331
      %v1160 = vunpack.c.l.b16 %v332
      %v1161 = vunpack.c.l.b16 %v333
      %v1162 = vunpack.c.l.b16 %v334
      %v1163 = vunpack.c.l.b16 %v335
      %v1164 = vunpack.c.l.b16 %v336
      %v1165 = vunpack.c.l.b16 %v337
      %v1166 = vunpack.c.l.b16 %v338
      %v1167 = vunpack.c.l.b16 %v339
      %v1168 = vunpack.c.l.b16 %v340
      %v1169 = vunpack.c.l.b16 %v341
      %v1170 = vunpack.c.l.b16 %v342
      %v1171 = vunpack.c.l.b16 %v343
      %v1172 = vunpack.c.l.b16 %v344
      %v1173 = vunpack.c.l.b16 %v345
      %v1174 = vunpack.c.l.b16 %v346
      %v1175 = vunpack.c.l.b16 %v347
      %v1176 = vunpack.c.l.b16 %v348
      %v1177 = vunpack.c.l.b16 %v349
      %v1178 = vunpack.c.l.b16 %v350
      %v1179 = vunpack.c.l.b16 %v351
      %v1180 = vunpack.c.l.b16 %v352
      %v1181 = vunpack.c.l.b16 %v353
      %v1182 = vunpack.c.l.b16 %v354
      %v1183 = vunpack.c.l.b16 %v355
      %v1184 = vunpack.c.l.b16 %v356
      %v1185 = vunpack.c.l.b16 %v357
      %v1186 = vunpack.c.l.b16 %v358
      %v1187 = vpack.c.b16 %v1124, %v1123
      %v1188 = vpack.c.b16 %v1126, %v1125
      %v1189 = vpack.c.b16 %v1128, %v1127
      %v1190 = vpack.c.b16 %v1130, %v1129
      %v1191 = vpack.c.b16 %v1132, %v1131
      %v1192 = vpack.c.b16 %v1134, %v1133
      %v1193 = vpack.c.b16 %v1136, %v1135
      %v1194 = vpack.c.b16 %v1138, %v1137
      %v1195 = vpack.c.b16 %v1140, %v1139
      %v1196 = vpack.c.b16 %v1142, %v1141
      %v1197 = vpack.c.b16 %v1144, %v1143
      %v1198 = vpack.c.b16 %v1146, %v1145
      %v1199 = vpack.c.b16 %v1148, %v1147
      %v1200 = vpack.c.b16 %v1150, %v1149
      %v1201 = vpack.c.b16 %v1152, %v1151
      %v1202 = vpack.c.b16 %v1154, %v1153
      %v1203 = vpack.c.b16 %v1156, %v1155
      %v1204 = vpack.c.b16 %v1158, %v1157
      %v1205 = vpack.c.b16 %v1160, %v1159
      %v1206 = vpack.c.b16 %v1162, %v1161
      %v1207 = vpack.c.b16 %v1164, %v1163
      %v1208 = vpack.c.b16 %v1166, %v1165
      %v1209 = vpack.c.b16 %v1168, %v1167
      %v1210 = vpack.c.b16 %v1170, %v1169
      %v1211 = vpack.c.b16 %v1172, %v1171
      %v1212 = vpack.c.b16 %v1174, %v1173
      %v1213 = vpack.c.b16 %v1176, %v1175
      %v1214 = vpack.c.b16 %v1178, %v1177
      %v1215 = vpack.c.b16 %v1180, %v1179
      %v1216 = vpack.c.b16 %v1182, %v1181
      %v1217 = vpack.c.b16 %v1184, %v1183
      %v1218 = vpack.c.b16 %v1186, %v1185
      %1251 = vmatpush.bf16.msra.mxu0 %v1194
      %1252 = vmatpush.bf16.msra.mxu0 %v1193
      %1253 = vmatpush.bf16.msra.mxu0 %v1192
      %1254 = vmatpush.bf16.msra.mxu0 %v1191
      %1255 = vmatpush.bf16.msra.mxu0 %v1190
      %1256 = vmatpush.bf16.msra.mxu0 %v1189
      %1257 = vmatpush.bf16.msra.mxu0 %v1188
      %1258 = vmatpush.bf16.msra.mxu0 %v1187
      %1259 = vmatmul.bf16.gmra.mxu0 %v490
      %v1260 = vpop.f32.mrf.mxu0
      %v1261 = vadd.f32 %v1015, %v1260
      %v1262 = vpop.f32.mrf.mxu0
      %v1263 = vadd.f32 %v1017, %v1262
      %1264 = vmatmul.bf16.gmra.mxu0 %v494
      %v1265 = vpop.f32.mrf.mxu0
      %v1266 = vadd.f32 %v1020, %v1265
      %v1267 = vpop.f32.mrf.mxu0
      %v1268 = vadd.f32 %v1022, %v1267
      %1269 = vmatmul.bf16.gmra.mxu0 %v498
      %v1270 = vpop.f32.mrf.mxu0
      %v1271 = vadd.f32 %v1025, %v1270
      %v1272 = vpop.f32.mrf.mxu0
      %v1273 = vadd.f32 %v1027, %v1272
      %1274 = vmatmul.bf16.gmra.mxu0 %v502
      %v1275 = vpop.f32.mrf.mxu0
      %v1276 = vadd.f32 %v1030, %v1275
      %v1277 = vpop.f32.mrf.mxu0
      %v1278 = vadd.f32 %v1032, %v1277
      %1279 = vmatmul.bf16.gmra.mxu0 %v506
      %v1280 = vpop.f32.mrf.mxu0
      %v1281 = vadd.f32 %v1035, %v1280
      %v1282 = vpop.f32.mrf.mxu0
      %v1283 = vadd.f32 %v1037, %v1282
      %1284 = vdwg.mxu0
      %1285 = vmatpush.bf16.msra.mxu0 %v1202
      %1286 = vmatpush.bf16.msra.mxu0 %v1201
      %1287 = vmatpush.bf16.msra.mxu0 %v1200
      %1288 = vmatpush.bf16.msra.mxu0 %v1199
      %1289 = vmatpush.bf16.msra.mxu0 %v1198
      %1290 = vmatpush.bf16.msra.mxu0 %v1197
      %1291 = vmatpush.bf16.msra.mxu0 %v1196
      %1292 = vmatpush.bf16.msra.mxu0 %v1195
      %1293 = vmatmul.bf16.gmra.mxu0 %v491
      %v1294 = vpop.f32.mrf.mxu0
      %v1295 = vadd.f32 %v1261, %v1294
      %v1296 = vpop.f32.mrf.mxu0
      %v1297 = vadd.f32 %v1263, %v1296
      %1298 = vmatmul.bf16.gmra.mxu0 %v495
      %v1299 = vpop.f32.mrf.mxu0
      %v1300 = vadd.f32 %v1266, %v1299
      %v1301 = vpop.f32.mrf.mxu0
      %v1302 = vadd.f32 %v1268, %v1301
      %1303 = vmatmul.bf16.gmra.mxu0 %v499
      %v1304 = vpop.f32.mrf.mxu0
      %v1305 = vadd.f32 %v1271, %v1304
      %v1306 = vpop.f32.mrf.mxu0
      %v1307 = vadd.f32 %v1273, %v1306
      %1308 = vmatmul.bf16.gmra.mxu0 %v503
      %v1309 = vpop.f32.mrf.mxu0
      %v1310 = vadd.f32 %v1276, %v1309
      %v1311 = vpop.f32.mrf.mxu0
      %v1312 = vadd.f32 %v1278, %v1311
      %1313 = vmatmul.bf16.gmra.mxu0 %v507
      %v1314 = vpop.f32.mrf.mxu0
      %v1315 = vadd.f32 %v1281, %v1314
      %v1316 = vpop.f32.mrf.mxu0
      %v1317 = vadd.f32 %v1283, %v1316
      %1318 = vdwg.mxu0
      %1319 = vmatpush.bf16.msra.mxu0 %v1210
      %1320 = vmatpush.bf16.msra.mxu0 %v1209
      %1321 = vmatpush.bf16.msra.mxu0 %v1208
      %1322 = vmatpush.bf16.msra.mxu0 %v1207
      %1323 = vmatpush.bf16.msra.mxu0 %v1206
      %1324 = vmatpush.bf16.msra.mxu0 %v1205
      %1325 = vmatpush.bf16.msra.mxu0 %v1204
      %1326 = vmatpush.bf16.msra.mxu0 %v1203
      %1327 = vmatmul.bf16.gmra.mxu0 %v492
      %v1328 = vpop.f32.mrf.mxu0
      %v1329 = vadd.f32 %v1295, %v1328
      %v1330 = vpop.f32.mrf.mxu0
      %v1331 = vadd.f32 %v1297, %v1330
      %1332 = vmatmul.bf16.gmra.mxu0 %v496
      %v1333 = vpop.f32.mrf.mxu0
      %v1334 = vadd.f32 %v1300, %v1333
      %v1335 = vpop.f32.mrf.mxu0
      %v1336 = vadd.f32 %v1302, %v1335
      %1337 = vmatmul.bf16.gmra.mxu0 %v500
      %v1338 = vpop.f32.mrf.mxu0
      %v1339 = vadd.f32 %v1305, %v1338
      %v1340 = vpop.f32.mrf.mxu0
      %v1341 = vadd.f32 %v1307, %v1340
      %1342 = vmatmul.bf16.gmra.mxu0 %v504
      %v1343 = vpop.f32.mrf.mxu0
      %v1344 = vadd.f32 %v1310, %v1343
      %v1345 = vpop.f32.mrf.mxu0
      %v1346 = vadd.f32 %v1312, %v1345
      %1347 = vmatmul.bf16.gmra.mxu0 %v508
      %v1348 = vpop.f32.mrf.mxu0
      %v1349 = vadd.f32 %v1315, %v1348
      %v1350 = vpop.f32.mrf.mxu0
      %v1351 = vadd.f32 %v1317, %v1350
      %1352 = vdwg.mxu0
      %1353 = vmatpush.bf16.msra.mxu0 %v1218
      %1354 = vmatpush.bf16.msra.mxu0 %v1217
      %1355 = vmatpush.bf16.msra.mxu0 %v1216
      %1356 = vmatpush.bf16.msra.mxu0 %v1215
      %1357 = vmatpush.bf16.msra.mxu0 %v1214
      %1358 = vmatpush.bf16.msra.mxu0 %v1213
      %1359 = vmatpush.bf16.msra.mxu0 %v1212
      %1360 = vmatpush.bf16.msra.mxu0 %v1211
      %1361 = vmatmul.bf16.gmra.mxu0 %v493
      %v1362 = vpop.f32.mrf.mxu0
      %v1363 = vadd.f32 %v1329, %v1362
      %v1364 = vpop.f32.mrf.mxu0
      %v1365 = vadd.f32 %v1331, %v1364
      %1366 = vmatmul.bf16.gmra.mxu0 %v497
      %v1367 = vpop.f32.mrf.mxu0
      %v1368 = vadd.f32 %v1334, %v1367
      %v1369 = vpop.f32.mrf.mxu0
      %v1370 = vadd.f32 %v1336, %v1369
      %1371 = vmatmul.bf16.gmra.mxu0 %v501
      %v1372 = vpop.f32.mrf.mxu0
      %v1373 = vadd.f32 %v1339, %v1372
      %v1374 = vpop.f32.mrf.mxu0
      %v1375 = vadd.f32 %v1341, %v1374
      %1376 = vmatmul.bf16.gmra.mxu0 %v505
      %v1377 = vpop.f32.mrf.mxu0
      %v1378 = vadd.f32 %v1344, %v1377
      %v1379 = vpop.f32.mrf.mxu0
      %v1380 = vadd.f32 %v1346, %v1379
      %1381 = vmatmul.bf16.gmra.mxu0 %v509
      %v1382 = vpop.f32.mrf.mxu0
      %v1383 = vadd.f32 %v1349, %v1382
      %v1384 = vpop.f32.mrf.mxu0
      %v1385 = vadd.f32 %v1351, %v1384
      %1386 = vdwg.mxu0
      %s1387 = scalar_lea.vmem %s1, 512
      %v1388 = vld [vmem:[%s1387] sm:$0xf]
      %v1389 = vld [vmem:[%s1387 + $0x4] sm:$0xf]
      %v1390 = vld [vmem:[%s1387 + $0x8] sm:$0xf]
      %v1391 = vld [vmem:[%s1387 + $0xc] sm:$0xf]
      %v1392 = vld [vmem:[%s1387 + $0x10] sm:$0xf]
      %v1393 = vld [vmem:[%s1387 + $0x14] sm:$0xf]
      %v1394 = vld [vmem:[%s1387 + $0x18] sm:$0xf]
      %v1395 = vld [vmem:[%s1387 + $0x1c] sm:$0xf]
      %v1396 = vld [vmem:[%s1387 + $0x20] sm:$0xf]
      %v1397 = vld [vmem:[%s1387 + $0x24] sm:$0xf]
      %v1398 = vld [vmem:[%s1387 + $0x28] sm:$0xf]
      %v1399 = vld [vmem:[%s1387 + $0x2c] sm:$0xf]
      %v1400 = vld [vmem:[%s1387 + $0x30] sm:$0xf]
      %v1401 = vld [vmem:[%s1387 + $0x34] sm:$0xf]
      %v1402 = vld [vmem:[%s1387 + $0x38] sm:$0xf]
      %v1403 = vld [vmem:[%s1387 + $0x3c] sm:$0xf]
      %v1404 = vld [vmem:[%s1387 + $0x40] sm:$0xf]
      %v1405 = vld [vmem:[%s1387 + $0x44] sm:$0xf]
      %v1406 = vld [vmem:[%s1387 + $0x48] sm:$0xf]
      %v1407 = vld [vmem:[%s1387 + $0x4c] sm:$0xf]
      %v1408 = vld [vmem:[%s1387 + $0x50] sm:$0xf]
      %v1409 = vld [vmem:[%s1387 + $0x54] sm:$0xf]
      %v1410 = vld [vmem:[%s1387 + $0x58] sm:$0xf]
      %v1411 = vld [vmem:[%s1387 + $0x5c] sm:$0xf]
      %v1412 = vld [vmem:[%s1387 + $0x60] sm:$0xf]
      %v1413 = vld [vmem:[%s1387 + $0x64] sm:$0xf]
      %v1414 = vld [vmem:[%s1387 + $0x68] sm:$0xf]
      %v1415 = vld [vmem:[%s1387 + $0x6c] sm:$0xf]
      %v1416 = vld [vmem:[%s1387 + $0x70] sm:$0xf]
      %v1417 = vld [vmem:[%s1387 + $0x74] sm:$0xf]
      %v1418 = vld [vmem:[%s1387 + $0x78] sm:$0xf]
      %v1419 = vld [vmem:[%s1387 + $0x7c] sm:$0xf]
      %v1420 = vld [vmem:[%s1387 + $0x80] sm:$0xf]
      %v1421 = vld [vmem:[%s1387 + $0x84] sm:$0xf]
      %v1422 = vld [vmem:[%s1387 + $0x88] sm:$0xf]
      %v1423 = vld [vmem:[%s1387 + $0x8c] sm:$0xf]
      %v1424 = vld [vmem:[%s1387 + $0x90] sm:$0xf]
      %v1425 = vld [vmem:[%s1387 + $0x94] sm:$0xf]
      %v1426 = vld [vmem:[%s1387 + $0x98] sm:$0xf]
      %v1427 = vld [vmem:[%s1387 + $0x9c] sm:$0xf]
      %v1428 = vld [vmem:[%s1387 + $0xa0] sm:$0xf]
      %v1429 = vld [vmem:[%s1387 + $0xa4] sm:$0xf]
      %v1430 = vld [vmem:[%s1387 + $0xa8] sm:$0xf]
      %v1431 = vld [vmem:[%s1387 + $0xac] sm:$0xf]
      %v1432 = vld [vmem:[%s1387 + $0xb0] sm:$0xf]
      %v1433 = vld [vmem:[%s1387 + $0xb4] sm:$0xf]
      %v1434 = vld [vmem:[%s1387 + $0xb8] sm:$0xf]
      %v1435 = vld [vmem:[%s1387 + $0xbc] sm:$0xf]
      %v1436 = vld [vmem:[%s1387 + $0xc0] sm:$0xf]
      %v1437 = vld [vmem:[%s1387 + $0xc4] sm:$0xf]
      %v1438 = vld [vmem:[%s1387 + $0xc8] sm:$0xf]
      %v1439 = vld [vmem:[%s1387 + $0xcc] sm:$0xf]
      %v1440 = vld [vmem:[%s1387 + $0xd0] sm:$0xf]
      %v1441 = vld [vmem:[%s1387 + $0xd4] sm:$0xf]
      %v1442 = vld [vmem:[%s1387 + $0xd8] sm:$0xf]
      %v1443 = vld [vmem:[%s1387 + $0xdc] sm:$0xf]
      %v1444 = vld [vmem:[%s1387 + $0xe0] sm:$0xf]
      %v1445 = vld [vmem:[%s1387 + $0xe4] sm:$0xf]
      %v1446 = vld [vmem:[%s1387 + $0xe8] sm:$0xf]
      %v1447 = vld [vmem:[%s1387 + $0xec] sm:$0xf]
      %v1448 = vld [vmem:[%s1387 + $0xf0] sm:$0xf]
      %v1449 = vld [vmem:[%s1387 + $0xf4] sm:$0xf]
      %v1450 = vld [vmem:[%s1387 + $0xf8] sm:$0xf]
      %v1451 = vld [vmem:[%s1387 + $0xfc] sm:$0xf]
      %vm1452 = vcmask 1046528
      %v1453 = vrot.slane %v490, 1
      %v1454 = vrot.slane %v494, 1
      %v1455 = vsel %vm1452, %v1453, %v1454
      %v1456 = vrot.slane %v491, 1
      %v1457 = vrot.slane %v495, 1
      %v1458 = vsel %vm1452, %v1456, %v1457
      %v1459 = vrot.slane %v492, 1
      %v1460 = vrot.slane %v496, 1
      %v1461 = vsel %vm1452, %v1459, %v1460
      %v1462 = vrot.slane %v493, 1
      %v1463 = vrot.slane %v497, 1
      %v1464 = vsel %vm1452, %v1462, %v1463
      %v1465 = vrot.slane %v498, 1
      %v1466 = vsel %vm1452, %v1454, %v1465
      %v1467 = vrot.slane %v499, 1
      %v1468 = vsel %vm1452, %v1457, %v1467
      %v1469 = vrot.slane %v500, 1
      %v1470 = vsel %vm1452, %v1460, %v1469
      %v1471 = vrot.slane %v501, 1
      %v1472 = vsel %vm1452, %v1463, %v1471
      %v1473 = vrot.slane %v502, 1
      %v1474 = vsel %vm1452, %v1465, %v1473
      %v1475 = vrot.slane %v503, 1
      %v1476 = vsel %vm1452, %v1467, %v1475
      %v1477 = vrot.slane %v504, 1
      %v1478 = vsel %vm1452, %v1469, %v1477
      %v1479 = vrot.slane %v505, 1
      %v1480 = vsel %vm1452, %v1471, %v1479
      %v1481 = vrot.slane %v506, 1
      %v1482 = vsel %vm1452, %v1473, %v1481
      %v1483 = vrot.slane %v507, 1
      %v1484 = vsel %vm1452, %v1475, %v1483
      %v1485 = vrot.slane %v508, 1
      %v1486 = vsel %vm1452, %v1477, %v1485
      %v1487 = vrot.slane %v509, 1
      %v1488 = vsel %vm1452, %v1479, %v1487
      %v1489 = vrot.slane %v510, 1
      %v1490 = vsel %vm1452, %v1481, %v1489
      %v1491 = vrot.slane %v511, 1
      %v1492 = vsel %vm1452, %v1483, %v1491
      %v1493 = vrot.slane %v512, 1
      %v1494 = vsel %vm1452, %v1485, %v1493
      %v1495 = vrot.slane %v513, 1
      %v1496 = vsel %vm1452, %v1487, %v1495
      %v1581 = vunpack.c.l.b16 %v1388
      %v1582 = vunpack.c.l.b16 %v1389
      %v1583 = vunpack.c.l.b16 %v1390
      %v1584 = vunpack.c.l.b16 %v1391
      %v1585 = vunpack.c.l.b16 %v1392
      %v1586 = vunpack.c.l.b16 %v1393
      %v1587 = vunpack.c.l.b16 %v1394
      %v1588 = vunpack.c.l.b16 %v1395
      %v1589 = vunpack.c.l.b16 %v1396
      %v1590 = vunpack.c.l.b16 %v1397
      %v1591 = vunpack.c.l.b16 %v1398
      %v1592 = vunpack.c.l.b16 %v1399
      %v1593 = vunpack.c.l.b16 %v1400
      %v1594 = vunpack.c.l.b16 %v1401
      %v1595 = vunpack.c.l.b16 %v1402
      %v1596 = vunpack.c.l.b16 %v1403
      %v1597 = vunpack.c.l.b16 %v1404
      %v1598 = vunpack.c.l.b16 %v1405
      %v1599 = vunpack.c.l.b16 %v1406
      %v1600 = vunpack.c.l.b16 %v1407
      %v1601 = vunpack.c.l.b16 %v1408
      %v1602 = vunpack.c.l.b16 %v1409
      %v1603 = vunpack.c.l.b16 %v1410
      %v1604 = vunpack.c.l.b16 %v1411
      %v1605 = vunpack.c.l.b16 %v1412
      %v1606 = vunpack.c.l.b16 %v1413
      %v1607 = vunpack.c.l.b16 %v1414
      %v1608 = vunpack.c.l.b16 %v1415
      %v1609 = vunpack.c.l.b16 %v1416
      %v1610 = vunpack.c.l.b16 %v1417
      %v1611 = vunpack.c.l.b16 %v1418
      %v1612 = vunpack.c.l.b16 %v1419
      %v1613 = vunpack.c.l.b16 %v1420
      %v1614 = vunpack.c.l.b16 %v1421
      %v1615 = vunpack.c.l.b16 %v1422
      %v1616 = vunpack.c.l.b16 %v1423
      %v1617 = vunpack.c.l.b16 %v1424
      %v1618 = vunpack.c.l.b16 %v1425
      %v1619 = vunpack.c.l.b16 %v1426
      %v1620 = vunpack.c.l.b16 %v1427
      %v1621 = vunpack.c.l.b16 %v1428
      %v1622 = vunpack.c.l.b16 %v1429
      %v1623 = vunpack.c.l.b16 %v1430
      %v1624 = vunpack.c.l.b16 %v1431
      %v1625 = vunpack.c.l.b16 %v1432
      %v1626 = vunpack.c.l.b16 %v1433
      %v1627 = vunpack.c.l.b16 %v1434
      %v1628 = vunpack.c.l.b16 %v1435
      %v1629 = vunpack.c.l.b16 %v1436
      %v1630 = vunpack.c.l.b16 %v1437
      %v1631 = vunpack.c.l.b16 %v1438
      %v1632 = vunpack.c.l.b16 %v1439
      %v1633 = vunpack.c.l.b16 %v1440
      %v1634 = vunpack.c.l.b16 %v1441
      %v1635 = vunpack.c.l.b16 %v1442
      %v1636 = vunpack.c.l.b16 %v1443
      %v1637 = vunpack.c.l.b16 %v1444
      %v1638 = vunpack.c.l.b16 %v1445
      %v1639 = vunpack.c.l.b16 %v1446
      %v1640 = vunpack.c.l.b16 %v1447
      %v1641 = vunpack.c.l.b16 %v1448
      %v1642 = vunpack.c.l.b16 %v1449
      %v1643 = vunpack.c.l.b16 %v1450
      %v1644 = vunpack.c.l.b16 %v1451
      %v1645 = vpack.c.b16 %v1582, %v1581
      %v1646 = vpack.c.b16 %v1584, %v1583
      %v1647 = vpack.c.b16 %v1586, %v1585
      %v1648 = vpack.c.b16 %v1588, %v1587
      %v1649 = vpack.c.b16 %v1590, %v1589
      %v1650 = vpack.c.b16 %v1592, %v1591
      %v1651 = vpack.c.b16 %v1594, %v1593
      %v1652 = vpack.c.b16 %v1596, %v1595
      %v1653 = vpack.c.b16 %v1598, %v1597
      %v1654 = vpack.c.b16 %v1600, %v1599
      %v1655 = vpack.c.b16 %v1602, %v1601
      %v1656 = vpack.c.b16 %v1604, %v1603
      %v1657 = vpack.c.b16 %v1606, %v1605
      %v1658 = vpack.c.b16 %v1608, %v1607
      %v1659 = vpack.c.b16 %v1610, %v1609
      %v1660 = vpack.c.b16 %v1612, %v1611
      %v1661 = vpack.c.b16 %v1614, %v1613
      %v1662 = vpack.c.b16 %v1616, %v1615
      %v1663 = vpack.c.b16 %v1618, %v1617
      %v1664 = vpack.c.b16 %v1620, %v1619
      %v1665 = vpack.c.b16 %v1622, %v1621
      %v1666 = vpack.c.b16 %v1624, %v1623
      %v1667 = vpack.c.b16 %v1626, %v1625
      %v1668 = vpack.c.b16 %v1628, %v1627
      %v1669 = vpack.c.b16 %v1630, %v1629
      %v1670 = vpack.c.b16 %v1632, %v1631
      %v1671 = vpack.c.b16 %v1634, %v1633
      %v1672 = vpack.c.b16 %v1636, %v1635
      %v1673 = vpack.c.b16 %v1638, %v1637
      %v1674 = vpack.c.b16 %v1640, %v1639
      %v1675 = vpack.c.b16 %v1642, %v1641
      %v1676 = vpack.c.b16 %v1644, %v1643
      %1709 = vmatpush.bf16.msra.mxu0 %v1652
      %1710 = vmatpush.bf16.msra.mxu0 %v1651
      %1711 = vmatpush.bf16.msra.mxu0 %v1650
      %1712 = vmatpush.bf16.msra.mxu0 %v1649
      %1713 = vmatpush.bf16.msra.mxu0 %v1648
      %1714 = vmatpush.bf16.msra.mxu0 %v1647
      %1715 = vmatpush.bf16.msra.mxu0 %v1646
      %1716 = vmatpush.bf16.msra.mxu0 %v1645
      %1717 = vmatmul.bf16.gmra.mxu0 %v1455
      %v1718 = vpop.f32.mrf.mxu0
      %v1719 = vadd.f32 0.0, %v1718
      %v1720 = vpop.f32.mrf.mxu0
      %v1721 = vadd.f32 0.0, %v1720
      %1722 = vmatmul.bf16.gmra.mxu0 %v1466
      %v1723 = vpop.f32.mrf.mxu0
      %v1724 = vadd.f32 0.0, %v1723
      %v1725 = vpop.f32.mrf.mxu0
      %v1726 = vadd.f32 0.0, %v1725
      %1727 = vmatmul.bf16.gmra.mxu0 %v1474
      %v1728 = vpop.f32.mrf.mxu0
      %v1729 = vadd.f32 0.0, %v1728
      %v1730 = vpop.f32.mrf.mxu0
      %v1731 = vadd.f32 0.0, %v1730
      %1732 = vmatmul.bf16.gmra.mxu0 %v1482
      %v1733 = vpop.f32.mrf.mxu0
      %v1734 = vadd.f32 0.0, %v1733
      %v1735 = vpop.f32.mrf.mxu0
      %v1736 = vadd.f32 0.0, %v1735
      %1737 = vmatmul.bf16.gmra.mxu0 %v1490
      %v1738 = vpop.f32.mrf.mxu0
      %v1739 = vadd.f32 0.0, %v1738
      %v1740 = vpop.f32.mrf.mxu0
      %v1741 = vadd.f32 0.0, %v1740
      %1742 = vdwg.mxu0
      %1743 = vmatpush.bf16.msra.mxu0 %v1660
      %1744 = vmatpush.bf16.msra.mxu0 %v1659
      %1745 = vmatpush.bf16.msra.mxu0 %v1658
      %1746 = vmatpush.bf16.msra.mxu0 %v1657
      %1747 = vmatpush.bf16.msra.mxu0 %v1656
      %1748 = vmatpush.bf16.msra.mxu0 %v1655
      %1749 = vmatpush.bf16.msra.mxu0 %v1654
      %1750 = vmatpush.bf16.msra.mxu0 %v1653
      %1751 = vmatmul.bf16.gmra.mxu0 %v1458
      %v1752 = vpop.f32.mrf.mxu0
      %v1753 = vadd.f32 %v1719, %v1752
      %v1754 = vpop.f32.mrf.mxu0
      %v1755 = vadd.f32 %v1721, %v1754
      %1756 = vmatmul.bf16.gmra.mxu0 %v1468
      %v1757 = vpop.f32.mrf.mxu0
      %v1758 = vadd.f32 %v1724, %v1757
      %v1759 = vpop.f32.mrf.mxu0
      %v1760 = vadd.f32 %v1726, %v1759
      %1761 = vmatmul.bf16.gmra.mxu0 %v1476
      %v1762 = vpop.f32.mrf.mxu0
      %v1763 = vadd.f32 %v1729, %v1762
      %v1764 = vpop.f32.mrf.mxu0
      %v1765 = vadd.f32 %v1731, %v1764
      %1766 = vmatmul.bf16.gmra.mxu0 %v1484
      %v1767 = vpop.f32.mrf.mxu0
      %v1768 = vadd.f32 %v1734, %v1767
      %v1769 = vpop.f32.mrf.mxu0
      %v1770 = vadd.f32 %v1736, %v1769
      %1771 = vmatmul.bf16.gmra.mxu0 %v1492
      %v1772 = vpop.f32.mrf.mxu0
      %v1773 = vadd.f32 %v1739, %v1772
      %v1774 = vpop.f32.mrf.mxu0
      %v1775 = vadd.f32 %v1741, %v1774
      %1776 = vdwg.mxu0
      %1777 = vmatpush.bf16.msra.mxu0 %v1668
      %1778 = vmatpush.bf16.msra.mxu0 %v1667
      %1779 = vmatpush.bf16.msra.mxu0 %v1666
      %1780 = vmatpush.bf16.msra.mxu0 %v1665
      %1781 = vmatpush.bf16.msra.mxu0 %v1664
      %1782 = vmatpush.bf16.msra.mxu0 %v1663
      %1783 = vmatpush.bf16.msra.mxu0 %v1662
      %1784 = vmatpush.bf16.msra.mxu0 %v1661
      %1785 = vmatmul.bf16.gmra.mxu0 %v1461
      %v1786 = vpop.f32.mrf.mxu0
      %v1787 = vadd.f32 %v1753, %v1786
      %v1788 = vpop.f32.mrf.mxu0
      %v1789 = vadd.f32 %v1755, %v1788
      %1790 = vmatmul.bf16.gmra.mxu0 %v1470
      %v1791 = vpop.f32.mrf.mxu0
      %v1792 = vadd.f32 %v1758, %v1791
      %v1793 = vpop.f32.mrf.mxu0
      %v1794 = vadd.f32 %v1760, %v1793
      %1795 = vmatmul.bf16.gmra.mxu0 %v1478
      %v1796 = vpop.f32.mrf.mxu0
      %v1797 = vadd.f32 %v1763, %v1796
      %v1798 = vpop.f32.mrf.mxu0
      %v1799 = vadd.f32 %v1765, %v1798
      %1800 = vmatmul.bf16.gmra.mxu0 %v1486
      %v1801 = vpop.f32.mrf.mxu0
      %v1802 = vadd.f32 %v1768, %v1801
      %v1803 = vpop.f32.mrf.mxu0
      %v1804 = vadd.f32 %v1770, %v1803
      %1805 = vmatmul.bf16.gmra.mxu0 %v1494
      %v1806 = vpop.f32.mrf.mxu0
      %v1807 = vadd.f32 %v1773, %v1806
      %v1808 = vpop.f32.mrf.mxu0
      %v1809 = vadd.f32 %v1775, %v1808
      %1810 = vdwg.mxu0
      %1811 = vmatpush.bf16.msra.mxu0 %v1676
      %1812 = vmatpush.bf16.msra.mxu0 %v1675
      %1813 = vmatpush.bf16.msra.mxu0 %v1674
      %1814 = vmatpush.bf16.msra.mxu0 %v1673
      %1815 = vmatpush.bf16.msra.mxu0 %v1672
      %1816 = vmatpush.bf16.msra.mxu0 %v1671
      %1817 = vmatpush.bf16.msra.mxu0 %v1670
      %1818 = vmatpush.bf16.msra.mxu0 %v1669
      %1819 = vmatmul.bf16.gmra.mxu0 %v1464
      %v1820 = vpop.f32.mrf.mxu0
      %v1821 = vadd.f32 %v1787, %v1820
      %v1822 = vpop.f32.mrf.mxu0
      %v1823 = vadd.f32 %v1789, %v1822
      %1824 = vmatmul.bf16.gmra.mxu0 %v1472
      %v1825 = vpop.f32.mrf.mxu0
      %v1826 = vadd.f32 %v1792, %v1825
      %v1827 = vpop.f32.mrf.mxu0
      %v1828 = vadd.f32 %v1794, %v1827
      %1829 = vmatmul.bf16.gmra.mxu0 %v1480
      %v1830 = vpop.f32.mrf.mxu0
      %v1831 = vadd.f32 %v1797, %v1830
      %v1832 = vpop.f32.mrf.mxu0
      %v1833 = vadd.f32 %v1799, %v1832
      %1834 = vmatmul.bf16.gmra.mxu0 %v1488
      %v1835 = vpop.f32.mrf.mxu0
      %v1836 = vadd.f32 %v1802, %v1835
      %v1837 = vpop.f32.mrf.mxu0
      %v1838 = vadd.f32 %v1804, %v1837
      %1839 = vmatmul.bf16.gmra.mxu0 %v1496
      %v1840 = vpop.f32.mrf.mxu0
      %v1841 = vadd.f32 %v1807, %v1840
      %v1842 = vpop.f32.mrf.mxu0
      %v1843 = vadd.f32 %v1809, %v1842
      %1844 = vdwg.mxu0
      %v1845 = vadd.f32 %v1363, %v1821
      %v1846 = vadd.f32 %v1365, %v1823
      %v1847 = vadd.f32 %v1368, %v1826
      %v1848 = vadd.f32 %v1370, %v1828
      %v1849 = vadd.f32 %v1373, %v1831
      %v1850 = vadd.f32 %v1375, %v1833
      %v1851 = vadd.f32 %v1378, %v1836
      %v1852 = vadd.f32 %v1380, %v1838
      %v1853 = vadd.f32 %v1383, %v1841
      %v1854 = vadd.f32 %v1385, %v1843
      %s1855 = scalar_lea.vmem %s1, 768
      %v1856 = vld [vmem:[%s1855] sm:$0xf]
      %v1857 = vld [vmem:[%s1855 + $0x4] sm:$0xf]
      %v1858 = vld [vmem:[%s1855 + $0x8] sm:$0xf]
      %v1859 = vld [vmem:[%s1855 + $0xc] sm:$0xf]
      %v1860 = vld [vmem:[%s1855 + $0x10] sm:$0xf]
      %v1861 = vld [vmem:[%s1855 + $0x14] sm:$0xf]
      %v1862 = vld [vmem:[%s1855 + $0x18] sm:$0xf]
      %v1863 = vld [vmem:[%s1855 + $0x1c] sm:$0xf]
      %v1864 = vld [vmem:[%s1855 + $0x20] sm:$0xf]
      %v1865 = vld [vmem:[%s1855 + $0x24] sm:$0xf]
      %v1866 = vld [vmem:[%s1855 + $0x28] sm:$0xf]
      %v1867 = vld [vmem:[%s1855 + $0x2c] sm:$0xf]
      %v1868 = vld [vmem:[%s1855 + $0x30] sm:$0xf]
      %v1869 = vld [vmem:[%s1855 + $0x34] sm:$0xf]
      %v1870 = vld [vmem:[%s1855 + $0x38] sm:$0xf]
      %v1871 = vld [vmem:[%s1855 + $0x3c] sm:$0xf]
      %v1872 = vld [vmem:[%s1855 + $0x40] sm:$0xf]
      %v1873 = vld [vmem:[%s1855 + $0x44] sm:$0xf]
      %v1874 = vld [vmem:[%s1855 + $0x48] sm:$0xf]
      %v1875 = vld [vmem:[%s1855 + $0x4c] sm:$0xf]
      %v1876 = vld [vmem:[%s1855 + $0x50] sm:$0xf]
      %v1877 = vld [vmem:[%s1855 + $0x54] sm:$0xf]
      %v1878 = vld [vmem:[%s1855 + $0x58] sm:$0xf]
      %v1879 = vld [vmem:[%s1855 + $0x5c] sm:$0xf]
      %v1880 = vld [vmem:[%s1855 + $0x60] sm:$0xf]
      %v1881 = vld [vmem:[%s1855 + $0x64] sm:$0xf]
      %v1882 = vld [vmem:[%s1855 + $0x68] sm:$0xf]
      %v1883 = vld [vmem:[%s1855 + $0x6c] sm:$0xf]
      %v1884 = vld [vmem:[%s1855 + $0x70] sm:$0xf]
      %v1885 = vld [vmem:[%s1855 + $0x74] sm:$0xf]
      %v1886 = vld [vmem:[%s1855 + $0x78] sm:$0xf]
      %v1887 = vld [vmem:[%s1855 + $0x7c] sm:$0xf]
      %v1888 = vld [vmem:[%s1855 + $0x80] sm:$0xf]
      %v1889 = vld [vmem:[%s1855 + $0x84] sm:$0xf]
      %v1890 = vld [vmem:[%s1855 + $0x88] sm:$0xf]
      %v1891 = vld [vmem:[%s1855 + $0x8c] sm:$0xf]
      %v1892 = vld [vmem:[%s1855 + $0x90] sm:$0xf]
      %v1893 = vld [vmem:[%s1855 + $0x94] sm:$0xf]
      %v1894 = vld [vmem:[%s1855 + $0x98] sm:$0xf]
      %v1895 = vld [vmem:[%s1855 + $0x9c] sm:$0xf]
      %v1896 = vld [vmem:[%s1855 + $0xa0] sm:$0xf]
      %v1897 = vld [vmem:[%s1855 + $0xa4] sm:$0xf]
      %v1898 = vld [vmem:[%s1855 + $0xa8] sm:$0xf]
      %v1899 = vld [vmem:[%s1855 + $0xac] sm:$0xf]
      %v1900 = vld [vmem:[%s1855 + $0xb0] sm:$0xf]
      %v1901 = vld [vmem:[%s1855 + $0xb4] sm:$0xf]
      %v1902 = vld [vmem:[%s1855 + $0xb8] sm:$0xf]
      %v1903 = vld [vmem:[%s1855 + $0xbc] sm:$0xf]
      %v1904 = vld [vmem:[%s1855 + $0xc0] sm:$0xf]
      %v1905 = vld [vmem:[%s1855 + $0xc4] sm:$0xf]
      %v1906 = vld [vmem:[%s1855 + $0xc8] sm:$0xf]
      %v1907 = vld [vmem:[%s1855 + $0xcc] sm:$0xf]
      %v1908 = vld [vmem:[%s1855 + $0xd0] sm:$0xf]
      %v1909 = vld [vmem:[%s1855 + $0xd4] sm:$0xf]
      %v1910 = vld [vmem:[%s1855 + $0xd8] sm:$0xf]
      %v1911 = vld [vmem:[%s1855 + $0xdc] sm:$0xf]
      %v1912 = vld [vmem:[%s1855 + $0xe0] sm:$0xf]
      %v1913 = vld [vmem:[%s1855 + $0xe4] sm:$0xf]
      %v1914 = vld [vmem:[%s1855 + $0xe8] sm:$0xf]
      %v1915 = vld [vmem:[%s1855 + $0xec] sm:$0xf]
      %v1916 = vld [vmem:[%s1855 + $0xf0] sm:$0xf]
      %v1917 = vld [vmem:[%s1855 + $0xf4] sm:$0xf]
      %v1918 = vld [vmem:[%s1855 + $0xf8] sm:$0xf]
      %v1919 = vld [vmem:[%s1855 + $0xfc] sm:$0xf]
      %v1922 = vunpack.c.l.b16 %v291
      %v1923 = vunpack.c.h.b16 %v291
      %v1924 = vunpack.c.l.b16 %v292
      %v1925 = vunpack.c.h.b16 %v292
      %v1926 = vpack.c.b16 %v454, %v450
      %v1927 = vpack.c.b16 %v455, %v451
      %v1928 = vpack.c.b16 %v456, %v452
      %v1929 = vpack.c.b16 %v457, %v453
      %v1930 = vpack.c.b16 %v462, %v458
      %v1931 = vpack.c.b16 %v463, %v459
      %v1932 = vpack.c.b16 %v464, %v460
      %v1933 = vpack.c.b16 %v465, %v461
      %v1934 = vpack.c.b16 %v470, %v466
      %v1935 = vpack.c.b16 %v471, %v467
      %v1936 = vpack.c.b16 %v472, %v468
      %v1937 = vpack.c.b16 %v473, %v469
      %v1938 = vpack.c.b16 %v478, %v474
      %v1939 = vpack.c.b16 %v479, %v475
      %v1940 = vpack.c.b16 %v480, %v476
      %v1941 = vpack.c.b16 %v481, %v477
      %v1942 = vpack.c.b16 %v486, %v482
      %v1943 = vpack.c.b16 %v487, %v483
      %v1944 = vpack.c.b16 %v488, %v484
      %v1945 = vpack.c.b16 %v489, %v485
      %v1946 = vpack.c.b16 %v1922, %v1922
      %v1947 = vpack.c.b16 %v1923, %v1923
      %v1948 = vpack.c.b16 %v1924, %v1924
      %v1949 = vpack.c.b16 %v1925, %v1925
      %v1950 = vrot.slane %v1926, 1
      %v1951 = vrot.slane %v1930, 1
      %v1952 = vsel %vm1452, %v1950, %v1951
      %v1953 = vrot.slane %v1927, 1
      %v1954 = vrot.slane %v1931, 1
      %v1955 = vsel %vm1452, %v1953, %v1954
      %v1956 = vrot.slane %v1928, 1
      %v1957 = vrot.slane %v1932, 1
      %v1958 = vsel %vm1452, %v1956, %v1957
      %v1959 = vrot.slane %v1929, 1
      %v1960 = vrot.slane %v1933, 1
      %v1961 = vsel %vm1452, %v1959, %v1960
      %v1962 = vrot.slane %v1934, 1
      %v1963 = vsel %vm1452, %v1951, %v1962
      %v1964 = vrot.slane %v1935, 1
      %v1965 = vsel %vm1452, %v1954, %v1964
      %v1966 = vrot.slane %v1936, 1
      %v1967 = vsel %vm1452, %v1957, %v1966
      %v1968 = vrot.slane %v1937, 1
      %v1969 = vsel %vm1452, %v1960, %v1968
      %v1970 = vrot.slane %v1938, 1
      %v1971 = vsel %vm1452, %v1962, %v1970
      %v1972 = vrot.slane %v1939, 1
      %v1973 = vsel %vm1452, %v1964, %v1972
      %v1974 = vrot.slane %v1940, 1
      %v1975 = vsel %vm1452, %v1966, %v1974
      %v1976 = vrot.slane %v1941, 1
      %v1977 = vsel %vm1452, %v1968, %v1976
      %v1978 = vrot.slane %v1942, 1
      %v1979 = vsel %vm1452, %v1970, %v1978
      %v1980 = vrot.slane %v1943, 1
      %v1981 = vsel %vm1452, %v1972, %v1980
      %v1982 = vrot.slane %v1944, 1
      %v1983 = vsel %vm1452, %v1974, %v1982
      %v1984 = vrot.slane %v1945, 1
      %v1985 = vsel %vm1452, %v1976, %v1984
      %v1986 = vrot.slane %v1946, 1
      %v1987 = vsel %vm1452, %v1978, %v1986
      %v1988 = vrot.slane %v1947, 1
      %v1989 = vsel %vm1452, %v1980, %v1988
      %v1990 = vrot.slane %v1948, 1
      %v1991 = vsel %vm1452, %v1982, %v1990
      %v1992 = vrot.slane %v1949, 1
      %v1993 = vsel %vm1452, %v1984, %v1992
      %v2078 = vunpack.c.l.b16 %v1856
      %v2079 = vunpack.c.l.b16 %v1857
      %v2080 = vunpack.c.l.b16 %v1858
      %v2081 = vunpack.c.l.b16 %v1859
      %v2082 = vunpack.c.l.b16 %v1860
      %v2083 = vunpack.c.l.b16 %v1861
      %v2084 = vunpack.c.l.b16 %v1862
      %v2085 = vunpack.c.l.b16 %v1863
      %v2086 = vunpack.c.l.b16 %v1864
      %v2087 = vunpack.c.l.b16 %v1865
      %v2088 = vunpack.c.l.b16 %v1866
      %v2089 = vunpack.c.l.b16 %v1867
      %v2090 = vunpack.c.l.b16 %v1868
      %v2091 = vunpack.c.l.b16 %v1869
      %v2092 = vunpack.c.l.b16 %v1870
      %v2093 = vunpack.c.l.b16 %v1871
      %v2094 = vunpack.c.l.b16 %v1872
      %v2095 = vunpack.c.l.b16 %v1873
      %v2096 = vunpack.c.l.b16 %v1874
      %v2097 = vunpack.c.l.b16 %v1875
      %v2098 = vunpack.c.l.b16 %v1876
      %v2099 = vunpack.c.l.b16 %v1877
      %v2100 = vunpack.c.l.b16 %v1878
      %v2101 = vunpack.c.l.b16 %v1879
      %v2102 = vunpack.c.l.b16 %v1880
      %v2103 = vunpack.c.l.b16 %v1881
      %v2104 = vunpack.c.l.b16 %v1882
      %v2105 = vunpack.c.l.b16 %v1883
      %v2106 = vunpack.c.l.b16 %v1884
      %v2107 = vunpack.c.l.b16 %v1885
      %v2108 = vunpack.c.l.b16 %v1886
      %v2109 = vunpack.c.l.b16 %v1887
      %v2110 = vunpack.c.l.b16 %v1888
      %v2111 = vunpack.c.l.b16 %v1889
      %v2112 = vunpack.c.l.b16 %v1890
      %v2113 = vunpack.c.l.b16 %v1891
      %v2114 = vunpack.c.l.b16 %v1892
      %v2115 = vunpack.c.l.b16 %v1893
      %v2116 = vunpack.c.l.b16 %v1894
      %v2117 = vunpack.c.l.b16 %v1895
      %v2118 = vunpack.c.l.b16 %v1896
      %v2119 = vunpack.c.l.b16 %v1897
      %v2120 = vunpack.c.l.b16 %v1898
      %v2121 = vunpack.c.l.b16 %v1899
      %v2122 = vunpack.c.l.b16 %v1900
      %v2123 = vunpack.c.l.b16 %v1901
      %v2124 = vunpack.c.l.b16 %v1902
      %v2125 = vunpack.c.l.b16 %v1903
      %v2126 = vunpack.c.l.b16 %v1904
      %v2127 = vunpack.c.l.b16 %v1905
      %v2128 = vunpack.c.l.b16 %v1906
      %v2129 = vunpack.c.l.b16 %v1907
      %v2130 = vunpack.c.l.b16 %v1908
      %v2131 = vunpack.c.l.b16 %v1909
      %v2132 = vunpack.c.l.b16 %v1910
      %v2133 = vunpack.c.l.b16 %v1911
      %v2134 = vunpack.c.l.b16 %v1912
      %v2135 = vunpack.c.l.b16 %v1913
      %v2136 = vunpack.c.l.b16 %v1914
      %v2137 = vunpack.c.l.b16 %v1915
      %v2138 = vunpack.c.l.b16 %v1916
      %v2139 = vunpack.c.l.b16 %v1917
      %v2140 = vunpack.c.l.b16 %v1918
      %v2141 = vunpack.c.l.b16 %v1919
      %v2142 = vpack.c.b16 %v2079, %v2078
      %v2143 = vpack.c.b16 %v2081, %v2080
      %v2144 = vpack.c.b16 %v2083, %v2082
      %v2145 = vpack.c.b16 %v2085, %v2084
      %v2146 = vpack.c.b16 %v2087, %v2086
      %v2147 = vpack.c.b16 %v2089, %v2088
      %v2148 = vpack.c.b16 %v2091, %v2090
      %v2149 = vpack.c.b16 %v2093, %v2092
      %v2150 = vpack.c.b16 %v2095, %v2094
      %v2151 = vpack.c.b16 %v2097, %v2096
      %v2152 = vpack.c.b16 %v2099, %v2098
      %v2153 = vpack.c.b16 %v2101, %v2100
      %v2154 = vpack.c.b16 %v2103, %v2102
      %v2155 = vpack.c.b16 %v2105, %v2104
      %v2156 = vpack.c.b16 %v2107, %v2106
      %v2157 = vpack.c.b16 %v2109, %v2108
      %v2158 = vpack.c.b16 %v2111, %v2110
      %v2159 = vpack.c.b16 %v2113, %v2112
      %v2160 = vpack.c.b16 %v2115, %v2114
      %v2161 = vpack.c.b16 %v2117, %v2116
      %v2162 = vpack.c.b16 %v2119, %v2118
      %v2163 = vpack.c.b16 %v2121, %v2120
      %v2164 = vpack.c.b16 %v2123, %v2122
      %v2165 = vpack.c.b16 %v2125, %v2124
      %v2166 = vpack.c.b16 %v2127, %v2126
      %v2167 = vpack.c.b16 %v2129, %v2128
      %v2168 = vpack.c.b16 %v2131, %v2130
      %v2169 = vpack.c.b16 %v2133, %v2132
      %v2170 = vpack.c.b16 %v2135, %v2134
      %v2171 = vpack.c.b16 %v2137, %v2136
      %v2172 = vpack.c.b16 %v2139, %v2138
      %v2173 = vpack.c.b16 %v2141, %v2140
      %2206 = vmatpush.bf16.msra.mxu0 %v2149
      %2207 = vmatpush.bf16.msra.mxu0 %v2148
      %2208 = vmatpush.bf16.msra.mxu0 %v2147
      %2209 = vmatpush.bf16.msra.mxu0 %v2146
      %2210 = vmatpush.bf16.msra.mxu0 %v2145
      %2211 = vmatpush.bf16.msra.mxu0 %v2144
      %2212 = vmatpush.bf16.msra.mxu0 %v2143
      %2213 = vmatpush.bf16.msra.mxu0 %v2142
      %2214 = vmatmul.bf16.gmra.mxu0 %v1952
      %v2215 = vpop.f32.mrf.mxu0
      %v2216 = vadd.f32 0.0, %v2215
      %v2217 = vpop.f32.mrf.mxu0
      %v2218 = vadd.f32 0.0, %v2217
      %2219 = vmatmul.bf16.gmra.mxu0 %v1963
      %v2220 = vpop.f32.mrf.mxu0
      %v2221 = vadd.f32 0.0, %v2220
      %v2222 = vpop.f32.mrf.mxu0
      %v2223 = vadd.f32 0.0, %v2222
      %2224 = vmatmul.bf16.gmra.mxu0 %v1971
      %v2225 = vpop.f32.mrf.mxu0
      %v2226 = vadd.f32 0.0, %v2225
      %v2227 = vpop.f32.mrf.mxu0
      %v2228 = vadd.f32 0.0, %v2227
      %2229 = vmatmul.bf16.gmra.mxu0 %v1979
      %v2230 = vpop.f32.mrf.mxu0
      %v2231 = vadd.f32 0.0, %v2230
      %v2232 = vpop.f32.mrf.mxu0
      %v2233 = vadd.f32 0.0, %v2232
      %2234 = vmatmul.bf16.gmra.mxu0 %v1987
      %v2235 = vpop.f32.mrf.mxu0
      %v2236 = vadd.f32 0.0, %v2235
      %v2237 = vpop.f32.mrf.mxu0
      %v2238 = vadd.f32 0.0, %v2237
      %2239 = vdwg.mxu0
      %2240 = vmatpush.bf16.msra.mxu0 %v2157
      %2241 = vmatpush.bf16.msra.mxu0 %v2156
      %2242 = vmatpush.bf16.msra.mxu0 %v2155
      %2243 = vmatpush.bf16.msra.mxu0 %v2154
      %2244 = vmatpush.bf16.msra.mxu0 %v2153
      %2245 = vmatpush.bf16.msra.mxu0 %v2152
      %2246 = vmatpush.bf16.msra.mxu0 %v2151
      %2247 = vmatpush.bf16.msra.mxu0 %v2150
      %2248 = vmatmul.bf16.gmra.mxu0 %v1955
      %v2249 = vpop.f32.mrf.mxu0
      %v2250 = vadd.f32 %v2216, %v2249
      %v2251 = vpop.f32.mrf.mxu0
      %v2252 = vadd.f32 %v2218, %v2251
      %2253 = vmatmul.bf16.gmra.mxu0 %v1965
      %v2254 = vpop.f32.mrf.mxu0
      %v2255 = vadd.f32 %v2221, %v2254
      %v2256 = vpop.f32.mrf.mxu0
      %v2257 = vadd.f32 %v2223, %v2256
      %2258 = vmatmul.bf16.gmra.mxu0 %v1973
      %v2259 = vpop.f32.mrf.mxu0
      %v2260 = vadd.f32 %v2226, %v2259
      %v2261 = vpop.f32.mrf.mxu0
      %v2262 = vadd.f32 %v2228, %v2261
      %2263 = vmatmul.bf16.gmra.mxu0 %v1981
      %v2264 = vpop.f32.mrf.mxu0
      %v2265 = vadd.f32 %v2231, %v2264
      %v2266 = vpop.f32.mrf.mxu0
      %v2267 = vadd.f32 %v2233, %v2266
      %2268 = vmatmul.bf16.gmra.mxu0 %v1989
      %v2269 = vpop.f32.mrf.mxu0
      %v2270 = vadd.f32 %v2236, %v2269
      %v2271 = vpop.f32.mrf.mxu0
      %v2272 = vadd.f32 %v2238, %v2271
      %2273 = vdwg.mxu0
      %2274 = vmatpush.bf16.msra.mxu0 %v2165
      %2275 = vmatpush.bf16.msra.mxu0 %v2164
      %2276 = vmatpush.bf16.msra.mxu0 %v2163
      %2277 = vmatpush.bf16.msra.mxu0 %v2162
      %2278 = vmatpush.bf16.msra.mxu0 %v2161
      %2279 = vmatpush.bf16.msra.mxu0 %v2160
      %2280 = vmatpush.bf16.msra.mxu0 %v2159
      %2281 = vmatpush.bf16.msra.mxu0 %v2158
      %2282 = vmatmul.bf16.gmra.mxu0 %v1958
      %v2283 = vpop.f32.mrf.mxu0
      %v2284 = vadd.f32 %v2250, %v2283
      %v2285 = vpop.f32.mrf.mxu0
      %v2286 = vadd.f32 %v2252, %v2285
      %2287 = vmatmul.bf16.gmra.mxu0 %v1967
      %v2288 = vpop.f32.mrf.mxu0
      %v2289 = vadd.f32 %v2255, %v2288
      %v2290 = vpop.f32.mrf.mxu0
      %v2291 = vadd.f32 %v2257, %v2290
      %2292 = vmatmul.bf16.gmra.mxu0 %v1975
      %v2293 = vpop.f32.mrf.mxu0
      %v2294 = vadd.f32 %v2260, %v2293
      %v2295 = vpop.f32.mrf.mxu0
      %v2296 = vadd.f32 %v2262, %v2295
      %2297 = vmatmul.bf16.gmra.mxu0 %v1983
      %v2298 = vpop.f32.mrf.mxu0
      %v2299 = vadd.f32 %v2265, %v2298
      %v2300 = vpop.f32.mrf.mxu0
      %v2301 = vadd.f32 %v2267, %v2300
      %2302 = vmatmul.bf16.gmra.mxu0 %v1991
      %v2303 = vpop.f32.mrf.mxu0
      %v2304 = vadd.f32 %v2270, %v2303
      %v2305 = vpop.f32.mrf.mxu0
      %v2306 = vadd.f32 %v2272, %v2305
      %2307 = vdwg.mxu0
      %2308 = vmatpush.bf16.msra.mxu0 %v2173
      %2309 = vmatpush.bf16.msra.mxu0 %v2172
      %2310 = vmatpush.bf16.msra.mxu0 %v2171
      %2311 = vmatpush.bf16.msra.mxu0 %v2170
      %2312 = vmatpush.bf16.msra.mxu0 %v2169
      %2313 = vmatpush.bf16.msra.mxu0 %v2168
      %2314 = vmatpush.bf16.msra.mxu0 %v2167
      %2315 = vmatpush.bf16.msra.mxu0 %v2166
      %2316 = vmatmul.bf16.gmra.mxu0 %v1961
      %v2317 = vpop.f32.mrf.mxu0
      %v2318 = vadd.f32 %v2284, %v2317
      %v2319 = vpop.f32.mrf.mxu0
      %v2320 = vadd.f32 %v2286, %v2319
      %2321 = vmatmul.bf16.gmra.mxu0 %v1969
      %v2322 = vpop.f32.mrf.mxu0
      %v2323 = vadd.f32 %v2289, %v2322
      %v2324 = vpop.f32.mrf.mxu0
      %v2325 = vadd.f32 %v2291, %v2324
      %2326 = vmatmul.bf16.gmra.mxu0 %v1977
      %v2327 = vpop.f32.mrf.mxu0
      %v2328 = vadd.f32 %v2294, %v2327
      %v2329 = vpop.f32.mrf.mxu0
      %v2330 = vadd.f32 %v2296, %v2329
      %2331 = vmatmul.bf16.gmra.mxu0 %v1985
      %v2332 = vpop.f32.mrf.mxu0
      %v2333 = vadd.f32 %v2299, %v2332
      %v2334 = vpop.f32.mrf.mxu0
      %v2335 = vadd.f32 %v2301, %v2334
      %2336 = vmatmul.bf16.gmra.mxu0 %v1993
      %v2337 = vpop.f32.mrf.mxu0
      %v2338 = vadd.f32 %v2304, %v2337
      %v2339 = vpop.f32.mrf.mxu0
      %v2340 = vadd.f32 %v2306, %v2339
      %2341 = vdwg.mxu0
      %v2342 = vadd.f32 %v1845, %v2318
      %v2343 = vadd.f32 %v1846, %v2320
      %v2344 = vadd.f32 %v1847, %v2323
      %v2345 = vadd.f32 %v1848, %v2325
      %v2346 = vadd.f32 %v1849, %v2328
      %v2347 = vadd.f32 %v1850, %v2330
      %v2348 = vadd.f32 %v1851, %v2333
      %v2349 = vadd.f32 %v1852, %v2335
      %v2350 = vadd.f32 %v1853, %v2338
      %v2351 = vadd.f32 %v1854, %v2340
      %s2352 = scalar_lea.vmem %s1, 1024
      %v2353 = vld [vmem:[%s2352] sm:$0xf]
      %v2354 = vld [vmem:[%s2352 + $0x4] sm:$0xf]
      %v2355 = vld [vmem:[%s2352 + $0x8] sm:$0xf]
      %v2356 = vld [vmem:[%s2352 + $0xc] sm:$0xf]
      %v2357 = vld [vmem:[%s2352 + $0x10] sm:$0xf]
      %v2358 = vld [vmem:[%s2352 + $0x14] sm:$0xf]
      %v2359 = vld [vmem:[%s2352 + $0x18] sm:$0xf]
      %v2360 = vld [vmem:[%s2352 + $0x1c] sm:$0xf]
      %v2361 = vld [vmem:[%s2352 + $0x20] sm:$0xf]
      %v2362 = vld [vmem:[%s2352 + $0x24] sm:$0xf]
      %v2363 = vld [vmem:[%s2352 + $0x28] sm:$0xf]
      %v2364 = vld [vmem:[%s2352 + $0x2c] sm:$0xf]
      %v2365 = vld [vmem:[%s2352 + $0x30] sm:$0xf]
      %v2366 = vld [vmem:[%s2352 + $0x34] sm:$0xf]
      %v2367 = vld [vmem:[%s2352 + $0x38] sm:$0xf]
      %v2368 = vld [vmem:[%s2352 + $0x3c] sm:$0xf]
      %v2369 = vld [vmem:[%s2352 + $0x40] sm:$0xf]
      %v2370 = vld [vmem:[%s2352 + $0x44] sm:$0xf]
      %v2371 = vld [vmem:[%s2352 + $0x48] sm:$0xf]
      %v2372 = vld [vmem:[%s2352 + $0x4c] sm:$0xf]
      %v2373 = vld [vmem:[%s2352 + $0x50] sm:$0xf]
      %v2374 = vld [vmem:[%s2352 + $0x54] sm:$0xf]
      %v2375 = vld [vmem:[%s2352 + $0x58] sm:$0xf]
      %v2376 = vld [vmem:[%s2352 + $0x5c] sm:$0xf]
      %v2377 = vld [vmem:[%s2352 + $0x60] sm:$0xf]
      %v2378 = vld [vmem:[%s2352 + $0x64] sm:$0xf]
      %v2379 = vld [vmem:[%s2352 + $0x68] sm:$0xf]
      %v2380 = vld [vmem:[%s2352 + $0x6c] sm:$0xf]
      %v2381 = vld [vmem:[%s2352 + $0x70] sm:$0xf]
      %v2382 = vld [vmem:[%s2352 + $0x74] sm:$0xf]
      %v2383 = vld [vmem:[%s2352 + $0x78] sm:$0xf]
      %v2384 = vld [vmem:[%s2352 + $0x7c] sm:$0xf]
      %v2385 = vld [vmem:[%s2352 + $0x80] sm:$0xf]
      %v2386 = vld [vmem:[%s2352 + $0x84] sm:$0xf]
      %v2387 = vld [vmem:[%s2352 + $0x88] sm:$0xf]
      %v2388 = vld [vmem:[%s2352 + $0x8c] sm:$0xf]
      %v2389 = vld [vmem:[%s2352 + $0x90] sm:$0xf]
      %v2390 = vld [vmem:[%s2352 + $0x94] sm:$0xf]
      %v2391 = vld [vmem:[%s2352 + $0x98] sm:$0xf]
      %v2392 = vld [vmem:[%s2352 + $0x9c] sm:$0xf]
      %v2393 = vld [vmem:[%s2352 + $0xa0] sm:$0xf]
      %v2394 = vld [vmem:[%s2352 + $0xa4] sm:$0xf]
      %v2395 = vld [vmem:[%s2352 + $0xa8] sm:$0xf]
      %v2396 = vld [vmem:[%s2352 + $0xac] sm:$0xf]
      %v2397 = vld [vmem:[%s2352 + $0xb0] sm:$0xf]
      %v2398 = vld [vmem:[%s2352 + $0xb4] sm:$0xf]
      %v2399 = vld [vmem:[%s2352 + $0xb8] sm:$0xf]
      %v2400 = vld [vmem:[%s2352 + $0xbc] sm:$0xf]
      %v2401 = vld [vmem:[%s2352 + $0xc0] sm:$0xf]
      %v2402 = vld [vmem:[%s2352 + $0xc4] sm:$0xf]
      %v2403 = vld [vmem:[%s2352 + $0xc8] sm:$0xf]
      %v2404 = vld [vmem:[%s2352 + $0xcc] sm:$0xf]
      %v2405 = vld [vmem:[%s2352 + $0xd0] sm:$0xf]
      %v2406 = vld [vmem:[%s2352 + $0xd4] sm:$0xf]
      %v2407 = vld [vmem:[%s2352 + $0xd8] sm:$0xf]
      %v2408 = vld [vmem:[%s2352 + $0xdc] sm:$0xf]
      %v2409 = vld [vmem:[%s2352 + $0xe0] sm:$0xf]
      %v2410 = vld [vmem:[%s2352 + $0xe4] sm:$0xf]
      %v2411 = vld [vmem:[%s2352 + $0xe8] sm:$0xf]
      %v2412 = vld [vmem:[%s2352 + $0xec] sm:$0xf]
      %v2413 = vld [vmem:[%s2352 + $0xf0] sm:$0xf]
      %v2414 = vld [vmem:[%s2352 + $0xf4] sm:$0xf]
      %v2415 = vld [vmem:[%s2352 + $0xf8] sm:$0xf]
      %v2416 = vld [vmem:[%s2352 + $0xfc] sm:$0xf]
      %vm2417 = vsmask.f32 6400
      %v2419 = vshrl.u32 %v1926, 16
      %v2421 = vrot.slane %v2419, 1
      %v2422 = vshll.u32 %v1926, 16
      %v2424 = vrot.slane %v2422, 2
      %v2425 = vor.u32 %v2421, %v2424
      %v2427 = vshrl.u32 %v1930, 16
      %v2429 = vrot.slane %v2427, 1
      %v2430 = vshll.u32 %v1930, 16
      %v2432 = vrot.slane %v2430, 2
      %v2433 = vor.u32 %v2429, %v2432
      %v2434 = vsel %vm2417, %v2425, %v2433
      %v2436 = vshrl.u32 %v1927, 16
      %v2438 = vrot.slane %v2436, 1
      %v2439 = vshll.u32 %v1927, 16
      %v2441 = vrot.slane %v2439, 2
      %v2442 = vor.u32 %v2438, %v2441
      %v2444 = vshrl.u32 %v1931, 16
      %v2446 = vrot.slane %v2444, 1
      %v2447 = vshll.u32 %v1931, 16
      %v2449 = vrot.slane %v2447, 2
      %v2450 = vor.u32 %v2446, %v2449
      %v2451 = vsel %vm2417, %v2442, %v2450
      %v2453 = vshrl.u32 %v1928, 16
      %v2455 = vrot.slane %v2453, 1
      %v2456 = vshll.u32 %v1928, 16
      %v2458 = vrot.slane %v2456, 2
      %v2459 = vor.u32 %v2455, %v2458
      %v2461 = vshrl.u32 %v1932, 16
      %v2463 = vrot.slane %v2461, 1
      %v2464 = vshll.u32 %v1932, 16
      %v2466 = vrot.slane %v2464, 2
      %v2467 = vor.u32 %v2463, %v2466
      %v2468 = vsel %vm2417, %v2459, %v2467
      %v2470 = vshrl.u32 %v1929, 16
      %v2472 = vrot.slane %v2470, 1
      %v2473 = vshll.u32 %v1929, 16
      %v2475 = vrot.slane %v2473, 2
      %v2476 = vor.u32 %v2472, %v2475
      %v2478 = vshrl.u32 %v1933, 16
      %v2480 = vrot.slane %v2478, 1
      %v2481 = vshll.u32 %v1933, 16
      %v2483 = vrot.slane %v2481, 2
      %v2484 = vor.u32 %v2480, %v2483
      %v2485 = vsel %vm2417, %v2476, %v2484
      %v2487 = vshrl.u32 %v1934, 16
      %v2489 = vrot.slane %v2487, 1
      %v2490 = vshll.u32 %v1934, 16
      %v2492 = vrot.slane %v2490, 2
      %v2493 = vor.u32 %v2489, %v2492
      %v2494 = vsel %vm2417, %v2433, %v2493
      %v2496 = vshrl.u32 %v1935, 16
      %v2498 = vrot.slane %v2496, 1
      %v2499 = vshll.u32 %v1935, 16
      %v2501 = vrot.slane %v2499, 2
      %v2502 = vor.u32 %v2498, %v2501
      %v2503 = vsel %vm2417, %v2450, %v2502
      %v2505 = vshrl.u32 %v1936, 16
      %v2507 = vrot.slane %v2505, 1
      %v2508 = vshll.u32 %v1936, 16
      %v2510 = vrot.slane %v2508, 2
      %v2511 = vor.u32 %v2507, %v2510
      %v2512 = vsel %vm2417, %v2467, %v2511
      %v2514 = vshrl.u32 %v1937, 16
      %v2516 = vrot.slane %v2514, 1
      %v2517 = vshll.u32 %v1937, 16
      %v2519 = vrot.slane %v2517, 2
      %v2520 = vor.u32 %v2516, %v2519
      %v2521 = vsel %vm2417, %v2484, %v2520
      %v2523 = vshrl.u32 %v1938, 16
      %v2525 = vrot.slane %v2523, 1
      %v2526 = vshll.u32 %v1938, 16
      %v2528 = vrot.slane %v2526, 2
      %v2529 = vor.u32 %v2525, %v2528
      %v2530 = vsel %vm2417, %v2493, %v2529
      %v2532 = vshrl.u32 %v1939, 16
      %v2534 = vrot.slane %v2532, 1
      %v2535 = vshll.u32 %v1939, 16
      %v2537 = vrot.slane %v2535, 2
      %v2538 = vor.u32 %v2534, %v2537
      %v2539 = vsel %vm2417, %v2502, %v2538
      %v2541 = vshrl.u32 %v1940, 16
      %v2543 = vrot.slane %v2541, 1
      %v2544 = vshll.u32 %v1940, 16
      %v2546 = vrot.slane %v2544, 2
      %v2547 = vor.u32 %v2543, %v2546
      %v2548 = vsel %vm2417, %v2511, %v2547
      %v2550 = vshrl.u32 %v1941, 16
      %v2552 = vrot.slane %v2550, 1
      %v2553 = vshll.u32 %v1941, 16
      %v2555 = vrot.slane %v2553, 2
      %v2556 = vor.u32 %v2552, %v2555
      %v2557 = vsel %vm2417, %v2520, %v2556
      %v2559 = vshrl.u32 %v1942, 16
      %v2561 = vrot.slane %v2559, 1
      %v2562 = vshll.u32 %v1942, 16
      %v2564 = vrot.slane %v2562, 2
      %v2565 = vor.u32 %v2561, %v2564
      %v2566 = vsel %vm2417, %v2529, %v2565
      %v2568 = vshrl.u32 %v1943, 16
      %v2570 = vrot.slane %v2568, 1
      %v2571 = vshll.u32 %v1943, 16
      %v2573 = vrot.slane %v2571, 2
      %v2574 = vor.u32 %v2570, %v2573
      %v2575 = vsel %vm2417, %v2538, %v2574
      %v2577 = vshrl.u32 %v1944, 16
      %v2579 = vrot.slane %v2577, 1
      %v2580 = vshll.u32 %v1944, 16
      %v2582 = vrot.slane %v2580, 2
      %v2583 = vor.u32 %v2579, %v2582
      %v2584 = vsel %vm2417, %v2547, %v2583
      %v2586 = vshrl.u32 %v1945, 16
      %v2588 = vrot.slane %v2586, 1
      %v2589 = vshll.u32 %v1945, 16
      %v2591 = vrot.slane %v2589, 2
      %v2592 = vor.u32 %v2588, %v2591
      %v2593 = vsel %vm2417, %v2556, %v2592
      %v2595 = vshrl.u32 %v1946, 16
      %v2597 = vrot.slane %v2595, 1
      %v2598 = vshll.u32 %v1946, 16
      %v2600 = vrot.slane %v2598, 2
      %v2601 = vor.u32 %v2597, %v2600
      %v2602 = vsel %vm2417, %v2565, %v2601
      %v2604 = vshrl.u32 %v1947, 16
      %v2606 = vrot.slane %v2604, 1
      %v2607 = vshll.u32 %v1947, 16
      %v2609 = vrot.slane %v2607, 2
      %v2610 = vor.u32 %v2606, %v2609
      %v2611 = vsel %vm2417, %v2574, %v2610
      %v2613 = vshrl.u32 %v1948, 16
      %v2615 = vrot.slane %v2613, 1
      %v2616 = vshll.u32 %v1948, 16
      %v2618 = vrot.slane %v2616, 2
      %v2619 = vor.u32 %v2615, %v2618
      %v2620 = vsel %vm2417, %v2583, %v2619
      %v2622 = vshrl.u32 %v1949, 16
      %v2624 = vrot.slane %v2622, 1
      %v2625 = vshll.u32 %v1949, 16
      %v2627 = vrot.slane %v2625, 2
      %v2628 = vor.u32 %v2624, %v2627
      %v2629 = vsel %vm2417, %v2592, %v2628
      %v2714 = vunpack.c.l.b16 %v2353
      %v2715 = vunpack.c.l.b16 %v2354
      %v2716 = vunpack.c.l.b16 %v2355
      %v2717 = vunpack.c.l.b16 %v2356
      %v2718 = vunpack.c.l.b16 %v2357
      %v2719 = vunpack.c.l.b16 %v2358
      %v2720 = vunpack.c.l.b16 %v2359
      %v2721 = vunpack.c.l.b16 %v2360
      %v2722 = vunpack.c.l.b16 %v2361
      %v2723 = vunpack.c.l.b16 %v2362
      %v2724 = vunpack.c.l.b16 %v2363
      %v2725 = vunpack.c.l.b16 %v2364
      %v2726 = vunpack.c.l.b16 %v2365
      %v2727 = vunpack.c.l.b16 %v2366
      %v2728 = vunpack.c.l.b16 %v2367
      %v2729 = vunpack.c.l.b16 %v2368
      %v2730 = vunpack.c.l.b16 %v2369
      %v2731 = vunpack.c.l.b16 %v2370
      %v2732 = vunpack.c.l.b16 %v2371
      %v2733 = vunpack.c.l.b16 %v2372
      %v2734 = vunpack.c.l.b16 %v2373
      %v2735 = vunpack.c.l.b16 %v2374
      %v2736 = vunpack.c.l.b16 %v2375
      %v2737 = vunpack.c.l.b16 %v2376
      %v2738 = vunpack.c.l.b16 %v2377
      %v2739 = vunpack.c.l.b16 %v2378
      %v2740 = vunpack.c.l.b16 %v2379
      %v2741 = vunpack.c.l.b16 %v2380
      %v2742 = vunpack.c.l.b16 %v2381
      %v2743 = vunpack.c.l.b16 %v2382
      %v2744 = vunpack.c.l.b16 %v2383
      %v2745 = vunpack.c.l.b16 %v2384
      %v2746 = vunpack.c.l.b16 %v2385
      %v2747 = vunpack.c.l.b16 %v2386
      %v2748 = vunpack.c.l.b16 %v2387
      %v2749 = vunpack.c.l.b16 %v2388
      %v2750 = vunpack.c.l.b16 %v2389
      %v2751 = vunpack.c.l.b16 %v2390
      %v2752 = vunpack.c.l.b16 %v2391
      %v2753 = vunpack.c.l.b16 %v2392
      %v2754 = vunpack.c.l.b16 %v2393
      %v2755 = vunpack.c.l.b16 %v2394
      %v2756 = vunpack.c.l.b16 %v2395
      %v2757 = vunpack.c.l.b16 %v2396
      %v2758 = vunpack.c.l.b16 %v2397
      %v2759 = vunpack.c.l.b16 %v2398
      %v2760 = vunpack.c.l.b16 %v2399
      %v2761 = vunpack.c.l.b16 %v2400
      %v2762 = vunpack.c.l.b16 %v2401
      %v2763 = vunpack.c.l.b16 %v2402
      %v2764 = vunpack.c.l.b16 %v2403
      %v2765 = vunpack.c.l.b16 %v2404
      %v2766 = vunpack.c.l.b16 %v2405
      %v2767 = vunpack.c.l.b16 %v2406
      %v2768 = vunpack.c.l.b16 %v2407
      %v2769 = vunpack.c.l.b16 %v2408
      %v2770 = vunpack.c.l.b16 %v2409
      %v2771 = vunpack.c.l.b16 %v2410
      %v2772 = vunpack.c.l.b16 %v2411
      %v2773 = vunpack.c.l.b16 %v2412
      %v2774 = vunpack.c.l.b16 %v2413
      %v2775 = vunpack.c.l.b16 %v2414
      %v2776 = vunpack.c.l.b16 %v2415
      %v2777 = vunpack.c.l.b16 %v2416
      %v2778 = vpack.c.b16 %v2715, %v2714
      %v2779 = vpack.c.b16 %v2717, %v2716
      %v2780 = vpack.c.b16 %v2719, %v2718
      %v2781 = vpack.c.b16 %v2721, %v2720
      %v2782 = vpack.c.b16 %v2723, %v2722
      %v2783 = vpack.c.b16 %v2725, %v2724
      %v2784 = vpack.c.b16 %v2727, %v2726
      %v2785 = vpack.c.b16 %v2729, %v2728
      %v2786 = vpack.c.b16 %v2731, %v2730
      %v2787 = vpack.c.b16 %v2733, %v2732
      %v2788 = vpack.c.b16 %v2735, %v2734
      %v2789 = vpack.c.b16 %v2737, %v2736
      %v2790 = vpack.c.b16 %v2739, %v2738
      %v2791 = vpack.c.b16 %v2741, %v2740
      %v2792 = vpack.c.b16 %v2743, %v2742
      %v2793 = vpack.c.b16 %v2745, %v2744
      %v2794 = vpack.c.b16 %v2747, %v2746
      %v2795 = vpack.c.b16 %v2749, %v2748
      %v2796 = vpack.c.b16 %v2751, %v2750
      %v2797 = vpack.c.b16 %v2753, %v2752
      %v2798 = vpack.c.b16 %v2755, %v2754
      %v2799 = vpack.c.b16 %v2757, %v2756
      %v2800 = vpack.c.b16 %v2759, %v2758
      %v2801 = vpack.c.b16 %v2761, %v2760
      %v2802 = vpack.c.b16 %v2763, %v2762
      %v2803 = vpack.c.b16 %v2765, %v2764
      %v2804 = vpack.c.b16 %v2767, %v2766
      %v2805 = vpack.c.b16 %v2769, %v2768
      %v2806 = vpack.c.b16 %v2771, %v2770
      %v2807 = vpack.c.b16 %v2773, %v2772
      %v2808 = vpack.c.b16 %v2775, %v2774
      %v2809 = vpack.c.b16 %v2777, %v2776
      %2842 = vmatpush.bf16.msra.mxu0 %v2785
      %2843 = vmatpush.bf16.msra.mxu0 %v2784
      %2844 = vmatpush.bf16.msra.mxu0 %v2783
      %2845 = vmatpush.bf16.msra.mxu0 %v2782
      %2846 = vmatpush.bf16.msra.mxu0 %v2781
      %2847 = vmatpush.bf16.msra.mxu0 %v2780
      %2848 = vmatpush.bf16.msra.mxu0 %v2779
      %2849 = vmatpush.bf16.msra.mxu0 %v2778
      %2850 = vmatmul.bf16.gmra.mxu0 %v2434
      %v2851 = vpop.f32.mrf.mxu0
      %v2852 = vadd.f32 0.0, %v2851
      %v2853 = vpop.f32.mrf.mxu0
      %v2854 = vadd.f32 0.0, %v2853
      %2855 = vmatmul.bf16.gmra.mxu0 %v2494
      %v2856 = vpop.f32.mrf.mxu0
      %v2857 = vadd.f32 0.0, %v2856
      %v2858 = vpop.f32.mrf.mxu0
      %v2859 = vadd.f32 0.0, %v2858
      %2860 = vmatmul.bf16.gmra.mxu0 %v2530
      %v2861 = vpop.f32.mrf.mxu0
      %v2862 = vadd.f32 0.0, %v2861
      %v2863 = vpop.f32.mrf.mxu0
      %v2864 = vadd.f32 0.0, %v2863
      %2865 = vmatmul.bf16.gmra.mxu0 %v2566
      %v2866 = vpop.f32.mrf.mxu0
      %v2867 = vadd.f32 0.0, %v2866
      %v2868 = vpop.f32.mrf.mxu0
      %v2869 = vadd.f32 0.0, %v2868
      %2870 = vmatmul.bf16.gmra.mxu0 %v2602
      %v2871 = vpop.f32.mrf.mxu0
      %v2872 = vadd.f32 0.0, %v2871
      %v2873 = vpop.f32.mrf.mxu0
      %v2874 = vadd.f32 0.0, %v2873
      %2875 = vdwg.mxu0
      %2876 = vmatpush.bf16.msra.mxu0 %v2793
      %2877 = vmatpush.bf16.msra.mxu0 %v2792
      %2878 = vmatpush.bf16.msra.mxu0 %v2791
      %2879 = vmatpush.bf16.msra.mxu0 %v2790
      %2880 = vmatpush.bf16.msra.mxu0 %v2789
      %2881 = vmatpush.bf16.msra.mxu0 %v2788
      %2882 = vmatpush.bf16.msra.mxu0 %v2787
      %2883 = vmatpush.bf16.msra.mxu0 %v2786
      %2884 = vmatmul.bf16.gmra.mxu0 %v2451
      %v2885 = vpop.f32.mrf.mxu0
      %v2886 = vadd.f32 %v2852, %v2885
      %v2887 = vpop.f32.mrf.mxu0
      %v2888 = vadd.f32 %v2854, %v2887
      %2889 = vmatmul.bf16.gmra.mxu0 %v2503
      %v2890 = vpop.f32.mrf.mxu0
      %v2891 = vadd.f32 %v2857, %v2890
      %v2892 = vpop.f32.mrf.mxu0
      %v2893 = vadd.f32 %v2859, %v2892
      %2894 = vmatmul.bf16.gmra.mxu0 %v2539
      %v2895 = vpop.f32.mrf.mxu0
      %v2896 = vadd.f32 %v2862, %v2895
      %v2897 = vpop.f32.mrf.mxu0
      %v2898 = vadd.f32 %v2864, %v2897
      %2899 = vmatmul.bf16.gmra.mxu0 %v2575
      %v2900 = vpop.f32.mrf.mxu0
      %v2901 = vadd.f32 %v2867, %v2900
      %v2902 = vpop.f32.mrf.mxu0
      %v2903 = vadd.f32 %v2869, %v2902
      %2904 = vmatmul.bf16.gmra.mxu0 %v2611
      %v2905 = vpop.f32.mrf.mxu0
      %v2906 = vadd.f32 %v2872, %v2905
      %v2907 = vpop.f32.mrf.mxu0
      %v2908 = vadd.f32 %v2874, %v2907
      %2909 = vdwg.mxu0
      %2910 = vmatpush.bf16.msra.mxu0 %v2801
      %2911 = vmatpush.bf16.msra.mxu0 %v2800
      %2912 = vmatpush.bf16.msra.mxu0 %v2799
      %2913 = vmatpush.bf16.msra.mxu0 %v2798
      %2914 = vmatpush.bf16.msra.mxu0 %v2797
      %2915 = vmatpush.bf16.msra.mxu0 %v2796
      %2916 = vmatpush.bf16.msra.mxu0 %v2795
      %2917 = vmatpush.bf16.msra.mxu0 %v2794
      %2918 = vmatmul.bf16.gmra.mxu0 %v2468
      %v2919 = vpop.f32.mrf.mxu0
      %v2920 = vadd.f32 %v2886, %v2919
      %v2921 = vpop.f32.mrf.mxu0
      %v2922 = vadd.f32 %v2888, %v2921
      %2923 = vmatmul.bf16.gmra.mxu0 %v2512
      %v2924 = vpop.f32.mrf.mxu0
      %v2925 = vadd.f32 %v2891, %v2924
      %v2926 = vpop.f32.mrf.mxu0
      %v2927 = vadd.f32 %v2893, %v2926
      %2928 = vmatmul.bf16.gmra.mxu0 %v2548
      %v2929 = vpop.f32.mrf.mxu0
      %v2930 = vadd.f32 %v2896, %v2929
      %v2931 = vpop.f32.mrf.mxu0
      %v2932 = vadd.f32 %v2898, %v2931
      %2933 = vmatmul.bf16.gmra.mxu0 %v2584
      %v2934 = vpop.f32.mrf.mxu0
      %v2935 = vadd.f32 %v2901, %v2934
      %v2936 = vpop.f32.mrf.mxu0
      %v2937 = vadd.f32 %v2903, %v2936
      %2938 = vmatmul.bf16.gmra.mxu0 %v2620
      %v2939 = vpop.f32.mrf.mxu0
      %v2940 = vadd.f32 %v2906, %v2939
      %v2941 = vpop.f32.mrf.mxu0
      %v2942 = vadd.f32 %v2908, %v2941
      %2943 = vdwg.mxu0
      %2944 = vmatpush.bf16.msra.mxu0 %v2809
      %2945 = vmatpush.bf16.msra.mxu0 %v2808
      %2946 = vmatpush.bf16.msra.mxu0 %v2807
      %2947 = vmatpush.bf16.msra.mxu0 %v2806
      %2948 = vmatpush.bf16.msra.mxu0 %v2805
      %2949 = vmatpush.bf16.msra.mxu0 %v2804
      %2950 = vmatpush.bf16.msra.mxu0 %v2803
      %2951 = vmatpush.bf16.msra.mxu0 %v2802
      %2952 = vmatmul.bf16.gmra.mxu0 %v2485
      %v2953 = vpop.f32.mrf.mxu0
      %v2954 = vadd.f32 %v2920, %v2953
      %v2955 = vpop.f32.mrf.mxu0
      %v2956 = vadd.f32 %v2922, %v2955
      %2957 = vmatmul.bf16.gmra.mxu0 %v2521
      %v2958 = vpop.f32.mrf.mxu0
      %v2959 = vadd.f32 %v2925, %v2958
      %v2960 = vpop.f32.mrf.mxu0
      %v2961 = vadd.f32 %v2927, %v2960
      %2962 = vmatmul.bf16.gmra.mxu0 %v2557
      %v2963 = vpop.f32.mrf.mxu0
      %v2964 = vadd.f32 %v2930, %v2963
      %v2965 = vpop.f32.mrf.mxu0
      %v2966 = vadd.f32 %v2932, %v2965
      %2967 = vmatmul.bf16.gmra.mxu0 %v2593
      %v2968 = vpop.f32.mrf.mxu0
      %v2969 = vadd.f32 %v2935, %v2968
      %v2970 = vpop.f32.mrf.mxu0
      %v2971 = vadd.f32 %v2937, %v2970
      %2972 = vmatmul.bf16.gmra.mxu0 %v2629
      %v2973 = vpop.f32.mrf.mxu0
      %v2974 = vadd.f32 %v2940, %v2973
      %v2975 = vpop.f32.mrf.mxu0
      %v2976 = vadd.f32 %v2942, %v2975
      %2977 = vdwg.mxu0
      %v2978 = vadd.f32 %v2342, %v2954
      %v2979 = vadd.f32 %v2343, %v2956
      %v2980 = vadd.f32 %v2344, %v2959
      %v2981 = vadd.f32 %v2345, %v2961
      %v2982 = vadd.f32 %v2346, %v2964
      %v2983 = vadd.f32 %v2347, %v2966
      %v2984 = vadd.f32 %v2348, %v2969
      %v2985 = vadd.f32 %v2349, %v2971
      %v2986 = vadd.f32 %v2350, %v2974
      %v2987 = vadd.f32 %v2351, %v2976
      %s2988 = scalar_lea.vmem %s1, 1280
      %v2989 = vld [vmem:[%s2988] sm:$0xf]
      %v2990 = vld [vmem:[%s2988 + $0x4] sm:$0xf]
      %v2991 = vld [vmem:[%s2988 + $0x8] sm:$0xf]
      %v2992 = vld [vmem:[%s2988 + $0xc] sm:$0xf]
      %v2993 = vld [vmem:[%s2988 + $0x10] sm:$0xf]
      %v2994 = vld [vmem:[%s2988 + $0x14] sm:$0xf]
      %v2995 = vld [vmem:[%s2988 + $0x18] sm:$0xf]
      %v2996 = vld [vmem:[%s2988 + $0x1c] sm:$0xf]
      %v2997 = vld [vmem:[%s2988 + $0x20] sm:$0xf]
      %v2998 = vld [vmem:[%s2988 + $0x24] sm:$0xf]
      %v2999 = vld [vmem:[%s2988 + $0x28] sm:$0xf]
      %v3000 = vld [vmem:[%s2988 + $0x2c] sm:$0xf]
      %v3001 = vld [vmem:[%s2988 + $0x30] sm:$0xf]
      %v3002 = vld [vmem:[%s2988 + $0x34] sm:$0xf]
      %v3003 = vld [vmem:[%s2988 + $0x38] sm:$0xf]
      %v3004 = vld [vmem:[%s2988 + $0x3c] sm:$0xf]
      %v3005 = vld [vmem:[%s2988 + $0x40] sm:$0xf]
      %v3006 = vld [vmem:[%s2988 + $0x44] sm:$0xf]
      %v3007 = vld [vmem:[%s2988 + $0x48] sm:$0xf]
      %v3008 = vld [vmem:[%s2988 + $0x4c] sm:$0xf]
      %v3009 = vld [vmem:[%s2988 + $0x50] sm:$0xf]
      %v3010 = vld [vmem:[%s2988 + $0x54] sm:$0xf]
      %v3011 = vld [vmem:[%s2988 + $0x58] sm:$0xf]
      %v3012 = vld [vmem:[%s2988 + $0x5c] sm:$0xf]
      %v3013 = vld [vmem:[%s2988 + $0x60] sm:$0xf]
      %v3014 = vld [vmem:[%s2988 + $0x64] sm:$0xf]
      %v3015 = vld [vmem:[%s2988 + $0x68] sm:$0xf]
      %v3016 = vld [vmem:[%s2988 + $0x6c] sm:$0xf]
      %v3017 = vld [vmem:[%s2988 + $0x70] sm:$0xf]
      %v3018 = vld [vmem:[%s2988 + $0x74] sm:$0xf]
      %v3019 = vld [vmem:[%s2988 + $0x78] sm:$0xf]
      %v3020 = vld [vmem:[%s2988 + $0x7c] sm:$0xf]
      %v3021 = vld [vmem:[%s2988 + $0x80] sm:$0xf]
      %v3022 = vld [vmem:[%s2988 + $0x84] sm:$0xf]
      %v3023 = vld [vmem:[%s2988 + $0x88] sm:$0xf]
      %v3024 = vld [vmem:[%s2988 + $0x8c] sm:$0xf]
      %v3025 = vld [vmem:[%s2988 + $0x90] sm:$0xf]
      %v3026 = vld [vmem:[%s2988 + $0x94] sm:$0xf]
      %v3027 = vld [vmem:[%s2988 + $0x98] sm:$0xf]
      %v3028 = vld [vmem:[%s2988 + $0x9c] sm:$0xf]
      %v3029 = vld [vmem:[%s2988 + $0xa0] sm:$0xf]
      %v3030 = vld [vmem:[%s2988 + $0xa4] sm:$0xf]
      %v3031 = vld [vmem:[%s2988 + $0xa8] sm:$0xf]
      %v3032 = vld [vmem:[%s2988 + $0xac] sm:$0xf]
      %v3033 = vld [vmem:[%s2988 + $0xb0] sm:$0xf]
      %v3034 = vld [vmem:[%s2988 + $0xb4] sm:$0xf]
      %v3035 = vld [vmem:[%s2988 + $0xb8] sm:$0xf]
      %v3036 = vld [vmem:[%s2988 + $0xbc] sm:$0xf]
      %v3037 = vld [vmem:[%s2988 + $0xc0] sm:$0xf]
      %v3038 = vld [vmem:[%s2988 + $0xc4] sm:$0xf]
      %v3039 = vld [vmem:[%s2988 + $0xc8] sm:$0xf]
      %v3040 = vld [vmem:[%s2988 + $0xcc] sm:$0xf]
      %v3041 = vld [vmem:[%s2988 + $0xd0] sm:$0xf]
      %v3042 = vld [vmem:[%s2988 + $0xd4] sm:$0xf]
      %v3043 = vld [vmem:[%s2988 + $0xd8] sm:$0xf]
      %v3044 = vld [vmem:[%s2988 + $0xdc] sm:$0xf]
      %v3045 = vld [vmem:[%s2988 + $0xe0] sm:$0xf]
      %v3046 = vld [vmem:[%s2988 + $0xe4] sm:$0xf]
      %v3047 = vld [vmem:[%s2988 + $0xe8] sm:$0xf]
      %v3048 = vld [vmem:[%s2988 + $0xec] sm:$0xf]
      %v3049 = vld [vmem:[%s2988 + $0xf0] sm:$0xf]
      %v3050 = vld [vmem:[%s2988 + $0xf4] sm:$0xf]
      %v3051 = vld [vmem:[%s2988 + $0xf8] sm:$0xf]
      %v3052 = vld [vmem:[%s2988 + $0xfc] sm:$0xf]
      %vm3053 = vcmask 1045504
      %v3054 = vrot.slane %v1926, 2
      %v3055 = vrot.slane %v1930, 2
      %v3056 = vsel %vm3053, %v3054, %v3055
      %v3057 = vrot.slane %v1927, 2
      %v3058 = vrot.slane %v1931, 2
      %v3059 = vsel %vm3053, %v3057, %v3058
      %v3060 = vrot.slane %v1928, 2
      %v3061 = vrot.slane %v1932, 2
      %v3062 = vsel %vm3053, %v3060, %v3061
      %v3063 = vrot.slane %v1929, 2
      %v3064 = vrot.slane %v1933, 2
      %v3065 = vsel %vm3053, %v3063, %v3064
      %v3066 = vrot.slane %v1934, 2
      %v3067 = vsel %vm3053, %v3055, %v3066
      %v3068 = vrot.slane %v1935, 2
      %v3069 = vsel %vm3053, %v3058, %v3068
      %v3070 = vrot.slane %v1936, 2
      %v3071 = vsel %vm3053, %v3061, %v3070
      %v3072 = vrot.slane %v1937, 2
      %v3073 = vsel %vm3053, %v3064, %v3072
      %v3074 = vrot.slane %v1938, 2
      %v3075 = vsel %vm3053, %v3066, %v3074
      %v3076 = vrot.slane %v1939, 2
      %v3077 = vsel %vm3053, %v3068, %v3076
      %v3078 = vrot.slane %v1940, 2
      %v3079 = vsel %vm3053, %v3070, %v3078
      %v3080 = vrot.slane %v1941, 2
      %v3081 = vsel %vm3053, %v3072, %v3080
      %v3082 = vrot.slane %v1942, 2
      %v3083 = vsel %vm3053, %v3074, %v3082
      %v3084 = vrot.slane %v1943, 2
      %v3085 = vsel %vm3053, %v3076, %v3084
      %v3086 = vrot.slane %v1944, 2
      %v3087 = vsel %vm3053, %v3078, %v3086
      %v3088 = vrot.slane %v1945, 2
      %v3089 = vsel %vm3053, %v3080, %v3088
      %v3090 = vrot.slane %v1946, 2
      %v3091 = vsel %vm3053, %v3082, %v3090
      %v3092 = vrot.slane %v1947, 2
      %v3093 = vsel %vm3053, %v3084, %v3092
      %v3094 = vrot.slane %v1948, 2
      %v3095 = vsel %vm3053, %v3086, %v3094
      %v3096 = vrot.slane %v1949, 2
      %v3097 = vsel %vm3053, %v3088, %v3096
      %v3182 = vunpack.c.l.b16 %v2989
      %v3183 = vunpack.c.l.b16 %v2990
      %v3184 = vunpack.c.l.b16 %v2991
      %v3185 = vunpack.c.l.b16 %v2992
      %v3186 = vunpack.c.l.b16 %v2993
      %v3187 = vunpack.c.l.b16 %v2994
      %v3188 = vunpack.c.l.b16 %v2995
      %v3189 = vunpack.c.l.b16 %v2996
      %v3190 = vunpack.c.l.b16 %v2997
      %v3191 = vunpack.c.l.b16 %v2998
      %v3192 = vunpack.c.l.b16 %v2999
      %v3193 = vunpack.c.l.b16 %v3000
      %v3194 = vunpack.c.l.b16 %v3001
      %v3195 = vunpack.c.l.b16 %v3002
      %v3196 = vunpack.c.l.b16 %v3003
      %v3197 = vunpack.c.l.b16 %v3004
      %v3198 = vunpack.c.l.b16 %v3005
      %v3199 = vunpack.c.l.b16 %v3006
      %v3200 = vunpack.c.l.b16 %v3007
      %v3201 = vunpack.c.l.b16 %v3008
      %v3202 = vunpack.c.l.b16 %v3009
      %v3203 = vunpack.c.l.b16 %v3010
      %v3204 = vunpack.c.l.b16 %v3011
      %v3205 = vunpack.c.l.b16 %v3012
      %v3206 = vunpack.c.l.b16 %v3013
      %v3207 = vunpack.c.l.b16 %v3014
      %v3208 = vunpack.c.l.b16 %v3015
      %v3209 = vunpack.c.l.b16 %v3016
      %v3210 = vunpack.c.l.b16 %v3017
      %v3211 = vunpack.c.l.b16 %v3018
      %v3212 = vunpack.c.l.b16 %v3019
      %v3213 = vunpack.c.l.b16 %v3020
      %v3214 = vunpack.c.l.b16 %v3021
      %v3215 = vunpack.c.l.b16 %v3022
      %v3216 = vunpack.c.l.b16 %v3023
      %v3217 = vunpack.c.l.b16 %v3024
      %v3218 = vunpack.c.l.b16 %v3025
      %v3219 = vunpack.c.l.b16 %v3026
      %v3220 = vunpack.c.l.b16 %v3027
      %v3221 = vunpack.c.l.b16 %v3028
      %v3222 = vunpack.c.l.b16 %v3029
      %v3223 = vunpack.c.l.b16 %v3030
      %v3224 = vunpack.c.l.b16 %v3031
      %v3225 = vunpack.c.l.b16 %v3032
      %v3226 = vunpack.c.l.b16 %v3033
      %v3227 = vunpack.c.l.b16 %v3034
      %v3228 = vunpack.c.l.b16 %v3035
      %v3229 = vunpack.c.l.b16 %v3036
      %v3230 = vunpack.c.l.b16 %v3037
      %v3231 = vunpack.c.l.b16 %v3038
      %v3232 = vunpack.c.l.b16 %v3039
      %v3233 = vunpack.c.l.b16 %v3040
      %v3234 = vunpack.c.l.b16 %v3041
      %v3235 = vunpack.c.l.b16 %v3042
      %v3236 = vunpack.c.l.b16 %v3043
      %v3237 = vunpack.c.l.b16 %v3044
      %v3238 = vunpack.c.l.b16 %v3045
      %v3239 = vunpack.c.l.b16 %v3046
      %v3240 = vunpack.c.l.b16 %v3047
      %v3241 = vunpack.c.l.b16 %v3048
      %v3242 = vunpack.c.l.b16 %v3049
      %v3243 = vunpack.c.l.b16 %v3050
      %v3244 = vunpack.c.l.b16 %v3051
      %v3245 = vunpack.c.l.b16 %v3052
      %v3246 = vpack.c.b16 %v3183, %v3182
      %v3247 = vpack.c.b16 %v3185, %v3184
      %v3248 = vpack.c.b16 %v3187, %v3186
      %v3249 = vpack.c.b16 %v3189, %v3188
      %v3250 = vpack.c.b16 %v3191, %v3190
      %v3251 = vpack.c.b16 %v3193, %v3192
      %v3252 = vpack.c.b16 %v3195, %v3194
      %v3253 = vpack.c.b16 %v3197, %v3196
      %v3254 = vpack.c.b16 %v3199, %v3198
      %v3255 = vpack.c.b16 %v3201, %v3200
      %v3256 = vpack.c.b16 %v3203, %v3202
      %v3257 = vpack.c.b16 %v3205, %v3204
      %v3258 = vpack.c.b16 %v3207, %v3206
      %v3259 = vpack.c.b16 %v3209, %v3208
      %v3260 = vpack.c.b16 %v3211, %v3210
      %v3261 = vpack.c.b16 %v3213, %v3212
      %v3262 = vpack.c.b16 %v3215, %v3214
      %v3263 = vpack.c.b16 %v3217, %v3216
      %v3264 = vpack.c.b16 %v3219, %v3218
      %v3265 = vpack.c.b16 %v3221, %v3220
      %v3266 = vpack.c.b16 %v3223, %v3222
      %v3267 = vpack.c.b16 %v3225, %v3224
      %v3268 = vpack.c.b16 %v3227, %v3226
      %v3269 = vpack.c.b16 %v3229, %v3228
      %v3270 = vpack.c.b16 %v3231, %v3230
      %v3271 = vpack.c.b16 %v3233, %v3232
      %v3272 = vpack.c.b16 %v3235, %v3234
      %v3273 = vpack.c.b16 %v3237, %v3236
      %v3274 = vpack.c.b16 %v3239, %v3238
      %v3275 = vpack.c.b16 %v3241, %v3240
      %v3276 = vpack.c.b16 %v3243, %v3242
      %v3277 = vpack.c.b16 %v3245, %v3244
      %3310 = vmatpush.bf16.msra.mxu0 %v3253
      %3311 = vmatpush.bf16.msra.mxu0 %v3252
      %3312 = vmatpush.bf16.msra.mxu0 %v3251
      %3313 = vmatpush.bf16.msra.mxu0 %v3250
      %3314 = vmatpush.bf16.msra.mxu0 %v3249
      %3315 = vmatpush.bf16.msra.mxu0 %v3248
      %3316 = vmatpush.bf16.msra.mxu0 %v3247
      %3317 = vmatpush.bf16.msra.mxu0 %v3246
      %3318 = vmatmul.bf16.gmra.mxu0 %v3056
      %v3319 = vpop.f32.mrf.mxu0
      %v3320 = vadd.f32 0.0, %v3319
      %v3321 = vpop.f32.mrf.mxu0
      %v3322 = vadd.f32 0.0, %v3321
      %3323 = vmatmul.bf16.gmra.mxu0 %v3067
      %v3324 = vpop.f32.mrf.mxu0
      %v3325 = vadd.f32 0.0, %v3324
      %v3326 = vpop.f32.mrf.mxu0
      %v3327 = vadd.f32 0.0, %v3326
      %3328 = vmatmul.bf16.gmra.mxu0 %v3075
      %v3329 = vpop.f32.mrf.mxu0
      %v3330 = vadd.f32 0.0, %v3329
      %v3331 = vpop.f32.mrf.mxu0
      %v3332 = vadd.f32 0.0, %v3331
      %3333 = vmatmul.bf16.gmra.mxu0 %v3083
      %v3334 = vpop.f32.mrf.mxu0
      %v3335 = vadd.f32 0.0, %v3334
      %v3336 = vpop.f32.mrf.mxu0
      %v3337 = vadd.f32 0.0, %v3336
      %3338 = vmatmul.bf16.gmra.mxu0 %v3091
      %v3339 = vpop.f32.mrf.mxu0
      %v3340 = vadd.f32 0.0, %v3339
      %v3341 = vpop.f32.mrf.mxu0
      %v3342 = vadd.f32 0.0, %v3341
      %3343 = vdwg.mxu0
      %3344 = vmatpush.bf16.msra.mxu0 %v3261
      %3345 = vmatpush.bf16.msra.mxu0 %v3260
      %3346 = vmatpush.bf16.msra.mxu0 %v3259
      %3347 = vmatpush.bf16.msra.mxu0 %v3258
      %3348 = vmatpush.bf16.msra.mxu0 %v3257
      %3349 = vmatpush.bf16.msra.mxu0 %v3256
      %3350 = vmatpush.bf16.msra.mxu0 %v3255
      %3351 = vmatpush.bf16.msra.mxu0 %v3254
      %3352 = vmatmul.bf16.gmra.mxu0 %v3059
      %v3353 = vpop.f32.mrf.mxu0
      %v3354 = vadd.f32 %v3320, %v3353
      %v3355 = vpop.f32.mrf.mxu0
      %v3356 = vadd.f32 %v3322, %v3355
      %3357 = vmatmul.bf16.gmra.mxu0 %v3069
      %v3358 = vpop.f32.mrf.mxu0
      %v3359 = vadd.f32 %v3325, %v3358
      %v3360 = vpop.f32.mrf.mxu0
      %v3361 = vadd.f32 %v3327, %v3360
      %3362 = vmatmul.bf16.gmra.mxu0 %v3077
      %v3363 = vpop.f32.mrf.mxu0
      %v3364 = vadd.f32 %v3330, %v3363
      %v3365 = vpop.f32.mrf.mxu0
      %v3366 = vadd.f32 %v3332, %v3365
      %3367 = vmatmul.bf16.gmra.mxu0 %v3085
      %v3368 = vpop.f32.mrf.mxu0
      %v3369 = vadd.f32 %v3335, %v3368
      %v3370 = vpop.f32.mrf.mxu0
      %v3371 = vadd.f32 %v3337, %v3370
      %3372 = vmatmul.bf16.gmra.mxu0 %v3093
      %v3373 = vpop.f32.mrf.mxu0
      %v3374 = vadd.f32 %v3340, %v3373
      %v3375 = vpop.f32.mrf.mxu0
      %v3376 = vadd.f32 %v3342, %v3375
      %3377 = vdwg.mxu0
      %3378 = vmatpush.bf16.msra.mxu0 %v3269
      %3379 = vmatpush.bf16.msra.mxu0 %v3268
      %3380 = vmatpush.bf16.msra.mxu0 %v3267
      %3381 = vmatpush.bf16.msra.mxu0 %v3266
      %3382 = vmatpush.bf16.msra.mxu0 %v3265
      %3383 = vmatpush.bf16.msra.mxu0 %v3264
      %3384 = vmatpush.bf16.msra.mxu0 %v3263
      %3385 = vmatpush.bf16.msra.mxu0 %v3262
      %3386 = vmatmul.bf16.gmra.mxu0 %v3062
      %v3387 = vpop.f32.mrf.mxu0
      %v3388 = vadd.f32 %v3354, %v3387
      %v3389 = vpop.f32.mrf.mxu0
      %v3390 = vadd.f32 %v3356, %v3389
      %3391 = vmatmul.bf16.gmra.mxu0 %v3071
      %v3392 = vpop.f32.mrf.mxu0
      %v3393 = vadd.f32 %v3359, %v3392
      %v3394 = vpop.f32.mrf.mxu0
      %v3395 = vadd.f32 %v3361, %v3394
      %3396 = vmatmul.bf16.gmra.mxu0 %v3079
      %v3397 = vpop.f32.mrf.mxu0
      %v3398 = vadd.f32 %v3364, %v3397
      %v3399 = vpop.f32.mrf.mxu0
      %v3400 = vadd.f32 %v3366, %v3399
      %3401 = vmatmul.bf16.gmra.mxu0 %v3087
      %v3402 = vpop.f32.mrf.mxu0
      %v3403 = vadd.f32 %v3369, %v3402
      %v3404 = vpop.f32.mrf.mxu0
      %v3405 = vadd.f32 %v3371, %v3404
      %3406 = vmatmul.bf16.gmra.mxu0 %v3095
      %v3407 = vpop.f32.mrf.mxu0
      %v3408 = vadd.f32 %v3374, %v3407
      %v3409 = vpop.f32.mrf.mxu0
      %v3410 = vadd.f32 %v3376, %v3409
      %3411 = vdwg.mxu0
      %3412 = vmatpush.bf16.msra.mxu0 %v3277
      %3413 = vmatpush.bf16.msra.mxu0 %v3276
      %3414 = vmatpush.bf16.msra.mxu0 %v3275
      %3415 = vmatpush.bf16.msra.mxu0 %v3274
      %3416 = vmatpush.bf16.msra.mxu0 %v3273
      %3417 = vmatpush.bf16.msra.mxu0 %v3272
      %3418 = vmatpush.bf16.msra.mxu0 %v3271
      %3419 = vmatpush.bf16.msra.mxu0 %v3270
      %3420 = vmatmul.bf16.gmra.mxu0 %v3065
      %v3421 = vpop.f32.mrf.mxu0
      %v3422 = vadd.f32 %v3388, %v3421
      %v3423 = vpop.f32.mrf.mxu0
      %v3424 = vadd.f32 %v3390, %v3423
      %3425 = vmatmul.bf16.gmra.mxu0 %v3073
      %v3426 = vpop.f32.mrf.mxu0
      %v3427 = vadd.f32 %v3393, %v3426
      %v3428 = vpop.f32.mrf.mxu0
      %v3429 = vadd.f32 %v3395, %v3428
      %3430 = vmatmul.bf16.gmra.mxu0 %v3081
      %v3431 = vpop.f32.mrf.mxu0
      %v3432 = vadd.f32 %v3398, %v3431
      %v3433 = vpop.f32.mrf.mxu0
      %v3434 = vadd.f32 %v3400, %v3433
      %3435 = vmatmul.bf16.gmra.mxu0 %v3089
      %v3436 = vpop.f32.mrf.mxu0
      %v3437 = vadd.f32 %v3403, %v3436
      %v3438 = vpop.f32.mrf.mxu0
      %v3439 = vadd.f32 %v3405, %v3438
      %3440 = vmatmul.bf16.gmra.mxu0 %v3097
      %v3441 = vpop.f32.mrf.mxu0
      %v3442 = vadd.f32 %v3408, %v3441
      %v3443 = vpop.f32.mrf.mxu0
      %v3444 = vadd.f32 %v3410, %v3443
      %3445 = vdwg.mxu0
      %v3446 = vadd.f32 %v2978, %v3422
      %v3447 = vadd.f32 %v2979, %v3424
      %v3448 = vadd.f32 %v2980, %v3427
      %v3449 = vadd.f32 %v2981, %v3429
      %v3450 = vadd.f32 %v2982, %v3432
      %v3451 = vadd.f32 %v2983, %v3434
      %v3452 = vadd.f32 %v2984, %v3437
      %v3453 = vadd.f32 %v2985, %v3439
      %v3454 = vadd.f32 %v2986, %v3442
      %v3455 = vadd.f32 %v2987, %v3444
      %s3456 = scalar_lea.vmem %s1, 1536
      %v3457 = vld [vmem:[%s3456] sm:$0xf]
      %v3458 = vld [vmem:[%s3456 + $0x4] sm:$0xf]
      %v3459 = vld [vmem:[%s3456 + $0x8] sm:$0xf]
      %v3460 = vld [vmem:[%s3456 + $0xc] sm:$0xf]
      %v3461 = vld [vmem:[%s3456 + $0x10] sm:$0xf]
      %v3462 = vld [vmem:[%s3456 + $0x14] sm:$0xf]
      %v3463 = vld [vmem:[%s3456 + $0x18] sm:$0xf]
      %v3464 = vld [vmem:[%s3456 + $0x1c] sm:$0xf]
      %v3465 = vld [vmem:[%s3456 + $0x20] sm:$0xf]
      %v3466 = vld [vmem:[%s3456 + $0x24] sm:$0xf]
      %v3467 = vld [vmem:[%s3456 + $0x28] sm:$0xf]
      %v3468 = vld [vmem:[%s3456 + $0x2c] sm:$0xf]
      %v3469 = vld [vmem:[%s3456 + $0x30] sm:$0xf]
      %v3470 = vld [vmem:[%s3456 + $0x34] sm:$0xf]
      %v3471 = vld [vmem:[%s3456 + $0x38] sm:$0xf]
      %v3472 = vld [vmem:[%s3456 + $0x3c] sm:$0xf]
      %v3473 = vld [vmem:[%s3456 + $0x40] sm:$0xf]
      %v3474 = vld [vmem:[%s3456 + $0x44] sm:$0xf]
      %v3475 = vld [vmem:[%s3456 + $0x48] sm:$0xf]
      %v3476 = vld [vmem:[%s3456 + $0x4c] sm:$0xf]
      %v3477 = vld [vmem:[%s3456 + $0x50] sm:$0xf]
      %v3478 = vld [vmem:[%s3456 + $0x54] sm:$0xf]
      %v3479 = vld [vmem:[%s3456 + $0x58] sm:$0xf]
      %v3480 = vld [vmem:[%s3456 + $0x5c] sm:$0xf]
      %v3481 = vld [vmem:[%s3456 + $0x60] sm:$0xf]
      %v3482 = vld [vmem:[%s3456 + $0x64] sm:$0xf]
      %v3483 = vld [vmem:[%s3456 + $0x68] sm:$0xf]
      %v3484 = vld [vmem:[%s3456 + $0x6c] sm:$0xf]
      %v3485 = vld [vmem:[%s3456 + $0x70] sm:$0xf]
      %v3486 = vld [vmem:[%s3456 + $0x74] sm:$0xf]
      %v3487 = vld [vmem:[%s3456 + $0x78] sm:$0xf]
      %v3488 = vld [vmem:[%s3456 + $0x7c] sm:$0xf]
      %v3489 = vld [vmem:[%s3456 + $0x80] sm:$0xf]
      %v3490 = vld [vmem:[%s3456 + $0x84] sm:$0xf]
      %v3491 = vld [vmem:[%s3456 + $0x88] sm:$0xf]
      %v3492 = vld [vmem:[%s3456 + $0x8c] sm:$0xf]
      %v3493 = vld [vmem:[%s3456 + $0x90] sm:$0xf]
      %v3494 = vld [vmem:[%s3456 + $0x94] sm:$0xf]
      %v3495 = vld [vmem:[%s3456 + $0x98] sm:$0xf]
      %v3496 = vld [vmem:[%s3456 + $0x9c] sm:$0xf]
      %v3497 = vld [vmem:[%s3456 + $0xa0] sm:$0xf]
      %v3498 = vld [vmem:[%s3456 + $0xa4] sm:$0xf]
      %v3499 = vld [vmem:[%s3456 + $0xa8] sm:$0xf]
      %v3500 = vld [vmem:[%s3456 + $0xac] sm:$0xf]
      %v3501 = vld [vmem:[%s3456 + $0xb0] sm:$0xf]
      %v3502 = vld [vmem:[%s3456 + $0xb4] sm:$0xf]
      %v3503 = vld [vmem:[%s3456 + $0xb8] sm:$0xf]
      %v3504 = vld [vmem:[%s3456 + $0xbc] sm:$0xf]
      %v3505 = vld [vmem:[%s3456 + $0xc0] sm:$0xf]
      %v3506 = vld [vmem:[%s3456 + $0xc4] sm:$0xf]
      %v3507 = vld [vmem:[%s3456 + $0xc8] sm:$0xf]
      %v3508 = vld [vmem:[%s3456 + $0xcc] sm:$0xf]
      %v3509 = vld [vmem:[%s3456 + $0xd0] sm:$0xf]
      %v3510 = vld [vmem:[%s3456 + $0xd4] sm:$0xf]
      %v3511 = vld [vmem:[%s3456 + $0xd8] sm:$0xf]
      %v3512 = vld [vmem:[%s3456 + $0xdc] sm:$0xf]
      %v3513 = vld [vmem:[%s3456 + $0xe0] sm:$0xf]
      %v3514 = vld [vmem:[%s3456 + $0xe4] sm:$0xf]
      %v3515 = vld [vmem:[%s3456 + $0xe8] sm:$0xf]
      %v3516 = vld [vmem:[%s3456 + $0xec] sm:$0xf]
      %v3517 = vld [vmem:[%s3456 + $0xf0] sm:$0xf]
      %v3518 = vld [vmem:[%s3456 + $0xf4] sm:$0xf]
      %v3519 = vld [vmem:[%s3456 + $0xf8] sm:$0xf]
      %v3520 = vld [vmem:[%s3456 + $0xfc] sm:$0xf]
      %v3523 = vunpack.c.l.b16 %v293
      %v3524 = vunpack.c.h.b16 %v293
      %v3525 = vunpack.c.l.b16 %v294
      %v3526 = vunpack.c.h.b16 %v294
      %v3527 = vpack.c.b16 %v1922, %v486
      %v3528 = vpack.c.b16 %v1923, %v487
      %v3529 = vpack.c.b16 %v1924, %v488
      %v3530 = vpack.c.b16 %v1925, %v489
      %v3531 = vpack.c.b16 %v3523, %v3523
      %v3532 = vpack.c.b16 %v3524, %v3524
      %v3533 = vpack.c.b16 %v3525, %v3525
      %v3534 = vpack.c.b16 %v3526, %v3526
      %v3535 = vrot.slane %v494, 2
      %v3536 = vrot.slane %v498, 2
      %v3537 = vsel %vm3053, %v3535, %v3536
      %v3538 = vrot.slane %v495, 2
      %v3539 = vrot.slane %v499, 2
      %v3540 = vsel %vm3053, %v3538, %v3539
      %v3541 = vrot.slane %v496, 2
      %v3542 = vrot.slane %v500, 2
      %v3543 = vsel %vm3053, %v3541, %v3542
      %v3544 = vrot.slane %v497, 2
      %v3545 = vrot.slane %v501, 2
      %v3546 = vsel %vm3053, %v3544, %v3545
      %v3547 = vrot.slane %v502, 2
      %v3548 = vsel %vm3053, %v3536, %v3547
      %v3549 = vrot.slane %v503, 2
      %v3550 = vsel %vm3053, %v3539, %v3549
      %v3551 = vrot.slane %v504, 2
      %v3552 = vsel %vm3053, %v3542, %v3551
      %v3553 = vrot.slane %v505, 2
      %v3554 = vsel %vm3053, %v3545, %v3553
      %v3555 = vrot.slane %v506, 2
      %v3556 = vsel %vm3053, %v3547, %v3555
      %v3557 = vrot.slane %v507, 2
      %v3558 = vsel %vm3053, %v3549, %v3557
      %v3559 = vrot.slane %v508, 2
      %v3560 = vsel %vm3053, %v3551, %v3559
      %v3561 = vrot.slane %v509, 2
      %v3562 = vsel %vm3053, %v3553, %v3561
      %v3563 = vrot.slane %v3527, 2
      %v3564 = vsel %vm3053, %v3555, %v3563
      %v3565 = vrot.slane %v3528, 2
      %v3566 = vsel %vm3053, %v3557, %v3565
      %v3567 = vrot.slane %v3529, 2
      %v3568 = vsel %vm3053, %v3559, %v3567
      %v3569 = vrot.slane %v3530, 2
      %v3570 = vsel %vm3053, %v3561, %v3569
      %v3571 = vrot.slane %v3531, 2
      %v3572 = vsel %vm3053, %v3563, %v3571
      %v3573 = vrot.slane %v3532, 2
      %v3574 = vsel %vm3053, %v3565, %v3573
      %v3575 = vrot.slane %v3533, 2
      %v3576 = vsel %vm3053, %v3567, %v3575
      %v3577 = vrot.slane %v3534, 2
      %v3578 = vsel %vm3053, %v3569, %v3577
      %v3663 = vunpack.c.l.b16 %v3457
      %v3664 = vunpack.c.l.b16 %v3458
      %v3665 = vunpack.c.l.b16 %v3459
      %v3666 = vunpack.c.l.b16 %v3460
      %v3667 = vunpack.c.l.b16 %v3461
      %v3668 = vunpack.c.l.b16 %v3462
      %v3669 = vunpack.c.l.b16 %v3463
      %v3670 = vunpack.c.l.b16 %v3464
      %v3671 = vunpack.c.l.b16 %v3465
      %v3672 = vunpack.c.l.b16 %v3466
      %v3673 = vunpack.c.l.b16 %v3467
      %v3674 = vunpack.c.l.b16 %v3468
      %v3675 = vunpack.c.l.b16 %v3469
      %v3676 = vunpack.c.l.b16 %v3470
      %v3677 = vunpack.c.l.b16 %v3471
      %v3678 = vunpack.c.l.b16 %v3472
      %v3679 = vunpack.c.l.b16 %v3473
      %v3680 = vunpack.c.l.b16 %v3474
      %v3681 = vunpack.c.l.b16 %v3475
      %v3682 = vunpack.c.l.b16 %v3476
      %v3683 = vunpack.c.l.b16 %v3477
      %v3684 = vunpack.c.l.b16 %v3478
      %v3685 = vunpack.c.l.b16 %v3479
      %v3686 = vunpack.c.l.b16 %v3480
      %v3687 = vunpack.c.l.b16 %v3481
      %v3688 = vunpack.c.l.b16 %v3482
      %v3689 = vunpack.c.l.b16 %v3483
      %v3690 = vunpack.c.l.b16 %v3484
      %v3691 = vunpack.c.l.b16 %v3485
      %v3692 = vunpack.c.l.b16 %v3486
      %v3693 = vunpack.c.l.b16 %v3487
      %v3694 = vunpack.c.l.b16 %v3488
      %v3695 = vunpack.c.l.b16 %v3489
      %v3696 = vunpack.c.l.b16 %v3490
      %v3697 = vunpack.c.l.b16 %v3491
      %v3698 = vunpack.c.l.b16 %v3492
      %v3699 = vunpack.c.l.b16 %v3493
      %v3700 = vunpack.c.l.b16 %v3494
      %v3701 = vunpack.c.l.b16 %v3495
      %v3702 = vunpack.c.l.b16 %v3496
      %v3703 = vunpack.c.l.b16 %v3497
      %v3704 = vunpack.c.l.b16 %v3498
      %v3705 = vunpack.c.l.b16 %v3499
      %v3706 = vunpack.c.l.b16 %v3500
      %v3707 = vunpack.c.l.b16 %v3501
      %v3708 = vunpack.c.l.b16 %v3502
      %v3709 = vunpack.c.l.b16 %v3503
      %v3710 = vunpack.c.l.b16 %v3504
      %v3711 = vunpack.c.l.b16 %v3505
      %v3712 = vunpack.c.l.b16 %v3506
      %v3713 = vunpack.c.l.b16 %v3507
      %v3714 = vunpack.c.l.b16 %v3508
      %v3715 = vunpack.c.l.b16 %v3509
      %v3716 = vunpack.c.l.b16 %v3510
      %v3717 = vunpack.c.l.b16 %v3511
      %v3718 = vunpack.c.l.b16 %v3512
      %v3719 = vunpack.c.l.b16 %v3513
      %v3720 = vunpack.c.l.b16 %v3514
      %v3721 = vunpack.c.l.b16 %v3515
      %v3722 = vunpack.c.l.b16 %v3516
      %v3723 = vunpack.c.l.b16 %v3517
      %v3724 = vunpack.c.l.b16 %v3518
      %v3725 = vunpack.c.l.b16 %v3519
      %v3726 = vunpack.c.l.b16 %v3520
      %v3727 = vpack.c.b16 %v3664, %v3663
      %v3728 = vpack.c.b16 %v3666, %v3665
      %v3729 = vpack.c.b16 %v3668, %v3667
      %v3730 = vpack.c.b16 %v3670, %v3669
      %v3731 = vpack.c.b16 %v3672, %v3671
      %v3732 = vpack.c.b16 %v3674, %v3673
      %v3733 = vpack.c.b16 %v3676, %v3675
      %v3734 = vpack.c.b16 %v3678, %v3677
      %v3735 = vpack.c.b16 %v3680, %v3679
      %v3736 = vpack.c.b16 %v3682, %v3681
      %v3737 = vpack.c.b16 %v3684, %v3683
      %v3738 = vpack.c.b16 %v3686, %v3685
      %v3739 = vpack.c.b16 %v3688, %v3687
      %v3740 = vpack.c.b16 %v3690, %v3689
      %v3741 = vpack.c.b16 %v3692, %v3691
      %v3742 = vpack.c.b16 %v3694, %v3693
      %v3743 = vpack.c.b16 %v3696, %v3695
      %v3744 = vpack.c.b16 %v3698, %v3697
      %v3745 = vpack.c.b16 %v3700, %v3699
      %v3746 = vpack.c.b16 %v3702, %v3701
      %v3747 = vpack.c.b16 %v3704, %v3703
      %v3748 = vpack.c.b16 %v3706, %v3705
      %v3749 = vpack.c.b16 %v3708, %v3707
      %v3750 = vpack.c.b16 %v3710, %v3709
      %v3751 = vpack.c.b16 %v3712, %v3711
      %v3752 = vpack.c.b16 %v3714, %v3713
      %v3753 = vpack.c.b16 %v3716, %v3715
      %v3754 = vpack.c.b16 %v3718, %v3717
      %v3755 = vpack.c.b16 %v3720, %v3719
      %v3756 = vpack.c.b16 %v3722, %v3721
      %v3757 = vpack.c.b16 %v3724, %v3723
      %v3758 = vpack.c.b16 %v3726, %v3725
      %3791 = vmatpush.bf16.msra.mxu0 %v3734
      %3792 = vmatpush.bf16.msra.mxu0 %v3733
      %3793 = vmatpush.bf16.msra.mxu0 %v3732
      %3794 = vmatpush.bf16.msra.mxu0 %v3731
      %3795 = vmatpush.bf16.msra.mxu0 %v3730
      %3796 = vmatpush.bf16.msra.mxu0 %v3729
      %3797 = vmatpush.bf16.msra.mxu0 %v3728
      %3798 = vmatpush.bf16.msra.mxu0 %v3727
      %3799 = vmatmul.bf16.gmra.mxu0 %v3537
      %v3800 = vpop.f32.mrf.mxu0
      %v3801 = vadd.f32 0.0, %v3800
      %v3802 = vpop.f32.mrf.mxu0
      %v3803 = vadd.f32 0.0, %v3802
      %3804 = vmatmul.bf16.gmra.mxu0 %v3548
      %v3805 = vpop.f32.mrf.mxu0
      %v3806 = vadd.f32 0.0, %v3805
      %v3807 = vpop.f32.mrf.mxu0
      %v3808 = vadd.f32 0.0, %v3807
      %3809 = vmatmul.bf16.gmra.mxu0 %v3556
      %v3810 = vpop.f32.mrf.mxu0
      %v3811 = vadd.f32 0.0, %v3810
      %v3812 = vpop.f32.mrf.mxu0
      %v3813 = vadd.f32 0.0, %v3812
      %3814 = vmatmul.bf16.gmra.mxu0 %v3564
      %v3815 = vpop.f32.mrf.mxu0
      %v3816 = vadd.f32 0.0, %v3815
      %v3817 = vpop.f32.mrf.mxu0
      %v3818 = vadd.f32 0.0, %v3817
      %3819 = vmatmul.bf16.gmra.mxu0 %v3572
      %v3820 = vpop.f32.mrf.mxu0
      %v3821 = vadd.f32 0.0, %v3820
      %v3822 = vpop.f32.mrf.mxu0
      %v3823 = vadd.f32 0.0, %v3822
      %3824 = vdwg.mxu0
      %3825 = vmatpush.bf16.msra.mxu0 %v3742
      %3826 = vmatpush.bf16.msra.mxu0 %v3741
      %3827 = vmatpush.bf16.msra.mxu0 %v3740
      %3828 = vmatpush.bf16.msra.mxu0 %v3739
      %3829 = vmatpush.bf16.msra.mxu0 %v3738
      %3830 = vmatpush.bf16.msra.mxu0 %v3737
      %3831 = vmatpush.bf16.msra.mxu0 %v3736
      %3832 = vmatpush.bf16.msra.mxu0 %v3735
      %3833 = vmatmul.bf16.gmra.mxu0 %v3540
      %v3834 = vpop.f32.mrf.mxu0
      %v3835 = vadd.f32 %v3801, %v3834
      %v3836 = vpop.f32.mrf.mxu0
      %v3837 = vadd.f32 %v3803, %v3836
      %3838 = vmatmul.bf16.gmra.mxu0 %v3550
      %v3839 = vpop.f32.mrf.mxu0
      %v3840 = vadd.f32 %v3806, %v3839
      %v3841 = vpop.f32.mrf.mxu0
      %v3842 = vadd.f32 %v3808, %v3841
      %3843 = vmatmul.bf16.gmra.mxu0 %v3558
      %v3844 = vpop.f32.mrf.mxu0
      %v3845 = vadd.f32 %v3811, %v3844
      %v3846 = vpop.f32.mrf.mxu0
      %v3847 = vadd.f32 %v3813, %v3846
      %3848 = vmatmul.bf16.gmra.mxu0 %v3566
      %v3849 = vpop.f32.mrf.mxu0
      %v3850 = vadd.f32 %v3816, %v3849
      %v3851 = vpop.f32.mrf.mxu0
      %v3852 = vadd.f32 %v3818, %v3851
      %3853 = vmatmul.bf16.gmra.mxu0 %v3574
      %v3854 = vpop.f32.mrf.mxu0
      %v3855 = vadd.f32 %v3821, %v3854
      %v3856 = vpop.f32.mrf.mxu0
      %v3857 = vadd.f32 %v3823, %v3856
      %3858 = vdwg.mxu0
      %3859 = vmatpush.bf16.msra.mxu0 %v3750
      %3860 = vmatpush.bf16.msra.mxu0 %v3749
      %3861 = vmatpush.bf16.msra.mxu0 %v3748
      %3862 = vmatpush.bf16.msra.mxu0 %v3747
      %3863 = vmatpush.bf16.msra.mxu0 %v3746
      %3864 = vmatpush.bf16.msra.mxu0 %v3745
      %3865 = vmatpush.bf16.msra.mxu0 %v3744
      %3866 = vmatpush.bf16.msra.mxu0 %v3743
      %3867 = vmatmul.bf16.gmra.mxu0 %v3543
      %v3868 = vpop.f32.mrf.mxu0
      %v3869 = vadd.f32 %v3835, %v3868
      %v3870 = vpop.f32.mrf.mxu0
      %v3871 = vadd.f32 %v3837, %v3870
      %3872 = vmatmul.bf16.gmra.mxu0 %v3552
      %v3873 = vpop.f32.mrf.mxu0
      %v3874 = vadd.f32 %v3840, %v3873
      %v3875 = vpop.f32.mrf.mxu0
      %v3876 = vadd.f32 %v3842, %v3875
      %3877 = vmatmul.bf16.gmra.mxu0 %v3560
      %v3878 = vpop.f32.mrf.mxu0
      %v3879 = vadd.f32 %v3845, %v3878
      %v3880 = vpop.f32.mrf.mxu0
      %v3881 = vadd.f32 %v3847, %v3880
      %3882 = vmatmul.bf16.gmra.mxu0 %v3568
      %v3883 = vpop.f32.mrf.mxu0
      %v3884 = vadd.f32 %v3850, %v3883
      %v3885 = vpop.f32.mrf.mxu0
      %v3886 = vadd.f32 %v3852, %v3885
      %3887 = vmatmul.bf16.gmra.mxu0 %v3576
      %v3888 = vpop.f32.mrf.mxu0
      %v3889 = vadd.f32 %v3855, %v3888
      %v3890 = vpop.f32.mrf.mxu0
      %v3891 = vadd.f32 %v3857, %v3890
      %3892 = vdwg.mxu0
      %3893 = vmatpush.bf16.msra.mxu0 %v3758
      %3894 = vmatpush.bf16.msra.mxu0 %v3757
      %3895 = vmatpush.bf16.msra.mxu0 %v3756
      %3896 = vmatpush.bf16.msra.mxu0 %v3755
      %3897 = vmatpush.bf16.msra.mxu0 %v3754
      %3898 = vmatpush.bf16.msra.mxu0 %v3753
      %3899 = vmatpush.bf16.msra.mxu0 %v3752
      %3900 = vmatpush.bf16.msra.mxu0 %v3751
      %3901 = vmatmul.bf16.gmra.mxu0 %v3546
      %v3902 = vpop.f32.mrf.mxu0
      %v3903 = vadd.f32 %v3869, %v3902
      %v3904 = vpop.f32.mrf.mxu0
      %v3905 = vadd.f32 %v3871, %v3904
      %3906 = vmatmul.bf16.gmra.mxu0 %v3554
      %v3907 = vpop.f32.mrf.mxu0
      %v3908 = vadd.f32 %v3874, %v3907
      %v3909 = vpop.f32.mrf.mxu0
      %v3910 = vadd.f32 %v3876, %v3909
      %3911 = vmatmul.bf16.gmra.mxu0 %v3562
      %v3912 = vpop.f32.mrf.mxu0
      %v3913 = vadd.f32 %v3879, %v3912
      %v3914 = vpop.f32.mrf.mxu0
      %v3915 = vadd.f32 %v3881, %v3914
      %3916 = vmatmul.bf16.gmra.mxu0 %v3570
      %v3917 = vpop.f32.mrf.mxu0
      %v3918 = vadd.f32 %v3884, %v3917
      %v3919 = vpop.f32.mrf.mxu0
      %v3920 = vadd.f32 %v3886, %v3919
      %3921 = vmatmul.bf16.gmra.mxu0 %v3578
      %v3922 = vpop.f32.mrf.mxu0
      %v3923 = vadd.f32 %v3889, %v3922
      %v3924 = vpop.f32.mrf.mxu0
      %v3925 = vadd.f32 %v3891, %v3924
      %3926 = vdwg.mxu0
      %v3927 = vadd.f32 %v3446, %v3903
      %v3928 = vadd.f32 %v3447, %v3905
      %v3929 = vadd.f32 %v3448, %v3908
      %v3930 = vadd.f32 %v3449, %v3910
      %v3931 = vadd.f32 %v3450, %v3913
      %v3932 = vadd.f32 %v3451, %v3915
      %v3933 = vadd.f32 %v3452, %v3918
      %v3934 = vadd.f32 %v3453, %v3920
      %v3935 = vadd.f32 %v3454, %v3923
      %v3936 = vadd.f32 %v3455, %v3925
      %s3937 = scalar_lea.vmem %s1, 1792
      %v3938 = vld [vmem:[%s3937] sm:$0xf]
      %v3939 = vld [vmem:[%s3937 + $0x4] sm:$0xf]
      %v3940 = vld [vmem:[%s3937 + $0x8] sm:$0xf]
      %v3941 = vld [vmem:[%s3937 + $0xc] sm:$0xf]
      %v3942 = vld [vmem:[%s3937 + $0x10] sm:$0xf]
      %v3943 = vld [vmem:[%s3937 + $0x14] sm:$0xf]
      %v3944 = vld [vmem:[%s3937 + $0x18] sm:$0xf]
      %v3945 = vld [vmem:[%s3937 + $0x1c] sm:$0xf]
      %v3946 = vld [vmem:[%s3937 + $0x20] sm:$0xf]
      %v3947 = vld [vmem:[%s3937 + $0x24] sm:$0xf]
      %v3948 = vld [vmem:[%s3937 + $0x28] sm:$0xf]
      %v3949 = vld [vmem:[%s3937 + $0x2c] sm:$0xf]
      %v3950 = vld [vmem:[%s3937 + $0x30] sm:$0xf]
      %v3951 = vld [vmem:[%s3937 + $0x34] sm:$0xf]
      %v3952 = vld [vmem:[%s3937 + $0x38] sm:$0xf]
      %v3953 = vld [vmem:[%s3937 + $0x3c] sm:$0xf]
      %v3954 = vld [vmem:[%s3937 + $0x40] sm:$0xf]
      %v3955 = vld [vmem:[%s3937 + $0x44] sm:$0xf]
      %v3956 = vld [vmem:[%s3937 + $0x48] sm:$0xf]
      %v3957 = vld [vmem:[%s3937 + $0x4c] sm:$0xf]
      %v3958 = vld [vmem:[%s3937 + $0x50] sm:$0xf]
      %v3959 = vld [vmem:[%s3937 + $0x54] sm:$0xf]
      %v3960 = vld [vmem:[%s3937 + $0x58] sm:$0xf]
      %v3961 = vld [vmem:[%s3937 + $0x5c] sm:$0xf]
      %v3962 = vld [vmem:[%s3937 + $0x60] sm:$0xf]
      %v3963 = vld [vmem:[%s3937 + $0x64] sm:$0xf]
      %v3964 = vld [vmem:[%s3937 + $0x68] sm:$0xf]
      %v3965 = vld [vmem:[%s3937 + $0x6c] sm:$0xf]
      %v3966 = vld [vmem:[%s3937 + $0x70] sm:$0xf]
      %v3967 = vld [vmem:[%s3937 + $0x74] sm:$0xf]
      %v3968 = vld [vmem:[%s3937 + $0x78] sm:$0xf]
      %v3969 = vld [vmem:[%s3937 + $0x7c] sm:$0xf]
      %v3970 = vld [vmem:[%s3937 + $0x80] sm:$0xf]
      %v3971 = vld [vmem:[%s3937 + $0x84] sm:$0xf]
      %v3972 = vld [vmem:[%s3937 + $0x88] sm:$0xf]
      %v3973 = vld [vmem:[%s3937 + $0x8c] sm:$0xf]
      %v3974 = vld [vmem:[%s3937 + $0x90] sm:$0xf]
      %v3975 = vld [vmem:[%s3937 + $0x94] sm:$0xf]
      %v3976 = vld [vmem:[%s3937 + $0x98] sm:$0xf]
      %v3977 = vld [vmem:[%s3937 + $0x9c] sm:$0xf]
      %v3978 = vld [vmem:[%s3937 + $0xa0] sm:$0xf]
      %v3979 = vld [vmem:[%s3937 + $0xa4] sm:$0xf]
      %v3980 = vld [vmem:[%s3937 + $0xa8] sm:$0xf]
      %v3981 = vld [vmem:[%s3937 + $0xac] sm:$0xf]
      %v3982 = vld [vmem:[%s3937 + $0xb0] sm:$0xf]
      %v3983 = vld [vmem:[%s3937 + $0xb4] sm:$0xf]
      %v3984 = vld [vmem:[%s3937 + $0xb8] sm:$0xf]
      %v3985 = vld [vmem:[%s3937 + $0xbc] sm:$0xf]
      %v3986 = vld [vmem:[%s3937 + $0xc0] sm:$0xf]
      %v3987 = vld [vmem:[%s3937 + $0xc4] sm:$0xf]
      %v3988 = vld [vmem:[%s3937 + $0xc8] sm:$0xf]
      %v3989 = vld [vmem:[%s3937 + $0xcc] sm:$0xf]
      %v3990 = vld [vmem:[%s3937 + $0xd0] sm:$0xf]
      %v3991 = vld [vmem:[%s3937 + $0xd4] sm:$0xf]
      %v3992 = vld [vmem:[%s3937 + $0xd8] sm:$0xf]
      %v3993 = vld [vmem:[%s3937 + $0xdc] sm:$0xf]
      %v3994 = vld [vmem:[%s3937 + $0xe0] sm:$0xf]
      %v3995 = vld [vmem:[%s3937 + $0xe4] sm:$0xf]
      %v3996 = vld [vmem:[%s3937 + $0xe8] sm:$0xf]
      %v3997 = vld [vmem:[%s3937 + $0xec] sm:$0xf]
      %v3998 = vld [vmem:[%s3937 + $0xf0] sm:$0xf]
      %v3999 = vld [vmem:[%s3937 + $0xf4] sm:$0xf]
      %v4000 = vld [vmem:[%s3937 + $0xf8] sm:$0xf]
      %v4001 = vld [vmem:[%s3937 + $0xfc] sm:$0xf]
      %vm4002 = vsmask.f32 5376
      %v4003 = vrot.slane %v563, 2
      %v4004 = vrot.slane %v523, 3
      %v4005 = vor.u32 %v4003, %v4004
      %v4006 = vrot.slane %v595, 2
      %v4007 = vrot.slane %v567, 3
      %v4008 = vor.u32 %v4006, %v4007
      %v4009 = vsel %vm4002, %v4005, %v4008
      %v4010 = vrot.slane %v571, 2
      %v4011 = vrot.slane %v535, 3
      %v4012 = vor.u32 %v4010, %v4011
      %v4013 = vrot.slane %v603, 2
      %v4014 = vrot.slane %v575, 3
      %v4015 = vor.u32 %v4013, %v4014
      %v4016 = vsel %vm4002, %v4012, %v4015
      %v4017 = vrot.slane %v579, 2
      %v4018 = vrot.slane %v547, 3
      %v4019 = vor.u32 %v4017, %v4018
      %v4020 = vrot.slane %v611, 2
      %v4021 = vrot.slane %v583, 3
      %v4022 = vor.u32 %v4020, %v4021
      %v4023 = vsel %vm4002, %v4019, %v4022
      %v4024 = vrot.slane %v587, 2
      %v4025 = vrot.slane %v559, 3
      %v4026 = vor.u32 %v4024, %v4025
      %v4027 = vrot.slane %v619, 2
      %v4028 = vrot.slane %v591, 3
      %v4029 = vor.u32 %v4027, %v4028
      %v4030 = vsel %vm4002, %v4026, %v4029
      %v4031 = vrot.slane %v627, 2
      %v4032 = vrot.slane %v599, 3
      %v4033 = vor.u32 %v4031, %v4032
      %v4034 = vsel %vm4002, %v4008, %v4033
      %v4035 = vrot.slane %v635, 2
      %v4036 = vrot.slane %v607, 3
      %v4037 = vor.u32 %v4035, %v4036
      %v4038 = vsel %vm4002, %v4015, %v4037
      %v4039 = vrot.slane %v643, 2
      %v4040 = vrot.slane %v615, 3
      %v4041 = vor.u32 %v4039, %v4040
      %v4042 = vsel %vm4002, %v4022, %v4041
      %v4043 = vrot.slane %v651, 2
      %v4044 = vrot.slane %v623, 3
      %v4045 = vor.u32 %v4043, %v4044
      %v4046 = vsel %vm4002, %v4029, %v4045
      %v4047 = vrot.slane %v659, 2
      %v4048 = vrot.slane %v631, 3
      %v4049 = vor.u32 %v4047, %v4048
      %v4050 = vsel %vm4002, %v4033, %v4049
      %v4051 = vrot.slane %v667, 2
      %v4052 = vrot.slane %v639, 3
      %v4053 = vor.u32 %v4051, %v4052
      %v4054 = vsel %vm4002, %v4037, %v4053
      %v4055 = vrot.slane %v675, 2
      %v4056 = vrot.slane %v647, 3
      %v4057 = vor.u32 %v4055, %v4056
      %v4058 = vsel %vm4002, %v4041, %v4057
      %v4059 = vrot.slane %v683, 2
      %v4060 = vrot.slane %v655, 3
      %v4061 = vor.u32 %v4059, %v4060
      %v4062 = vsel %vm4002, %v4045, %v4061
      %v4064 = vshrl.u32 %v3527, 16
      %v4066 = vrot.slane %v4064, 2
      %v4067 = vshll.u32 %v3527, 16
      %v4069 = vrot.slane %v4067, 3
      %v4070 = vor.u32 %v4066, %v4069
      %v4071 = vsel %vm4002, %v4049, %v4070
      %v4073 = vshrl.u32 %v3528, 16
      %v4075 = vrot.slane %v4073, 2
      %v4076 = vshll.u32 %v3528, 16
      %v4078 = vrot.slane %v4076, 3
      %v4079 = vor.u32 %v4075, %v4078
      %v4080 = vsel %vm4002, %v4053, %v4079
      %v4082 = vshrl.u32 %v3529, 16
      %v4084 = vrot.slane %v4082, 2
      %v4085 = vshll.u32 %v3529, 16
      %v4087 = vrot.slane %v4085, 3
      %v4088 = vor.u32 %v4084, %v4087
      %v4089 = vsel %vm4002, %v4057, %v4088
      %v4091 = vshrl.u32 %v3530, 16
      %v4093 = vrot.slane %v4091, 2
      %v4094 = vshll.u32 %v3530, 16
      %v4096 = vrot.slane %v4094, 3
      %v4097 = vor.u32 %v4093, %v4096
      %v4098 = vsel %vm4002, %v4061, %v4097
      %v4100 = vshrl.u32 %v3531, 16
      %v4102 = vrot.slane %v4100, 2
      %v4103 = vshll.u32 %v3531, 16
      %v4105 = vrot.slane %v4103, 3
      %v4106 = vor.u32 %v4102, %v4105
      %v4107 = vsel %vm4002, %v4070, %v4106
      %v4109 = vshrl.u32 %v3532, 16
      %v4111 = vrot.slane %v4109, 2
      %v4112 = vshll.u32 %v3532, 16
      %v4114 = vrot.slane %v4112, 3
      %v4115 = vor.u32 %v4111, %v4114
      %v4116 = vsel %vm4002, %v4079, %v4115
      %v4118 = vshrl.u32 %v3533, 16
      %v4120 = vrot.slane %v4118, 2
      %v4121 = vshll.u32 %v3533, 16
      %v4123 = vrot.slane %v4121, 3
      %v4124 = vor.u32 %v4120, %v4123
      %v4125 = vsel %vm4002, %v4088, %v4124
      %v4127 = vshrl.u32 %v3534, 16
      %v4129 = vrot.slane %v4127, 2
      %v4130 = vshll.u32 %v3534, 16
      %v4132 = vrot.slane %v4130, 3
      %v4133 = vor.u32 %v4129, %v4132
      %v4134 = vsel %vm4002, %v4097, %v4133
      %v4219 = vunpack.c.l.b16 %v3938
      %v4220 = vunpack.c.l.b16 %v3939
      %v4221 = vunpack.c.l.b16 %v3940
      %v4222 = vunpack.c.l.b16 %v3941
      %v4223 = vunpack.c.l.b16 %v3942
      %v4224 = vunpack.c.l.b16 %v3943
      %v4225 = vunpack.c.l.b16 %v3944
      %v4226 = vunpack.c.l.b16 %v3945
      %v4227 = vunpack.c.l.b16 %v3946
      %v4228 = vunpack.c.l.b16 %v3947
      %v4229 = vunpack.c.l.b16 %v3948
      %v4230 = vunpack.c.l.b16 %v3949
      %v4231 = vunpack.c.l.b16 %v3950
      %v4232 = vunpack.c.l.b16 %v3951
      %v4233 = vunpack.c.l.b16 %v3952
      %v4234 = vunpack.c.l.b16 %v3953
      %v4235 = vunpack.c.l.b16 %v3954
      %v4236 = vunpack.c.l.b16 %v3955
      %v4237 = vunpack.c.l.b16 %v3956
      %v4238 = vunpack.c.l.b16 %v3957
      %v4239 = vunpack.c.l.b16 %v3958
      %v4240 = vunpack.c.l.b16 %v3959
      %v4241 = vunpack.c.l.b16 %v3960
      %v4242 = vunpack.c.l.b16 %v3961
      %v4243 = vunpack.c.l.b16 %v3962
      %v4244 = vunpack.c.l.b16 %v3963
      %v4245 = vunpack.c.l.b16 %v3964
      %v4246 = vunpack.c.l.b16 %v3965
      %v4247 = vunpack.c.l.b16 %v3966
      %v4248 = vunpack.c.l.b16 %v3967
      %v4249 = vunpack.c.l.b16 %v3968
      %v4250 = vunpack.c.l.b16 %v3969
      %v4251 = vunpack.c.l.b16 %v3970
      %v4252 = vunpack.c.l.b16 %v3971
      %v4253 = vunpack.c.l.b16 %v3972
      %v4254 = vunpack.c.l.b16 %v3973
      %v4255 = vunpack.c.l.b16 %v3974
      %v4256 = vunpack.c.l.b16 %v3975
      %v4257 = vunpack.c.l.b16 %v3976
      %v4258 = vunpack.c.l.b16 %v3977
      %v4259 = vunpack.c.l.b16 %v3978
      %v4260 = vunpack.c.l.b16 %v3979
      %v4261 = vunpack.c.l.b16 %v3980
      %v4262 = vunpack.c.l.b16 %v3981
      %v4263 = vunpack.c.l.b16 %v3982
      %v4264 = vunpack.c.l.b16 %v3983
      %v4265 = vunpack.c.l.b16 %v3984
      %v4266 = vunpack.c.l.b16 %v3985
      %v4267 = vunpack.c.l.b16 %v3986
      %v4268 = vunpack.c.l.b16 %v3987
      %v4269 = vunpack.c.l.b16 %v3988
      %v4270 = vunpack.c.l.b16 %v3989
      %v4271 = vunpack.c.l.b16 %v3990
      %v4272 = vunpack.c.l.b16 %v3991
      %v4273 = vunpack.c.l.b16 %v3992
      %v4274 = vunpack.c.l.b16 %v3993
      %v4275 = vunpack.c.l.b16 %v3994
      %v4276 = vunpack.c.l.b16 %v3995
      %v4277 = vunpack.c.l.b16 %v3996
      %v4278 = vunpack.c.l.b16 %v3997
      %v4279 = vunpack.c.l.b16 %v3998
      %v4280 = vunpack.c.l.b16 %v3999
      %v4281 = vunpack.c.l.b16 %v4000
      %v4282 = vunpack.c.l.b16 %v4001
      %v4283 = vpack.c.b16 %v4220, %v4219
      %v4284 = vpack.c.b16 %v4222, %v4221
      %v4285 = vpack.c.b16 %v4224, %v4223
      %v4286 = vpack.c.b16 %v4226, %v4225
      %v4287 = vpack.c.b16 %v4228, %v4227
      %v4288 = vpack.c.b16 %v4230, %v4229
      %v4289 = vpack.c.b16 %v4232, %v4231
      %v4290 = vpack.c.b16 %v4234, %v4233
      %v4291 = vpack.c.b16 %v4236, %v4235
      %v4292 = vpack.c.b16 %v4238, %v4237
      %v4293 = vpack.c.b16 %v4240, %v4239
      %v4294 = vpack.c.b16 %v4242, %v4241
      %v4295 = vpack.c.b16 %v4244, %v4243
      %v4296 = vpack.c.b16 %v4246, %v4245
      %v4297 = vpack.c.b16 %v4248, %v4247
      %v4298 = vpack.c.b16 %v4250, %v4249
      %v4299 = vpack.c.b16 %v4252, %v4251
      %v4300 = vpack.c.b16 %v4254, %v4253
      %v4301 = vpack.c.b16 %v4256, %v4255
      %v4302 = vpack.c.b16 %v4258, %v4257
      %v4303 = vpack.c.b16 %v4260, %v4259
      %v4304 = vpack.c.b16 %v4262, %v4261
      %v4305 = vpack.c.b16 %v4264, %v4263
      %v4306 = vpack.c.b16 %v4266, %v4265
      %v4307 = vpack.c.b16 %v4268, %v4267
      %v4308 = vpack.c.b16 %v4270, %v4269
      %v4309 = vpack.c.b16 %v4272, %v4271
      %v4310 = vpack.c.b16 %v4274, %v4273
      %v4311 = vpack.c.b16 %v4276, %v4275
      %v4312 = vpack.c.b16 %v4278, %v4277
      %v4313 = vpack.c.b16 %v4280, %v4279
      %v4314 = vpack.c.b16 %v4282, %v4281
      %4347 = vmatpush.bf16.msra.mxu0 %v4290
      %4348 = vmatpush.bf16.msra.mxu0 %v4289
      %4349 = vmatpush.bf16.msra.mxu0 %v4288
      %4350 = vmatpush.bf16.msra.mxu0 %v4287
      %4351 = vmatpush.bf16.msra.mxu0 %v4286
      %4352 = vmatpush.bf16.msra.mxu0 %v4285
      %4353 = vmatpush.bf16.msra.mxu0 %v4284
      %4354 = vmatpush.bf16.msra.mxu0 %v4283
      %4355 = vmatmul.bf16.gmra.mxu0 %v4009
      %v4356 = vpop.f32.mrf.mxu0
      %v4357 = vadd.f32 0.0, %v4356
      %v4358 = vpop.f32.mrf.mxu0
      %v4359 = vadd.f32 0.0, %v4358
      %4360 = vmatmul.bf16.gmra.mxu0 %v4034
      %v4361 = vpop.f32.mrf.mxu0
      %v4362 = vadd.f32 0.0, %v4361
      %v4363 = vpop.f32.mrf.mxu0
      %v4364 = vadd.f32 0.0, %v4363
      %4365 = vmatmul.bf16.gmra.mxu0 %v4050
      %v4366 = vpop.f32.mrf.mxu0
      %v4367 = vadd.f32 0.0, %v4366
      %v4368 = vpop.f32.mrf.mxu0
      %v4369 = vadd.f32 0.0, %v4368
      %4370 = vmatmul.bf16.gmra.mxu0 %v4071
      %v4371 = vpop.f32.mrf.mxu0
      %v4372 = vadd.f32 0.0, %v4371
      %v4373 = vpop.f32.mrf.mxu0
      %v4374 = vadd.f32 0.0, %v4373
      %4375 = vmatmul.bf16.gmra.mxu0 %v4107
      %v4376 = vpop.f32.mrf.mxu0
      %v4377 = vadd.f32 0.0, %v4376
      %v4378 = vpop.f32.mrf.mxu0
      %v4379 = vadd.f32 0.0, %v4378
      %4380 = vdwg.mxu0
      %4381 = vmatpush.bf16.msra.mxu0 %v4298
      %4382 = vmatpush.bf16.msra.mxu0 %v4297
      %4383 = vmatpush.bf16.msra.mxu0 %v4296
      %4384 = vmatpush.bf16.msra.mxu0 %v4295
      %4385 = vmatpush.bf16.msra.mxu0 %v4294
      %4386 = vmatpush.bf16.msra.mxu0 %v4293
      %4387 = vmatpush.bf16.msra.mxu0 %v4292
      %4388 = vmatpush.bf16.msra.mxu0 %v4291
      %4389 = vmatmul.bf16.gmra.mxu0 %v4016
      %v4390 = vpop.f32.mrf.mxu0
      %v4391 = vadd.f32 %v4357, %v4390
      %v4392 = vpop.f32.mrf.mxu0
      %v4393 = vadd.f32 %v4359, %v4392
      %4394 = vmatmul.bf16.gmra.mxu0 %v4038
      %v4395 = vpop.f32.mrf.mxu0
      %v4396 = vadd.f32 %v4362, %v4395
      %v4397 = vpop.f32.mrf.mxu0
      %v4398 = vadd.f32 %v4364, %v4397
      %4399 = vmatmul.bf16.gmra.mxu0 %v4054
      %v4400 = vpop.f32.mrf.mxu0
      %v4401 = vadd.f32 %v4367, %v4400
      %v4402 = vpop.f32.mrf.mxu0
      %v4403 = vadd.f32 %v4369, %v4402
      %4404 = vmatmul.bf16.gmra.mxu0 %v4080
      %v4405 = vpop.f32.mrf.mxu0
      %v4406 = vadd.f32 %v4372, %v4405
      %v4407 = vpop.f32.mrf.mxu0
      %v4408 = vadd.f32 %v4374, %v4407
      %4409 = vmatmul.bf16.gmra.mxu0 %v4116
      %v4410 = vpop.f32.mrf.mxu0
      %v4411 = vadd.f32 %v4377, %v4410
      %v4412 = vpop.f32.mrf.mxu0
      %v4413 = vadd.f32 %v4379, %v4412
      %4414 = vdwg.mxu0
      %4415 = vmatpush.bf16.msra.mxu0 %v4306
      %4416 = vmatpush.bf16.msra.mxu0 %v4305
      %4417 = vmatpush.bf16.msra.mxu0 %v4304
      %4418 = vmatpush.bf16.msra.mxu0 %v4303
      %4419 = vmatpush.bf16.msra.mxu0 %v4302
      %4420 = vmatpush.bf16.msra.mxu0 %v4301
      %4421 = vmatpush.bf16.msra.mxu0 %v4300
      %4422 = vmatpush.bf16.msra.mxu0 %v4299
      %4423 = vmatmul.bf16.gmra.mxu0 %v4023
      %v4424 = vpop.f32.mrf.mxu0
      %v4425 = vadd.f32 %v4391, %v4424
      %v4426 = vpop.f32.mrf.mxu0
      %v4427 = vadd.f32 %v4393, %v4426
      %4428 = vmatmul.bf16.gmra.mxu0 %v4042
      %v4429 = vpop.f32.mrf.mxu0
      %v4430 = vadd.f32 %v4396, %v4429
      %v4431 = vpop.f32.mrf.mxu0
      %v4432 = vadd.f32 %v4398, %v4431
      %4433 = vmatmul.bf16.gmra.mxu0 %v4058
      %v4434 = vpop.f32.mrf.mxu0
      %v4435 = vadd.f32 %v4401, %v4434
      %v4436 = vpop.f32.mrf.mxu0
      %v4437 = vadd.f32 %v4403, %v4436
      %4438 = vmatmul.bf16.gmra.mxu0 %v4089
      %v4439 = vpop.f32.mrf.mxu0
      %v4440 = vadd.f32 %v4406, %v4439
      %v4441 = vpop.f32.mrf.mxu0
      %v4442 = vadd.f32 %v4408, %v4441
      %4443 = vmatmul.bf16.gmra.mxu0 %v4125
      %v4444 = vpop.f32.mrf.mxu0
      %v4445 = vadd.f32 %v4411, %v4444
      %v4446 = vpop.f32.mrf.mxu0
      %v4447 = vadd.f32 %v4413, %v4446
      %4448 = vdwg.mxu0
      %4449 = vmatpush.bf16.msra.mxu0 %v4314
      %4450 = vmatpush.bf16.msra.mxu0 %v4313
      %4451 = vmatpush.bf16.msra.mxu0 %v4312
      %4452 = vmatpush.bf16.msra.mxu0 %v4311
      %4453 = vmatpush.bf16.msra.mxu0 %v4310
      %4454 = vmatpush.bf16.msra.mxu0 %v4309
      %4455 = vmatpush.bf16.msra.mxu0 %v4308
      %4456 = vmatpush.bf16.msra.mxu0 %v4307
      %4457 = vmatmul.bf16.gmra.mxu0 %v4030
      %v4458 = vpop.f32.mrf.mxu0
      %v4459 = vadd.f32 %v4425, %v4458
      %v4460 = vpop.f32.mrf.mxu0
      %v4461 = vadd.f32 %v4427, %v4460
      %4462 = vmatmul.bf16.gmra.mxu0 %v4046
      %v4463 = vpop.f32.mrf.mxu0
      %v4464 = vadd.f32 %v4430, %v4463
      %v4465 = vpop.f32.mrf.mxu0
      %v4466 = vadd.f32 %v4432, %v4465
      %4467 = vmatmul.bf16.gmra.mxu0 %v4062
      %v4468 = vpop.f32.mrf.mxu0
      %v4469 = vadd.f32 %v4435, %v4468
      %v4470 = vpop.f32.mrf.mxu0
      %v4471 = vadd.f32 %v4437, %v4470
      %4472 = vmatmul.bf16.gmra.mxu0 %v4098
      %v4473 = vpop.f32.mrf.mxu0
      %v4474 = vadd.f32 %v4440, %v4473
      %v4475 = vpop.f32.mrf.mxu0
      %v4476 = vadd.f32 %v4442, %v4475
      %4477 = vmatmul.bf16.gmra.mxu0 %v4134
      %v4478 = vpop.f32.mrf.mxu0
      %v4479 = vadd.f32 %v4445, %v4478
      %v4480 = vpop.f32.mrf.mxu0
      %v4481 = vadd.f32 %v4447, %v4480
      %4482 = vdwg.mxu0
      %v4483 = vadd.f32 %v3927, %v4459
      %v4484 = vadd.f32 %v3928, %v4461
      %v4485 = vadd.f32 %v3929, %v4464
      %v4486 = vadd.f32 %v3930, %v4466
      %v4487 = vadd.f32 %v3931, %v4469
      %v4488 = vadd.f32 %v3932, %v4471
      %v4489 = vadd.f32 %v3933, %v4474
      %v4490 = vadd.f32 %v3934, %v4476
      %v4491 = vadd.f32 %v3935, %v4479
      %v4492 = vadd.f32 %v3936, %v4481
      %s4493 = scalar_lea.vmem %s1, 2048
      %v4494 = vld [vmem:[%s4493] sm:$0xf]
      %v4495 = vld [vmem:[%s4493 + $0x4] sm:$0xf]
      %v4496 = vld [vmem:[%s4493 + $0x8] sm:$0xf]
      %v4497 = vld [vmem:[%s4493 + $0xc] sm:$0xf]
      %v4498 = vld [vmem:[%s4493 + $0x10] sm:$0xf]
      %v4499 = vld [vmem:[%s4493 + $0x14] sm:$0xf]
      %v4500 = vld [vmem:[%s4493 + $0x18] sm:$0xf]
      %v4501 = vld [vmem:[%s4493 + $0x1c] sm:$0xf]
      %v4502 = vld [vmem:[%s4493 + $0x20] sm:$0xf]
      %v4503 = vld [vmem:[%s4493 + $0x24] sm:$0xf]
      %v4504 = vld [vmem:[%s4493 + $0x28] sm:$0xf]
      %v4505 = vld [vmem:[%s4493 + $0x2c] sm:$0xf]
      %v4506 = vld [vmem:[%s4493 + $0x30] sm:$0xf]
      %v4507 = vld [vmem:[%s4493 + $0x34] sm:$0xf]
      %v4508 = vld [vmem:[%s4493 + $0x38] sm:$0xf]
      %v4509 = vld [vmem:[%s4493 + $0x3c] sm:$0xf]
      %v4510 = vld [vmem:[%s4493 + $0x40] sm:$0xf]
      %v4511 = vld [vmem:[%s4493 + $0x44] sm:$0xf]
      %v4512 = vld [vmem:[%s4493 + $0x48] sm:$0xf]
      %v4513 = vld [vmem:[%s4493 + $0x4c] sm:$0xf]
      %v4514 = vld [vmem:[%s4493 + $0x50] sm:$0xf]
      %v4515 = vld [vmem:[%s4493 + $0x54] sm:$0xf]
      %v4516 = vld [vmem:[%s4493 + $0x58] sm:$0xf]
      %v4517 = vld [vmem:[%s4493 + $0x5c] sm:$0xf]
      %v4518 = vld [vmem:[%s4493 + $0x60] sm:$0xf]
      %v4519 = vld [vmem:[%s4493 + $0x64] sm:$0xf]
      %v4520 = vld [vmem:[%s4493 + $0x68] sm:$0xf]
      %v4521 = vld [vmem:[%s4493 + $0x6c] sm:$0xf]
      %v4522 = vld [vmem:[%s4493 + $0x70] sm:$0xf]
      %v4523 = vld [vmem:[%s4493 + $0x74] sm:$0xf]
      %v4524 = vld [vmem:[%s4493 + $0x78] sm:$0xf]
      %v4525 = vld [vmem:[%s4493 + $0x7c] sm:$0xf]
      %v4526 = vld [vmem:[%s4493 + $0x80] sm:$0xf]
      %v4527 = vld [vmem:[%s4493 + $0x84] sm:$0xf]
      %v4528 = vld [vmem:[%s4493 + $0x88] sm:$0xf]
      %v4529 = vld [vmem:[%s4493 + $0x8c] sm:$0xf]
      %v4530 = vld [vmem:[%s4493 + $0x90] sm:$0xf]
      %v4531 = vld [vmem:[%s4493 + $0x94] sm:$0xf]
      %v4532 = vld [vmem:[%s4493 + $0x98] sm:$0xf]
      %v4533 = vld [vmem:[%s4493 + $0x9c] sm:$0xf]
      %v4534 = vld [vmem:[%s4493 + $0xa0] sm:$0xf]
      %v4535 = vld [vmem:[%s4493 + $0xa4] sm:$0xf]
      %v4536 = vld [vmem:[%s4493 + $0xa8] sm:$0xf]
      %v4537 = vld [vmem:[%s4493 + $0xac] sm:$0xf]
      %v4538 = vld [vmem:[%s4493 + $0xb0] sm:$0xf]
      %v4539 = vld [vmem:[%s4493 + $0xb4] sm:$0xf]
      %v4540 = vld [vmem:[%s4493 + $0xb8] sm:$0xf]
      %v4541 = vld [vmem:[%s4493 + $0xbc] sm:$0xf]
      %v4542 = vld [vmem:[%s4493 + $0xc0] sm:$0xf]
      %v4543 = vld [vmem:[%s4493 + $0xc4] sm:$0xf]
      %v4544 = vld [vmem:[%s4493 + $0xc8] sm:$0xf]
      %v4545 = vld [vmem:[%s4493 + $0xcc] sm:$0xf]
      %v4546 = vld [vmem:[%s4493 + $0xd0] sm:$0xf]
      %v4547 = vld [vmem:[%s4493 + $0xd4] sm:$0xf]
      %v4548 = vld [vmem:[%s4493 + $0xd8] sm:$0xf]
      %v4549 = vld [vmem:[%s4493 + $0xdc] sm:$0xf]
      %v4550 = vld [vmem:[%s4493 + $0xe0] sm:$0xf]
      %v4551 = vld [vmem:[%s4493 + $0xe4] sm:$0xf]
      %v4552 = vld [vmem:[%s4493 + $0xe8] sm:$0xf]
      %v4553 = vld [vmem:[%s4493 + $0xec] sm:$0xf]
      %v4554 = vld [vmem:[%s4493 + $0xf0] sm:$0xf]
      %v4555 = vld [vmem:[%s4493 + $0xf4] sm:$0xf]
      %v4556 = vld [vmem:[%s4493 + $0xf8] sm:$0xf]
      %v4557 = vld [vmem:[%s4493 + $0xfc] sm:$0xf]
      %vm4558 = vcmask 1044480
      %v4559 = vrot.slane %v494, 3
      %v4560 = vrot.slane %v498, 3
      %v4561 = vsel %vm4558, %v4559, %v4560
      %v4562 = vrot.slane %v495, 3
      %v4563 = vrot.slane %v499, 3
      %v4564 = vsel %vm4558, %v4562, %v4563
      %v4565 = vrot.slane %v496, 3
      %v4566 = vrot.slane %v500, 3
      %v4567 = vsel %vm4558, %v4565, %v4566
      %v4568 = vrot.slane %v497, 3
      %v4569 = vrot.slane %v501, 3
      %v4570 = vsel %vm4558, %v4568, %v4569
      %v4571 = vrot.slane %v502, 3
      %v4572 = vsel %vm4558, %v4560, %v4571
      %v4573 = vrot.slane %v503, 3
      %v4574 = vsel %vm4558, %v4563, %v4573
      %v4575 = vrot.slane %v504, 3
      %v4576 = vsel %vm4558, %v4566, %v4575
      %v4577 = vrot.slane %v505, 3
      %v4578 = vsel %vm4558, %v4569, %v4577
      %v4579 = vrot.slane %v506, 3
      %v4580 = vsel %vm4558, %v4571, %v4579
      %v4581 = vrot.slane %v507, 3
      %v4582 = vsel %vm4558, %v4573, %v4581
      %v4583 = vrot.slane %v508, 3
      %v4584 = vsel %vm4558, %v4575, %v4583
      %v4585 = vrot.slane %v509, 3
      %v4586 = vsel %vm4558, %v4577, %v4585
      %v4587 = vrot.slane %v3527, 3
      %v4588 = vsel %vm4558, %v4579, %v4587
      %v4589 = vrot.slane %v3528, 3
      %v4590 = vsel %vm4558, %v4581, %v4589
      %v4591 = vrot.slane %v3529, 3
      %v4592 = vsel %vm4558, %v4583, %v4591
      %v4593 = vrot.slane %v3530, 3
      %v4594 = vsel %vm4558, %v4585, %v4593
      %v4595 = vrot.slane %v3531, 3
      %v4596 = vsel %vm4558, %v4587, %v4595
      %v4597 = vrot.slane %v3532, 3
      %v4598 = vsel %vm4558, %v4589, %v4597
      %v4599 = vrot.slane %v3533, 3
      %v4600 = vsel %vm4558, %v4591, %v4599
      %v4601 = vrot.slane %v3534, 3
      %v4602 = vsel %vm4558, %v4593, %v4601
      %v4687 = vunpack.c.l.b16 %v4494
      %v4688 = vunpack.c.l.b16 %v4495
      %v4689 = vunpack.c.l.b16 %v4496
      %v4690 = vunpack.c.l.b16 %v4497
      %v4691 = vunpack.c.l.b16 %v4498
      %v4692 = vunpack.c.l.b16 %v4499
      %v4693 = vunpack.c.l.b16 %v4500
      %v4694 = vunpack.c.l.b16 %v4501
      %v4695 = vunpack.c.l.b16 %v4502
      %v4696 = vunpack.c.l.b16 %v4503
      %v4697 = vunpack.c.l.b16 %v4504
      %v4698 = vunpack.c.l.b16 %v4505
      %v4699 = vunpack.c.l.b16 %v4506
      %v4700 = vunpack.c.l.b16 %v4507
      %v4701 = vunpack.c.l.b16 %v4508
      %v4702 = vunpack.c.l.b16 %v4509
      %v4703 = vunpack.c.l.b16 %v4510
      %v4704 = vunpack.c.l.b16 %v4511
      %v4705 = vunpack.c.l.b16 %v4512
      %v4706 = vunpack.c.l.b16 %v4513
      %v4707 = vunpack.c.l.b16 %v4514
      %v4708 = vunpack.c.l.b16 %v4515
      %v4709 = vunpack.c.l.b16 %v4516
      %v4710 = vunpack.c.l.b16 %v4517
      %v4711 = vunpack.c.l.b16 %v4518
      %v4712 = vunpack.c.l.b16 %v4519
      %v4713 = vunpack.c.l.b16 %v4520
      %v4714 = vunpack.c.l.b16 %v4521
      %v4715 = vunpack.c.l.b16 %v4522
      %v4716 = vunpack.c.l.b16 %v4523
      %v4717 = vunpack.c.l.b16 %v4524
      %v4718 = vunpack.c.l.b16 %v4525
      %v4719 = vunpack.c.l.b16 %v4526
      %v4720 = vunpack.c.l.b16 %v4527
      %v4721 = vunpack.c.l.b16 %v4528
      %v4722 = vunpack.c.l.b16 %v4529
      %v4723 = vunpack.c.l.b16 %v4530
      %v4724 = vunpack.c.l.b16 %v4531
      %v4725 = vunpack.c.l.b16 %v4532
      %v4726 = vunpack.c.l.b16 %v4533
      %v4727 = vunpack.c.l.b16 %v4534
      %v4728 = vunpack.c.l.b16 %v4535
      %v4729 = vunpack.c.l.b16 %v4536
      %v4730 = vunpack.c.l.b16 %v4537
      %v4731 = vunpack.c.l.b16 %v4538
      %v4732 = vunpack.c.l.b16 %v4539
      %v4733 = vunpack.c.l.b16 %v4540
      %v4734 = vunpack.c.l.b16 %v4541
      %v4735 = vunpack.c.l.b16 %v4542
      %v4736 = vunpack.c.l.b16 %v4543
      %v4737 = vunpack.c.l.b16 %v4544
      %v4738 = vunpack.c.l.b16 %v4545
      %v4739 = vunpack.c.l.b16 %v4546
      %v4740 = vunpack.c.l.b16 %v4547
      %v4741 = vunpack.c.l.b16 %v4548
      %v4742 = vunpack.c.l.b16 %v4549
      %v4743 = vunpack.c.l.b16 %v4550
      %v4744 = vunpack.c.l.b16 %v4551
      %v4745 = vunpack.c.l.b16 %v4552
      %v4746 = vunpack.c.l.b16 %v4553
      %v4747 = vunpack.c.l.b16 %v4554
      %v4748 = vunpack.c.l.b16 %v4555
      %v4749 = vunpack.c.l.b16 %v4556
      %v4750 = vunpack.c.l.b16 %v4557
      %v4751 = vpack.c.b16 %v4688, %v4687
      %v4752 = vpack.c.b16 %v4690, %v4689
      %v4753 = vpack.c.b16 %v4692, %v4691
      %v4754 = vpack.c.b16 %v4694, %v4693
      %v4755 = vpack.c.b16 %v4696, %v4695
      %v4756 = vpack.c.b16 %v4698, %v4697
      %v4757 = vpack.c.b16 %v4700, %v4699
      %v4758 = vpack.c.b16 %v4702, %v4701
      %v4759 = vpack.c.b16 %v4704, %v4703
      %v4760 = vpack.c.b16 %v4706, %v4705
      %v4761 = vpack.c.b16 %v4708, %v4707
      %v4762 = vpack.c.b16 %v4710, %v4709
      %v4763 = vpack.c.b16 %v4712, %v4711
      %v4764 = vpack.c.b16 %v4714, %v4713
      %v4765 = vpack.c.b16 %v4716, %v4715
      %v4766 = vpack.c.b16 %v4718, %v4717
      %v4767 = vpack.c.b16 %v4720, %v4719
      %v4768 = vpack.c.b16 %v4722, %v4721
      %v4769 = vpack.c.b16 %v4724, %v4723
      %v4770 = vpack.c.b16 %v4726, %v4725
      %v4771 = vpack.c.b16 %v4728, %v4727
      %v4772 = vpack.c.b16 %v4730, %v4729
      %v4773 = vpack.c.b16 %v4732, %v4731
      %v4774 = vpack.c.b16 %v4734, %v4733
      %v4775 = vpack.c.b16 %v4736, %v4735
      %v4776 = vpack.c.b16 %v4738, %v4737
      %v4777 = vpack.c.b16 %v4740, %v4739
      %v4778 = vpack.c.b16 %v4742, %v4741
      %v4779 = vpack.c.b16 %v4744, %v4743
      %v4780 = vpack.c.b16 %v4746, %v4745
      %v4781 = vpack.c.b16 %v4748, %v4747
      %v4782 = vpack.c.b16 %v4750, %v4749
      %4815 = vmatpush.bf16.msra.mxu0 %v4758
      %4816 = vmatpush.bf16.msra.mxu0 %v4757
      %4817 = vmatpush.bf16.msra.mxu0 %v4756
      %4818 = vmatpush.bf16.msra.mxu0 %v4755
      %4819 = vmatpush.bf16.msra.mxu0 %v4754
      %4820 = vmatpush.bf16.msra.mxu0 %v4753
      %4821 = vmatpush.bf16.msra.mxu0 %v4752
      %4822 = vmatpush.bf16.msra.mxu0 %v4751
      %4823 = vmatmul.bf16.gmra.mxu0 %v4561
      %v4824 = vpop.f32.mrf.mxu0
      %v4825 = vadd.f32 0.0, %v4824
      %v4826 = vpop.f32.mrf.mxu0
      %v4827 = vadd.f32 0.0, %v4826
      %4828 = vmatmul.bf16.gmra.mxu0 %v4572
      %v4829 = vpop.f32.mrf.mxu0
      %v4830 = vadd.f32 0.0, %v4829
      %v4831 = vpop.f32.mrf.mxu0
      %v4832 = vadd.f32 0.0, %v4831
      %4833 = vmatmul.bf16.gmra.mxu0 %v4580
      %v4834 = vpop.f32.mrf.mxu0
      %v4835 = vadd.f32 0.0, %v4834
      %v4836 = vpop.f32.mrf.mxu0
      %v4837 = vadd.f32 0.0, %v4836
      %4838 = vmatmul.bf16.gmra.mxu0 %v4588
      %v4839 = vpop.f32.mrf.mxu0
      %v4840 = vadd.f32 0.0, %v4839
      %v4841 = vpop.f32.mrf.mxu0
      %v4842 = vadd.f32 0.0, %v4841
      %4843 = vmatmul.bf16.gmra.mxu0 %v4596
      %v4844 = vpop.f32.mrf.mxu0
      %v4845 = vadd.f32 0.0, %v4844
      %v4846 = vpop.f32.mrf.mxu0
      %v4847 = vadd.f32 0.0, %v4846
      %4848 = vdwg.mxu0
      %4849 = vmatpush.bf16.msra.mxu0 %v4766
      %4850 = vmatpush.bf16.msra.mxu0 %v4765
      %4851 = vmatpush.bf16.msra.mxu0 %v4764
      %4852 = vmatpush.bf16.msra.mxu0 %v4763
      %4853 = vmatpush.bf16.msra.mxu0 %v4762
      %4854 = vmatpush.bf16.msra.mxu0 %v4761
      %4855 = vmatpush.bf16.msra.mxu0 %v4760
      %4856 = vmatpush.bf16.msra.mxu0 %v4759
      %4857 = vmatmul.bf16.gmra.mxu0 %v4564
      %v4858 = vpop.f32.mrf.mxu0
      %v4859 = vadd.f32 %v4825, %v4858
      %v4860 = vpop.f32.mrf.mxu0
      %v4861 = vadd.f32 %v4827, %v4860
      %4862 = vmatmul.bf16.gmra.mxu0 %v4574
      %v4863 = vpop.f32.mrf.mxu0
      %v4864 = vadd.f32 %v4830, %v4863
      %v4865 = vpop.f32.mrf.mxu0
      %v4866 = vadd.f32 %v4832, %v4865
      %4867 = vmatmul.bf16.gmra.mxu0 %v4582
      %v4868 = vpop.f32.mrf.mxu0
      %v4869 = vadd.f32 %v4835, %v4868
      %v4870 = vpop.f32.mrf.mxu0
      %v4871 = vadd.f32 %v4837, %v4870
      %4872 = vmatmul.bf16.gmra.mxu0 %v4590
      %v4873 = vpop.f32.mrf.mxu0
      %v4874 = vadd.f32 %v4840, %v4873
      %v4875 = vpop.f32.mrf.mxu0
      %v4876 = vadd.f32 %v4842, %v4875
      %4877 = vmatmul.bf16.gmra.mxu0 %v4598
      %v4878 = vpop.f32.mrf.mxu0
      %v4879 = vadd.f32 %v4845, %v4878
      %v4880 = vpop.f32.mrf.mxu0
      %v4881 = vadd.f32 %v4847, %v4880
      %4882 = vdwg.mxu0
      %4883 = vmatpush.bf16.msra.mxu0 %v4774
      %4884 = vmatpush.bf16.msra.mxu0 %v4773
      %4885 = vmatpush.bf16.msra.mxu0 %v4772
      %4886 = vmatpush.bf16.msra.mxu0 %v4771
      %4887 = vmatpush.bf16.msra.mxu0 %v4770
      %4888 = vmatpush.bf16.msra.mxu0 %v4769
      %4889 = vmatpush.bf16.msra.mxu0 %v4768
      %4890 = vmatpush.bf16.msra.mxu0 %v4767
      %4891 = vmatmul.bf16.gmra.mxu0 %v4567
      %v4892 = vpop.f32.mrf.mxu0
      %v4893 = vadd.f32 %v4859, %v4892
      %v4894 = vpop.f32.mrf.mxu0
      %v4895 = vadd.f32 %v4861, %v4894
      %4896 = vmatmul.bf16.gmra.mxu0 %v4576
      %v4897 = vpop.f32.mrf.mxu0
      %v4898 = vadd.f32 %v4864, %v4897
      %v4899 = vpop.f32.mrf.mxu0
      %v4900 = vadd.f32 %v4866, %v4899
      %4901 = vmatmul.bf16.gmra.mxu0 %v4584
      %v4902 = vpop.f32.mrf.mxu0
      %v4903 = vadd.f32 %v4869, %v4902
      %v4904 = vpop.f32.mrf.mxu0
      %v4905 = vadd.f32 %v4871, %v4904
      %4906 = vmatmul.bf16.gmra.mxu0 %v4592
      %v4907 = vpop.f32.mrf.mxu0
      %v4908 = vadd.f32 %v4874, %v4907
      %v4909 = vpop.f32.mrf.mxu0
      %v4910 = vadd.f32 %v4876, %v4909
      %4911 = vmatmul.bf16.gmra.mxu0 %v4600
      %v4912 = vpop.f32.mrf.mxu0
      %v4913 = vadd.f32 %v4879, %v4912
      %v4914 = vpop.f32.mrf.mxu0
      %v4915 = vadd.f32 %v4881, %v4914
      %4916 = vdwg.mxu0
      %4917 = vmatpush.bf16.msra.mxu0 %v4782
      %4918 = vmatpush.bf16.msra.mxu0 %v4781
      %4919 = vmatpush.bf16.msra.mxu0 %v4780
      %4920 = vmatpush.bf16.msra.mxu0 %v4779
      %4921 = vmatpush.bf16.msra.mxu0 %v4778
      %4922 = vmatpush.bf16.msra.mxu0 %v4777
      %4923 = vmatpush.bf16.msra.mxu0 %v4776
      %4924 = vmatpush.bf16.msra.mxu0 %v4775
      %4925 = vmatmul.bf16.gmra.mxu0 %v4570
      %v4926 = vpop.f32.mrf.mxu0
      %v4927 = vadd.f32 %v4893, %v4926
      %v4928 = vpop.f32.mrf.mxu0
      %v4929 = vadd.f32 %v4895, %v4928
      %4930 = vmatmul.bf16.gmra.mxu0 %v4578
      %v4931 = vpop.f32.mrf.mxu0
      %v4932 = vadd.f32 %v4898, %v4931
      %v4933 = vpop.f32.mrf.mxu0
      %v4934 = vadd.f32 %v4900, %v4933
      %4935 = vmatmul.bf16.gmra.mxu0 %v4586
      %v4936 = vpop.f32.mrf.mxu0
      %v4937 = vadd.f32 %v4903, %v4936
      %v4938 = vpop.f32.mrf.mxu0
      %v4939 = vadd.f32 %v4905, %v4938
      %4940 = vmatmul.bf16.gmra.mxu0 %v4594
      %v4941 = vpop.f32.mrf.mxu0
      %v4942 = vadd.f32 %v4908, %v4941
      %v4943 = vpop.f32.mrf.mxu0
      %v4944 = vadd.f32 %v4910, %v4943
      %4945 = vmatmul.bf16.gmra.mxu0 %v4602
      %v4946 = vpop.f32.mrf.mxu0
      %v4947 = vadd.f32 %v4913, %v4946
      %v4948 = vpop.f32.mrf.mxu0
      %v4949 = vadd.f32 %v4915, %v4948
      %4950 = vdwg.mxu0
      %v4951 = vadd.f32 %v4483, %v4927
      %v4952 = vadd.f32 %v4484, %v4929
      %v4953 = vadd.f32 %v4485, %v4932
      %v4954 = vadd.f32 %v4486, %v4934
      %v4955 = vadd.f32 %v4487, %v4937
      %v4956 = vadd.f32 %v4488, %v4939
      %v4957 = vadd.f32 %v4489, %v4942
      %v4958 = vadd.f32 %v4490, %v4944
      %v4959 = vadd.f32 %v4491, %v4947
      %v4960 = vadd.f32 %v4492, %v4949
      %v4961 = vld [vmem:[%s2] sm:$0x1]
      %v4963 = vperm.slane %v4961, 0
      %v4965 = vadd.f32 %v4951, %v4963
      %v4966 = vadd.f32 %v4952, %v4963
      %v4967 = vadd.f32 %v4953, %v4963
      %v4968 = vadd.f32 %v4954, %v4963
      %v4969 = vadd.f32 %v4955, %v4963
      %v4970 = vadd.f32 %v4956, %v4963
      %v4971 = vadd.f32 %v4957, %v4963
      %v4972 = vadd.f32 %v4958, %v4963
      %v4973 = vadd.f32 %v4959, %v4963
      %v4974 = vadd.f32 %v4960, %v4963
      %4975 = vst [vmem:[%s262] sm:$0xff] %v4965
      %4976 = vst [vmem:[%s262 + $0x8] sm:$0xff] %v4966
      %4977 = vst [vmem:[%s262 + $0x10] sm:$0xff] %v4967
      %4978 = vst [vmem:[%s262 + $0x18] sm:$0xff] %v4968
      %4979 = vst [vmem:[%s262 + $0x20] sm:$0xff] %v4969
      %4980 = vst [vmem:[%s262 + $0x28] sm:$0xff] %v4970
      %4981 = vst [vmem:[%s262 + $0x30] sm:$0xff] %v4971
      %4982 = vst [vmem:[%s262 + $0x38] sm:$0xff] %v4972
      %4983 = vst [vmem:[%s262 + $0x40] sm:$0xff] %v4973
      %4984 = vst [vmem:[%s262 + $0x48] sm:$0xff] %v4974
      %v4985 = vld [vmem:[%s3] sm:$0xff]
      %v4986 = vld [vmem:[%s3 + $0x8] sm:$0xff]
      %v4987 = vld [vmem:[%s3 + $0x10] sm:$0xff]
      %v4988 = vld [vmem:[%s3 + $0x18] sm:$0xff]
      %v4989 = vld [vmem:[%s3 + $0x20] sm:$0xff]
      %v4990 = vld [vmem:[%s3 + $0x28] sm:$0xff]
      %v4991 = vld [vmem:[%s3 + $0x30] sm:$0xff]
      %v4992 = vld [vmem:[%s3 + $0x38] sm:$0xff]
      %v4993 = vld [vmem:[%s3 + $0x40] sm:$0xff]
      %v4994 = vld [vmem:[%s3 + $0x48] sm:$0xff]
      %4996 = vset.pattern.permute.xlu0 0
      %4997 = vperm.xlu0 %4996, %v4985
      %v4998 = vpop.permute.xlu0 %4997
      %5001 = vset.pattern.permute.xlu0 0
      %5002 = vperm.xlu0 %5001, %v4986
      %v5003 = vpop.permute.xlu0 %5002
      %5006 = vset.pattern.permute.xlu0 0
      %5007 = vperm.xlu0 %5006, %v4987
      %v5008 = vpop.permute.xlu0 %5007
      %5011 = vset.pattern.permute.xlu0 0
      %5012 = vperm.xlu0 %5011, %v4988
      %v5013 = vpop.permute.xlu0 %5012
      %5016 = vset.pattern.permute.xlu0 0
      %5017 = vperm.xlu0 %5016, %v4989
      %v5018 = vpop.permute.xlu0 %5017
      %5021 = vset.pattern.permute.xlu0 0
      %5022 = vperm.xlu0 %5021, %v4990
      %v5023 = vpop.permute.xlu0 %5022
      %5026 = vset.pattern.permute.xlu0 0
      %5027 = vperm.xlu0 %5026, %v4991
      %v5028 = vpop.permute.xlu0 %5027
      %5031 = vset.pattern.permute.xlu0 0
      %5032 = vperm.xlu0 %5031, %v4992
      %v5033 = vpop.permute.xlu0 %5032
      %5036 = vset.pattern.permute.xlu0 0
      %5037 = vperm.xlu0 %5036, %v4993
      %v5038 = vpop.permute.xlu0 %5037
      %5041 = vset.pattern.permute.xlu0 0
      %5042 = vperm.xlu0 %5041, %v4994
      %v5043 = vpop.permute.xlu0 %5042
      %v5045 = vmul.f32 %v4965, %v4998
      %v5046 = vmul.f32 %v4966, %v5003
      %v5047 = vmul.f32 %v4967, %v5008
      %v5048 = vmul.f32 %v4968, %v5013
      %v5049 = vmul.f32 %v4969, %v5018
      %v5050 = vmul.f32 %v4970, %v5023
      %v5051 = vmul.f32 %v4971, %v5028
      %v5052 = vmul.f32 %v4972, %v5033
      %v5053 = vmul.f32 %v4973, %v5038
      %v5054 = vmul.f32 %v4974, %v5043
      %v5055 = vadd.f32 %v5045, %v5046
      %v5056 = vadd.f32 %v5055, %v5047
      %v5057 = vadd.f32 %v5056, %v5048
      %v5058 = vadd.f32 %v5057, %v5049
      %v5059 = vadd.f32 %v5058, %v5050
      %v5060 = vadd.f32 %v5059, %v5051
      %v5061 = vadd.f32 %v5060, %v5052
      %v5062 = vadd.f32 %v5061, %v5053
      %v5063 = vadd.f32 %v5062, %v5054
      %v5064 = vrot.slane %v5063, 4
      %v5065 = vadd.f32 %v5063, %v5064
      %v5066 = vrot.slane %v5065, 2
      %v5067 = vadd.f32 %v5065, %v5066
      %v5068 = vrot.slane %v5067, 1
      %v5069 = vadd.f32 %v5067, %v5068
      %5070 = vst [vmem:[%s265] sm:$0x1] %v5069
      %v5071 = vmul.f32 %v5045, %v5045
      %v5072 = vmul.f32 %v5046, %v5046
      %v5073 = vmul.f32 %v5047, %v5047
      %v5074 = vmul.f32 %v5048, %v5048
      %v5075 = vmul.f32 %v5049, %v5049
      %v5076 = vmul.f32 %v5050, %v5050
      %v5077 = vmul.f32 %v5051, %v5051
      %v5078 = vmul.f32 %v5052, %v5052
      %v5079 = vmul.f32 %v5053, %v5053
      %v5080 = vmul.f32 %v5054, %v5054
      %v5081 = vadd.f32 %v5071, %v5072
      %v5082 = vadd.f32 %v5081, %v5073
      %v5083 = vadd.f32 %v5082, %v5074
      %v5084 = vadd.f32 %v5083, %v5075
      %v5085 = vadd.f32 %v5084, %v5076
      %v5086 = vadd.f32 %v5085, %v5077
      %v5087 = vadd.f32 %v5086, %v5078
      %v5088 = vadd.f32 %v5087, %v5079
      %v5089 = vadd.f32 %v5088, %v5080
      %v5090 = vrot.slane %v5089, 4
      %v5091 = vadd.f32 %v5089, %v5090
      %v5092 = vrot.slane %v5091, 2
      %v5093 = vadd.f32 %v5091, %v5092
      %v5094 = vrot.slane %v5093, 1
      %v5095 = vadd.f32 %v5093, %v5094
      %5096 = vst [vmem:[%s268] sm:$0x1] %v5095
      %p5097 = scmp.lt.s32.totalorder %s18, 1
      %s5098 = scalar_select %p5097, %s18, 1
      %s5099 = smul.addr %s5098, 10
      %s5100 = smul.addr %s5099, 8
      %s5101 = scalar_lea.vmem %s4, %s5100
      %p5102 = scmp.lt.s32.totalorder %s18, 1
      %s5103 = scalar_select %p5102, %s18, 1
      %s5104 = scalar_lea.vmem %s5, %s5103
      %p5105 = scmp.lt.s32.totalorder %s18, 1
      %s5106 = scalar_select %p5105, %s18, 1
      %s5107 = scalar_lea.vmem %s6, %s5106
      // Predicated region
      $region37: #{decoder_block_forward.4} parent=35 // pred_check
        %p5108 = pneg %p125
      $region38: #{decoder_block_forward.4} parent=35 // pred_check_branch
        %5110 = sbr.rel (%p5108) target = $region40
      $region39: #{decoder_block_forward.4} parent=35 // pred_region
        _
      $region40: #{decoder_block_forward.4} parent=35 // pred_fallthru
        _
      // Predicated region
      $region41: #{decoder_block_forward.4} parent=35 // pred_check
        %p5111 = pneg %p151
      $region42: #{decoder_block_forward.4} parent=35 // pred_check_branch
        %5113 = sbr.rel (%p5111) target = $region44
      $region43: #{decoder_block_forward.4} parent=35 // pred_region
        _
      $region44: #{decoder_block_forward.4} parent=35 // pred_fallthru
        _
      // Predicated region
      $region45: #{decoder_block_forward.4} parent=35 // pred_check
        %p5114 = pneg %p177
      $region46: #{decoder_block_forward.4} parent=35 // pred_check_branch
        %5116 = sbr.rel (%p5114) target = $region48
      $region47: #{decoder_block_forward.4} parent=35 // pred_region
        _
      $region48: #{decoder_block_forward.4} parent=35 // pred_fallthru
        _
    $region36: #{decoder_block_forward.4} parent=5 // pred_fallthru
      _
    %p5117 = scmp.le.s32.totalorder 2, %s13
    // Predicated region
    $region49: #{decoder_block_forward.4} parent=5 // pred_check
      %p5118 = pneg %p5117
    $region50: #{decoder_block_forward.4} parent=5 // pred_check_branch
      %5120 = sbr.rel (%p5118) target = $region52
    $region51: #{decoder_block_forward.4} parent=5 // pred_region
      %s5121 = ssub.s32 %s13, 2
      // Predicated region
      $region53: #{decoder_block_forward.4} parent=51 // pred_check
        %p5122 = pneg %p131
      $region54: #{decoder_block_forward.4} parent=51 // pred_check_branch
        %5124 = sbr.rel (%p5122) target = $region56
      $region55: #{decoder_block_forward.4} parent=51 // pred_region
        %p5125 = scmp.lt.s32.totalorder %s19, 1
        %s5126 = scalar_select %p5125, %s19, 1
        %s5127 = smul.addr %s5126, 10
        %s5128 = smul.addr %s5127, 8
        %s5129 = scalar_lea.vmem %s4, %s5128
      $region56: #{decoder_block_forward.4} parent=51 // pred_fallthru
        _
      // Predicated region
      $region57: #{decoder_block_forward.4} parent=51 // pred_check
        %p5130 = pneg %p157
      $region58: #{decoder_block_forward.4} parent=51 // pred_check_branch
        %5132 = sbr.rel (%p5130) target = $region60
      $region59: #{decoder_block_forward.4} parent=51 // pred_region
        %p5133 = scmp.lt.s32.totalorder %s19, 1
        %s5134 = scalar_select %p5133, %s19, 1
        %s5135 = scalar_lea.vmem %s5, %s5134
      $region60: #{decoder_block_forward.4} parent=51 // pred_fallthru
        _
      // Predicated region
      $region61: #{decoder_block_forward.4} parent=51 // pred_check
        %p5136 = pneg %p183
      $region62: #{decoder_block_forward.4} parent=51 // pred_check_branch
        %5138 = sbr.rel (%p5136) target = $region64
      $region63: #{decoder_block_forward.4} parent=51 // pred_region
        %p5139 = scmp.lt.s32.totalorder %s19, 1
        %s5140 = scalar_select %p5139, %s19, 1
        %s5141 = scalar_lea.vmem %s6, %s5140
      $region64: #{decoder_block_forward.4} parent=51 // pred_fallthru
        _
    $region52: #{decoder_block_forward.4} parent=5 // pred_fallthru
      _
  $region6: #{decoder_block_forward.4} parent=0 // loop_footer
    %s17 = sadd.s32 1, %s13
  $region7: #{decoder_block_forward.4} parent=0 // loop_footer_branch
    %12 = sbr.rel target = $region3
  $region8: #{decoder_block_forward.4} parent=0 // loop_exit
    _

// kernel: decoder_block_forward.7
$region0: #{decoder_block_forward.7}
  #allocation0 [shape = 'u32[]', space=smem, size = 0x4, offset = 0x4, fixed_abs, tag = 'smem constant byte address 0x4 - core index']
  #allocation1 [shape = 'u32[72,128]{1,0:T(1,128)}', space=vmem, size = 0x9000, scoped, tag = 'internal scratch']
  %s0 = inlined_call_operand.vmem [shape: f32[2,288,256], index: 0, kind: input, shape index: {}]
  %s1 = inlined_call_operand.vmem [shape: f32[1,256], index: 1, kind: input, shape index: {}]
  %s2 = inlined_call_operand.vmem [shape: f32[1,256], index: 2, kind: input, shape index: {}]
  %s3 = inlined_call_operand.vmem [shape: f32[2,288,256], index: 3, kind: output, shape index: {}]
  %s4 = sld [smem:[#allocation0]]
  $region45: #{decoder_block_forward.7} parent=0
    _
  %s6 = ssub.s32 1, %s4
  %s7 = scalar_select 0, %s6, %s4
  loop: start=0, step=1, limit=4
  $region2: #{decoder_block_forward.7} parent=0 // loop_pre_header
    _
  $region3: #{decoder_block_forward.7} parent=0 // loop_header
    %s9 = sphi 0, %s13
    %p10 = scmp.ge.s32.totalorder %s9, 4
    %s19 = sphi 0, %s21
    %s22 = sphi 0, %s19
    %s23 = sphi 0, %s22
    %s39 = sphi 0, %s23
    %s43 = sphi 0, %s43
    %s45 = sphi 0, %s43
    %s46 = sphi 0, %s45
    %s60 = sphi 0, %s46
    %s64 = sphi 0, %s64
    %s66 = sphi 0, %s64
    %s67 = sphi 0, %s66
    %s81 = sphi 0, %s67
    %s87 = sphi 0, %s89
    %s90 = sphi 0, %s87
    %s91 = sphi 0, %s90
    %s107 = sphi 0, %s91
  $region4: #{decoder_block_forward.7} parent=0 // loop_header_branch
    %12 = sbr.rel (%p10) target = $region8
  $region5: #{decoder_block_forward.7} parent=0 // loop_body
    %s14 = ssub.s32 %s9, 1
    %s15 = ssub.s32 %s9, 2
    %s16 = sadd.s32 %s9, 1
    %s17 = ssub.s32 %s9, %s16
    %p18 = scmp.eq.s32.totalorder %s17, 0
    %s20 = sadd.s32 %s19, 1
    %s21 = scalar_select %p18, %s19, %s20
    %p24 = pneg %p18
    %p25 = scmp.eq.s32.totalorder %s9, 1
    %p26 = por %p24, %p25
    %p27 = scmp.ne.s32.totalorder %s19, %s22
    %p28 = scmp.eq.s32.totalorder %s9, 0
    %p29 = por %p27, %p28
    %p30 = scmp.ne.s32.totalorder %s19, %s22
    %p31 = scmp.eq.s32.totalorder %s14, 1
    %p32 = por %p30, %p31
    %p33 = scmp.ne.s32.totalorder %s22, %s23
    %p34 = scmp.eq.s32.totalorder %s14, 0
    %p35 = por %p33, %p34
    %p36 = scmp.ne.s32.totalorder %s22, %s23
    %p37 = scmp.eq.s32.totalorder %s15, 1
    %p38 = por %p36, %p37
    %p40 = scmp.ne.s32.totalorder %s23, %s39
    %p41 = scmp.eq.s32.totalorder %s15, 0
    %p42 = por %p40, %p41
    %s44 = sadd.s32 %s43, 1
    %p47 = scmp.eq.s32.totalorder %s9, 1
    %p48 = scmp.ne.s32.totalorder %s43, %s45
    %p49 = scmp.eq.s32.totalorder %s9, 0
    %p50 = por %p48, %p49
    %p51 = scmp.ne.s32.totalorder %s43, %s45
    %p52 = scmp.eq.s32.totalorder %s14, 1
    %p53 = por %p51, %p52
    %p54 = scmp.ne.s32.totalorder %s45, %s46
    %p55 = scmp.eq.s32.totalorder %s14, 0
    %p56 = por %p54, %p55
    %p57 = scmp.ne.s32.totalorder %s45, %s46
    %p58 = scmp.eq.s32.totalorder %s15, 1
    %p59 = por %p57, %p58
    %p61 = scmp.ne.s32.totalorder %s46, %s60
    %p62 = scmp.eq.s32.totalorder %s15, 0
    %p63 = por %p61, %p62
    %s65 = sadd.s32 %s64, 1
    %p68 = scmp.eq.s32.totalorder %s9, 1
    %p69 = scmp.ne.s32.totalorder %s64, %s66
    %p70 = scmp.eq.s32.totalorder %s9, 0
    %p71 = por %p69, %p70
    %p72 = scmp.ne.s32.totalorder %s64, %s66
    %p73 = scmp.eq.s32.totalorder %s14, 1
    %p74 = por %p72, %p73
    %p75 = scmp.ne.s32.totalorder %s66, %s67
    %p76 = scmp.eq.s32.totalorder %s14, 0
    %p77 = por %p75, %p76
    %p78 = scmp.ne.s32.totalorder %s66, %s67
    %p79 = scmp.eq.s32.totalorder %s15, 1
    %p80 = por %p78, %p79
    %p82 = scmp.ne.s32.totalorder %s67, %s81
    %p83 = scmp.eq.s32.totalorder %s15, 0
    %p84 = por %p82, %p83
    %s85 = ssub.s32 %s9, %s16
    %p86 = scmp.eq.s32.totalorder %s85, 0
    %s88 = sadd.s32 %s87, 1
    %s89 = scalar_select %p86, %s87, %s88
    %p92 = pneg %p86
    %p93 = scmp.eq.s32.totalorder %s9, 1
    %p94 = por %p92, %p93
    %p95 = scmp.ne.s32.totalorder %s87, %s90
    %p96 = scmp.eq.s32.totalorder %s9, 0
    %p97 = por %p95, %p96
    %p98 = scmp.ne.s32.totalorder %s87, %s90
    %p99 = scmp.eq.s32.totalorder %s14, 1
    %p100 = por %p98, %p99
    %p101 = scmp.ne.s32.totalorder %s90, %s91
    %p102 = scmp.eq.s32.totalorder %s14, 0
    %p103 = por %p101, %p102
    %p104 = scmp.ne.s32.totalorder %s90, %s91
    %p105 = scmp.eq.s32.totalorder %s15, 1
    %p106 = por %p104, %p105
    %p108 = scmp.ne.s32.totalorder %s91, %s107
    %p109 = scmp.eq.s32.totalorder %s15, 0
    %p110 = por %p108, %p109
    %p111 = scmp.le.s32.totalorder 1, %s9
    %p112 = scmp.lt.s32.totalorder %s9, 3
    %p113 = pnand %p111, %p112
    %p114 = pneg %p113
    // Predicated region
    $region9: #{decoder_block_forward.7} parent=5 // pred_check
      _
    $region10: #{decoder_block_forward.7} parent=5 // pred_check_branch
      %116 = sbr.rel (%p113) target = $region12
    $region11: #{decoder_block_forward.7} parent=5 // pred_region
      %s117 = ssub.s32 %s9, 1
      // Predicated region
      $region13: #{decoder_block_forward.7} parent=11 // pred_check
        %p118 = pneg %p56
      $region14: #{decoder_block_forward.7} parent=11 // pred_check_branch
        %120 = sbr.rel (%p118) target = $region16
      $region15: #{decoder_block_forward.7} parent=11 // pred_region
        _
      $region16: #{decoder_block_forward.7} parent=11 // pred_fallthru
        _
      // Predicated region
      $region17: #{decoder_block_forward.7} parent=11 // pred_check
        %p121 = pneg %p77
      $region18: #{decoder_block_forward.7} parent=11 // pred_check_branch
        %123 = sbr.rel (%p121) target = $region20
      $region19: #{decoder_block_forward.7} parent=11 // pred_region
        _
      $region20: #{decoder_block_forward.7} parent=11 // pred_fallthru
        _
    $region12: #{decoder_block_forward.7} parent=5 // pred_fallthru
      _
    %p124 = scmp.lt.s32.totalorder %s9, 2
    // Predicated region
    $region21: #{decoder_block_forward.7} parent=5 // pred_check
      %p125 = pneg %p124
    $region22: #{decoder_block_forward.7} parent=5 // pred_check_branch
      %127 = sbr.rel (%p125) target = $region24
    $region23: #{decoder_block_forward.7} parent=5 // pred_region
      // Predicated region
      $region25: #{decoder_block_forward.7} parent=23 // pred_check
        %p128 = pneg %p29
      $region26: #{decoder_block_forward.7} parent=23 // pred_check_branch
        %130 = sbr.rel (%p128) target = $region28
      $region27: #{decoder_block_forward.7} parent=23 // pred_region
        %p131 = scmp.lt.s32.totalorder %s9, 1
        %s132 = scalar_select %p131, %s9, 1
        %s133 = smul.addr %s132, 72
        %s134 = smul.addr %s133, 8
        %s135 = scalar_lea.vmem %s0, %s134
      $region28: #{decoder_block_forward.7} parent=23 // pred_fallthru
        _
    $region24: #{decoder_block_forward.7} parent=5 // pred_fallthru
      _
    %p136 = scmp.le.s32.totalorder 1, %s9
    %p137 = scmp.lt.s32.totalorder %s9, 3
    %p138 = pnand %p136, %p137
    %p139 = pneg %p138
    // Predicated region
    $region29: #{decoder_block_forward.7} parent=5 // pred_check
      _
    $region30: #{decoder_block_forward.7} parent=5 // pred_check_branch
      %141 = sbr.rel (%p138) target = $region32
    $region31: #{decoder_block_forward.7} parent=5 // pred_region
      %s142 = ssub.s32 %s9, 1
      %p143 = scmp.lt.s32.totalorder %s14, 1
      %s144 = scalar_select %p143, %s14, 1
      %s145 = smul.addr %s144, 72
      %s146 = smul.addr %s145, 8
      %s147 = scalar_lea.vmem %s0, %s146
      %p148 = pneg %p35
      %p149 = pneg %p32
      %p150 = pneg %p56
      %p151 = pneg %p53
      %p152 = pneg %p77
      %p153 = pneg %p74
      %p154 = pneg %p103
      %p155 = pneg %p100
      %p156 = scmp.lt.s32.totalorder %s14, 1
      %s157 = scalar_select %p156, %s14, 1
      %s158 = smul.addr %s157, 72
      %s159 = smul.addr %s158, 8
      %s160 = scalar_lea.vmem %s3, %s159
      %p161 = scmp.lt.s32.totalorder %s14, 1
      %s162 = scalar_select %p161, %s14, 1
      %s163 = smul.addr %s162, 72
      %s164 = smul.addr %s163, 8
      %s165 = scalar_lea.vmem %s0, %s164
      %p166 = scmp.lt.s32.totalorder %s14, 1
      %s167 = scalar_select %p166, %s14, 1
      %s168 = smul.addr %s167, 72
      %s169 = smul.addr %s168, 8
      %s170 = scalar_lea.vmem %s3, %s169
      %v171 = vld [vmem:[%s165] sm:$0xff]
      %v172 = vld [vmem:[%s165 + $0x8] sm:$0xff]
      %v173 = vld [vmem:[%s165 + $0x10] sm:$0xff]
      %v174 = vld [vmem:[%s165 + $0x18] sm:$0xff]
      %v175 = vld [vmem:[%s165 + $0x20] sm:$0xff]
      %v176 = vld [vmem:[%s165 + $0x28] sm:$0xff]
      %v177 = vld [vmem:[%s165 + $0x30] sm:$0xff]
      %v178 = vld [vmem:[%s165 + $0x38] sm:$0xff]
      %v179 = vld [vmem:[%s165 + $0x40] sm:$0xff]
      %v180 = vld [vmem:[%s165 + $0x48] sm:$0xff]
      %v181 = vld [vmem:[%s165 + $0x50] sm:$0xff]
      %v182 = vld [vmem:[%s165 + $0x58] sm:$0xff]
      %v183 = vld [vmem:[%s165 + $0x60] sm:$0xff]
      %v184 = vld [vmem:[%s165 + $0x68] sm:$0xff]
      %v185 = vld [vmem:[%s165 + $0x70] sm:$0xff]
      %v186 = vld [vmem:[%s165 + $0x78] sm:$0xff]
      %v187 = vld [vmem:[%s165 + $0x80] sm:$0xff]
      %v188 = vld [vmem:[%s165 + $0x88] sm:$0xff]
      %v189 = vld [vmem:[%s165 + $0x90] sm:$0xff]
      %v190 = vld [vmem:[%s165 + $0x98] sm:$0xff]
      %v191 = vld [vmem:[%s165 + $0xa0] sm:$0xff]
      %v192 = vld [vmem:[%s165 + $0xa8] sm:$0xff]
      %v193 = vld [vmem:[%s165 + $0xb0] sm:$0xff]
      %v194 = vld [vmem:[%s165 + $0xb8] sm:$0xff]
      %v195 = vld [vmem:[%s165 + $0xc0] sm:$0xff]
      %v196 = vld [vmem:[%s165 + $0xc8] sm:$0xff]
      %v197 = vld [vmem:[%s165 + $0xd0] sm:$0xff]
      %v198 = vld [vmem:[%s165 + $0xd8] sm:$0xff]
      %v199 = vld [vmem:[%s165 + $0xe0] sm:$0xff]
      %v200 = vld [vmem:[%s165 + $0xe8] sm:$0xff]
      %v201 = vld [vmem:[%s165 + $0xf0] sm:$0xff]
      %v202 = vld [vmem:[%s165 + $0xf8] sm:$0xff]
      %v203 = vld [vmem:[%s165 + $0x100] sm:$0xff]
      %v204 = vld [vmem:[%s165 + $0x108] sm:$0xff]
      %v205 = vld [vmem:[%s165 + $0x110] sm:$0xff]
      %v206 = vld [vmem:[%s165 + $0x118] sm:$0xff]
      %v207 = vld [vmem:[%s165 + $0x120] sm:$0xff]
      %v208 = vld [vmem:[%s165 + $0x128] sm:$0xff]
      %v209 = vld [vmem:[%s165 + $0x130] sm:$0xff]
      %v210 = vld [vmem:[%s165 + $0x138] sm:$0xff]
      %v211 = vld [vmem:[%s165 + $0x140] sm:$0xff]
      %v212 = vld [vmem:[%s165 + $0x148] sm:$0xff]
      %v213 = vld [vmem:[%s165 + $0x150] sm:$0xff]
      %v214 = vld [vmem:[%s165 + $0x158] sm:$0xff]
      %v215 = vld [vmem:[%s165 + $0x160] sm:$0xff]
      %v216 = vld [vmem:[%s165 + $0x168] sm:$0xff]
      %v217 = vld [vmem:[%s165 + $0x170] sm:$0xff]
      %v218 = vld [vmem:[%s165 + $0x178] sm:$0xff]
      %v219 = vld [vmem:[%s165 + $0x180] sm:$0xff]
      %v220 = vld [vmem:[%s165 + $0x188] sm:$0xff]
      %v221 = vld [vmem:[%s165 + $0x190] sm:$0xff]
      %v222 = vld [vmem:[%s165 + $0x198] sm:$0xff]
      %v223 = vld [vmem:[%s165 + $0x1a0] sm:$0xff]
      %v224 = vld [vmem:[%s165 + $0x1a8] sm:$0xff]
      %v225 = vld [vmem:[%s165 + $0x1b0] sm:$0xff]
      %v226 = vld [vmem:[%s165 + $0x1b8] sm:$0xff]
      %v227 = vld [vmem:[%s165 + $0x1c0] sm:$0xff]
      %v228 = vld [vmem:[%s165 + $0x1c8] sm:$0xff]
      %v229 = vld [vmem:[%s165 + $0x1d0] sm:$0xff]
      %v230 = vld [vmem:[%s165 + $0x1d8] sm:$0xff]
      %v231 = vld [vmem:[%s165 + $0x1e0] sm:$0xff]
      %v232 = vld [vmem:[%s165 + $0x1e8] sm:$0xff]
      %v233 = vld [vmem:[%s165 + $0x1f0] sm:$0xff]
      %v234 = vld [vmem:[%s165 + $0x1f8] sm:$0xff]
      %v235 = vld [vmem:[%s165 + $0x200] sm:$0xff]
      %v236 = vld [vmem:[%s165 + $0x208] sm:$0xff]
      %v237 = vld [vmem:[%s165 + $0x210] sm:$0xff]
      %v238 = vld [vmem:[%s165 + $0x218] sm:$0xff]
      %v239 = vld [vmem:[%s165 + $0x220] sm:$0xff]
      %v240 = vld [vmem:[%s165 + $0x228] sm:$0xff]
      %v241 = vld [vmem:[%s165 + $0x230] sm:$0xff]
      %v242 = vld [vmem:[%s165 + $0x238] sm:$0xff]
      %v243 = vld [vmem:[%s1] sm:$0x3]
      %v245 = vperm.slane %v243, 0
      %v246 = vperm.slane %v243, 1
      %v249 = vmul.f32 %v171, %v245
      %v250 = vmul.f32 %v172, %v246
      %v251 = vmul.f32 %v173, %v245
      %v252 = vmul.f32 %v174, %v246
      %v253 = vmul.f32 %v175, %v245
      %v254 = vmul.f32 %v176, %v246
      %v255 = vmul.f32 %v177, %v245
      %v256 = vmul.f32 %v178, %v246
      %v257 = vmul.f32 %v179, %v245
      %v258 = vmul.f32 %v180, %v246
      %v259 = vmul.f32 %v181, %v245
      %v260 = vmul.f32 %v182, %v246
      %v261 = vmul.f32 %v183, %v245
      %v262 = vmul.f32 %v184, %v246
      %v263 = vmul.f32 %v185, %v245
      %v264 = vmul.f32 %v186, %v246
      %v265 = vmul.f32 %v187, %v245
      %v266 = vmul.f32 %v188, %v246
      %v267 = vmul.f32 %v189, %v245
      %v268 = vmul.f32 %v190, %v246
      %v269 = vmul.f32 %v191, %v245
      %v270 = vmul.f32 %v192, %v246
      %v271 = vmul.f32 %v193, %v245
      %v272 = vmul.f32 %v194, %v246
      %v273 = vmul.f32 %v195, %v245
      %v274 = vmul.f32 %v196, %v246
      %v275 = vmul.f32 %v197, %v245
      %v276 = vmul.f32 %v198, %v246
      %v277 = vmul.f32 %v199, %v245
      %v278 = vmul.f32 %v200, %v246
      %v279 = vmul.f32 %v201, %v245
      %v280 = vmul.f32 %v202, %v246
      %v281 = vmul.f32 %v203, %v245
      %v282 = vmul.f32 %v204, %v246
      %v283 = vmul.f32 %v205, %v245
      %v284 = vmul.f32 %v206, %v246
      %v285 = vmul.f32 %v207, %v245
      %v286 = vmul.f32 %v208, %v246
      %v287 = vmul.f32 %v209, %v245
      %v288 = vmul.f32 %v210, %v246
      %v289 = vmul.f32 %v211, %v245
      %v290 = vmul.f32 %v212, %v246
      %v291 = vmul.f32 %v213, %v245
      %v292 = vmul.f32 %v214, %v246
      %v293 = vmul.f32 %v215, %v245
      %v294 = vmul.f32 %v216, %v246
      %v295 = vmul.f32 %v217, %v245
      %v296 = vmul.f32 %v218, %v246
      %v297 = vmul.f32 %v219, %v245
      %v298 = vmul.f32 %v220, %v246
      %v299 = vmul.f32 %v221, %v245
      %v300 = vmul.f32 %v222, %v246
      %v301 = vmul.f32 %v223, %v245
      %v302 = vmul.f32 %v224, %v246
      %v303 = vmul.f32 %v225, %v245
      %v304 = vmul.f32 %v226, %v246
      %v305 = vmul.f32 %v227, %v245
      %v306 = vmul.f32 %v228, %v246
      %v307 = vmul.f32 %v229, %v245
      %v308 = vmul.f32 %v230, %v246
      %v309 = vmul.f32 %v231, %v245
      %v310 = vmul.f32 %v232, %v246
      %v311 = vmul.f32 %v233, %v245
      %v312 = vmul.f32 %v234, %v246
      %v313 = vmul.f32 %v235, %v245
      %v314 = vmul.f32 %v236, %v246
      %v315 = vmul.f32 %v237, %v245
      %v316 = vmul.f32 %v238, %v246
      %v317 = vmul.f32 %v239, %v245
      %v318 = vmul.f32 %v240, %v246
      %v319 = vmul.f32 %v241, %v245
      %v320 = vmul.f32 %v242, %v246
      %v321 = vld [vmem:[%s2] sm:$0x3]
      %v323 = vperm.slane %v321, 0
      %v324 = vperm.slane %v321, 1
      %v327 = vadd.f32 %v249, %v323
      %v328 = vadd.f32 %v250, %v324
      %v329 = vadd.f32 %v251, %v323
      %v330 = vadd.f32 %v252, %v324
      %v331 = vadd.f32 %v253, %v323
      %v332 = vadd.f32 %v254, %v324
      %v333 = vadd.f32 %v255, %v323
      %v334 = vadd.f32 %v256, %v324
      %v335 = vadd.f32 %v257, %v323
      %v336 = vadd.f32 %v258, %v324
      %v337 = vadd.f32 %v259, %v323
      %v338 = vadd.f32 %v260, %v324
      %v339 = vadd.f32 %v261, %v323
      %v340 = vadd.f32 %v262, %v324
      %v341 = vadd.f32 %v263, %v323
      %v342 = vadd.f32 %v264, %v324
      %v343 = vadd.f32 %v265, %v323
      %v344 = vadd.f32 %v266, %v324
      %v345 = vadd.f32 %v267, %v323
      %v346 = vadd.f32 %v268, %v324
      %v347 = vadd.f32 %v269, %v323
      %v348 = vadd.f32 %v270, %v324
      %v349 = vadd.f32 %v271, %v323
      %v350 = vadd.f32 %v272, %v324
      %v351 = vadd.f32 %v273, %v323
      %v352 = vadd.f32 %v274, %v324
      %v353 = vadd.f32 %v275, %v323
      %v354 = vadd.f32 %v276, %v324
      %v355 = vadd.f32 %v277, %v323
      %v356 = vadd.f32 %v278, %v324
      %v357 = vadd.f32 %v279, %v323
      %v358 = vadd.f32 %v280, %v324
      %v359 = vadd.f32 %v281, %v323
      %v360 = vadd.f32 %v282, %v324
      %v361 = vadd.f32 %v283, %v323
      %v362 = vadd.f32 %v284, %v324
      %v363 = vadd.f32 %v285, %v323
      %v364 = vadd.f32 %v286, %v324
      %v365 = vadd.f32 %v287, %v323
      %v366 = vadd.f32 %v288, %v324
      %v367 = vadd.f32 %v289, %v323
      %v368 = vadd.f32 %v290, %v324
      %v369 = vadd.f32 %v291, %v323
      %v370 = vadd.f32 %v292, %v324
      %v371 = vadd.f32 %v293, %v323
      %v372 = vadd.f32 %v294, %v324
      %v373 = vadd.f32 %v295, %v323
      %v374 = vadd.f32 %v296, %v324
      %v375 = vadd.f32 %v297, %v323
      %v376 = vadd.f32 %v298, %v324
      %v377 = vadd.f32 %v299, %v323
      %v378 = vadd.f32 %v300, %v324
      %v379 = vadd.f32 %v301, %v323
      %v380 = vadd.f32 %v302, %v324
      %v381 = vadd.f32 %v303, %v323
      %v382 = vadd.f32 %v304, %v324
      %v383 = vadd.f32 %v305, %v323
      %v384 = vadd.f32 %v306, %v324
      %v385 = vadd.f32 %v307, %v323
      %v386 = vadd.f32 %v308, %v324
      %v387 = vadd.f32 %v309, %v323
      %v388 = vadd.f32 %v310, %v324
      %v389 = vadd.f32 %v311, %v323
      %v390 = vadd.f32 %v312, %v324
      %v391 = vadd.f32 %v313, %v323
      %v392 = vadd.f32 %v314, %v324
      %v393 = vadd.f32 %v315, %v323
      %v394 = vadd.f32 %v316, %v324
      %v395 = vadd.f32 %v317, %v323
      %v396 = vadd.f32 %v318, %v324
      %v397 = vadd.f32 %v319, %v323
      %v398 = vadd.f32 %v320, %v324
      %v399 = vmax.f32 %v327, 0.0
      %v400 = vmax.f32 %v328, 0.0
      %v401 = vmax.f32 %v329, 0.0
      %v402 = vmax.f32 %v330, 0.0
      %v403 = vmax.f32 %v331, 0.0
      %v404 = vmax.f32 %v332, 0.0
      %v405 = vmax.f32 %v333, 0.0
      %v406 = vmax.f32 %v334, 0.0
      %v407 = vmax.f32 %v335, 0.0
      %v408 = vmax.f32 %v336, 0.0
      %v409 = vmax.f32 %v337, 0.0
      %v410 = vmax.f32 %v338, 0.0
      %v411 = vmax.f32 %v339, 0.0
      %v412 = vmax.f32 %v340, 0.0
      %v413 = vmax.f32 %v341, 0.0
      %v414 = vmax.f32 %v342, 0.0
      %v415 = vmax.f32 %v343, 0.0
      %v416 = vmax.f32 %v344, 0.0
      %v417 = vmax.f32 %v345, 0.0
      %v418 = vmax.f32 %v346, 0.0
      %v419 = vmax.f32 %v347, 0.0
      %v420 = vmax.f32 %v348, 0.0
      %v421 = vmax.f32 %v349, 0.0
      %v422 = vmax.f32 %v350, 0.0
      %v423 = vmax.f32 %v351, 0.0
      %v424 = vmax.f32 %v352, 0.0
      %v425 = vmax.f32 %v353, 0.0
      %v426 = vmax.f32 %v354, 0.0
      %v427 = vmax.f32 %v355, 0.0
      %v428 = vmax.f32 %v356, 0.0
      %v429 = vmax.f32 %v357, 0.0
      %v430 = vmax.f32 %v358, 0.0
      %v431 = vmax.f32 %v359, 0.0
      %v432 = vmax.f32 %v360, 0.0
      %v433 = vmax.f32 %v361, 0.0
      %v434 = vmax.f32 %v362, 0.0
      %v435 = vmax.f32 %v363, 0.0
      %v436 = vmax.f32 %v364, 0.0
      %v437 = vmax.f32 %v365, 0.0
      %v438 = vmax.f32 %v366, 0.0
      %v439 = vmax.f32 %v367, 0.0
      %v440 = vmax.f32 %v368, 0.0
      %v441 = vmax.f32 %v369, 0.0
      %v442 = vmax.f32 %v370, 0.0
      %v443 = vmax.f32 %v371, 0.0
      %v444 = vmax.f32 %v372, 0.0
      %v445 = vmax.f32 %v373, 0.0
      %v446 = vmax.f32 %v374, 0.0
      %v447 = vmax.f32 %v375, 0.0
      %v448 = vmax.f32 %v376, 0.0
      %v449 = vmax.f32 %v377, 0.0
      %v450 = vmax.f32 %v378, 0.0
      %v451 = vmax.f32 %v379, 0.0
      %v452 = vmax.f32 %v380, 0.0
      %v453 = vmax.f32 %v381, 0.0
      %v454 = vmax.f32 %v382, 0.0
      %v455 = vmax.f32 %v383, 0.0
      %v456 = vmax.f32 %v384, 0.0
      %v457 = vmax.f32 %v385, 0.0
      %v458 = vmax.f32 %v386, 0.0
      %v459 = vmax.f32 %v387, 0.0
      %v460 = vmax.f32 %v388, 0.0
      %v461 = vmax.f32 %v389, 0.0
      %v462 = vmax.f32 %v390, 0.0
      %v463 = vmax.f32 %v391, 0.0
      %v464 = vmax.f32 %v392, 0.0
      %v465 = vmax.f32 %v393, 0.0
      %v466 = vmax.f32 %v394, 0.0
      %v467 = vmax.f32 %v395, 0.0
      %v468 = vmax.f32 %v396, 0.0
      %v469 = vmax.f32 %v397, 0.0
      %v470 = vmax.f32 %v398, 0.0
      %471 = vst [vmem:[%s170] sm:$0xff] %v399
      %472 = vst [vmem:[%s170 + $0x8] sm:$0xff] %v400
      %473 = vst [vmem:[%s170 + $0x10] sm:$0xff] %v401
      %474 = vst [vmem:[%s170 + $0x18] sm:$0xff] %v402
      %475 = vst [vmem:[%s170 + $0x20] sm:$0xff] %v403
      %476 = vst [vmem:[%s170 + $0x28] sm:$0xff] %v404
      %477 = vst [vmem:[%s170 + $0x30] sm:$0xff] %v405
      %478 = vst [vmem:[%s170 + $0x38] sm:$0xff] %v406
      %479 = vst [vmem:[%s170 + $0x40] sm:$0xff] %v407
      %480 = vst [vmem:[%s170 + $0x48] sm:$0xff] %v408
      %481 = vst [vmem:[%s170 + $0x50] sm:$0xff] %v409
      %482 = vst [vmem:[%s170 + $0x58] sm:$0xff] %v410
      %483 = vst [vmem:[%s170 + $0x60] sm:$0xff] %v411
      %484 = vst [vmem:[%s170 + $0x68] sm:$0xff] %v412
      %485 = vst [vmem:[%s170 + $0x70] sm:$0xff] %v413
      %486 = vst [vmem:[%s170 + $0x78] sm:$0xff] %v414
      %487 = vst [vmem:[%s170 + $0x80] sm:$0xff] %v415
      %488 = vst [vmem:[%s170 + $0x88] sm:$0xff] %v416
      %489 = vst [vmem:[%s170 + $0x90] sm:$0xff] %v417
      %490 = vst [vmem:[%s170 + $0x98] sm:$0xff] %v418
      %491 = vst [vmem:[%s170 + $0xa0] sm:$0xff] %v419
      %492 = vst [vmem:[%s170 + $0xa8] sm:$0xff] %v420
      %493 = vst [vmem:[%s170 + $0xb0] sm:$0xff] %v421
      %494 = vst [vmem:[%s170 + $0xb8] sm:$0xff] %v422
      %495 = vst [vmem:[%s170 + $0xc0] sm:$0xff] %v423
      %496 = vst [vmem:[%s170 + $0xc8] sm:$0xff] %v424
      %497 = vst [vmem:[%s170 + $0xd0] sm:$0xff] %v425
      %498 = vst [vmem:[%s170 + $0xd8] sm:$0xff] %v426
      %499 = vst [vmem:[%s170 + $0xe0] sm:$0xff] %v427
      %500 = vst [vmem:[%s170 + $0xe8] sm:$0xff] %v428
      %501 = vst [vmem:[%s170 + $0xf0] sm:$0xff] %v429
      %502 = vst [vmem:[%s170 + $0xf8] sm:$0xff] %v430
      %503 = vst [vmem:[%s170 + $0x100] sm:$0xff] %v431
      %504 = vst [vmem:[%s170 + $0x108] sm:$0xff] %v432
      %505 = vst [vmem:[%s170 + $0x110] sm:$0xff] %v433
      %506 = vst [vmem:[%s170 + $0x118] sm:$0xff] %v434
      %507 = vst [vmem:[%s170 + $0x120] sm:$0xff] %v435
      %508 = vst [vmem:[%s170 + $0x128] sm:$0xff] %v436
      %509 = vst [vmem:[%s170 + $0x130] sm:$0xff] %v437
      %510 = vst [vmem:[%s170 + $0x138] sm:$0xff] %v438
      %511 = vst [vmem:[%s170 + $0x140] sm:$0xff] %v439
      %512 = vst [vmem:[%s170 + $0x148] sm:$0xff] %v440
      %513 = vst [vmem:[%s170 + $0x150] sm:$0xff] %v441
      %514 = vst [vmem:[%s170 + $0x158] sm:$0xff] %v442
      %515 = vst [vmem:[%s170 + $0x160] sm:$0xff] %v443
      %516 = vst [vmem:[%s170 + $0x168] sm:$0xff] %v444
      %517 = vst [vmem:[%s170 + $0x170] sm:$0xff] %v445
      %518 = vst [vmem:[%s170 + $0x178] sm:$0xff] %v446
      %519 = vst [vmem:[%s170 + $0x180] sm:$0xff] %v447
      %520 = vst [vmem:[%s170 + $0x188] sm:$0xff] %v448
      %521 = vst [vmem:[%s170 + $0x190] sm:$0xff] %v449
      %522 = vst [vmem:[%s170 + $0x198] sm:$0xff] %v450
      %523 = vst [vmem:[%s170 + $0x1a0] sm:$0xff] %v451
      %524 = vst [vmem:[%s170 + $0x1a8] sm:$0xff] %v452
      %525 = vst [vmem:[%s170 + $0x1b0] sm:$0xff] %v453
      %526 = vst [vmem:[%s170 + $0x1b8] sm:$0xff] %v454
      %527 = vst [vmem:[%s170 + $0x1c0] sm:$0xff] %v455
      %528 = vst [vmem:[%s170 + $0x1c8] sm:$0xff] %v456
      %529 = vst [vmem:[%s170 + $0x1d0] sm:$0xff] %v457
      %530 = vst [vmem:[%s170 + $0x1d8] sm:$0xff] %v458
      %531 = vst [vmem:[%s170 + $0x1e0] sm:$0xff] %v459
      %532 = vst [vmem:[%s170 + $0x1e8] sm:$0xff] %v460
      %533 = vst [vmem:[%s170 + $0x1f0] sm:$0xff] %v461
      %534 = vst [vmem:[%s170 + $0x1f8] sm:$0xff] %v462
      %535 = vst [vmem:[%s170 + $0x200] sm:$0xff] %v463
      %536 = vst [vmem:[%s170 + $0x208] sm:$0xff] %v464
      %537 = vst [vmem:[%s170 + $0x210] sm:$0xff] %v465
      %538 = vst [vmem:[%s170 + $0x218] sm:$0xff] %v466
      %539 = vst [vmem:[%s170 + $0x220] sm:$0xff] %v467
      %540 = vst [vmem:[%s170 + $0x228] sm:$0xff] %v468
      %541 = vst [vmem:[%s170 + $0x230] sm:$0xff] %v469
      %542 = vst [vmem:[%s170 + $0x238] sm:$0xff] %v470
      %p543 = scmp.lt.s32.totalorder %s14, 1
      %s544 = scalar_select %p543, %s14, 1
      %s545 = smul.addr %s544, 72
      %s546 = smul.addr %s545, 8
      %s547 = scalar_lea.vmem %s3, %s546
      // Predicated region
      $region33: #{decoder_block_forward.7} parent=31 // pred_check
        %p548 = pneg %p100
      $region34: #{decoder_block_forward.7} parent=31 // pred_check_branch
        %550 = sbr.rel (%p548) target = $region36
      $region35: #{decoder_block_forward.7} parent=31 // pred_region
        _
      $region36: #{decoder_block_forward.7} parent=31 // pred_fallthru
        _
    $region32: #{decoder_block_forward.7} parent=5 // pred_fallthru
      _
    %p551 = scmp.le.s32.totalorder 2, %s9
    // Predicated region
    $region37: #{decoder_block_forward.7} parent=5 // pred_check
      %p552 = pneg %p551
    $region38: #{decoder_block_forward.7} parent=5 // pred_check_branch
      %554 = sbr.rel (%p552) target = $region40
    $region39: #{decoder_block_forward.7} parent=5 // pred_region
      %s555 = ssub.s32 %s9, 2
      // Predicated region
      $region41: #{decoder_block_forward.7} parent=39 // pred_check
        %p556 = pneg %p106
      $region42: #{decoder_block_forward.7} parent=39 // pred_check_branch
        %558 = sbr.rel (%p556) target = $region44
      $region43: #{decoder_block_forward.7} parent=39 // pred_region
        %p559 = scmp.lt.s32.totalorder %s15, 1
        %s560 = scalar_select %p559, %s15, 1
        %s561 = smul.addr %s560, 72
        %s562 = smul.addr %s561, 8
        %s563 = scalar_lea.vmem %s3, %s562
      $region44: #{decoder_block_forward.7} parent=39 // pred_fallthru
        _
    $region40: #{decoder_block_forward.7} parent=5 // pred_fallthru
      _
  $region6: #{decoder_block_forward.7} parent=0 // loop_footer
    %s13 = sadd.s32 1, %s9
  $region7: #{decoder_block_forward.7} parent=0 // loop_footer_branch
    %8 = sbr.rel target = $region3
  $region8: #{decoder_block_forward.7} parent=0 // loop_exit
    _

// kernel: decoder_block_forward.6
$region0: #{decoder_block_forward.6}
  #allocation0 [shape = 'u32[]', space=smem, size = 0x4, offset = 0x4, fixed_abs, tag = 'smem constant byte address 0x4 - core index']
  #allocation1 [shape = 'u32[72,128]{1,0:T(1,128)}', space=vmem, size = 0x9000, scoped, tag = 'internal scratch']
  %s0 = inlined_call_operand.vmem [shape: bf16[2,328,128], index: 0, kind: input, shape index: {}]
  %s1 = inlined_call_operand.vmem [shape: f32[1,128], index: 1, kind: input, shape index: {}]
  %s2 = inlined_call_operand.vmem [shape: f32[1,128], index: 2, kind: input, shape index: {}]
  %s3 = inlined_call_operand.vmem [shape: f32[328,1], index: 3, kind: input, shape index: {}]
  %s4 = inlined_call_operand.vmem [shape: bf16[9,128,256], index: 4, kind: input, shape index: {}]
  %s5 = inlined_call_operand.vmem [shape: f32[1,256], index: 5, kind: input, shape index: {}]
  %s6 = inlined_call_operand.vmem [shape: f32[288,1], index: 6, kind: input, shape index: {}]
  %s7 = inlined_call_operand.vmem [shape: f32[2,288,256], index: 7, kind: output, shape index: {0}]
  %s8 = inlined_call_operand.vmem [shape: f32[2,1,256], index: 8, kind: output, shape index: {1}]
  %s9 = inlined_call_operand.vmem [shape: f32[2,1,256], index: 9, kind: output, shape index: {2}]
  %10 = xla_tuple %s7, %s8, %s9
  %s11 = sld [smem:[#allocation0]]
  $region77: #{decoder_block_forward.6} parent=0
    _
  %s13 = ssub.s32 1, %s11
  %s14 = scalar_select 0, %s13, %s11
  loop: start=0, step=1, limit=4
  $region2: #{decoder_block_forward.6} parent=0 // loop_pre_header
    _
  $region3: #{decoder_block_forward.6} parent=0 // loop_header
    %s16 = sphi 0, %s20
    %p17 = scmp.ge.s32.totalorder %s16, 4
    %s26 = sphi 0, %s28
    %s29 = sphi 0, %s26
    %s30 = sphi 0, %s29
    %s46 = sphi 0, %s30
    %s50 = sphi 0, %s50
    %s52 = sphi 0, %s50
    %s53 = sphi 0, %s52
    %s67 = sphi 0, %s53
    %s71 = sphi 0, %s71
    %s73 = sphi 0, %s71
    %s74 = sphi 0, %s73
    %s88 = sphi 0, %s74
    %s92 = sphi 0, %s92
    %s94 = sphi 0, %s92
    %s95 = sphi 0, %s94
    %s109 = sphi 0, %s95
    %s113 = sphi 0, %s113
    %s115 = sphi 0, %s113
    %s116 = sphi 0, %s115
    %s130 = sphi 0, %s116
    %s134 = sphi 0, %s134
    %s136 = sphi 0, %s134
    %s137 = sphi 0, %s136
    %s151 = sphi 0, %s137
    %s155 = sphi 0, %s155
    %s157 = sphi 0, %s155
    %s158 = sphi 0, %s157
    %s172 = sphi 0, %s158
    %s178 = sphi 0, %s180
    %s181 = sphi 0, %s178
    %s182 = sphi 0, %s181
    %s198 = sphi 0, %s182
    %s204 = sphi 0, %s206
    %s207 = sphi 0, %s204
    %s208 = sphi 0, %s207
    %s224 = sphi 0, %s208
    %s230 = sphi 0, %s232
    %s233 = sphi 0, %s230
    %s234 = sphi 0, %s233
    %s250 = sphi 0, %s234
  $region4: #{decoder_block_forward.6} parent=0 // loop_header_branch
    %19 = sbr.rel (%p17) target = $region8
  $region5: #{decoder_block_forward.6} parent=0 // loop_body
    %s21 = ssub.s32 %s16, 1
    %s22 = ssub.s32 %s16, 2
    %s23 = sadd.s32 %s16, 1
    %s24 = ssub.s32 %s16, %s23
    %p25 = scmp.eq.s32.totalorder %s24, 0
    %s27 = sadd.s32 %s26, 1
    %s28 = scalar_select %p25, %s26, %s27
    %p31 = pneg %p25
    %p32 = scmp.eq.s32.totalorder %s16, 1
    %p33 = por %p31, %p32
    %p34 = scmp.ne.s32.totalorder %s26, %s29
    %p35 = scmp.eq.s32.totalorder %s16, 0
    %p36 = por %p34, %p35
    %p37 = scmp.ne.s32.totalorder %s26, %s29
    %p38 = scmp.eq.s32.totalorder %s21, 1
    %p39 = por %p37, %p38
    %p40 = scmp.ne.s32.totalorder %s29, %s30
    %p41 = scmp.eq.s32.totalorder %s21, 0
    %p42 = por %p40, %p41
    %p43 = scmp.ne.s32.totalorder %s29, %s30
    %p44 = scmp.eq.s32.totalorder %s22, 1
    %p45 = por %p43, %p44
    %p47 = scmp.ne.s32.totalorder %s30, %s46
    %p48 = scmp.eq.s32.totalorder %s22, 0
    %p49 = por %p47, %p48
    %s51 = sadd.s32 %s50, 1
    %p54 = scmp.eq.s32.totalorder %s16, 1
    %p55 = scmp.ne.s32.totalorder %s50, %s52
    %p56 = scmp.eq.s32.totalorder %s16, 0
    %p57 = por %p55, %p56
    %p58 = scmp.ne.s32.totalorder %s50, %s52
    %p59 = scmp.eq.s32.totalorder %s21, 1
    %p60 = por %p58, %p59
    %p61 = scmp.ne.s32.totalorder %s52, %s53
    %p62 = scmp.eq.s32.totalorder %s21, 0
    %p63 = por %p61, %p62
    %p64 = scmp.ne.s32.totalorder %s52, %s53
    %p65 = scmp.eq.s32.totalorder %s22, 1
    %p66 = por %p64, %p65
    %p68 = scmp.ne.s32.totalorder %s53, %s67
    %p69 = scmp.eq.s32.totalorder %s22, 0
    %p70 = por %p68, %p69
    %s72 = sadd.s32 %s71, 1
    %p75 = scmp.eq.s32.totalorder %s16, 1
    %p76 = scmp.ne.s32.totalorder %s71, %s73
    %p77 = scmp.eq.s32.totalorder %s16, 0
    %p78 = por %p76, %p77
    %p79 = scmp.ne.s32.totalorder %s71, %s73
    %p80 = scmp.eq.s32.totalorder %s21, 1
    %p81 = por %p79, %p80
    %p82 = scmp.ne.s32.totalorder %s73, %s74
    %p83 = scmp.eq.s32.totalorder %s21, 0
    %p84 = por %p82, %p83
    %p85 = scmp.ne.s32.totalorder %s73, %s74
    %p86 = scmp.eq.s32.totalorder %s22, 1
    %p87 = por %p85, %p86
    %p89 = scmp.ne.s32.totalorder %s74, %s88
    %p90 = scmp.eq.s32.totalorder %s22, 0
    %p91 = por %p89, %p90
    %s93 = sadd.s32 %s92, 1
    %p96 = scmp.eq.s32.totalorder %s16, 1
    %p97 = scmp.ne.s32.totalorder %s92, %s94
    %p98 = scmp.eq.s32.totalorder %s16, 0
    %p99 = por %p97, %p98
    %p100 = scmp.ne.s32.totalorder %s92, %s94
    %p101 = scmp.eq.s32.totalorder %s21, 1
    %p102 = por %p100, %p101
    %p103 = scmp.ne.s32.totalorder %s94, %s95
    %p104 = scmp.eq.s32.totalorder %s21, 0
    %p105 = por %p103, %p104
    %p106 = scmp.ne.s32.totalorder %s94, %s95
    %p107 = scmp.eq.s32.totalorder %s22, 1
    %p108 = por %p106, %p107
    %p110 = scmp.ne.s32.totalorder %s95, %s109
    %p111 = scmp.eq.s32.totalorder %s22, 0
    %p112 = por %p110, %p111
    %s114 = sadd.s32 %s113, 1
    %p117 = scmp.eq.s32.totalorder %s16, 1
    %p118 = scmp.ne.s32.totalorder %s113, %s115
    %p119 = scmp.eq.s32.totalorder %s16, 0
    %p120 = por %p118, %p119
    %p121 = scmp.ne.s32.totalorder %s113, %s115
    %p122 = scmp.eq.s32.totalorder %s21, 1
    %p123 = por %p121, %p122
    %p124 = scmp.ne.s32.totalorder %s115, %s116
    %p125 = scmp.eq.s32.totalorder %s21, 0
    %p126 = por %p124, %p125
    %p127 = scmp.ne.s32.totalorder %s115, %s116
    %p128 = scmp.eq.s32.totalorder %s22, 1
    %p129 = por %p127, %p128
    %p131 = scmp.ne.s32.totalorder %s116, %s130
    %p132 = scmp.eq.s32.totalorder %s22, 0
    %p133 = por %p131, %p132
    %s135 = sadd.s32 %s134, 1
    %p138 = scmp.eq.s32.totalorder %s16, 1
    %p139 = scmp.ne.s32.totalorder %s134, %s136
    %p140 = scmp.eq.s32.totalorder %s16, 0
    %p141 = por %p139, %p140
    %p142 = scmp.ne.s32.totalorder %s134, %s136
    %p143 = scmp.eq.s32.totalorder %s21, 1
    %p144 = por %p142, %p143
    %p145 = scmp.ne.s32.totalorder %s136, %s137
    %p146 = scmp.eq.s32.totalorder %s21, 0
    %p147 = por %p145, %p146
    %p148 = scmp.ne.s32.totalorder %s136, %s137
    %p149 = scmp.eq.s32.totalorder %s22, 1
    %p150 = por %p148, %p149
    %p152 = scmp.ne.s32.totalorder %s137, %s151
    %p153 = scmp.eq.s32.totalorder %s22, 0
    %p154 = por %p152, %p153
    %s156 = sadd.s32 %s155, 1
    %p159 = scmp.eq.s32.totalorder %s16, 1
    %p160 = scmp.ne.s32.totalorder %s155, %s157
    %p161 = scmp.eq.s32.totalorder %s16, 0
    %p162 = por %p160, %p161
    %p163 = scmp.ne.s32.totalorder %s155, %s157
    %p164 = scmp.eq.s32.totalorder %s21, 1
    %p165 = por %p163, %p164
    %p166 = scmp.ne.s32.totalorder %s157, %s158
    %p167 = scmp.eq.s32.totalorder %s21, 0
    %p168 = por %p166, %p167
    %p169 = scmp.ne.s32.totalorder %s157, %s158
    %p170 = scmp.eq.s32.totalorder %s22, 1
    %p171 = por %p169, %p170
    %p173 = scmp.ne.s32.totalorder %s158, %s172
    %p174 = scmp.eq.s32.totalorder %s22, 0
    %p175 = por %p173, %p174
    %s176 = ssub.s32 %s16, %s23
    %p177 = scmp.eq.s32.totalorder %s176, 0
    %s179 = sadd.s32 %s178, 1
    %s180 = scalar_select %p177, %s178, %s179
    %p183 = pneg %p177
    %p184 = scmp.eq.s32.totalorder %s16, 1
    %p185 = por %p183, %p184
    %p186 = scmp.ne.s32.totalorder %s178, %s181
    %p187 = scmp.eq.s32.totalorder %s16, 0
    %p188 = por %p186, %p187
    %p189 = scmp.ne.s32.totalorder %s178, %s181
    %p190 = scmp.eq.s32.totalorder %s21, 1
    %p191 = por %p189, %p190
    %p192 = scmp.ne.s32.totalorder %s181, %s182
    %p193 = scmp.eq.s32.totalorder %s21, 0
    %p194 = por %p192, %p193
    %p195 = scmp.ne.s32.totalorder %s181, %s182
    %p196 = scmp.eq.s32.totalorder %s22, 1
    %p197 = por %p195, %p196
    %p199 = scmp.ne.s32.totalorder %s182, %s198
    %p200 = scmp.eq.s32.totalorder %s22, 0
    %p201 = por %p199, %p200
    %s202 = ssub.s32 %s16, %s23
    %p203 = scmp.eq.s32.totalorder %s202, 0
    %s205 = sadd.s32 %s204, 1
    %s206 = scalar_select %p203, %s204, %s205
    %p209 = pneg %p203
    %p210 = scmp.eq.s32.totalorder %s16, 1
    %p211 = por %p209, %p210
    %p212 = scmp.ne.s32.totalorder %s204, %s207
    %p213 = scmp.eq.s32.totalorder %s16, 0
    %p214 = por %p212, %p213
    %p215 = scmp.ne.s32.totalorder %s204, %s207
    %p216 = scmp.eq.s32.totalorder %s21, 1
    %p217 = por %p215, %p216
    %p218 = scmp.ne.s32.totalorder %s207, %s208
    %p219 = scmp.eq.s32.totalorder %s21, 0
    %p220 = por %p218, %p219
    %p221 = scmp.ne.s32.totalorder %s207, %s208
    %p222 = scmp.eq.s32.totalorder %s22, 1
    %p223 = por %p221, %p222
    %p225 = scmp.ne.s32.totalorder %s208, %s224
    %p226 = scmp.eq.s32.totalorder %s22, 0
    %p227 = por %p225, %p226
    %s228 = ssub.s32 %s16, %s23
    %p229 = scmp.eq.s32.totalorder %s228, 0
    %s231 = sadd.s32 %s230, 1
    %s232 = scalar_select %p229, %s230, %s231
    %p235 = pneg %p229
    %p236 = scmp.eq.s32.totalorder %s16, 1
    %p237 = por %p235, %p236
    %p238 = scmp.ne.s32.totalorder %s230, %s233
    %p239 = scmp.eq.s32.totalorder %s16, 0
    %p240 = por %p238, %p239
    %p241 = scmp.ne.s32.totalorder %s230, %s233
    %p242 = scmp.eq.s32.totalorder %s21, 1
    %p243 = por %p241, %p242
    %p244 = scmp.ne.s32.totalorder %s233, %s234
    %p245 = scmp.eq.s32.totalorder %s21, 0
    %p246 = por %p244, %p245
    %p247 = scmp.ne.s32.totalorder %s233, %s234
    %p248 = scmp.eq.s32.totalorder %s22, 1
    %p249 = por %p247, %p248
    %p251 = scmp.ne.s32.totalorder %s234, %s250
    %p252 = scmp.eq.s32.totalorder %s22, 0
    %p253 = por %p251, %p252
    %p254 = scmp.le.s32.totalorder 1, %s16
    %p255 = scmp.lt.s32.totalorder %s16, 3
    %p256 = pnand %p254, %p255
    %p257 = pneg %p256
    // Predicated region
    $region9: #{decoder_block_forward.6} parent=5 // pred_check
      _
    $region10: #{decoder_block_forward.6} parent=5 // pred_check_branch
      %259 = sbr.rel (%p256) target = $region12
    $region11: #{decoder_block_forward.6} parent=5 // pred_region
      %s260 = ssub.s32 %s16, 1
      // Predicated region
      $region13: #{decoder_block_forward.6} parent=11 // pred_check
        %p261 = pneg %p63
      $region14: #{decoder_block_forward.6} parent=11 // pred_check_branch
        %263 = sbr.rel (%p261) target = $region16
      $region15: #{decoder_block_forward.6} parent=11 // pred_region
        _
      $region16: #{decoder_block_forward.6} parent=11 // pred_fallthru
        _
      // Predicated region
      $region17: #{decoder_block_forward.6} parent=11 // pred_check
        %p264 = pneg %p84
      $region18: #{decoder_block_forward.6} parent=11 // pred_check_branch
        %266 = sbr.rel (%p264) target = $region20
      $region19: #{decoder_block_forward.6} parent=11 // pred_region
        _
      $region20: #{decoder_block_forward.6} parent=11 // pred_fallthru
        _
      // Predicated region
      $region21: #{decoder_block_forward.6} parent=11 // pred_check
        %p267 = pneg %p105
      $region22: #{decoder_block_forward.6} parent=11 // pred_check_branch
        %269 = sbr.rel (%p267) target = $region24
      $region23: #{decoder_block_forward.6} parent=11 // pred_region
        _
      $region24: #{decoder_block_forward.6} parent=11 // pred_fallthru
        _
      // Predicated region
      $region25: #{decoder_block_forward.6} parent=11 // pred_check
        %p270 = pneg %p126
      $region26: #{decoder_block_forward.6} parent=11 // pred_check_branch
        %272 = sbr.rel (%p270) target = $region28
      $region27: #{decoder_block_forward.6} parent=11 // pred_region
        _
      $region28: #{decoder_block_forward.6} parent=11 // pred_fallthru
        _
      // Predicated region
      $region29: #{decoder_block_forward.6} parent=11 // pred_check
        %p273 = pneg %p147
      $region30: #{decoder_block_forward.6} parent=11 // pred_check_branch
        %275 = sbr.rel (%p273) target = $region32
      $region31: #{decoder_block_forward.6} parent=11 // pred_region
        _
      $region32: #{decoder_block_forward.6} parent=11 // pred_fallthru
        _
      // Predicated region
      $region33: #{decoder_block_forward.6} parent=11 // pred_check
        %p276 = pneg %p168
      $region34: #{decoder_block_forward.6} parent=11 // pred_check_branch
        %278 = sbr.rel (%p276) target = $region36
      $region35: #{decoder_block_forward.6} parent=11 // pred_region
        _
      $region36: #{decoder_block_forward.6} parent=11 // pred_fallthru
        _
    $region12: #{decoder_block_forward.6} parent=5 // pred_fallthru
      _
    %p279 = scmp.lt.s32.totalorder %s16, 2
    // Predicated region
    $region37: #{decoder_block_forward.6} parent=5 // pred_check
      %p280 = pneg %p279
    $region38: #{decoder_block_forward.6} parent=5 // pred_check_branch
      %282 = sbr.rel (%p280) target = $region40
    $region39: #{decoder_block_forward.6} parent=5 // pred_region
      // Predicated region
      $region41: #{decoder_block_forward.6} parent=39 // pred_check
        %p283 = pneg %p36
      $region42: #{decoder_block_forward.6} parent=39 // pred_check_branch
        %285 = sbr.rel (%p283) target = $region44
      $region43: #{decoder_block_forward.6} parent=39 // pred_region
        %p286 = scmp.lt.s32.totalorder %s16, 1
        %s287 = scalar_select %p286, %s16, 1
        %s288 = smul.addr %s287, 41
        %s289 = smul.addr %s288, 4
        %s290 = scalar_lea.vmem %s0, %s289
      $region44: #{decoder_block_forward.6} parent=39 // pred_fallthru
        _
    $region40: #{decoder_block_forward.6} parent=5 // pred_fallthru
      _
    %p291 = scmp.le.s32.totalorder 1, %s16
    %p292 = scmp.lt.s32.totalorder %s16, 3
    %p293 = pnand %p291, %p292
    %p294 = pneg %p293
    // Predicated region
    $region45: #{decoder_block_forward.6} parent=5 // pred_check
      _
    $region46: #{decoder_block_forward.6} parent=5 // pred_check_branch
      %296 = sbr.rel (%p293) target = $region48
    $region47: #{decoder_block_forward.6} parent=5 // pred_region
      %s297 = ssub.s32 %s16, 1
      %p298 = scmp.lt.s32.totalorder %s21, 1
      %s299 = scalar_select %p298, %s21, 1
      %s300 = smul.addr %s299, 41
      %s301 = smul.addr %s300, 4
      %s302 = scalar_lea.vmem %s0, %s301
      %p303 = pneg %p42
      %p304 = pneg %p39
      %p305 = pneg %p63
      %p306 = pneg %p60
      %p307 = pneg %p84
      %p308 = pneg %p81
      %p309 = pneg %p105
      %p310 = pneg %p102
      %p311 = pneg %p126
      %p312 = pneg %p123
      %p313 = pneg %p147
      %p314 = pneg %p144
      %p315 = pneg %p168
      %p316 = pneg %p165
      %p317 = pneg %p194
      %p318 = pneg %p191
      %p319 = scmp.lt.s32.totalorder %s21, 1
      %s320 = scalar_select %p319, %s21, 1
      %s321 = smul.addr %s320, 72
      %s322 = smul.addr %s321, 8
      %s323 = scalar_lea.vmem %s7, %s322
      %p324 = pneg %p220
      %p325 = pneg %p217
      %p326 = scmp.lt.s32.totalorder %s21, 1
      %s327 = scalar_select %p326, %s21, 1
      %s328 = smul.addr %s327, 2
      %s329 = scalar_lea.vmem %s8, %s328
      %p330 = pneg %p246
      %p331 = pneg %p243
      %p332 = scmp.lt.s32.totalorder %s21, 1
      %s333 = scalar_select %p332, %s21, 1
      %s334 = smul.addr %s333, 2
      %s335 = scalar_lea.vmem %s9, %s334
      %p336 = scmp.lt.s32.totalorder %s21, 1
      %s337 = scalar_select %p336, %s21, 1
      %s338 = smul.addr %s337, 41
      %s339 = smul.addr %s338, 4
      %s340 = scalar_lea.vmem %s0, %s339
      %p341 = scmp.lt.s32.totalorder %s21, 1
      %s342 = scalar_select %p341, %s21, 1
      %s343 = smul.addr %s342, 72
      %s344 = smul.addr %s343, 8
      %s345 = scalar_lea.vmem %s7, %s344
      %p346 = scmp.lt.s32.totalorder %s21, 1
      %s347 = scalar_select %p346, %s21, 1
      %s348 = smul.addr %s347, 2
      %s349 = scalar_lea.vmem %s8, %s348
      %p350 = scmp.lt.s32.totalorder %s21, 1
      %s351 = scalar_select %p350, %s21, 1
      %s352 = smul.addr %s351, 2
      %s353 = scalar_lea.vmem %s9, %s352
      %v354 = vld [vmem:[%s340] sm:$0xf]
      %v355 = vld [vmem:[%s340 + $0x4] sm:$0xf]
      %v356 = vld [vmem:[%s340 + $0x8] sm:$0xf]
      %v357 = vld [vmem:[%s340 + $0xc] sm:$0xf]
      %v358 = vld [vmem:[%s340 + $0x10] sm:$0xf]
      %v359 = vld [vmem:[%s340 + $0x14] sm:$0xf]
      %v360 = vld [vmem:[%s340 + $0x18] sm:$0xf]
      %v361 = vld [vmem:[%s340 + $0x1c] sm:$0xf]
      %v362 = vld [vmem:[%s340 + $0x20] sm:$0xf]
      %v363 = vld [vmem:[%s340 + $0x24] sm:$0xf]
      %v364 = vld [vmem:[%s340 + $0x28] sm:$0xf]
      %v365 = vld [vmem:[%s340 + $0x2c] sm:$0xf]
      %v366 = vld [vmem:[%s340 + $0x30] sm:$0xf]
      %v367 = vld [vmem:[%s340 + $0x34] sm:$0xf]
      %v368 = vld [vmem:[%s340 + $0x38] sm:$0xf]
      %v369 = vld [vmem:[%s340 + $0x3c] sm:$0xf]
      %v370 = vld [vmem:[%s340 + $0x40] sm:$0xf]
      %v371 = vld [vmem:[%s340 + $0x44] sm:$0xf]
      %v372 = vld [vmem:[%s340 + $0x48] sm:$0xf]
      %v373 = vld [vmem:[%s340 + $0x4c] sm:$0xf]
      %v374 = vld [vmem:[%s340 + $0x50] sm:$0xf]
      %v375 = vld [vmem:[%s340 + $0x54] sm:$0xf]
      %v376 = vld [vmem:[%s340 + $0x58] sm:$0xf]
      %v377 = vld [vmem:[%s340 + $0x5c] sm:$0xf]
      %v378 = vld [vmem:[%s340 + $0x60] sm:$0xf]
      %v379 = vld [vmem:[%s340 + $0x64] sm:$0xf]
      %v380 = vld [vmem:[%s340 + $0x68] sm:$0xf]
      %v381 = vld [vmem:[%s340 + $0x6c] sm:$0xf]
      %v382 = vld [vmem:[%s340 + $0x70] sm:$0xf]
      %v383 = vld [vmem:[%s340 + $0x74] sm:$0xf]
      %v384 = vld [vmem:[%s340 + $0x78] sm:$0xf]
      %v385 = vld [vmem:[%s340 + $0x7c] sm:$0xf]
      %v386 = vld [vmem:[%s340 + $0x80] sm:$0xf]
      %v387 = vld [vmem:[%s340 + $0x84] sm:$0xf]
      %v388 = vld [vmem:[%s340 + $0x88] sm:$0xf]
      %v389 = vld [vmem:[%s340 + $0x8c] sm:$0xf]
      %v390 = vld [vmem:[%s340 + $0x90] sm:$0xf]
      %v391 = vld [vmem:[%s340 + $0x94] sm:$0xf]
      %v392 = vld [vmem:[%s340 + $0x98] sm:$0xf]
      %v393 = vld [vmem:[%s340 + $0x9c] sm:$0xf]
      %v394 = vld [vmem:[%s340 + $0xa0] sm:$0xf]
      %v395 = vunpack.c.l.bf16 %v354
      %v396 = vunpack.c.l.bf16 %v355
      %v397 = vunpack.c.l.bf16 %v356
      %v398 = vunpack.c.l.bf16 %v357
      %v399 = vunpack.c.l.bf16 %v358
      %v400 = vunpack.c.l.bf16 %v359
      %v401 = vunpack.c.l.bf16 %v360
      %v402 = vunpack.c.l.bf16 %v361
      %v403 = vunpack.c.l.bf16 %v362
      %v404 = vunpack.c.l.bf16 %v363
      %v405 = vunpack.c.l.bf16 %v364
      %v406 = vunpack.c.l.bf16 %v365
      %v407 = vunpack.c.l.bf16 %v366
      %v408 = vunpack.c.l.bf16 %v367
      %v409 = vunpack.c.l.bf16 %v368
      %v410 = vunpack.c.l.bf16 %v369
      %v411 = vunpack.c.l.bf16 %v370
      %v412 = vunpack.c.l.bf16 %v371
      %v413 = vunpack.c.l.bf16 %v372
      %v414 = vunpack.c.l.bf16 %v373
      %v415 = vunpack.c.l.bf16 %v374
      %v416 = vunpack.c.l.bf16 %v375
      %v417 = vunpack.c.l.bf16 %v376
      %v418 = vunpack.c.l.bf16 %v377
      %v419 = vunpack.c.l.bf16 %v378
      %v420 = vunpack.c.l.bf16 %v379
      %v421 = vunpack.c.l.bf16 %v380
      %v422 = vunpack.c.l.bf16 %v381
      %v423 = vunpack.c.l.bf16 %v382
      %v424 = vunpack.c.l.bf16 %v383
      %v425 = vunpack.c.l.bf16 %v384
      %v426 = vunpack.c.l.bf16 %v385
      %v427 = vunpack.c.l.bf16 %v386
      %v428 = vunpack.c.l.bf16 %v387
      %v429 = vunpack.c.l.bf16 %v388
      %v430 = vunpack.c.l.bf16 %v389
      %v431 = vunpack.c.l.bf16 %v390
      %v432 = vunpack.c.l.bf16 %v391
      %v433 = vunpack.c.l.bf16 %v392
      %v434 = vunpack.c.l.bf16 %v393
      %v435 = vunpack.c.l.bf16 %v394
      %v436 = vld [vmem:[%s1] sm:$0x1]
      %v438 = vperm.slane %v436, 0
      %v440 = vmul.f32 %v395, %v438
      %v441 = vmul.f32 %v396, %v438
      %v442 = vmul.f32 %v397, %v438
      %v443 = vmul.f32 %v398, %v438
      %v444 = vmul.f32 %v399, %v438
      %v445 = vmul.f32 %v400, %v438
      %v446 = vmul.f32 %v401, %v438
      %v447 = vmul.f32 %v402, %v438
      %v448 = vmul.f32 %v403, %v438
      %v449 = vmul.f32 %v404, %v438
      %v450 = vmul.f32 %v405, %v438
      %v451 = vmul.f32 %v406, %v438
      %v452 = vmul.f32 %v407, %v438
      %v453 = vmul.f32 %v408, %v438
      %v454 = vmul.f32 %v409, %v438
      %v455 = vmul.f32 %v410, %v438
      %v456 = vmul.f32 %v411, %v438
      %v457 = vmul.f32 %v412, %v438
      %v458 = vmul.f32 %v413, %v438
      %v459 = vmul.f32 %v414, %v438
      %v460 = vmul.f32 %v415, %v438
      %v461 = vmul.f32 %v416, %v438
      %v462 = vmul.f32 %v417, %v438
      %v463 = vmul.f32 %v418, %v438
      %v464 = vmul.f32 %v419, %v438
      %v465 = vmul.f32 %v420, %v438
      %v466 = vmul.f32 %v421, %v438
      %v467 = vmul.f32 %v422, %v438
      %v468 = vmul.f32 %v423, %v438
      %v469 = vmul.f32 %v424, %v438
      %v470 = vmul.f32 %v425, %v438
      %v471 = vmul.f32 %v426, %v438
      %v472 = vmul.f32 %v427, %v438
      %v473 = vmul.f32 %v428, %v438
      %v474 = vmul.f32 %v429, %v438
      %v475 = vmul.f32 %v430, %v438
      %v476 = vmul.f32 %v431, %v438
      %v477 = vmul.f32 %v432, %v438
      %v478 = vmul.f32 %v433, %v438
      %v479 = vmul.f32 %v434, %v438
      %v480 = vmul.f32 %v435, %v438
      %v481 = vld [vmem:[%s2] sm:$0x1]
      %v483 = vperm.slane %v481, 0
      %v485 = vadd.f32 %v440, %v483
      %v486 = vadd.f32 %v441, %v483
      %v487 = vadd.f32 %v442, %v483
      %v488 = vadd.f32 %v443, %v483
      %v489 = vadd.f32 %v444, %v483
      %v490 = vadd.f32 %v445, %v483
      %v491 = vadd.f32 %v446, %v483
      %v492 = vadd.f32 %v447, %v483
      %v493 = vadd.f32 %v448, %v483
      %v494 = vadd.f32 %v449, %v483
      %v495 = vadd.f32 %v450, %v483
      %v496 = vadd.f32 %v451, %v483
      %v497 = vadd.f32 %v452, %v483
      %v498 = vadd.f32 %v453, %v483
      %v499 = vadd.f32 %v454, %v483
      %v500 = vadd.f32 %v455, %v483
      %v501 = vadd.f32 %v456, %v483
      %v502 = vadd.f32 %v457, %v483
      %v503 = vadd.f32 %v458, %v483
      %v504 = vadd.f32 %v459, %v483
      %v505 = vadd.f32 %v460, %v483
      %v506 = vadd.f32 %v461, %v483
      %v507 = vadd.f32 %v462, %v483
      %v508 = vadd.f32 %v463, %v483
      %v509 = vadd.f32 %v464, %v483
      %v510 = vadd.f32 %v465, %v483
      %v511 = vadd.f32 %v466, %v483
      %v512 = vadd.f32 %v467, %v483
      %v513 = vadd.f32 %v468, %v483
      %v514 = vadd.f32 %v469, %v483
      %v515 = vadd.f32 %v470, %v483
      %v516 = vadd.f32 %v471, %v483
      %v517 = vadd.f32 %v472, %v483
      %v518 = vadd.f32 %v473, %v483
      %v519 = vadd.f32 %v474, %v483
      %v520 = vadd.f32 %v475, %v483
      %v521 = vadd.f32 %v476, %v483
      %v522 = vadd.f32 %v477, %v483
      %v523 = vadd.f32 %v478, %v483
      %v524 = vadd.f32 %v479, %v483
      %v525 = vadd.f32 %v480, %v483
      %v526 = vmax.f32 %v485, 0.0
      %v527 = vmax.f32 %v486, 0.0
      %v528 = vmax.f32 %v487, 0.0
      %v529 = vmax.f32 %v488, 0.0
      %v530 = vmax.f32 %v489, 0.0
      %v531 = vmax.f32 %v490, 0.0
      %v532 = vmax.f32 %v491, 0.0
      %v533 = vmax.f32 %v492, 0.0
      %v534 = vmax.f32 %v493, 0.0
      %v535 = vmax.f32 %v494, 0.0
      %v536 = vmax.f32 %v495, 0.0
      %v537 = vmax.f32 %v496, 0.0
      %v538 = vmax.f32 %v497, 0.0
      %v539 = vmax.f32 %v498, 0.0
      %v540 = vmax.f32 %v499, 0.0
      %v541 = vmax.f32 %v500, 0.0
      %v542 = vmax.f32 %v501, 0.0
      %v543 = vmax.f32 %v502, 0.0
      %v544 = vmax.f32 %v503, 0.0
      %v545 = vmax.f32 %v504, 0.0
      %v546 = vmax.f32 %v505, 0.0
      %v547 = vmax.f32 %v506, 0.0
      %v548 = vmax.f32 %v507, 0.0
      %v549 = vmax.f32 %v508, 0.0
      %v550 = vmax.f32 %v509, 0.0
      %v551 = vmax.f32 %v510, 0.0
      %v552 = vmax.f32 %v511, 0.0
      %v553 = vmax.f32 %v512, 0.0
      %v554 = vmax.f32 %v513, 0.0
      %v555 = vmax.f32 %v514, 0.0
      %v556 = vmax.f32 %v515, 0.0
      %v557 = vmax.f32 %v516, 0.0
      %v558 = vmax.f32 %v517, 0.0
      %v559 = vmax.f32 %v518, 0.0
      %v560 = vmax.f32 %v519, 0.0
      %v561 = vmax.f32 %v520, 0.0
      %v562 = vmax.f32 %v521, 0.0
      %v563 = vmax.f32 %v522, 0.0
      %v564 = vmax.f32 %v523, 0.0
      %v565 = vmax.f32 %v524, 0.0
      %v566 = vmax.f32 %v525, 0.0
      %v567 = vld [vmem:[%s3] sm:$0xff]
      %v568 = vld [vmem:[%s3 + $0x8] sm:$0xff]
      %v569 = vld [vmem:[%s3 + $0x10] sm:$0xff]
      %v570 = vld [vmem:[%s3 + $0x18] sm:$0xff]
      %v571 = vld [vmem:[%s3 + $0x20] sm:$0xff]
      %v572 = vld [vmem:[%s3 + $0x28] sm:$0xff]
      %v573 = vld [vmem:[%s3 + $0x30] sm:$0xff]
      %v574 = vld [vmem:[%s3 + $0x38] sm:$0xff]
      %v575 = vld [vmem:[%s3 + $0x40] sm:$0xff]
      %v576 = vld [vmem:[%s3 + $0x48] sm:$0xff]
      %v577 = vld [vmem:[%s3 + $0x50] sm:$0xff]
      %v578 = vld [vmem:[%s3 + $0x58] sm:$0xff]
      %v579 = vld [vmem:[%s3 + $0x60] sm:$0xff]
      %v580 = vld [vmem:[%s3 + $0x68] sm:$0xff]
      %v581 = vld [vmem:[%s3 + $0x70] sm:$0xff]
      %v582 = vld [vmem:[%s3 + $0x78] sm:$0xff]
      %v583 = vld [vmem:[%s3 + $0x80] sm:$0xff]
      %v584 = vld [vmem:[%s3 + $0x88] sm:$0xff]
      %v585 = vld [vmem:[%s3 + $0x90] sm:$0xff]
      %v586 = vld [vmem:[%s3 + $0x98] sm:$0xff]
      %v587 = vld [vmem:[%s3 + $0xa0] sm:$0xff]
      %v588 = vld [vmem:[%s3 + $0xa8] sm:$0xff]
      %v589 = vld [vmem:[%s3 + $0xb0] sm:$0xff]
      %v590 = vld [vmem:[%s3 + $0xb8] sm:$0xff]
      %v591 = vld [vmem:[%s3 + $0xc0] sm:$0xff]
      %v592 = vld [vmem:[%s3 + $0xc8] sm:$0xff]
      %v593 = vld [vmem:[%s3 + $0xd0] sm:$0xff]
      %v594 = vld [vmem:[%s3 + $0xd8] sm:$0xff]
      %v595 = vld [vmem:[%s3 + $0xe0] sm:$0xff]
      %v596 = vld [vmem:[%s3 + $0xe8] sm:$0xff]
      %v597 = vld [vmem:[%s3 + $0xf0] sm:$0xff]
      %v598 = vld [vmem:[%s3 + $0xf8] sm:$0xff]
      %v599 = vld [vmem:[%s3 + $0x100] sm:$0xff]
      %v600 = vld [vmem:[%s3 + $0x108] sm:$0xff]
      %v601 = vld [vmem:[%s3 + $0x110] sm:$0xff]
      %v602 = vld [vmem:[%s3 + $0x118] sm:$0xff]
      %v603 = vld [vmem:[%s3 + $0x120] sm:$0xff]
      %v604 = vld [vmem:[%s3 + $0x128] sm:$0xff]
      %v605 = vld [vmem:[%s3 + $0x130] sm:$0xff]
      %v606 = vld [vmem:[%s3 + $0x138] sm:$0xff]
      %v607 = vld [vmem:[%s3 + $0x140] sm:$0xff]
      %609 = vset.pattern.permute.xlu0 0
      %610 = vperm.xlu0 %609, %v567
      %v611 = vpop.permute.xlu0 %610
      %614 = vset.pattern.permute.xlu0 0
      %615 = vperm.xlu0 %614, %v568
      %v616 = vpop.permute.xlu0 %615
      %619 = vset.pattern.permute.xlu0 0
      %620 = vperm.xlu0 %619, %v569
      %v621 = vpop.permute.xlu0 %620
      %624 = vset.pattern.permute.xlu0 0
      %625 = vperm.xlu0 %624, %v570
      %v626 = vpop.permute.xlu0 %625
      %629 = vset.pattern.permute.xlu0 0
      %630 = vperm.xlu0 %629, %v571
      %v631 = vpop.permute.xlu0 %630
      %634 = vset.pattern.permute.xlu0 0
      %635 = vperm.xlu0 %634, %v572
      %v636 = vpop.permute.xlu0 %635
      %639 = vset.pattern.permute.xlu0 0
      %640 = vperm.xlu0 %639, %v573
      %v641 = vpop.permute.xlu0 %640
      %644 = vset.pattern.permute.xlu0 0
      %645 = vperm.xlu0 %644, %v574
      %v646 = vpop.permute.xlu0 %645
      %649 = vset.pattern.permute.xlu0 0
      %650 = vperm.xlu0 %649, %v575
      %v651 = vpop.permute.xlu0 %650
      %654 = vset.pattern.permute.xlu0 0
      %655 = vperm.xlu0 %654, %v576
      %v656 = vpop.permute.xlu0 %655
      %659 = vset.pattern.permute.xlu0 0
      %660 = vperm.xlu0 %659, %v577
      %v661 = vpop.permute.xlu0 %660
      %664 = vset.pattern.permute.xlu0 0
      %665 = vperm.xlu0 %664, %v578
      %v666 = vpop.permute.xlu0 %665
      %669 = vset.pattern.permute.xlu0 0
      %670 = vperm.xlu0 %669, %v579
      %v671 = vpop.permute.xlu0 %670
      %674 = vset.pattern.permute.xlu0 0
      %675 = vperm.xlu0 %674, %v580
      %v676 = vpop.permute.xlu0 %675
      %679 = vset.pattern.permute.xlu0 0
      %680 = vperm.xlu0 %679, %v581
      %v681 = vpop.permute.xlu0 %680
      %684 = vset.pattern.permute.xlu0 0
      %685 = vperm.xlu0 %684, %v582
      %v686 = vpop.permute.xlu0 %685
      %689 = vset.pattern.permute.xlu0 0
      %690 = vperm.xlu0 %689, %v583
      %v691 = vpop.permute.xlu0 %690
      %694 = vset.pattern.permute.xlu0 0
      %695 = vperm.xlu0 %694, %v584
      %v696 = vpop.permute.xlu0 %695
      %699 = vset.pattern.permute.xlu0 0
      %700 = vperm.xlu0 %699, %v585
      %v701 = vpop.permute.xlu0 %700
      %704 = vset.pattern.permute.xlu0 0
      %705 = vperm.xlu0 %704, %v586
      %v706 = vpop.permute.xlu0 %705
      %709 = vset.pattern.permute.xlu0 0
      %710 = vperm.xlu0 %709, %v587
      %v711 = vpop.permute.xlu0 %710
      %714 = vset.pattern.permute.xlu0 0
      %715 = vperm.xlu0 %714, %v588
      %v716 = vpop.permute.xlu0 %715
      %719 = vset.pattern.permute.xlu0 0
      %720 = vperm.xlu0 %719, %v589
      %v721 = vpop.permute.xlu0 %720
      %724 = vset.pattern.permute.xlu0 0
      %725 = vperm.xlu0 %724, %v590
      %v726 = vpop.permute.xlu0 %725
      %729 = vset.pattern.permute.xlu0 0
      %730 = vperm.xlu0 %729, %v591
      %v731 = vpop.permute.xlu0 %730
      %734 = vset.pattern.permute.xlu0 0
      %735 = vperm.xlu0 %734, %v592
      %v736 = vpop.permute.xlu0 %735
      %739 = vset.pattern.permute.xlu0 0
      %740 = vperm.xlu0 %739, %v593
      %v741 = vpop.permute.xlu0 %740
      %744 = vset.pattern.permute.xlu0 0
      %745 = vperm.xlu0 %744, %v594
      %v746 = vpop.permute.xlu0 %745
      %749 = vset.pattern.permute.xlu0 0
      %750 = vperm.xlu0 %749, %v595
      %v751 = vpop.permute.xlu0 %750
      %754 = vset.pattern.permute.xlu0 0
      %755 = vperm.xlu0 %754, %v596
      %v756 = vpop.permute.xlu0 %755
      %759 = vset.pattern.permute.xlu0 0
      %760 = vperm.xlu0 %759, %v597
      %v761 = vpop.permute.xlu0 %760
      %764 = vset.pattern.permute.xlu0 0
      %765 = vperm.xlu0 %764, %v598
      %v766 = vpop.permute.xlu0 %765
      %769 = vset.pattern.permute.xlu0 0
      %770 = vperm.xlu0 %769, %v599
      %v771 = vpop.permute.xlu0 %770
      %774 = vset.pattern.permute.xlu0 0
      %775 = vperm.xlu0 %774, %v600
      %v776 = vpop.permute.xlu0 %775
      %779 = vset.pattern.permute.xlu0 0
      %780 = vperm.xlu0 %779, %v601
      %v781 = vpop.permute.xlu0 %780
      %784 = vset.pattern.permute.xlu0 0
      %785 = vperm.xlu0 %784, %v602
      %v786 = vpop.permute.xlu0 %785
      %789 = vset.pattern.permute.xlu0 0
      %790 = vperm.xlu0 %789, %v603
      %v791 = vpop.permute.xlu0 %790
      %794 = vset.pattern.permute.xlu0 0
      %795 = vperm.xlu0 %794, %v604
      %v796 = vpop.permute.xlu0 %795
      %799 = vset.pattern.permute.xlu0 0
      %800 = vperm.xlu0 %799, %v605
      %v801 = vpop.permute.xlu0 %800
      %804 = vset.pattern.permute.xlu0 0
      %805 = vperm.xlu0 %804, %v606
      %v806 = vpop.permute.xlu0 %805
      %809 = vset.pattern.permute.xlu0 0
      %810 = vperm.xlu0 %809, %v607
      %v811 = vpop.permute.xlu0 %810
      %v813 = vmul.f32 %v526, %v611
      %v814 = vmul.f32 %v527, %v616
      %v815 = vmul.f32 %v528, %v621
      %v816 = vmul.f32 %v529, %v626
      %v817 = vmul.f32 %v530, %v631
      %v818 = vmul.f32 %v531, %v636
      %v819 = vmul.f32 %v532, %v641
      %v820 = vmul.f32 %v533, %v646
      %v821 = vmul.f32 %v534, %v651
      %v822 = vmul.f32 %v535, %v656
      %v823 = vmul.f32 %v536, %v661
      %v824 = vmul.f32 %v537, %v666
      %v825 = vmul.f32 %v538, %v671
      %v826 = vmul.f32 %v539, %v676
      %v827 = vmul.f32 %v540, %v681
      %v828 = vmul.f32 %v541, %v686
      %v829 = vmul.f32 %v542, %v691
      %v830 = vmul.f32 %v543, %v696
      %v831 = vmul.f32 %v544, %v701
      %v832 = vmul.f32 %v545, %v706
      %v833 = vmul.f32 %v546, %v711
      %v834 = vmul.f32 %v547, %v716
      %v835 = vmul.f32 %v548, %v721
      %v836 = vmul.f32 %v549, %v726
      %v837 = vmul.f32 %v550, %v731
      %v838 = vmul.f32 %v551, %v736
      %v839 = vmul.f32 %v552, %v741
      %v840 = vmul.f32 %v553, %v746
      %v841 = vmul.f32 %v554, %v751
      %v842 = vmul.f32 %v555, %v756
      %v843 = vmul.f32 %v556, %v761
      %v844 = vmul.f32 %v557, %v766
      %v845 = vmul.f32 %v558, %v771
      %v846 = vmul.f32 %v559, %v776
      %v847 = vmul.f32 %v560, %v781
      %v848 = vmul.f32 %v561, %v786
      %v849 = vmul.f32 %v562, %v791
      %v850 = vmul.f32 %v563, %v796
      %v851 = vmul.f32 %v564, %v801
      %v852 = vmul.f32 %v565, %v806
      %v853 = vmul.f32 %v566, %v811
      %v854 = vpack.c.bf16 %v813, %v813
      %v855 = vpack.c.bf16 %v814, %v814
      %v856 = vpack.c.bf16 %v815, %v815
      %v857 = vpack.c.bf16 %v816, %v816
      %v858 = vpack.c.bf16 %v817, %v817
      %v859 = vpack.c.bf16 %v818, %v818
      %v860 = vpack.c.bf16 %v819, %v819
      %v861 = vpack.c.bf16 %v820, %v820
      %v862 = vpack.c.bf16 %v821, %v821
      %v863 = vpack.c.bf16 %v822, %v822
      %v864 = vpack.c.bf16 %v823, %v823
      %v865 = vpack.c.bf16 %v824, %v824
      %v866 = vpack.c.bf16 %v825, %v825
      %v867 = vpack.c.bf16 %v826, %v826
      %v868 = vpack.c.bf16 %v827, %v827
      %v869 = vpack.c.bf16 %v828, %v828
      %v870 = vpack.c.bf16 %v829, %v829
      %v871 = vpack.c.bf16 %v830, %v830
      %v872 = vpack.c.bf16 %v831, %v831
      %v873 = vpack.c.bf16 %v832, %v832
      %v874 = vpack.c.bf16 %v833, %v833
      %v875 = vpack.c.bf16 %v834, %v834
      %v876 = vpack.c.bf16 %v835, %v835
      %v877 = vpack.c.bf16 %v836, %v836
      %v878 = vpack.c.bf16 %v837, %v837
      %v879 = vpack.c.bf16 %v838, %v838
      %v880 = vpack.c.bf16 %v839, %v839
      %v881 = vpack.c.bf16 %v840, %v840
      %v882 = vpack.c.bf16 %v841, %v841
      %v883 = vpack.c.bf16 %v842, %v842
      %v884 = vpack.c.bf16 %v843, %v843
      %v885 = vpack.c.bf16 %v844, %v844
      %v886 = vpack.c.bf16 %v845, %v845
      %v887 = vpack.c.bf16 %v846, %v846
      %v888 = vpack.c.bf16 %v847, %v847
      %v889 = vpack.c.bf16 %v848, %v848
      %v890 = vpack.c.bf16 %v849, %v849
      %v891 = vpack.c.bf16 %v850, %v850
      %v892 = vpack.c.bf16 %v851, %v851
      %v893 = vpack.c.bf16 %v852, %v852
      %v894 = vpack.c.bf16 %v853, %v853
      %v895 = vld [vmem:[%s4] sm:$0xff]
      %v896 = vld [vmem:[%s4 + $0x8] sm:$0xff]
      %v897 = vld [vmem:[%s4 + $0x10] sm:$0xff]
      %v898 = vld [vmem:[%s4 + $0x18] sm:$0xff]
      %v899 = vld [vmem:[%s4 + $0x20] sm:$0xff]
      %v900 = vld [vmem:[%s4 + $0x28] sm:$0xff]
      %v901 = vld [vmem:[%s4 + $0x30] sm:$0xff]
      %v902 = vld [vmem:[%s4 + $0x38] sm:$0xff]
      %v903 = vld [vmem:[%s4 + $0x40] sm:$0xff]
      %v904 = vld [vmem:[%s4 + $0x48] sm:$0xff]
      %v905 = vld [vmem:[%s4 + $0x50] sm:$0xff]
      %v906 = vld [vmem:[%s4 + $0x58] sm:$0xff]
      %v907 = vld [vmem:[%s4 + $0x60] sm:$0xff]
      %v908 = vld [vmem:[%s4 + $0x68] sm:$0xff]
      %v909 = vld [vmem:[%s4 + $0x70] sm:$0xff]
      %v910 = vld [vmem:[%s4 + $0x78] sm:$0xff]
      %s911 = scalar_lea.vmem %s4, 128
      %v912 = vld [vmem:[%s911] sm:$0xff]
      %v913 = vld [vmem:[%s911 + $0x8] sm:$0xff]
      %v914 = vld [vmem:[%s911 + $0x10] sm:$0xff]
      %v915 = vld [vmem:[%s911 + $0x18] sm:$0xff]
      %v916 = vld [vmem:[%s911 + $0x20] sm:$0xff]
      %v917 = vld [vmem:[%s911 + $0x28] sm:$0xff]
      %v918 = vld [vmem:[%s911 + $0x30] sm:$0xff]
      %v919 = vld [vmem:[%s911 + $0x38] sm:$0xff]
      %v920 = vld [vmem:[%s911 + $0x40] sm:$0xff]
      %v921 = vld [vmem:[%s911 + $0x48] sm:$0xff]
      %v922 = vld [vmem:[%s911 + $0x50] sm:$0xff]
      %v923 = vld [vmem:[%s911 + $0x58] sm:$0xff]
      %v924 = vld [vmem:[%s911 + $0x60] sm:$0xff]
      %v925 = vld [vmem:[%s911 + $0x68] sm:$0xff]
      %v926 = vld [vmem:[%s911 + $0x70] sm:$0xff]
      %v927 = vld [vmem:[%s911 + $0x78] sm:$0xff]
      %v965 = vunpack.c.l.b16 %v854
      %v966 = vunpack.c.l.b16 %v855
      %v967 = vunpack.c.l.b16 %v856
      %v968 = vunpack.c.l.b16 %v857
      %v969 = vunpack.c.l.b16 %v858
      %v970 = vunpack.c.l.b16 %v859
      %v971 = vunpack.c.l.b16 %v860
      %v972 = vunpack.c.l.b16 %v861
      %v973 = vunpack.c.l.b16 %v862
      %v974 = vunpack.c.l.b16 %v863
      %v975 = vunpack.c.l.b16 %v864
      %v976 = vunpack.c.l.b16 %v865
      %v977 = vunpack.c.l.b16 %v866
      %v978 = vunpack.c.l.b16 %v867
      %v979 = vunpack.c.l.b16 %v868
      %v980 = vunpack.c.l.b16 %v869
      %v981 = vunpack.c.l.b16 %v870
      %v982 = vunpack.c.l.b16 %v871
      %v983 = vunpack.c.l.b16 %v872
      %v984 = vunpack.c.l.b16 %v873
      %v985 = vunpack.c.l.b16 %v874
      %v986 = vunpack.c.l.b16 %v875
      %v987 = vunpack.c.l.b16 %v876
      %v988 = vunpack.c.l.b16 %v877
      %v989 = vunpack.c.l.b16 %v878
      %v990 = vunpack.c.l.b16 %v879
      %v991 = vunpack.c.l.b16 %v880
      %v992 = vunpack.c.l.b16 %v881
      %v993 = vunpack.c.l.b16 %v882
      %v994 = vunpack.c.l.b16 %v883
      %v995 = vunpack.c.l.b16 %v884
      %v996 = vunpack.c.l.b16 %v885
      %v997 = vunpack.c.l.b16 %v886
      %v998 = vunpack.c.l.b16 %v887
      %v999 = vunpack.c.l.b16 %v888
      %v1000 = vunpack.c.l.b16 %v889
      %v1001 = vunpack.c.l.b16 %v890
      %v1002 = vpack.c.b16 %v966, %v965
      %v1003 = vpack.c.b16 %v968, %v967
      %v1004 = vpack.c.b16 %v970, %v969
      %v1005 = vpack.c.b16 %v972, %v971
      %v1006 = vpack.c.b16 %v974, %v973
      %v1007 = vpack.c.b16 %v976, %v975
      %v1008 = vpack.c.b16 %v978, %v977
      %v1009 = vpack.c.b16 %v980, %v979
      %v1010 = vpack.c.b16 %v982, %v981
      %v1011 = vpack.c.b16 %v984, %v983
      %v1012 = vpack.c.b16 %v986, %v985
      %v1013 = vpack.c.b16 %v988, %v987
      %v1014 = vpack.c.b16 %v990, %v989
      %v1015 = vpack.c.b16 %v992, %v991
      %v1016 = vpack.c.b16 %v994, %v993
      %v1017 = vpack.c.b16 %v996, %v995
      %v1018 = vpack.c.b16 %v998, %v997
      %v1019 = vpack.c.b16 %v1000, %v999
      %v1020 = vpack.c.b16 %v1001, %v1001
      %vm1021 = vsmask.f32 7424
      %v1023 = vshrl.u32 %v1002, 16
      %v1025 = vshll.u32 %v1002, 16
      %v1027 = vrot.slane %v1025, 1
      %v1028 = vor.u32 %v1023, %v1027
      %v1030 = vshll.u32 %v1003, 16
      %v1032 = vrot.slane %v1030, 1
      %v1033 = vsel %vm1021, %v1028, %v1032
      %v1034 = vshrl.u32 %v1003, 16
      %v1036 = vor.u32 %v1034, %v1032
      %v1038 = vshll.u32 %v1004, 16
      %v1040 = vrot.slane %v1038, 1
      %v1041 = vsel %vm1021, %v1036, %v1040
      %v1042 = vshrl.u32 %v1004, 16
      %v1044 = vor.u32 %v1042, %v1040
      %v1046 = vshll.u32 %v1005, 16
      %v1048 = vrot.slane %v1046, 1
      %v1049 = vsel %vm1021, %v1044, %v1048
      %v1050 = vshrl.u32 %v1005, 16
      %v1052 = vor.u32 %v1050, %v1048
      %v1054 = vshll.u32 %v1006, 16
      %v1056 = vrot.slane %v1054, 1
      %v1057 = vsel %vm1021, %v1052, %v1056
      %v1058 = vshrl.u32 %v1006, 16
      %v1060 = vor.u32 %v1058, %v1056
      %v1062 = vshll.u32 %v1007, 16
      %v1064 = vrot.slane %v1062, 1
      %v1065 = vsel %vm1021, %v1060, %v1064
      %v1066 = vshrl.u32 %v1007, 16
      %v1068 = vor.u32 %v1066, %v1064
      %v1070 = vshll.u32 %v1008, 16
      %v1072 = vrot.slane %v1070, 1
      %v1073 = vsel %vm1021, %v1068, %v1072
      %v1074 = vshrl.u32 %v1008, 16
      %v1076 = vor.u32 %v1074, %v1072
      %v1078 = vshll.u32 %v1009, 16
      %v1080 = vrot.slane %v1078, 1
      %v1081 = vsel %vm1021, %v1076, %v1080
      %v1082 = vshrl.u32 %v1009, 16
      %v1084 = vor.u32 %v1082, %v1080
      %v1086 = vshll.u32 %v1010, 16
      %v1088 = vrot.slane %v1086, 1
      %v1089 = vsel %vm1021, %v1084, %v1088
      %v1090 = vshrl.u32 %v1010, 16
      %v1092 = vor.u32 %v1090, %v1088
      %v1094 = vshll.u32 %v1011, 16
      %v1096 = vrot.slane %v1094, 1
      %v1097 = vsel %vm1021, %v1092, %v1096
      %v1098 = vshrl.u32 %v1011, 16
      %v1100 = vor.u32 %v1098, %v1096
      %v1102 = vshll.u32 %v1012, 16
      %v1104 = vrot.slane %v1102, 1
      %v1105 = vsel %vm1021, %v1100, %v1104
      %v1106 = vshrl.u32 %v1012, 16
      %v1108 = vor.u32 %v1106, %v1104
      %v1110 = vshll.u32 %v1013, 16
      %v1112 = vrot.slane %v1110, 1
      %v1113 = vsel %vm1021, %v1108, %v1112
      %v1114 = vshrl.u32 %v1013, 16
      %v1116 = vor.u32 %v1114, %v1112
      %v1118 = vshll.u32 %v1014, 16
      %v1120 = vrot.slane %v1118, 1
      %v1121 = vsel %vm1021, %v1116, %v1120
      %v1122 = vshrl.u32 %v1014, 16
      %v1124 = vor.u32 %v1122, %v1120
      %v1126 = vshll.u32 %v1015, 16
      %v1128 = vrot.slane %v1126, 1
      %v1129 = vsel %vm1021, %v1124, %v1128
      %v1130 = vshrl.u32 %v1015, 16
      %v1132 = vor.u32 %v1130, %v1128
      %v1134 = vshll.u32 %v1016, 16
      %v1136 = vrot.slane %v1134, 1
      %v1137 = vsel %vm1021, %v1132, %v1136
      %v1138 = vshrl.u32 %v1016, 16
      %v1140 = vor.u32 %v1138, %v1136
      %v1142 = vshll.u32 %v1017, 16
      %v1144 = vrot.slane %v1142, 1
      %v1145 = vsel %vm1021, %v1140, %v1144
      %v1146 = vshrl.u32 %v1017, 16
      %v1148 = vor.u32 %v1146, %v1144
      %v1150 = vshll.u32 %v1018, 16
      %v1152 = vrot.slane %v1150, 1
      %v1153 = vsel %vm1021, %v1148, %v1152
      %v1154 = vshrl.u32 %v1018, 16
      %v1156 = vor.u32 %v1154, %v1152
      %v1158 = vshll.u32 %v1019, 16
      %v1160 = vrot.slane %v1158, 1
      %v1161 = vsel %vm1021, %v1156, %v1160
      %v1162 = vshrl.u32 %v1019, 16
      %v1164 = vor.u32 %v1162, %v1160
      %v1166 = vshll.u32 %v1020, 16
      %v1168 = vrot.slane %v1166, 1
      %v1169 = vsel %vm1021, %v1164, %v1168
      %v1204 = vunpack.c.l.b16 %v912
      %v1205 = vunpack.c.h.b16 %v912
      %v1206 = vunpack.c.l.b16 %v913
      %v1207 = vunpack.c.h.b16 %v913
      %v1208 = vunpack.c.l.b16 %v914
      %v1209 = vunpack.c.h.b16 %v914
      %v1210 = vunpack.c.l.b16 %v915
      %v1211 = vunpack.c.h.b16 %v915
      %v1212 = vunpack.c.l.b16 %v916
      %v1213 = vunpack.c.h.b16 %v916
      %v1214 = vunpack.c.l.b16 %v917
      %v1215 = vunpack.c.h.b16 %v917
      %v1216 = vunpack.c.l.b16 %v918
      %v1217 = vunpack.c.h.b16 %v918
      %v1218 = vunpack.c.l.b16 %v919
      %v1219 = vunpack.c.h.b16 %v919
      %v1220 = vunpack.c.l.b16 %v920
      %v1221 = vunpack.c.h.b16 %v920
      %v1222 = vunpack.c.l.b16 %v921
      %v1223 = vunpack.c.h.b16 %v921
      %v1224 = vunpack.c.l.b16 %v922
      %v1225 = vunpack.c.h.b16 %v922
      %v1226 = vunpack.c.l.b16 %v923
      %v1227 = vunpack.c.h.b16 %v923
      %v1228 = vunpack.c.l.b16 %v924
      %v1229 = vunpack.c.h.b16 %v924
      %v1230 = vunpack.c.l.b16 %v925
      %v1231 = vunpack.c.h.b16 %v925
      %v1232 = vunpack.c.l.b16 %v926
      %v1233 = vunpack.c.h.b16 %v926
      %v1234 = vunpack.c.l.b16 %v927
      %v1235 = vunpack.c.h.b16 %v927
      %v1236 = vpack.c.b16 %v1206, %v1204
      %v1237 = vpack.c.b16 %v1207, %v1205
      %v1238 = vpack.c.b16 %v1210, %v1208
      %v1239 = vpack.c.b16 %v1211, %v1209
      %v1240 = vpack.c.b16 %v1214, %v1212
      %v1241 = vpack.c.b16 %v1215, %v1213
      %v1242 = vpack.c.b16 %v1218, %v1216
      %v1243 = vpack.c.b16 %v1219, %v1217
      %v1244 = vpack.c.b16 %v1222, %v1220
      %v1245 = vpack.c.b16 %v1223, %v1221
      %v1246 = vpack.c.b16 %v1226, %v1224
      %v1247 = vpack.c.b16 %v1227, %v1225
      %v1248 = vpack.c.b16 %v1230, %v1228
      %v1249 = vpack.c.b16 %v1231, %v1229
      %v1250 = vpack.c.b16 %v1234, %v1232
      %v1251 = vpack.c.b16 %v1235, %v1233
      %1268 = vmatpush.bf16.msra.mxu0 %v1250
      %1269 = vmatpush.bf16.msra.mxu0 %v1248
      %1270 = vmatpush.bf16.msra.mxu0 %v1246
      %1271 = vmatpush.bf16.msra.mxu0 %v1244
      %1272 = vmatpush.bf16.msra.mxu0 %v1242
      %1273 = vmatpush.bf16.msra.mxu0 %v1240
      %1274 = vmatpush.bf16.msra.mxu0 %v1238
      %1275 = vmatpush.bf16.msra.mxu0 %v1236
      %1276 = vmatmul.bf16.gmra.mxu0 %v1033
      %v1277 = vpop.f32.mrf.mxu0
      %v1278 = vadd.f32 0.0, %v1277
      %v1279 = vpop.f32.mrf.mxu0
      %v1280 = vadd.f32 0.0, %v1279
      %1281 = vmatmul.bf16.gmra.mxu0 %v1041
      %v1282 = vpop.f32.mrf.mxu0
      %v1283 = vadd.f32 0.0, %v1282
      %v1284 = vpop.f32.mrf.mxu0
      %v1285 = vadd.f32 0.0, %v1284
      %1286 = vmatmul.bf16.gmra.mxu0 %v1049
      %v1287 = vpop.f32.mrf.mxu0
      %v1288 = vadd.f32 0.0, %v1287
      %v1289 = vpop.f32.mrf.mxu0
      %v1290 = vadd.f32 0.0, %v1289
      %1291 = vmatmul.bf16.gmra.mxu0 %v1057
      %v1292 = vpop.f32.mrf.mxu0
      %v1293 = vadd.f32 0.0, %v1292
      %v1294 = vpop.f32.mrf.mxu0
      %v1295 = vadd.f32 0.0, %v1294
      %1296 = vmatmul.bf16.gmra.mxu0 %v1065
      %v1297 = vpop.f32.mrf.mxu0
      %v1298 = vadd.f32 0.0, %v1297
      %v1299 = vpop.f32.mrf.mxu0
      %v1300 = vadd.f32 0.0, %v1299
      %1301 = vmatmul.bf16.gmra.mxu0 %v1073
      %v1302 = vpop.f32.mrf.mxu0
      %v1303 = vadd.f32 0.0, %v1302
      %v1304 = vpop.f32.mrf.mxu0
      %v1305 = vadd.f32 0.0, %v1304
      %1306 = vmatmul.bf16.gmra.mxu0 %v1081
      %v1307 = vpop.f32.mrf.mxu0
      %v1308 = vadd.f32 0.0, %v1307
      %v1309 = vpop.f32.mrf.mxu0
      %v1310 = vadd.f32 0.0, %v1309
      %1311 = vmatmul.bf16.gmra.mxu0 %v1089
      %v1312 = vpop.f32.mrf.mxu0
      %v1313 = vadd.f32 0.0, %v1312
      %v1314 = vpop.f32.mrf.mxu0
      %v1315 = vadd.f32 0.0, %v1314
      %1316 = vmatmul.bf16.gmra.mxu0 %v1097
      %v1317 = vpop.f32.mrf.mxu0
      %v1318 = vadd.f32 0.0, %v1317
      %v1319 = vpop.f32.mrf.mxu0
      %v1320 = vadd.f32 0.0, %v1319
      %1321 = vmatmul.bf16.gmra.mxu0 %v1105
      %v1322 = vpop.f32.mrf.mxu0
      %v1323 = vadd.f32 0.0, %v1322
      %v1324 = vpop.f32.mrf.mxu0
      %v1325 = vadd.f32 0.0, %v1324
      %1326 = vmatmul.bf16.gmra.mxu0 %v1113
      %v1327 = vpop.f32.mrf.mxu0
      %v1328 = vadd.f32 0.0, %v1327
      %v1329 = vpop.f32.mrf.mxu0
      %v1330 = vadd.f32 0.0, %v1329
      %1331 = vmatmul.bf16.gmra.mxu0 %v1121
      %v1332 = vpop.f32.mrf.mxu0
      %v1333 = vadd.f32 0.0, %v1332
      %v1334 = vpop.f32.mrf.mxu0
      %v1335 = vadd.f32 0.0, %v1334
      %1336 = vmatmul.bf16.gmra.mxu0 %v1129
      %v1337 = vpop.f32.mrf.mxu0
      %v1338 = vadd.f32 0.0, %v1337
      %v1339 = vpop.f32.mrf.mxu0
      %v1340 = vadd.f32 0.0, %v1339
      %1341 = vmatmul.bf16.gmra.mxu0 %v1137
      %v1342 = vpop.f32.mrf.mxu0
      %v1343 = vadd.f32 0.0, %v1342
      %v1344 = vpop.f32.mrf.mxu0
      %v1345 = vadd.f32 0.0, %v1344
      %1346 = vmatmul.bf16.gmra.mxu0 %v1145
      %v1347 = vpop.f32.mrf.mxu0
      %v1348 = vadd.f32 0.0, %v1347
      %v1349 = vpop.f32.mrf.mxu0
      %v1350 = vadd.f32 0.0, %v1349
      %1351 = vmatmul.bf16.gmra.mxu0 %v1153
      %v1352 = vpop.f32.mrf.mxu0
      %v1353 = vadd.f32 0.0, %v1352
      %v1354 = vpop.f32.mrf.mxu0
      %v1355 = vadd.f32 0.0, %v1354
      %1356 = vmatmul.bf16.gmra.mxu0 %v1161
      %v1357 = vpop.f32.mrf.mxu0
      %v1358 = vadd.f32 0.0, %v1357
      %v1359 = vpop.f32.mrf.mxu0
      %v1360 = vadd.f32 0.0, %v1359
      %1361 = vmatmul.bf16.gmra.mxu0 %v1169
      %v1362 = vpop.f32.mrf.mxu0
      %v1363 = vadd.f32 0.0, %v1362
      %v1364 = vpop.f32.mrf.mxu0
      %v1365 = vadd.f32 0.0, %v1364
      %1366 = vdwg.mxu0
      %1367 = vmatpush.bf16.msra.mxu0 %v1251
      %1368 = vmatpush.bf16.msra.mxu0 %v1249
      %1369 = vmatpush.bf16.msra.mxu0 %v1247
      %1370 = vmatpush.bf16.msra.mxu0 %v1245
      %1371 = vmatpush.bf16.msra.mxu0 %v1243
      %1372 = vmatpush.bf16.msra.mxu0 %v1241
      %1373 = vmatpush.bf16.msra.mxu0 %v1239
      %1374 = vmatpush.bf16.msra.mxu0 %v1237
      %1375 = vmatmul.bf16.gmra.mxu0 %v1033
      %v1376 = vpop.f32.mrf.mxu0
      %v1377 = vadd.f32 0.0, %v1376
      %v1378 = vpop.f32.mrf.mxu0
      %v1379 = vadd.f32 0.0, %v1378
      %1380 = vmatmul.bf16.gmra.mxu0 %v1041
      %v1381 = vpop.f32.mrf.mxu0
      %v1382 = vadd.f32 0.0, %v1381
      %v1383 = vpop.f32.mrf.mxu0
      %v1384 = vadd.f32 0.0, %v1383
      %1385 = vmatmul.bf16.gmra.mxu0 %v1049
      %v1386 = vpop.f32.mrf.mxu0
      %v1387 = vadd.f32 0.0, %v1386
      %v1388 = vpop.f32.mrf.mxu0
      %v1389 = vadd.f32 0.0, %v1388
      %1390 = vmatmul.bf16.gmra.mxu0 %v1057
      %v1391 = vpop.f32.mrf.mxu0
      %v1392 = vadd.f32 0.0, %v1391
      %v1393 = vpop.f32.mrf.mxu0
      %v1394 = vadd.f32 0.0, %v1393
      %1395 = vmatmul.bf16.gmra.mxu0 %v1065
      %v1396 = vpop.f32.mrf.mxu0
      %v1397 = vadd.f32 0.0, %v1396
      %v1398 = vpop.f32.mrf.mxu0
      %v1399 = vadd.f32 0.0, %v1398
      %1400 = vmatmul.bf16.gmra.mxu0 %v1073
      %v1401 = vpop.f32.mrf.mxu0
      %v1402 = vadd.f32 0.0, %v1401
      %v1403 = vpop.f32.mrf.mxu0
      %v1404 = vadd.f32 0.0, %v1403
      %1405 = vmatmul.bf16.gmra.mxu0 %v1081
      %v1406 = vpop.f32.mrf.mxu0
      %v1407 = vadd.f32 0.0, %v1406
      %v1408 = vpop.f32.mrf.mxu0
      %v1409 = vadd.f32 0.0, %v1408
      %1410 = vmatmul.bf16.gmra.mxu0 %v1089
      %v1411 = vpop.f32.mrf.mxu0
      %v1412 = vadd.f32 0.0, %v1411
      %v1413 = vpop.f32.mrf.mxu0
      %v1414 = vadd.f32 0.0, %v1413
      %1415 = vmatmul.bf16.gmra.mxu0 %v1097
      %v1416 = vpop.f32.mrf.mxu0
      %v1417 = vadd.f32 0.0, %v1416
      %v1418 = vpop.f32.mrf.mxu0
      %v1419 = vadd.f32 0.0, %v1418
      %1420 = vmatmul.bf16.gmra.mxu0 %v1105
      %v1421 = vpop.f32.mrf.mxu0
      %v1422 = vadd.f32 0.0, %v1421
      %v1423 = vpop.f32.mrf.mxu0
      %v1424 = vadd.f32 0.0, %v1423
      %1425 = vmatmul.bf16.gmra.mxu0 %v1113
      %v1426 = vpop.f32.mrf.mxu0
      %v1427 = vadd.f32 0.0, %v1426
      %v1428 = vpop.f32.mrf.mxu0
      %v1429 = vadd.f32 0.0, %v1428
      %1430 = vmatmul.bf16.gmra.mxu0 %v1121
      %v1431 = vpop.f32.mrf.mxu0
      %v1432 = vadd.f32 0.0, %v1431
      %v1433 = vpop.f32.mrf.mxu0
      %v1434 = vadd.f32 0.0, %v1433
      %1435 = vmatmul.bf16.gmra.mxu0 %v1129
      %v1436 = vpop.f32.mrf.mxu0
      %v1437 = vadd.f32 0.0, %v1436
      %v1438 = vpop.f32.mrf.mxu0
      %v1439 = vadd.f32 0.0, %v1438
      %1440 = vmatmul.bf16.gmra.mxu0 %v1137
      %v1441 = vpop.f32.mrf.mxu0
      %v1442 = vadd.f32 0.0, %v1441
      %v1443 = vpop.f32.mrf.mxu0
      %v1444 = vadd.f32 0.0, %v1443
      %1445 = vmatmul.bf16.gmra.mxu0 %v1145
      %v1446 = vpop.f32.mrf.mxu0
      %v1447 = vadd.f32 0.0, %v1446
      %v1448 = vpop.f32.mrf.mxu0
      %v1449 = vadd.f32 0.0, %v1448
      %1450 = vmatmul.bf16.gmra.mxu0 %v1153
      %v1451 = vpop.f32.mrf.mxu0
      %v1452 = vadd.f32 0.0, %v1451
      %v1453 = vpop.f32.mrf.mxu0
      %v1454 = vadd.f32 0.0, %v1453
      %1455 = vmatmul.bf16.gmra.mxu0 %v1161
      %v1456 = vpop.f32.mrf.mxu0
      %v1457 = vadd.f32 0.0, %v1456
      %v1458 = vpop.f32.mrf.mxu0
      %v1459 = vadd.f32 0.0, %v1458
      %1460 = vmatmul.bf16.gmra.mxu0 %v1169
      %v1461 = vpop.f32.mrf.mxu0
      %v1462 = vadd.f32 0.0, %v1461
      %v1463 = vpop.f32.mrf.mxu0
      %v1464 = vadd.f32 0.0, %v1463
      %1465 = vdwg.mxu0
      %v1500 = vunpack.c.l.b16 %v895
      %v1501 = vunpack.c.h.b16 %v895
      %v1502 = vunpack.c.l.b16 %v896
      %v1503 = vunpack.c.h.b16 %v896
      %v1504 = vunpack.c.l.b16 %v897
      %v1505 = vunpack.c.h.b16 %v897
      %v1506 = vunpack.c.l.b16 %v898
      %v1507 = vunpack.c.h.b16 %v898
      %v1508 = vunpack.c.l.b16 %v899
      %v1509 = vunpack.c.h.b16 %v899
      %v1510 = vunpack.c.l.b16 %v900
      %v1511 = vunpack.c.h.b16 %v900
      %v1512 = vunpack.c.l.b16 %v901
      %v1513 = vunpack.c.h.b16 %v901
      %v1514 = vunpack.c.l.b16 %v902
      %v1515 = vunpack.c.h.b16 %v902
      %v1516 = vunpack.c.l.b16 %v903
      %v1517 = vunpack.c.h.b16 %v903
      %v1518 = vunpack.c.l.b16 %v904
      %v1519 = vunpack.c.h.b16 %v904
      %v1520 = vunpack.c.l.b16 %v905
      %v1521 = vunpack.c.h.b16 %v905
      %v1522 = vunpack.c.l.b16 %v906
      %v1523 = vunpack.c.h.b16 %v906
      %v1524 = vunpack.c.l.b16 %v907
      %v1525 = vunpack.c.h.b16 %v907
      %v1526 = vunpack.c.l.b16 %v908
      %v1527 = vunpack.c.h.b16 %v908
      %v1528 = vunpack.c.l.b16 %v909
      %v1529 = vunpack.c.h.b16 %v909
      %v1530 = vunpack.c.l.b16 %v910
      %v1531 = vunpack.c.h.b16 %v910
      %v1532 = vpack.c.b16 %v1502, %v1500
      %v1533 = vpack.c.b16 %v1503, %v1501
      %v1534 = vpack.c.b16 %v1506, %v1504
      %v1535 = vpack.c.b16 %v1507, %v1505
      %v1536 = vpack.c.b16 %v1510, %v1508
      %v1537 = vpack.c.b16 %v1511, %v1509
      %v1538 = vpack.c.b16 %v1514, %v1512
      %v1539 = vpack.c.b16 %v1515, %v1513
      %v1540 = vpack.c.b16 %v1518, %v1516
      %v1541 = vpack.c.b16 %v1519, %v1517
      %v1542 = vpack.c.b16 %v1522, %v1520
      %v1543 = vpack.c.b16 %v1523, %v1521
      %v1544 = vpack.c.b16 %v1526, %v1524
      %v1545 = vpack.c.b16 %v1527, %v1525
      %v1546 = vpack.c.b16 %v1530, %v1528
      %v1547 = vpack.c.b16 %v1531, %v1529
      %1564 = vmatpush.bf16.msra.mxu0 %v1546
      %1565 = vmatpush.bf16.msra.mxu0 %v1544
      %1566 = vmatpush.bf16.msra.mxu0 %v1542
      %1567 = vmatpush.bf16.msra.mxu0 %v1540
      %1568 = vmatpush.bf16.msra.mxu0 %v1538
      %1569 = vmatpush.bf16.msra.mxu0 %v1536
      %1570 = vmatpush.bf16.msra.mxu0 %v1534
      %1571 = vmatpush.bf16.msra.mxu0 %v1532
      %1572 = vmatmul.bf16.gmra.mxu0 %v1002
      %v1573 = vpop.f32.mrf.mxu0
      %v1574 = vadd.f32 %v1278, %v1573
      %v1575 = vpop.f32.mrf.mxu0
      %v1576 = vadd.f32 %v1280, %v1575
      %1577 = vmatmul.bf16.gmra.mxu0 %v1003
      %v1578 = vpop.f32.mrf.mxu0
      %v1579 = vadd.f32 %v1283, %v1578
      %v1580 = vpop.f32.mrf.mxu0
      %v1581 = vadd.f32 %v1285, %v1580
      %1582 = vmatmul.bf16.gmra.mxu0 %v1004
      %v1583 = vpop.f32.mrf.mxu0
      %v1584 = vadd.f32 %v1288, %v1583
      %v1585 = vpop.f32.mrf.mxu0
      %v1586 = vadd.f32 %v1290, %v1585
      %1587 = vmatmul.bf16.gmra.mxu0 %v1005
      %v1588 = vpop.f32.mrf.mxu0
      %v1589 = vadd.f32 %v1293, %v1588
      %v1590 = vpop.f32.mrf.mxu0
      %v1591 = vadd.f32 %v1295, %v1590
      %1592 = vmatmul.bf16.gmra.mxu0 %v1006
      %v1593 = vpop.f32.mrf.mxu0
      %v1594 = vadd.f32 %v1298, %v1593
      %v1595 = vpop.f32.mrf.mxu0
      %v1596 = vadd.f32 %v1300, %v1595
      %1597 = vmatmul.bf16.gmra.mxu0 %v1007
      %v1598 = vpop.f32.mrf.mxu0
      %v1599 = vadd.f32 %v1303, %v1598
      %v1600 = vpop.f32.mrf.mxu0
      %v1601 = vadd.f32 %v1305, %v1600
      %1602 = vmatmul.bf16.gmra.mxu0 %v1008
      %v1603 = vpop.f32.mrf.mxu0
      %v1604 = vadd.f32 %v1308, %v1603
      %v1605 = vpop.f32.mrf.mxu0
      %v1606 = vadd.f32 %v1310, %v1605
      %1607 = vmatmul.bf16.gmra.mxu0 %v1009
      %v1608 = vpop.f32.mrf.mxu0
      %v1609 = vadd.f32 %v1313, %v1608
      %v1610 = vpop.f32.mrf.mxu0
      %v1611 = vadd.f32 %v1315, %v1610
      %1612 = vmatmul.bf16.gmra.mxu0 %v1010
      %v1613 = vpop.f32.mrf.mxu0
      %v1614 = vadd.f32 %v1318, %v1613
      %v1615 = vpop.f32.mrf.mxu0
      %v1616 = vadd.f32 %v1320, %v1615
      %1617 = vmatmul.bf16.gmra.mxu0 %v1011
      %v1618 = vpop.f32.mrf.mxu0
      %v1619 = vadd.f32 %v1323, %v1618
      %v1620 = vpop.f32.mrf.mxu0
      %v1621 = vadd.f32 %v1325, %v1620
      %1622 = vmatmul.bf16.gmra.mxu0 %v1012
      %v1623 = vpop.f32.mrf.mxu0
      %v1624 = vadd.f32 %v1328, %v1623
      %v1625 = vpop.f32.mrf.mxu0
      %v1626 = vadd.f32 %v1330, %v1625
      %1627 = vmatmul.bf16.gmra.mxu0 %v1013
      %v1628 = vpop.f32.mrf.mxu0
      %v1629 = vadd.f32 %v1333, %v1628
      %v1630 = vpop.f32.mrf.mxu0
      %v1631 = vadd.f32 %v1335, %v1630
      %1632 = vmatmul.bf16.gmra.mxu0 %v1014
      %v1633 = vpop.f32.mrf.mxu0
      %v1634 = vadd.f32 %v1338, %v1633
      %v1635 = vpop.f32.mrf.mxu0
      %v1636 = vadd.f32 %v1340, %v1635
      %1637 = vmatmul.bf16.gmra.mxu0 %v1015
      %v1638 = vpop.f32.mrf.mxu0
      %v1639 = vadd.f32 %v1343, %v1638
      %v1640 = vpop.f32.mrf.mxu0
      %v1641 = vadd.f32 %v1345, %v1640
      %1642 = vmatmul.bf16.gmra.mxu0 %v1016
      %v1643 = vpop.f32.mrf.mxu0
      %v1644 = vadd.f32 %v1348, %v1643
      %v1645 = vpop.f32.mrf.mxu0
      %v1646 = vadd.f32 %v1350, %v1645
      %1647 = vmatmul.bf16.gmra.mxu0 %v1017
      %v1648 = vpop.f32.mrf.mxu0
      %v1649 = vadd.f32 %v1353, %v1648
      %v1650 = vpop.f32.mrf.mxu0
      %v1651 = vadd.f32 %v1355, %v1650
      %1652 = vmatmul.bf16.gmra.mxu0 %v1018
      %v1653 = vpop.f32.mrf.mxu0
      %v1654 = vadd.f32 %v1358, %v1653
      %v1655 = vpop.f32.mrf.mxu0
      %v1656 = vadd.f32 %v1360, %v1655
      %1657 = vmatmul.bf16.gmra.mxu0 %v1019
      %v1658 = vpop.f32.mrf.mxu0
      %v1659 = vadd.f32 %v1363, %v1658
      %v1660 = vpop.f32.mrf.mxu0
      %v1661 = vadd.f32 %v1365, %v1660
      %1662 = vdwg.mxu0
      %1663 = vmatpush.bf16.msra.mxu0 %v1547
      %1664 = vmatpush.bf16.msra.mxu0 %v1545
      %1665 = vmatpush.bf16.msra.mxu0 %v1543
      %1666 = vmatpush.bf16.msra.mxu0 %v1541
      %1667 = vmatpush.bf16.msra.mxu0 %v1539
      %1668 = vmatpush.bf16.msra.mxu0 %v1537
      %1669 = vmatpush.bf16.msra.mxu0 %v1535
      %1670 = vmatpush.bf16.msra.mxu0 %v1533
      %1671 = vmatmul.bf16.gmra.mxu0 %v1002
      %v1672 = vpop.f32.mrf.mxu0
      %v1673 = vadd.f32 %v1377, %v1672
      %v1674 = vpop.f32.mrf.mxu0
      %v1675 = vadd.f32 %v1379, %v1674
      %1676 = vmatmul.bf16.gmra.mxu0 %v1003
      %v1677 = vpop.f32.mrf.mxu0
      %v1678 = vadd.f32 %v1382, %v1677
      %v1679 = vpop.f32.mrf.mxu0
      %v1680 = vadd.f32 %v1384, %v1679
      %1681 = vmatmul.bf16.gmra.mxu0 %v1004
      %v1682 = vpop.f32.mrf.mxu0
      %v1683 = vadd.f32 %v1387, %v1682
      %v1684 = vpop.f32.mrf.mxu0
      %v1685 = vadd.f32 %v1389, %v1684
      %1686 = vmatmul.bf16.gmra.mxu0 %v1005
      %v1687 = vpop.f32.mrf.mxu0
      %v1688 = vadd.f32 %v1392, %v1687
      %v1689 = vpop.f32.mrf.mxu0
      %v1690 = vadd.f32 %v1394, %v1689
      %1691 = vmatmul.bf16.gmra.mxu0 %v1006
      %v1692 = vpop.f32.mrf.mxu0
      %v1693 = vadd.f32 %v1397, %v1692
      %v1694 = vpop.f32.mrf.mxu0
      %v1695 = vadd.f32 %v1399, %v1694
      %1696 = vmatmul.bf16.gmra.mxu0 %v1007
      %v1697 = vpop.f32.mrf.mxu0
      %v1698 = vadd.f32 %v1402, %v1697
      %v1699 = vpop.f32.mrf.mxu0
      %v1700 = vadd.f32 %v1404, %v1699
      %1701 = vmatmul.bf16.gmra.mxu0 %v1008
      %v1702 = vpop.f32.mrf.mxu0
      %v1703 = vadd.f32 %v1407, %v1702
      %v1704 = vpop.f32.mrf.mxu0
      %v1705 = vadd.f32 %v1409, %v1704
      %1706 = vmatmul.bf16.gmra.mxu0 %v1009
      %v1707 = vpop.f32.mrf.mxu0
      %v1708 = vadd.f32 %v1412, %v1707
      %v1709 = vpop.f32.mrf.mxu0
      %v1710 = vadd.f32 %v1414, %v1709
      %1711 = vmatmul.bf16.gmra.mxu0 %v1010
      %v1712 = vpop.f32.mrf.mxu0
      %v1713 = vadd.f32 %v1417, %v1712
      %v1714 = vpop.f32.mrf.mxu0
      %v1715 = vadd.f32 %v1419, %v1714
      %1716 = vmatmul.bf16.gmra.mxu0 %v1011
      %v1717 = vpop.f32.mrf.mxu0
      %v1718 = vadd.f32 %v1422, %v1717
      %v1719 = vpop.f32.mrf.mxu0
      %v1720 = vadd.f32 %v1424, %v1719
      %1721 = vmatmul.bf16.gmra.mxu0 %v1012
      %v1722 = vpop.f32.mrf.mxu0
      %v1723 = vadd.f32 %v1427, %v1722
      %v1724 = vpop.f32.mrf.mxu0
      %v1725 = vadd.f32 %v1429, %v1724
      %1726 = vmatmul.bf16.gmra.mxu0 %v1013
      %v1727 = vpop.f32.mrf.mxu0
      %v1728 = vadd.f32 %v1432, %v1727
      %v1729 = vpop.f32.mrf.mxu0
      %v1730 = vadd.f32 %v1434, %v1729
      %1731 = vmatmul.bf16.gmra.mxu0 %v1014
      %v1732 = vpop.f32.mrf.mxu0
      %v1733 = vadd.f32 %v1437, %v1732
      %v1734 = vpop.f32.mrf.mxu0
      %v1735 = vadd.f32 %v1439, %v1734
      %1736 = vmatmul.bf16.gmra.mxu0 %v1015
      %v1737 = vpop.f32.mrf.mxu0
      %v1738 = vadd.f32 %v1442, %v1737
      %v1739 = vpop.f32.mrf.mxu0
      %v1740 = vadd.f32 %v1444, %v1739
      %1741 = vmatmul.bf16.gmra.mxu0 %v1016
      %v1742 = vpop.f32.mrf.mxu0
      %v1743 = vadd.f32 %v1447, %v1742
      %v1744 = vpop.f32.mrf.mxu0
      %v1745 = vadd.f32 %v1449, %v1744
      %1746 = vmatmul.bf16.gmra.mxu0 %v1017
      %v1747 = vpop.f32.mrf.mxu0
      %v1748 = vadd.f32 %v1452, %v1747
      %v1749 = vpop.f32.mrf.mxu0
      %v1750 = vadd.f32 %v1454, %v1749
      %1751 = vmatmul.bf16.gmra.mxu0 %v1018
      %v1752 = vpop.f32.mrf.mxu0
      %v1753 = vadd.f32 %v1457, %v1752
      %v1754 = vpop.f32.mrf.mxu0
      %v1755 = vadd.f32 %v1459, %v1754
      %1756 = vmatmul.bf16.gmra.mxu0 %v1019
      %v1757 = vpop.f32.mrf.mxu0
      %v1758 = vadd.f32 %v1462, %v1757
      %v1759 = vpop.f32.mrf.mxu0
      %v1760 = vadd.f32 %v1464, %v1759
      %1761 = vdwg.mxu0
      %s1762 = scalar_lea.vmem %s4, 256
      %v1763 = vld [vmem:[%s1762] sm:$0xff]
      %v1764 = vld [vmem:[%s1762 + $0x8] sm:$0xff]
      %v1765 = vld [vmem:[%s1762 + $0x10] sm:$0xff]
      %v1766 = vld [vmem:[%s1762 + $0x18] sm:$0xff]
      %v1767 = vld [vmem:[%s1762 + $0x20] sm:$0xff]
      %v1768 = vld [vmem:[%s1762 + $0x28] sm:$0xff]
      %v1769 = vld [vmem:[%s1762 + $0x30] sm:$0xff]
      %v1770 = vld [vmem:[%s1762 + $0x38] sm:$0xff]
      %v1771 = vld [vmem:[%s1762 + $0x40] sm:$0xff]
      %v1772 = vld [vmem:[%s1762 + $0x48] sm:$0xff]
      %v1773 = vld [vmem:[%s1762 + $0x50] sm:$0xff]
      %v1774 = vld [vmem:[%s1762 + $0x58] sm:$0xff]
      %v1775 = vld [vmem:[%s1762 + $0x60] sm:$0xff]
      %v1776 = vld [vmem:[%s1762 + $0x68] sm:$0xff]
      %v1777 = vld [vmem:[%s1762 + $0x70] sm:$0xff]
      %v1778 = vld [vmem:[%s1762 + $0x78] sm:$0xff]
      %vm1779 = vcmask 1046528
      %v1780 = vrot.slane %v1002, 1
      %v1781 = vrot.slane %v1003, 1
      %v1782 = vsel %vm1779, %v1780, %v1781
      %v1783 = vrot.slane %v1004, 1
      %v1784 = vsel %vm1779, %v1781, %v1783
      %v1785 = vrot.slane %v1005, 1
      %v1786 = vsel %vm1779, %v1783, %v1785
      %v1787 = vrot.slane %v1006, 1
      %v1788 = vsel %vm1779, %v1785, %v1787
      %v1789 = vrot.slane %v1007, 1
      %v1790 = vsel %vm1779, %v1787, %v1789
      %v1791 = vrot.slane %v1008, 1
      %v1792 = vsel %vm1779, %v1789, %v1791
      %v1793 = vrot.slane %v1009, 1
      %v1794 = vsel %vm1779, %v1791, %v1793
      %v1795 = vrot.slane %v1010, 1
      %v1796 = vsel %vm1779, %v1793, %v1795
      %v1797 = vrot.slane %v1011, 1
      %v1798 = vsel %vm1779, %v1795, %v1797
      %v1799 = vrot.slane %v1012, 1
      %v1800 = vsel %vm1779, %v1797, %v1799
      %v1801 = vrot.slane %v1013, 1
      %v1802 = vsel %vm1779, %v1799, %v1801
      %v1803 = vrot.slane %v1014, 1
      %v1804 = vsel %vm1779, %v1801, %v1803
      %v1805 = vrot.slane %v1015, 1
      %v1806 = vsel %vm1779, %v1803, %v1805
      %v1807 = vrot.slane %v1016, 1
      %v1808 = vsel %vm1779, %v1805, %v1807
      %v1809 = vrot.slane %v1017, 1
      %v1810 = vsel %vm1779, %v1807, %v1809
      %v1811 = vrot.slane %v1018, 1
      %v1812 = vsel %vm1779, %v1809, %v1811
      %v1813 = vrot.slane %v1019, 1
      %v1814 = vsel %vm1779, %v1811, %v1813
      %v1815 = vrot.slane %v1020, 1
      %v1816 = vsel %vm1779, %v1813, %v1815
      %v1851 = vunpack.c.l.b16 %v1763
      %v1852 = vunpack.c.h.b16 %v1763
      %v1853 = vunpack.c.l.b16 %v1764
      %v1854 = vunpack.c.h.b16 %v1764
      %v1855 = vunpack.c.l.b16 %v1765
      %v1856 = vunpack.c.h.b16 %v1765
      %v1857 = vunpack.c.l.b16 %v1766
      %v1858 = vunpack.c.h.b16 %v1766
      %v1859 = vunpack.c.l.b16 %v1767
      %v1860 = vunpack.c.h.b16 %v1767
      %v1861 = vunpack.c.l.b16 %v1768
      %v1862 = vunpack.c.h.b16 %v1768
      %v1863 = vunpack.c.l.b16 %v1769
      %v1864 = vunpack.c.h.b16 %v1769
      %v1865 = vunpack.c.l.b16 %v1770
      %v1866 = vunpack.c.h.b16 %v1770
      %v1867 = vunpack.c.l.b16 %v1771
      %v1868 = vunpack.c.h.b16 %v1771
      %v1869 = vunpack.c.l.b16 %v1772
      %v1870 = vunpack.c.h.b16 %v1772
      %v1871 = vunpack.c.l.b16 %v1773
      %v1872 = vunpack.c.h.b16 %v1773
      %v1873 = vunpack.c.l.b16 %v1774
      %v1874 = vunpack.c.h.b16 %v1774
      %v1875 = vunpack.c.l.b16 %v1775
      %v1876 = vunpack.c.h.b16 %v1775
      %v1877 = vunpack.c.l.b16 %v1776
      %v1878 = vunpack.c.h.b16 %v1776
      %v1879 = vunpack.c.l.b16 %v1777
      %v1880 = vunpack.c.h.b16 %v1777
      %v1881 = vunpack.c.l.b16 %v1778
      %v1882 = vunpack.c.h.b16 %v1778
      %v1883 = vpack.c.b16 %v1853, %v1851
      %v1884 = vpack.c.b16 %v1854, %v1852
      %v1885 = vpack.c.b16 %v1857, %v1855
      %v1886 = vpack.c.b16 %v1858, %v1856
      %v1887 = vpack.c.b16 %v1861, %v1859
      %v1888 = vpack.c.b16 %v1862, %v1860
      %v1889 = vpack.c.b16 %v1865, %v1863
      %v1890 = vpack.c.b16 %v1866, %v1864
      %v1891 = vpack.c.b16 %v1869, %v1867
      %v1892 = vpack.c.b16 %v1870, %v1868
      %v1893 = vpack.c.b16 %v1873, %v1871
      %v1894 = vpack.c.b16 %v1874, %v1872
      %v1895 = vpack.c.b16 %v1877, %v1875
      %v1896 = vpack.c.b16 %v1878, %v1876
      %v1897 = vpack.c.b16 %v1881, %v1879
      %v1898 = vpack.c.b16 %v1882, %v1880
      %1915 = vmatpush.bf16.msra.mxu0 %v1897
      %1916 = vmatpush.bf16.msra.mxu0 %v1895
      %1917 = vmatpush.bf16.msra.mxu0 %v1893
      %1918 = vmatpush.bf16.msra.mxu0 %v1891
      %1919 = vmatpush.bf16.msra.mxu0 %v1889
      %1920 = vmatpush.bf16.msra.mxu0 %v1887
      %1921 = vmatpush.bf16.msra.mxu0 %v1885
      %1922 = vmatpush.bf16.msra.mxu0 %v1883
      %1923 = vmatmul.bf16.gmra.mxu0 %v1782
      %v1924 = vpop.f32.mrf.mxu0
      %v1925 = vadd.f32 0.0, %v1924
      %v1926 = vpop.f32.mrf.mxu0
      %v1927 = vadd.f32 0.0, %v1926
      %1928 = vmatmul.bf16.gmra.mxu0 %v1784
      %v1929 = vpop.f32.mrf.mxu0
      %v1930 = vadd.f32 0.0, %v1929
      %v1931 = vpop.f32.mrf.mxu0
      %v1932 = vadd.f32 0.0, %v1931
      %1933 = vmatmul.bf16.gmra.mxu0 %v1786
      %v1934 = vpop.f32.mrf.mxu0
      %v1935 = vadd.f32 0.0, %v1934
      %v1936 = vpop.f32.mrf.mxu0
      %v1937 = vadd.f32 0.0, %v1936
      %1938 = vmatmul.bf16.gmra.mxu0 %v1788
      %v1939 = vpop.f32.mrf.mxu0
      %v1940 = vadd.f32 0.0, %v1939
      %v1941 = vpop.f32.mrf.mxu0
      %v1942 = vadd.f32 0.0, %v1941
      %1943 = vmatmul.bf16.gmra.mxu0 %v1790
      %v1944 = vpop.f32.mrf.mxu0
      %v1945 = vadd.f32 0.0, %v1944
      %v1946 = vpop.f32.mrf.mxu0
      %v1947 = vadd.f32 0.0, %v1946
      %1948 = vmatmul.bf16.gmra.mxu0 %v1792
      %v1949 = vpop.f32.mrf.mxu0
      %v1950 = vadd.f32 0.0, %v1949
      %v1951 = vpop.f32.mrf.mxu0
      %v1952 = vadd.f32 0.0, %v1951
      %1953 = vmatmul.bf16.gmra.mxu0 %v1794
      %v1954 = vpop.f32.mrf.mxu0
      %v1955 = vadd.f32 0.0, %v1954
      %v1956 = vpop.f32.mrf.mxu0
      %v1957 = vadd.f32 0.0, %v1956
      %1958 = vmatmul.bf16.gmra.mxu0 %v1796
      %v1959 = vpop.f32.mrf.mxu0
      %v1960 = vadd.f32 0.0, %v1959
      %v1961 = vpop.f32.mrf.mxu0
      %v1962 = vadd.f32 0.0, %v1961
      %1963 = vmatmul.bf16.gmra.mxu0 %v1798
      %v1964 = vpop.f32.mrf.mxu0
      %v1965 = vadd.f32 0.0, %v1964
      %v1966 = vpop.f32.mrf.mxu0
      %v1967 = vadd.f32 0.0, %v1966
      %1968 = vmatmul.bf16.gmra.mxu0 %v1800
      %v1969 = vpop.f32.mrf.mxu0
      %v1970 = vadd.f32 0.0, %v1969
      %v1971 = vpop.f32.mrf.mxu0
      %v1972 = vadd.f32 0.0, %v1971
      %1973 = vmatmul.bf16.gmra.mxu0 %v1802
      %v1974 = vpop.f32.mrf.mxu0
      %v1975 = vadd.f32 0.0, %v1974
      %v1976 = vpop.f32.mrf.mxu0
      %v1977 = vadd.f32 0.0, %v1976
      %1978 = vmatmul.bf16.gmra.mxu0 %v1804
      %v1979 = vpop.f32.mrf.mxu0
      %v1980 = vadd.f32 0.0, %v1979
      %v1981 = vpop.f32.mrf.mxu0
      %v1982 = vadd.f32 0.0, %v1981
      %1983 = vmatmul.bf16.gmra.mxu0 %v1806
      %v1984 = vpop.f32.mrf.mxu0
      %v1985 = vadd.f32 0.0, %v1984
      %v1986 = vpop.f32.mrf.mxu0
      %v1987 = vadd.f32 0.0, %v1986
      %1988 = vmatmul.bf16.gmra.mxu0 %v1808
      %v1989 = vpop.f32.mrf.mxu0
      %v1990 = vadd.f32 0.0, %v1989
      %v1991 = vpop.f32.mrf.mxu0
      %v1992 = vadd.f32 0.0, %v1991
      %1993 = vmatmul.bf16.gmra.mxu0 %v1810
      %v1994 = vpop.f32.mrf.mxu0
      %v1995 = vadd.f32 0.0, %v1994
      %v1996 = vpop.f32.mrf.mxu0
      %v1997 = vadd.f32 0.0, %v1996
      %1998 = vmatmul.bf16.gmra.mxu0 %v1812
      %v1999 = vpop.f32.mrf.mxu0
      %v2000 = vadd.f32 0.0, %v1999
      %v2001 = vpop.f32.mrf.mxu0
      %v2002 = vadd.f32 0.0, %v2001
      %2003 = vmatmul.bf16.gmra.mxu0 %v1814
      %v2004 = vpop.f32.mrf.mxu0
      %v2005 = vadd.f32 0.0, %v2004
      %v2006 = vpop.f32.mrf.mxu0
      %v2007 = vadd.f32 0.0, %v2006
      %2008 = vmatmul.bf16.gmra.mxu0 %v1816
      %v2009 = vpop.f32.mrf.mxu0
      %v2010 = vadd.f32 0.0, %v2009
      %v2011 = vpop.f32.mrf.mxu0
      %v2012 = vadd.f32 0.0, %v2011
      %2013 = vdwg.mxu0
      %2014 = vmatpush.bf16.msra.mxu0 %v1898
      %2015 = vmatpush.bf16.msra.mxu0 %v1896
      %2016 = vmatpush.bf16.msra.mxu0 %v1894
      %2017 = vmatpush.bf16.msra.mxu0 %v1892
      %2018 = vmatpush.bf16.msra.mxu0 %v1890
      %2019 = vmatpush.bf16.msra.mxu0 %v1888
      %2020 = vmatpush.bf16.msra.mxu0 %v1886
      %2021 = vmatpush.bf16.msra.mxu0 %v1884
      %2022 = vmatmul.bf16.gmra.mxu0 %v1782
      %v2023 = vpop.f32.mrf.mxu0
      %v2024 = vadd.f32 0.0, %v2023
      %v2025 = vpop.f32.mrf.mxu0
      %v2026 = vadd.f32 0.0, %v2025
      %2027 = vmatmul.bf16.gmra.mxu0 %v1784
      %v2028 = vpop.f32.mrf.mxu0
      %v2029 = vadd.f32 0.0, %v2028
      %v2030 = vpop.f32.mrf.mxu0
      %v2031 = vadd.f32 0.0, %v2030
      %2032 = vmatmul.bf16.gmra.mxu0 %v1786
      %v2033 = vpop.f32.mrf.mxu0
      %v2034 = vadd.f32 0.0, %v2033
      %v2035 = vpop.f32.mrf.mxu0
      %v2036 = vadd.f32 0.0, %v2035
      %2037 = vmatmul.bf16.gmra.mxu0 %v1788
      %v2038 = vpop.f32.mrf.mxu0
      %v2039 = vadd.f32 0.0, %v2038
      %v2040 = vpop.f32.mrf.mxu0
      %v2041 = vadd.f32 0.0, %v2040
      %2042 = vmatmul.bf16.gmra.mxu0 %v1790
      %v2043 = vpop.f32.mrf.mxu0
      %v2044 = vadd.f32 0.0, %v2043
      %v2045 = vpop.f32.mrf.mxu0
      %v2046 = vadd.f32 0.0, %v2045
      %2047 = vmatmul.bf16.gmra.mxu0 %v1792
      %v2048 = vpop.f32.mrf.mxu0
      %v2049 = vadd.f32 0.0, %v2048
      %v2050 = vpop.f32.mrf.mxu0
      %v2051 = vadd.f32 0.0, %v2050
      %2052 = vmatmul.bf16.gmra.mxu0 %v1794
      %v2053 = vpop.f32.mrf.mxu0
      %v2054 = vadd.f32 0.0, %v2053
      %v2055 = vpop.f32.mrf.mxu0
      %v2056 = vadd.f32 0.0, %v2055
      %2057 = vmatmul.bf16.gmra.mxu0 %v1796
      %v2058 = vpop.f32.mrf.mxu0
      %v2059 = vadd.f32 0.0, %v2058
      %v2060 = vpop.f32.mrf.mxu0
      %v2061 = vadd.f32 0.0, %v2060
      %2062 = vmatmul.bf16.gmra.mxu0 %v1798
      %v2063 = vpop.f32.mrf.mxu0
      %v2064 = vadd.f32 0.0, %v2063
      %v2065 = vpop.f32.mrf.mxu0
      %v2066 = vadd.f32 0.0, %v2065
      %2067 = vmatmul.bf16.gmra.mxu0 %v1800
      %v2068 = vpop.f32.mrf.mxu0
      %v2069 = vadd.f32 0.0, %v2068
      %v2070 = vpop.f32.mrf.mxu0
      %v2071 = vadd.f32 0.0, %v2070
      %2072 = vmatmul.bf16.gmra.mxu0 %v1802
      %v2073 = vpop.f32.mrf.mxu0
      %v2074 = vadd.f32 0.0, %v2073
      %v2075 = vpop.f32.mrf.mxu0
      %v2076 = vadd.f32 0.0, %v2075
      %2077 = vmatmul.bf16.gmra.mxu0 %v1804
      %v2078 = vpop.f32.mrf.mxu0
      %v2079 = vadd.f32 0.0, %v2078
      %v2080 = vpop.f32.mrf.mxu0
      %v2081 = vadd.f32 0.0, %v2080
      %2082 = vmatmul.bf16.gmra.mxu0 %v1806
      %v2083 = vpop.f32.mrf.mxu0
      %v2084 = vadd.f32 0.0, %v2083
      %v2085 = vpop.f32.mrf.mxu0
      %v2086 = vadd.f32 0.0, %v2085
      %2087 = vmatmul.bf16.gmra.mxu0 %v1808
      %v2088 = vpop.f32.mrf.mxu0
      %v2089 = vadd.f32 0.0, %v2088
      %v2090 = vpop.f32.mrf.mxu0
      %v2091 = vadd.f32 0.0, %v2090
      %2092 = vmatmul.bf16.gmra.mxu0 %v1810
      %v2093 = vpop.f32.mrf.mxu0
      %v2094 = vadd.f32 0.0, %v2093
      %v2095 = vpop.f32.mrf.mxu0
      %v2096 = vadd.f32 0.0, %v2095
      %2097 = vmatmul.bf16.gmra.mxu0 %v1812
      %v2098 = vpop.f32.mrf.mxu0
      %v2099 = vadd.f32 0.0, %v2098
      %v2100 = vpop.f32.mrf.mxu0
      %v2101 = vadd.f32 0.0, %v2100
      %2102 = vmatmul.bf16.gmra.mxu0 %v1814
      %v2103 = vpop.f32.mrf.mxu0
      %v2104 = vadd.f32 0.0, %v2103
      %v2105 = vpop.f32.mrf.mxu0
      %v2106 = vadd.f32 0.0, %v2105
      %2107 = vmatmul.bf16.gmra.mxu0 %v1816
      %v2108 = vpop.f32.mrf.mxu0
      %v2109 = vadd.f32 0.0, %v2108
      %v2110 = vpop.f32.mrf.mxu0
      %v2111 = vadd.f32 0.0, %v2110
      %2112 = vdwg.mxu0
      %v2113 = vadd.f32 %v1574, %v1925
      %v2114 = vadd.f32 %v1673, %v2024
      %v2115 = vadd.f32 %v1576, %v1927
      %v2116 = vadd.f32 %v1675, %v2026
      %v2117 = vadd.f32 %v1579, %v1930
      %v2118 = vadd.f32 %v1678, %v2029
      %v2119 = vadd.f32 %v1581, %v1932
      %v2120 = vadd.f32 %v1680, %v2031
      %v2121 = vadd.f32 %v1584, %v1935
      %v2122 = vadd.f32 %v1683, %v2034
      %v2123 = vadd.f32 %v1586, %v1937
      %v2124 = vadd.f32 %v1685, %v2036
      %v2125 = vadd.f32 %v1589, %v1940
      %v2126 = vadd.f32 %v1688, %v2039
      %v2127 = vadd.f32 %v1591, %v1942
      %v2128 = vadd.f32 %v1690, %v2041
      %v2129 = vadd.f32 %v1594, %v1945
      %v2130 = vadd.f32 %v1693, %v2044
      %v2131 = vadd.f32 %v1596, %v1947
      %v2132 = vadd.f32 %v1695, %v2046
      %v2133 = vadd.f32 %v1599, %v1950
      %v2134 = vadd.f32 %v1698, %v2049
      %v2135 = vadd.f32 %v1601, %v1952
      %v2136 = vadd.f32 %v1700, %v2051
      %v2137 = vadd.f32 %v1604, %v1955
      %v2138 = vadd.f32 %v1703, %v2054
      %v2139 = vadd.f32 %v1606, %v1957
      %v2140 = vadd.f32 %v1705, %v2056
      %v2141 = vadd.f32 %v1609, %v1960
      %v2142 = vadd.f32 %v1708, %v2059
      %v2143 = vadd.f32 %v1611, %v1962
      %v2144 = vadd.f32 %v1710, %v2061
      %v2145 = vadd.f32 %v1614, %v1965
      %v2146 = vadd.f32 %v1713, %v2064
      %v2147 = vadd.f32 %v1616, %v1967
      %v2148 = vadd.f32 %v1715, %v2066
      %v2149 = vadd.f32 %v1619, %v1970
      %v2150 = vadd.f32 %v1718, %v2069
      %v2151 = vadd.f32 %v1621, %v1972
      %v2152 = vadd.f32 %v1720, %v2071
      %v2153 = vadd.f32 %v1624, %v1975
      %v2154 = vadd.f32 %v1723, %v2074
      %v2155 = vadd.f32 %v1626, %v1977
      %v2156 = vadd.f32 %v1725, %v2076
      %v2157 = vadd.f32 %v1629, %v1980
      %v2158 = vadd.f32 %v1728, %v2079
      %v2159 = vadd.f32 %v1631, %v1982
      %v2160 = vadd.f32 %v1730, %v2081
      %v2161 = vadd.f32 %v1634, %v1985
      %v2162 = vadd.f32 %v1733, %v2084
      %v2163 = vadd.f32 %v1636, %v1987
      %v2164 = vadd.f32 %v1735, %v2086
      %v2165 = vadd.f32 %v1639, %v1990
      %v2166 = vadd.f32 %v1738, %v2089
      %v2167 = vadd.f32 %v1641, %v1992
      %v2168 = vadd.f32 %v1740, %v2091
      %v2169 = vadd.f32 %v1644, %v1995
      %v2170 = vadd.f32 %v1743, %v2094
      %v2171 = vadd.f32 %v1646, %v1997
      %v2172 = vadd.f32 %v1745, %v2096
      %v2173 = vadd.f32 %v1649, %v2000
      %v2174 = vadd.f32 %v1748, %v2099
      %v2175 = vadd.f32 %v1651, %v2002
      %v2176 = vadd.f32 %v1750, %v2101
      %v2177 = vadd.f32 %v1654, %v2005
      %v2178 = vadd.f32 %v1753, %v2104
      %v2179 = vadd.f32 %v1656, %v2007
      %v2180 = vadd.f32 %v1755, %v2106
      %v2181 = vadd.f32 %v1659, %v2010
      %v2182 = vadd.f32 %v1758, %v2109
      %v2183 = vadd.f32 %v1661, %v2012
      %v2184 = vadd.f32 %v1760, %v2111
      %s2185 = scalar_lea.vmem %s4, 384
      %v2186 = vld [vmem:[%s2185] sm:$0xff]
      %v2187 = vld [vmem:[%s2185 + $0x8] sm:$0xff]
      %v2188 = vld [vmem:[%s2185 + $0x10] sm:$0xff]
      %v2189 = vld [vmem:[%s2185 + $0x18] sm:$0xff]
      %v2190 = vld [vmem:[%s2185 + $0x20] sm:$0xff]
      %v2191 = vld [vmem:[%s2185 + $0x28] sm:$0xff]
      %v2192 = vld [vmem:[%s2185 + $0x30] sm:$0xff]
      %v2193 = vld [vmem:[%s2185 + $0x38] sm:$0xff]
      %v2194 = vld [vmem:[%s2185 + $0x40] sm:$0xff]
      %v2195 = vld [vmem:[%s2185 + $0x48] sm:$0xff]
      %v2196 = vld [vmem:[%s2185 + $0x50] sm:$0xff]
      %v2197 = vld [vmem:[%s2185 + $0x58] sm:$0xff]
      %v2198 = vld [vmem:[%s2185 + $0x60] sm:$0xff]
      %v2199 = vld [vmem:[%s2185 + $0x68] sm:$0xff]
      %v2200 = vld [vmem:[%s2185 + $0x70] sm:$0xff]
      %v2201 = vld [vmem:[%s2185 + $0x78] sm:$0xff]
      %v2204 = vunpack.c.l.b16 %v891
      %v2205 = vunpack.c.l.b16 %v892
      %v2206 = vpack.c.b16 %v2204, %v1001
      %v2207 = vpack.c.b16 %v2205, %v2205
      %v2208 = vrot.slane %v2206, 1
      %v2209 = vsel %vm1779, %v1813, %v2208
      %v2210 = vrot.slane %v2207, 1
      %v2211 = vsel %vm1779, %v2208, %v2210
      %v2230 = vunpack.c.l.b16 %v2186
      %v2231 = vunpack.c.h.b16 %v2186
      %v2232 = vunpack.c.l.b16 %v2187
      %v2233 = vunpack.c.h.b16 %v2187
      %v2234 = vunpack.c.l.b16 %v2188
      %v2235 = vunpack.c.h.b16 %v2188
      %v2236 = vunpack.c.l.b16 %v2189
      %v2237 = vunpack.c.h.b16 %v2189
      %v2238 = vunpack.c.l.b16 %v2190
      %v2239 = vunpack.c.h.b16 %v2190
      %v2240 = vunpack.c.l.b16 %v2191
      %v2241 = vunpack.c.h.b16 %v2191
      %v2242 = vunpack.c.l.b16 %v2192
      %v2243 = vunpack.c.h.b16 %v2192
      %v2244 = vunpack.c.l.b16 %v2193
      %v2245 = vunpack.c.h.b16 %v2193
      %v2246 = vunpack.c.l.b16 %v2194
      %v2247 = vunpack.c.h.b16 %v2194
      %v2248 = vunpack.c.l.b16 %v2195
      %v2249 = vunpack.c.h.b16 %v2195
      %v2250 = vunpack.c.l.b16 %v2196
      %v2251 = vunpack.c.h.b16 %v2196
      %v2252 = vunpack.c.l.b16 %v2197
      %v2253 = vunpack.c.h.b16 %v2197
      %v2254 = vunpack.c.l.b16 %v2198
      %v2255 = vunpack.c.h.b16 %v2198
      %v2256 = vunpack.c.l.b16 %v2199
      %v2257 = vunpack.c.h.b16 %v2199
      %v2258 = vunpack.c.l.b16 %v2200
      %v2259 = vunpack.c.h.b16 %v2200
      %v2260 = vunpack.c.l.b16 %v2201
      %v2261 = vunpack.c.h.b16 %v2201
      %v2262 = vpack.c.b16 %v2232, %v2230
      %v2263 = vpack.c.b16 %v2233, %v2231
      %v2264 = vpack.c.b16 %v2236, %v2234
      %v2265 = vpack.c.b16 %v2237, %v2235
      %v2266 = vpack.c.b16 %v2240, %v2238
      %v2267 = vpack.c.b16 %v2241, %v2239
      %v2268 = vpack.c.b16 %v2244, %v2242
      %v2269 = vpack.c.b16 %v2245, %v2243
      %v2270 = vpack.c.b16 %v2248, %v2246
      %v2271 = vpack.c.b16 %v2249, %v2247
      %v2272 = vpack.c.b16 %v2252, %v2250
      %v2273 = vpack.c.b16 %v2253, %v2251
      %v2274 = vpack.c.b16 %v2256, %v2254
      %v2275 = vpack.c.b16 %v2257, %v2255
      %v2276 = vpack.c.b16 %v2260, %v2258
      %v2277 = vpack.c.b16 %v2261, %v2259
      %2294 = vmatpush.bf16.msra.mxu0 %v2276
      %2295 = vmatpush.bf16.msra.mxu0 %v2274
      %2296 = vmatpush.bf16.msra.mxu0 %v2272
      %2297 = vmatpush.bf16.msra.mxu0 %v2270
      %2298 = vmatpush.bf16.msra.mxu0 %v2268
      %2299 = vmatpush.bf16.msra.mxu0 %v2266
      %2300 = vmatpush.bf16.msra.mxu0 %v2264
      %2301 = vmatpush.bf16.msra.mxu0 %v2262
      %2302 = vmatmul.bf16.gmra.mxu0 %v1784
      %v2303 = vpop.f32.mrf.mxu0
      %v2304 = vadd.f32 0.0, %v2303
      %v2305 = vpop.f32.mrf.mxu0
      %v2306 = vadd.f32 0.0, %v2305
      %2307 = vmatmul.bf16.gmra.mxu0 %v1786
      %v2308 = vpop.f32.mrf.mxu0
      %v2309 = vadd.f32 0.0, %v2308
      %v2310 = vpop.f32.mrf.mxu0
      %v2311 = vadd.f32 0.0, %v2310
      %2312 = vmatmul.bf16.gmra.mxu0 %v1788
      %v2313 = vpop.f32.mrf.mxu0
      %v2314 = vadd.f32 0.0, %v2313
      %v2315 = vpop.f32.mrf.mxu0
      %v2316 = vadd.f32 0.0, %v2315
      %2317 = vmatmul.bf16.gmra.mxu0 %v1790
      %v2318 = vpop.f32.mrf.mxu0
      %v2319 = vadd.f32 0.0, %v2318
      %v2320 = vpop.f32.mrf.mxu0
      %v2321 = vadd.f32 0.0, %v2320
      %2322 = vmatmul.bf16.gmra.mxu0 %v1792
      %v2323 = vpop.f32.mrf.mxu0
      %v2324 = vadd.f32 0.0, %v2323
      %v2325 = vpop.f32.mrf.mxu0
      %v2326 = vadd.f32 0.0, %v2325
      %2327 = vmatmul.bf16.gmra.mxu0 %v1794
      %v2328 = vpop.f32.mrf.mxu0
      %v2329 = vadd.f32 0.0, %v2328
      %v2330 = vpop.f32.mrf.mxu0
      %v2331 = vadd.f32 0.0, %v2330
      %2332 = vmatmul.bf16.gmra.mxu0 %v1796
      %v2333 = vpop.f32.mrf.mxu0
      %v2334 = vadd.f32 0.0, %v2333
      %v2335 = vpop.f32.mrf.mxu0
      %v2336 = vadd.f32 0.0, %v2335
      %2337 = vmatmul.bf16.gmra.mxu0 %v1798
      %v2338 = vpop.f32.mrf.mxu0
      %v2339 = vadd.f32 0.0, %v2338
      %v2340 = vpop.f32.mrf.mxu0
      %v2341 = vadd.f32 0.0, %v2340
      %2342 = vmatmul.bf16.gmra.mxu0 %v1800
      %v2343 = vpop.f32.mrf.mxu0
      %v2344 = vadd.f32 0.0, %v2343
      %v2345 = vpop.f32.mrf.mxu0
      %v2346 = vadd.f32 0.0, %v2345
      %2347 = vmatmul.bf16.gmra.mxu0 %v1802
      %v2348 = vpop.f32.mrf.mxu0
      %v2349 = vadd.f32 0.0, %v2348
      %v2350 = vpop.f32.mrf.mxu0
      %v2351 = vadd.f32 0.0, %v2350
      %2352 = vmatmul.bf16.gmra.mxu0 %v1804
      %v2353 = vpop.f32.mrf.mxu0
      %v2354 = vadd.f32 0.0, %v2353
      %v2355 = vpop.f32.mrf.mxu0
      %v2356 = vadd.f32 0.0, %v2355
      %2357 = vmatmul.bf16.gmra.mxu0 %v1806
      %v2358 = vpop.f32.mrf.mxu0
      %v2359 = vadd.f32 0.0, %v2358
      %v2360 = vpop.f32.mrf.mxu0
      %v2361 = vadd.f32 0.0, %v2360
      %2362 = vmatmul.bf16.gmra.mxu0 %v1808
      %v2363 = vpop.f32.mrf.mxu0
      %v2364 = vadd.f32 0.0, %v2363
      %v2365 = vpop.f32.mrf.mxu0
      %v2366 = vadd.f32 0.0, %v2365
      %2367 = vmatmul.bf16.gmra.mxu0 %v1810
      %v2368 = vpop.f32.mrf.mxu0
      %v2369 = vadd.f32 0.0, %v2368
      %v2370 = vpop.f32.mrf.mxu0
      %v2371 = vadd.f32 0.0, %v2370
      %2372 = vmatmul.bf16.gmra.mxu0 %v1812
      %v2373 = vpop.f32.mrf.mxu0
      %v2374 = vadd.f32 0.0, %v2373
      %v2375 = vpop.f32.mrf.mxu0
      %v2376 = vadd.f32 0.0, %v2375
      %2377 = vmatmul.bf16.gmra.mxu0 %v1814
      %v2378 = vpop.f32.mrf.mxu0
      %v2379 = vadd.f32 0.0, %v2378
      %v2380 = vpop.f32.mrf.mxu0
      %v2381 = vadd.f32 0.0, %v2380
      %2382 = vmatmul.bf16.gmra.mxu0 %v2209
      %v2383 = vpop.f32.mrf.mxu0
      %v2384 = vadd.f32 0.0, %v2383
      %v2385 = vpop.f32.mrf.mxu0
      %v2386 = vadd.f32 0.0, %v2385
      %2387 = vmatmul.bf16.gmra.mxu0 %v2211
      %v2388 = vpop.f32.mrf.mxu0
      %v2389 = vadd.f32 0.0, %v2388
      %v2390 = vpop.f32.mrf.mxu0
      %v2391 = vadd.f32 0.0, %v2390
      %2392 = vdwg.mxu0
      %2393 = vmatpush.bf16.msra.mxu0 %v2277
      %2394 = vmatpush.bf16.msra.mxu0 %v2275
      %2395 = vmatpush.bf16.msra.mxu0 %v2273
      %2396 = vmatpush.bf16.msra.mxu0 %v2271
      %2397 = vmatpush.bf16.msra.mxu0 %v2269
      %2398 = vmatpush.bf16.msra.mxu0 %v2267
      %2399 = vmatpush.bf16.msra.mxu0 %v2265
      %2400 = vmatpush.bf16.msra.mxu0 %v2263
      %2401 = vmatmul.bf16.gmra.mxu0 %v1784
      %v2402 = vpop.f32.mrf.mxu0
      %v2403 = vadd.f32 0.0, %v2402
      %v2404 = vpop.f32.mrf.mxu0
      %v2405 = vadd.f32 0.0, %v2404
      %2406 = vmatmul.bf16.gmra.mxu0 %v1786
      %v2407 = vpop.f32.mrf.mxu0
      %v2408 = vadd.f32 0.0, %v2407
      %v2409 = vpop.f32.mrf.mxu0
      %v2410 = vadd.f32 0.0, %v2409
      %2411 = vmatmul.bf16.gmra.mxu0 %v1788
      %v2412 = vpop.f32.mrf.mxu0
      %v2413 = vadd.f32 0.0, %v2412
      %v2414 = vpop.f32.mrf.mxu0
      %v2415 = vadd.f32 0.0, %v2414
      %2416 = vmatmul.bf16.gmra.mxu0 %v1790
      %v2417 = vpop.f32.mrf.mxu0
      %v2418 = vadd.f32 0.0, %v2417
      %v2419 = vpop.f32.mrf.mxu0
      %v2420 = vadd.f32 0.0, %v2419
      %2421 = vmatmul.bf16.gmra.mxu0 %v1792
      %v2422 = vpop.f32.mrf.mxu0
      %v2423 = vadd.f32 0.0, %v2422
      %v2424 = vpop.f32.mrf.mxu0
      %v2425 = vadd.f32 0.0, %v2424
      %2426 = vmatmul.bf16.gmra.mxu0 %v1794
      %v2427 = vpop.f32.mrf.mxu0
      %v2428 = vadd.f32 0.0, %v2427
      %v2429 = vpop.f32.mrf.mxu0
      %v2430 = vadd.f32 0.0, %v2429
      %2431 = vmatmul.bf16.gmra.mxu0 %v1796
      %v2432 = vpop.f32.mrf.mxu0
      %v2433 = vadd.f32 0.0, %v2432
      %v2434 = vpop.f32.mrf.mxu0
      %v2435 = vadd.f32 0.0, %v2434
      %2436 = vmatmul.bf16.gmra.mxu0 %v1798
      %v2437 = vpop.f32.mrf.mxu0
      %v2438 = vadd.f32 0.0, %v2437
      %v2439 = vpop.f32.mrf.mxu0
      %v2440 = vadd.f32 0.0, %v2439
      %2441 = vmatmul.bf16.gmra.mxu0 %v1800
      %v2442 = vpop.f32.mrf.mxu0
      %v2443 = vadd.f32 0.0, %v2442
      %v2444 = vpop.f32.mrf.mxu0
      %v2445 = vadd.f32 0.0, %v2444
      %2446 = vmatmul.bf16.gmra.mxu0 %v1802
      %v2447 = vpop.f32.mrf.mxu0
      %v2448 = vadd.f32 0.0, %v2447
      %v2449 = vpop.f32.mrf.mxu0
      %v2450 = vadd.f32 0.0, %v2449
      %2451 = vmatmul.bf16.gmra.mxu0 %v1804
      %v2452 = vpop.f32.mrf.mxu0
      %v2453 = vadd.f32 0.0, %v2452
      %v2454 = vpop.f32.mrf.mxu0
      %v2455 = vadd.f32 0.0, %v2454
      %2456 = vmatmul.bf16.gmra.mxu0 %v1806
      %v2457 = vpop.f32.mrf.mxu0
      %v2458 = vadd.f32 0.0, %v2457
      %v2459 = vpop.f32.mrf.mxu0
      %v2460 = vadd.f32 0.0, %v2459
      %2461 = vmatmul.bf16.gmra.mxu0 %v1808
      %v2462 = vpop.f32.mrf.mxu0
      %v2463 = vadd.f32 0.0, %v2462
      %v2464 = vpop.f32.mrf.mxu0
      %v2465 = vadd.f32 0.0, %v2464
      %2466 = vmatmul.bf16.gmra.mxu0 %v1810
      %v2467 = vpop.f32.mrf.mxu0
      %v2468 = vadd.f32 0.0, %v2467
      %v2469 = vpop.f32.mrf.mxu0
      %v2470 = vadd.f32 0.0, %v2469
      %2471 = vmatmul.bf16.gmra.mxu0 %v1812
      %v2472 = vpop.f32.mrf.mxu0
      %v2473 = vadd.f32 0.0, %v2472
      %v2474 = vpop.f32.mrf.mxu0
      %v2475 = vadd.f32 0.0, %v2474
      %2476 = vmatmul.bf16.gmra.mxu0 %v1814
      %v2477 = vpop.f32.mrf.mxu0
      %v2478 = vadd.f32 0.0, %v2477
      %v2479 = vpop.f32.mrf.mxu0
      %v2480 = vadd.f32 0.0, %v2479
      %2481 = vmatmul.bf16.gmra.mxu0 %v2209
      %v2482 = vpop.f32.mrf.mxu0
      %v2483 = vadd.f32 0.0, %v2482
      %v2484 = vpop.f32.mrf.mxu0
      %v2485 = vadd.f32 0.0, %v2484
      %2486 = vmatmul.bf16.gmra.mxu0 %v2211
      %v2487 = vpop.f32.mrf.mxu0
      %v2488 = vadd.f32 0.0, %v2487
      %v2489 = vpop.f32.mrf.mxu0
      %v2490 = vadd.f32 0.0, %v2489
      %2491 = vdwg.mxu0
      %v2492 = vadd.f32 %v2113, %v2304
      %v2493 = vadd.f32 %v2114, %v2403
      %v2494 = vadd.f32 %v2115, %v2306
      %v2495 = vadd.f32 %v2116, %v2405
      %v2496 = vadd.f32 %v2117, %v2309
      %v2497 = vadd.f32 %v2118, %v2408
      %v2498 = vadd.f32 %v2119, %v2311
      %v2499 = vadd.f32 %v2120, %v2410
      %v2500 = vadd.f32 %v2121, %v2314
      %v2501 = vadd.f32 %v2122, %v2413
      %v2502 = vadd.f32 %v2123, %v2316
      %v2503 = vadd.f32 %v2124, %v2415
      %v2504 = vadd.f32 %v2125, %v2319
      %v2505 = vadd.f32 %v2126, %v2418
      %v2506 = vadd.f32 %v2127, %v2321
      %v2507 = vadd.f32 %v2128, %v2420
      %v2508 = vadd.f32 %v2129, %v2324
      %v2509 = vadd.f32 %v2130, %v2423
      %v2510 = vadd.f32 %v2131, %v2326
      %v2511 = vadd.f32 %v2132, %v2425
      %v2512 = vadd.f32 %v2133, %v2329
      %v2513 = vadd.f32 %v2134, %v2428
      %v2514 = vadd.f32 %v2135, %v2331
      %v2515 = vadd.f32 %v2136, %v2430
      %v2516 = vadd.f32 %v2137, %v2334
      %v2517 = vadd.f32 %v2138, %v2433
      %v2518 = vadd.f32 %v2139, %v2336
      %v2519 = vadd.f32 %v2140, %v2435
      %v2520 = vadd.f32 %v2141, %v2339
      %v2521 = vadd.f32 %v2142, %v2438
      %v2522 = vadd.f32 %v2143, %v2341
      %v2523 = vadd.f32 %v2144, %v2440
      %v2524 = vadd.f32 %v2145, %v2344
      %v2525 = vadd.f32 %v2146, %v2443
      %v2526 = vadd.f32 %v2147, %v2346
      %v2527 = vadd.f32 %v2148, %v2445
      %v2528 = vadd.f32 %v2149, %v2349
      %v2529 = vadd.f32 %v2150, %v2448
      %v2530 = vadd.f32 %v2151, %v2351
      %v2531 = vadd.f32 %v2152, %v2450
      %v2532 = vadd.f32 %v2153, %v2354
      %v2533 = vadd.f32 %v2154, %v2453
      %v2534 = vadd.f32 %v2155, %v2356
      %v2535 = vadd.f32 %v2156, %v2455
      %v2536 = vadd.f32 %v2157, %v2359
      %v2537 = vadd.f32 %v2158, %v2458
      %v2538 = vadd.f32 %v2159, %v2361
      %v2539 = vadd.f32 %v2160, %v2460
      %v2540 = vadd.f32 %v2161, %v2364
      %v2541 = vadd.f32 %v2162, %v2463
      %v2542 = vadd.f32 %v2163, %v2366
      %v2543 = vadd.f32 %v2164, %v2465
      %v2544 = vadd.f32 %v2165, %v2369
      %v2545 = vadd.f32 %v2166, %v2468
      %v2546 = vadd.f32 %v2167, %v2371
      %v2547 = vadd.f32 %v2168, %v2470
      %v2548 = vadd.f32 %v2169, %v2374
      %v2549 = vadd.f32 %v2170, %v2473
      %v2550 = vadd.f32 %v2171, %v2376
      %v2551 = vadd.f32 %v2172, %v2475
      %v2552 = vadd.f32 %v2173, %v2379
      %v2553 = vadd.f32 %v2174, %v2478
      %v2554 = vadd.f32 %v2175, %v2381
      %v2555 = vadd.f32 %v2176, %v2480
      %v2556 = vadd.f32 %v2177, %v2384
      %v2557 = vadd.f32 %v2178, %v2483
      %v2558 = vadd.f32 %v2179, %v2386
      %v2559 = vadd.f32 %v2180, %v2485
      %v2560 = vadd.f32 %v2181, %v2389
      %v2561 = vadd.f32 %v2182, %v2488
      %v2562 = vadd.f32 %v2183, %v2391
      %v2563 = vadd.f32 %v2184, %v2490
      %s2564 = scalar_lea.vmem %s4, 512
      %v2565 = vld [vmem:[%s2564] sm:$0xff]
      %v2566 = vld [vmem:[%s2564 + $0x8] sm:$0xff]
      %v2567 = vld [vmem:[%s2564 + $0x10] sm:$0xff]
      %v2568 = vld [vmem:[%s2564 + $0x18] sm:$0xff]
      %v2569 = vld [vmem:[%s2564 + $0x20] sm:$0xff]
      %v2570 = vld [vmem:[%s2564 + $0x28] sm:$0xff]
      %v2571 = vld [vmem:[%s2564 + $0x30] sm:$0xff]
      %v2572 = vld [vmem:[%s2564 + $0x38] sm:$0xff]
      %v2573 = vld [vmem:[%s2564 + $0x40] sm:$0xff]
      %v2574 = vld [vmem:[%s2564 + $0x48] sm:$0xff]
      %v2575 = vld [vmem:[%s2564 + $0x50] sm:$0xff]
      %v2576 = vld [vmem:[%s2564 + $0x58] sm:$0xff]
      %v2577 = vld [vmem:[%s2564 + $0x60] sm:$0xff]
      %v2578 = vld [vmem:[%s2564 + $0x68] sm:$0xff]
      %v2579 = vld [vmem:[%s2564 + $0x70] sm:$0xff]
      %v2580 = vld [vmem:[%s2564 + $0x78] sm:$0xff]
      %vm2581 = vsmask.f32 6400
      %v2582 = vrot.slane %v1034, 1
      %v2583 = vrot.slane %v1030, 2
      %v2584 = vor.u32 %v2582, %v2583
      %v2585 = vrot.slane %v1042, 1
      %v2586 = vrot.slane %v1038, 2
      %v2587 = vor.u32 %v2585, %v2586
      %v2588 = vsel %vm2581, %v2584, %v2587
      %v2589 = vrot.slane %v1050, 1
      %v2590 = vrot.slane %v1046, 2
      %v2591 = vor.u32 %v2589, %v2590
      %v2592 = vsel %vm2581, %v2587, %v2591
      %v2593 = vrot.slane %v1058, 1
      %v2594 = vrot.slane %v1054, 2
      %v2595 = vor.u32 %v2593, %v2594
      %v2596 = vsel %vm2581, %v2591, %v2595
      %v2597 = vrot.slane %v1066, 1
      %v2598 = vrot.slane %v1062, 2
      %v2599 = vor.u32 %v2597, %v2598
      %v2600 = vsel %vm2581, %v2595, %v2599
      %v2601 = vrot.slane %v1074, 1
      %v2602 = vrot.slane %v1070, 2
      %v2603 = vor.u32 %v2601, %v2602
      %v2604 = vsel %vm2581, %v2599, %v2603
      %v2605 = vrot.slane %v1082, 1
      %v2606 = vrot.slane %v1078, 2
      %v2607 = vor.u32 %v2605, %v2606
      %v2608 = vsel %vm2581, %v2603, %v2607
      %v2609 = vrot.slane %v1090, 1
      %v2610 = vrot.slane %v1086, 2
      %v2611 = vor.u32 %v2609, %v2610
      %v2612 = vsel %vm2581, %v2607, %v2611
      %v2613 = vrot.slane %v1098, 1
      %v2614 = vrot.slane %v1094, 2
      %v2615 = vor.u32 %v2613, %v2614
      %v2616 = vsel %vm2581, %v2611, %v2615
      %v2617 = vrot.slane %v1106, 1
      %v2618 = vrot.slane %v1102, 2
      %v2619 = vor.u32 %v2617, %v2618
      %v2620 = vsel %vm2581, %v2615, %v2619
      %v2621 = vrot.slane %v1114, 1
      %v2622 = vrot.slane %v1110, 2
      %v2623 = vor.u32 %v2621, %v2622
      %v2624 = vsel %vm2581, %v2619, %v2623
      %v2625 = vrot.slane %v1122, 1
      %v2626 = vrot.slane %v1118, 2
      %v2627 = vor.u32 %v2625, %v2626
      %v2628 = vsel %vm2581, %v2623, %v2627
      %v2629 = vrot.slane %v1130, 1
      %v2630 = vrot.slane %v1126, 2
      %v2631 = vor.u32 %v2629, %v2630
      %v2632 = vsel %vm2581, %v2627, %v2631
      %v2633 = vrot.slane %v1138, 1
      %v2634 = vrot.slane %v1134, 2
      %v2635 = vor.u32 %v2633, %v2634
      %v2636 = vsel %vm2581, %v2631, %v2635
      %v2637 = vrot.slane %v1146, 1
      %v2638 = vrot.slane %v1142, 2
      %v2639 = vor.u32 %v2637, %v2638
      %v2640 = vsel %vm2581, %v2635, %v2639
      %v2641 = vrot.slane %v1154, 1
      %v2642 = vrot.slane %v1150, 2
      %v2643 = vor.u32 %v2641, %v2642
      %v2644 = vsel %vm2581, %v2639, %v2643
      %v2645 = vrot.slane %v1162, 1
      %v2646 = vrot.slane %v1158, 2
      %v2647 = vor.u32 %v2645, %v2646
      %v2648 = vsel %vm2581, %v2643, %v2647
      %v2650 = vshrl.u32 %v2206, 16
      %v2652 = vrot.slane %v2650, 1
      %v2653 = vshll.u32 %v2206, 16
      %v2655 = vrot.slane %v2653, 2
      %v2656 = vor.u32 %v2652, %v2655
      %v2657 = vsel %vm2581, %v2647, %v2656
      %v2659 = vshrl.u32 %v2207, 16
      %v2661 = vrot.slane %v2659, 1
      %v2662 = vshll.u32 %v2207, 16
      %v2664 = vrot.slane %v2662, 2
      %v2665 = vor.u32 %v2661, %v2664
      %v2666 = vsel %vm2581, %v2656, %v2665
      %v2701 = vunpack.c.l.b16 %v2565
      %v2702 = vunpack.c.h.b16 %v2565
      %v2703 = vunpack.c.l.b16 %v2566
      %v2704 = vunpack.c.h.b16 %v2566
      %v2705 = vunpack.c.l.b16 %v2567
      %v2706 = vunpack.c.h.b16 %v2567
      %v2707 = vunpack.c.l.b16 %v2568
      %v2708 = vunpack.c.h.b16 %v2568
      %v2709 = vunpack.c.l.b16 %v2569
      %v2710 = vunpack.c.h.b16 %v2569
      %v2711 = vunpack.c.l.b16 %v2570
      %v2712 = vunpack.c.h.b16 %v2570
      %v2713 = vunpack.c.l.b16 %v2571
      %v2714 = vunpack.c.h.b16 %v2571
      %v2715 = vunpack.c.l.b16 %v2572
      %v2716 = vunpack.c.h.b16 %v2572
      %v2717 = vunpack.c.l.b16 %v2573
      %v2718 = vunpack.c.h.b16 %v2573
      %v2719 = vunpack.c.l.b16 %v2574
      %v2720 = vunpack.c.h.b16 %v2574
      %v2721 = vunpack.c.l.b16 %v2575
      %v2722 = vunpack.c.h.b16 %v2575
      %v2723 = vunpack.c.l.b16 %v2576
      %v2724 = vunpack.c.h.b16 %v2576
      %v2725 = vunpack.c.l.b16 %v2577
      %v2726 = vunpack.c.h.b16 %v2577
      %v2727 = vunpack.c.l.b16 %v2578
      %v2728 = vunpack.c.h.b16 %v2578
      %v2729 = vunpack.c.l.b16 %v2579
      %v2730 = vunpack.c.h.b16 %v2579
      %v2731 = vunpack.c.l.b16 %v2580
      %v2732 = vunpack.c.h.b16 %v2580
      %v2733 = vpack.c.b16 %v2703, %v2701
      %v2734 = vpack.c.b16 %v2704, %v2702
      %v2735 = vpack.c.b16 %v2707, %v2705
      %v2736 = vpack.c.b16 %v2708, %v2706
      %v2737 = vpack.c.b16 %v2711, %v2709
      %v2738 = vpack.c.b16 %v2712, %v2710
      %v2739 = vpack.c.b16 %v2715, %v2713
      %v2740 = vpack.c.b16 %v2716, %v2714
      %v2741 = vpack.c.b16 %v2719, %v2717
      %v2742 = vpack.c.b16 %v2720, %v2718
      %v2743 = vpack.c.b16 %v2723, %v2721
      %v2744 = vpack.c.b16 %v2724, %v2722
      %v2745 = vpack.c.b16 %v2727, %v2725
      %v2746 = vpack.c.b16 %v2728, %v2726
      %v2747 = vpack.c.b16 %v2731, %v2729
      %v2748 = vpack.c.b16 %v2732, %v2730
      %2765 = vmatpush.bf16.msra.mxu0 %v2747
      %2766 = vmatpush.bf16.msra.mxu0 %v2745
      %2767 = vmatpush.bf16.msra.mxu0 %v2743
      %2768 = vmatpush.bf16.msra.mxu0 %v2741
      %2769 = vmatpush.bf16.msra.mxu0 %v2739
      %2770 = vmatpush.bf16.msra.mxu0 %v2737
      %2771 = vmatpush.bf16.msra.mxu0 %v2735
      %2772 = vmatpush.bf16.msra.mxu0 %v2733
      %2773 = vmatmul.bf16.gmra.mxu0 %v2588
      %v2774 = vpop.f32.mrf.mxu0
      %v2775 = vadd.f32 0.0, %v2774
      %v2776 = vpop.f32.mrf.mxu0
      %v2777 = vadd.f32 0.0, %v2776
      %2778 = vmatmul.bf16.gmra.mxu0 %v2592
      %v2779 = vpop.f32.mrf.mxu0
      %v2780 = vadd.f32 0.0, %v2779
      %v2781 = vpop.f32.mrf.mxu0
      %v2782 = vadd.f32 0.0, %v2781
      %2783 = vmatmul.bf16.gmra.mxu0 %v2596
      %v2784 = vpop.f32.mrf.mxu0
      %v2785 = vadd.f32 0.0, %v2784
      %v2786 = vpop.f32.mrf.mxu0
      %v2787 = vadd.f32 0.0, %v2786
      %2788 = vmatmul.bf16.gmra.mxu0 %v2600
      %v2789 = vpop.f32.mrf.mxu0
      %v2790 = vadd.f32 0.0, %v2789
      %v2791 = vpop.f32.mrf.mxu0
      %v2792 = vadd.f32 0.0, %v2791
      %2793 = vmatmul.bf16.gmra.mxu0 %v2604
      %v2794 = vpop.f32.mrf.mxu0
      %v2795 = vadd.f32 0.0, %v2794
      %v2796 = vpop.f32.mrf.mxu0
      %v2797 = vadd.f32 0.0, %v2796
      %2798 = vmatmul.bf16.gmra.mxu0 %v2608
      %v2799 = vpop.f32.mrf.mxu0
      %v2800 = vadd.f32 0.0, %v2799
      %v2801 = vpop.f32.mrf.mxu0
      %v2802 = vadd.f32 0.0, %v2801
      %2803 = vmatmul.bf16.gmra.mxu0 %v2612
      %v2804 = vpop.f32.mrf.mxu0
      %v2805 = vadd.f32 0.0, %v2804
      %v2806 = vpop.f32.mrf.mxu0
      %v2807 = vadd.f32 0.0, %v2806
      %2808 = vmatmul.bf16.gmra.mxu0 %v2616
      %v2809 = vpop.f32.mrf.mxu0
      %v2810 = vadd.f32 0.0, %v2809
      %v2811 = vpop.f32.mrf.mxu0
      %v2812 = vadd.f32 0.0, %v2811
      %2813 = vmatmul.bf16.gmra.mxu0 %v2620
      %v2814 = vpop.f32.mrf.mxu0
      %v2815 = vadd.f32 0.0, %v2814
      %v2816 = vpop.f32.mrf.mxu0
      %v2817 = vadd.f32 0.0, %v2816
      %2818 = vmatmul.bf16.gmra.mxu0 %v2624
      %v2819 = vpop.f32.mrf.mxu0
      %v2820 = vadd.f32 0.0, %v2819
      %v2821 = vpop.f32.mrf.mxu0
      %v2822 = vadd.f32 0.0, %v2821
      %2823 = vmatmul.bf16.gmra.mxu0 %v2628
      %v2824 = vpop.f32.mrf.mxu0
      %v2825 = vadd.f32 0.0, %v2824
      %v2826 = vpop.f32.mrf.mxu0
      %v2827 = vadd.f32 0.0, %v2826
      %2828 = vmatmul.bf16.gmra.mxu0 %v2632
      %v2829 = vpop.f32.mrf.mxu0
      %v2830 = vadd.f32 0.0, %v2829
      %v2831 = vpop.f32.mrf.mxu0
      %v2832 = vadd.f32 0.0, %v2831
      %2833 = vmatmul.bf16.gmra.mxu0 %v2636
      %v2834 = vpop.f32.mrf.mxu0
      %v2835 = vadd.f32 0.0, %v2834
      %v2836 = vpop.f32.mrf.mxu0
      %v2837 = vadd.f32 0.0, %v2836
      %2838 = vmatmul.bf16.gmra.mxu0 %v2640
      %v2839 = vpop.f32.mrf.mxu0
      %v2840 = vadd.f32 0.0, %v2839
      %v2841 = vpop.f32.mrf.mxu0
      %v2842 = vadd.f32 0.0, %v2841
      %2843 = vmatmul.bf16.gmra.mxu0 %v2644
      %v2844 = vpop.f32.mrf.mxu0
      %v2845 = vadd.f32 0.0, %v2844
      %v2846 = vpop.f32.mrf.mxu0
      %v2847 = vadd.f32 0.0, %v2846
      %2848 = vmatmul.bf16.gmra.mxu0 %v2648
      %v2849 = vpop.f32.mrf.mxu0
      %v2850 = vadd.f32 0.0, %v2849
      %v2851 = vpop.f32.mrf.mxu0
      %v2852 = vadd.f32 0.0, %v2851
      %2853 = vmatmul.bf16.gmra.mxu0 %v2657
      %v2854 = vpop.f32.mrf.mxu0
      %v2855 = vadd.f32 0.0, %v2854
      %v2856 = vpop.f32.mrf.mxu0
      %v2857 = vadd.f32 0.0, %v2856
      %2858 = vmatmul.bf16.gmra.mxu0 %v2666
      %v2859 = vpop.f32.mrf.mxu0
      %v2860 = vadd.f32 0.0, %v2859
      %v2861 = vpop.f32.mrf.mxu0
      %v2862 = vadd.f32 0.0, %v2861
      %2863 = vdwg.mxu0
      %2864 = vmatpush.bf16.msra.mxu0 %v2748
      %2865 = vmatpush.bf16.msra.mxu0 %v2746
      %2866 = vmatpush.bf16.msra.mxu0 %v2744
      %2867 = vmatpush.bf16.msra.mxu0 %v2742
      %2868 = vmatpush.bf16.msra.mxu0 %v2740
      %2869 = vmatpush.bf16.msra.mxu0 %v2738
      %2870 = vmatpush.bf16.msra.mxu0 %v2736
      %2871 = vmatpush.bf16.msra.mxu0 %v2734
      %2872 = vmatmul.bf16.gmra.mxu0 %v2588
      %v2873 = vpop.f32.mrf.mxu0
      %v2874 = vadd.f32 0.0, %v2873
      %v2875 = vpop.f32.mrf.mxu0
      %v2876 = vadd.f32 0.0, %v2875
      %2877 = vmatmul.bf16.gmra.mxu0 %v2592
      %v2878 = vpop.f32.mrf.mxu0
      %v2879 = vadd.f32 0.0, %v2878
      %v2880 = vpop.f32.mrf.mxu0
      %v2881 = vadd.f32 0.0, %v2880
      %2882 = vmatmul.bf16.gmra.mxu0 %v2596
      %v2883 = vpop.f32.mrf.mxu0
      %v2884 = vadd.f32 0.0, %v2883
      %v2885 = vpop.f32.mrf.mxu0
      %v2886 = vadd.f32 0.0, %v2885
      %2887 = vmatmul.bf16.gmra.mxu0 %v2600
      %v2888 = vpop.f32.mrf.mxu0
      %v2889 = vadd.f32 0.0, %v2888
      %v2890 = vpop.f32.mrf.mxu0
      %v2891 = vadd.f32 0.0, %v2890
      %2892 = vmatmul.bf16.gmra.mxu0 %v2604
      %v2893 = vpop.f32.mrf.mxu0
      %v2894 = vadd.f32 0.0, %v2893
      %v2895 = vpop.f32.mrf.mxu0
      %v2896 = vadd.f32 0.0, %v2895
      %2897 = vmatmul.bf16.gmra.mxu0 %v2608
      %v2898 = vpop.f32.mrf.mxu0
      %v2899 = vadd.f32 0.0, %v2898
      %v2900 = vpop.f32.mrf.mxu0
      %v2901 = vadd.f32 0.0, %v2900
      %2902 = vmatmul.bf16.gmra.mxu0 %v2612
      %v2903 = vpop.f32.mrf.mxu0
      %v2904 = vadd.f32 0.0, %v2903
      %v2905 = vpop.f32.mrf.mxu0
      %v2906 = vadd.f32 0.0, %v2905
      %2907 = vmatmul.bf16.gmra.mxu0 %v2616
      %v2908 = vpop.f32.mrf.mxu0
      %v2909 = vadd.f32 0.0, %v2908
      %v2910 = vpop.f32.mrf.mxu0
      %v2911 = vadd.f32 0.0, %v2910
      %2912 = vmatmul.bf16.gmra.mxu0 %v2620
      %v2913 = vpop.f32.mrf.mxu0
      %v2914 = vadd.f32 0.0, %v2913
      %v2915 = vpop.f32.mrf.mxu0
      %v2916 = vadd.f32 0.0, %v2915
      %2917 = vmatmul.bf16.gmra.mxu0 %v2624
      %v2918 = vpop.f32.mrf.mxu0
      %v2919 = vadd.f32 0.0, %v2918
      %v2920 = vpop.f32.mrf.mxu0
      %v2921 = vadd.f32 0.0, %v2920
      %2922 = vmatmul.bf16.gmra.mxu0 %v2628
      %v2923 = vpop.f32.mrf.mxu0
      %v2924 = vadd.f32 0.0, %v2923
      %v2925 = vpop.f32.mrf.mxu0
      %v2926 = vadd.f32 0.0, %v2925
      %2927 = vmatmul.bf16.gmra.mxu0 %v2632
      %v2928 = vpop.f32.mrf.mxu0
      %v2929 = vadd.f32 0.0, %v2928
      %v2930 = vpop.f32.mrf.mxu0
      %v2931 = vadd.f32 0.0, %v2930
      %2932 = vmatmul.bf16.gmra.mxu0 %v2636
      %v2933 = vpop.f32.mrf.mxu0
      %v2934 = vadd.f32 0.0, %v2933
      %v2935 = vpop.f32.mrf.mxu0
      %v2936 = vadd.f32 0.0, %v2935
      %2937 = vmatmul.bf16.gmra.mxu0 %v2640
      %v2938 = vpop.f32.mrf.mxu0
      %v2939 = vadd.f32 0.0, %v2938
      %v2940 = vpop.f32.mrf.mxu0
      %v2941 = vadd.f32 0.0, %v2940
      %2942 = vmatmul.bf16.gmra.mxu0 %v2644
      %v2943 = vpop.f32.mrf.mxu0
      %v2944 = vadd.f32 0.0, %v2943
      %v2945 = vpop.f32.mrf.mxu0
      %v2946 = vadd.f32 0.0, %v2945
      %2947 = vmatmul.bf16.gmra.mxu0 %v2648
      %v2948 = vpop.f32.mrf.mxu0
      %v2949 = vadd.f32 0.0, %v2948
      %v2950 = vpop.f32.mrf.mxu0
      %v2951 = vadd.f32 0.0, %v2950
      %2952 = vmatmul.bf16.gmra.mxu0 %v2657
      %v2953 = vpop.f32.mrf.mxu0
      %v2954 = vadd.f32 0.0, %v2953
      %v2955 = vpop.f32.mrf.mxu0
      %v2956 = vadd.f32 0.0, %v2955
      %2957 = vmatmul.bf16.gmra.mxu0 %v2666
      %v2958 = vpop.f32.mrf.mxu0
      %v2959 = vadd.f32 0.0, %v2958
      %v2960 = vpop.f32.mrf.mxu0
      %v2961 = vadd.f32 0.0, %v2960
      %2962 = vdwg.mxu0
      %v2963 = vadd.f32 %v2492, %v2775
      %v2964 = vadd.f32 %v2493, %v2874
      %v2965 = vadd.f32 %v2494, %v2777
      %v2966 = vadd.f32 %v2495, %v2876
      %v2967 = vadd.f32 %v2496, %v2780
      %v2968 = vadd.f32 %v2497, %v2879
      %v2969 = vadd.f32 %v2498, %v2782
      %v2970 = vadd.f32 %v2499, %v2881
      %v2971 = vadd.f32 %v2500, %v2785
      %v2972 = vadd.f32 %v2501, %v2884
      %v2973 = vadd.f32 %v2502, %v2787
      %v2974 = vadd.f32 %v2503, %v2886
      %v2975 = vadd.f32 %v2504, %v2790
      %v2976 = vadd.f32 %v2505, %v2889
      %v2977 = vadd.f32 %v2506, %v2792
      %v2978 = vadd.f32 %v2507, %v2891
      %v2979 = vadd.f32 %v2508, %v2795
      %v2980 = vadd.f32 %v2509, %v2894
      %v2981 = vadd.f32 %v2510, %v2797
      %v2982 = vadd.f32 %v2511, %v2896
      %v2983 = vadd.f32 %v2512, %v2800
      %v2984 = vadd.f32 %v2513, %v2899
      %v2985 = vadd.f32 %v2514, %v2802
      %v2986 = vadd.f32 %v2515, %v2901
      %v2987 = vadd.f32 %v2516, %v2805
      %v2988 = vadd.f32 %v2517, %v2904
      %v2989 = vadd.f32 %v2518, %v2807
      %v2990 = vadd.f32 %v2519, %v2906
      %v2991 = vadd.f32 %v2520, %v2810
      %v2992 = vadd.f32 %v2521, %v2909
      %v2993 = vadd.f32 %v2522, %v2812
      %v2994 = vadd.f32 %v2523, %v2911
      %v2995 = vadd.f32 %v2524, %v2815
      %v2996 = vadd.f32 %v2525, %v2914
      %v2997 = vadd.f32 %v2526, %v2817
      %v2998 = vadd.f32 %v2527, %v2916
      %v2999 = vadd.f32 %v2528, %v2820
      %v3000 = vadd.f32 %v2529, %v2919
      %v3001 = vadd.f32 %v2530, %v2822
      %v3002 = vadd.f32 %v2531, %v2921
      %v3003 = vadd.f32 %v2532, %v2825
      %v3004 = vadd.f32 %v2533, %v2924
      %v3005 = vadd.f32 %v2534, %v2827
      %v3006 = vadd.f32 %v2535, %v2926
      %v3007 = vadd.f32 %v2536, %v2830
      %v3008 = vadd.f32 %v2537, %v2929
      %v3009 = vadd.f32 %v2538, %v2832
      %v3010 = vadd.f32 %v2539, %v2931
      %v3011 = vadd.f32 %v2540, %v2835
      %v3012 = vadd.f32 %v2541, %v2934
      %v3013 = vadd.f32 %v2542, %v2837
      %v3014 = vadd.f32 %v2543, %v2936
      %v3015 = vadd.f32 %v2544, %v2840
      %v3016 = vadd.f32 %v2545, %v2939
      %v3017 = vadd.f32 %v2546, %v2842
      %v3018 = vadd.f32 %v2547, %v2941
      %v3019 = vadd.f32 %v2548, %v2845
      %v3020 = vadd.f32 %v2549, %v2944
      %v3021 = vadd.f32 %v2550, %v2847
      %v3022 = vadd.f32 %v2551, %v2946
      %v3023 = vadd.f32 %v2552, %v2850
      %v3024 = vadd.f32 %v2553, %v2949
      %v3025 = vadd.f32 %v2554, %v2852
      %v3026 = vadd.f32 %v2555, %v2951
      %v3027 = vadd.f32 %v2556, %v2855
      %v3028 = vadd.f32 %v2557, %v2954
      %v3029 = vadd.f32 %v2558, %v2857
      %v3030 = vadd.f32 %v2559, %v2956
      %v3031 = vadd.f32 %v2560, %v2860
      %v3032 = vadd.f32 %v2561, %v2959
      %v3033 = vadd.f32 %v2562, %v2862
      %v3034 = vadd.f32 %v2563, %v2961
      %s3035 = scalar_lea.vmem %s4, 640
      %v3036 = vld [vmem:[%s3035] sm:$0xff]
      %v3037 = vld [vmem:[%s3035 + $0x8] sm:$0xff]
      %v3038 = vld [vmem:[%s3035 + $0x10] sm:$0xff]
      %v3039 = vld [vmem:[%s3035 + $0x18] sm:$0xff]
      %v3040 = vld [vmem:[%s3035 + $0x20] sm:$0xff]
      %v3041 = vld [vmem:[%s3035 + $0x28] sm:$0xff]
      %v3042 = vld [vmem:[%s3035 + $0x30] sm:$0xff]
      %v3043 = vld [vmem:[%s3035 + $0x38] sm:$0xff]
      %v3044 = vld [vmem:[%s3035 + $0x40] sm:$0xff]
      %v3045 = vld [vmem:[%s3035 + $0x48] sm:$0xff]
      %v3046 = vld [vmem:[%s3035 + $0x50] sm:$0xff]
      %v3047 = vld [vmem:[%s3035 + $0x58] sm:$0xff]
      %v3048 = vld [vmem:[%s3035 + $0x60] sm:$0xff]
      %v3049 = vld [vmem:[%s3035 + $0x68] sm:$0xff]
      %v3050 = vld [vmem:[%s3035 + $0x70] sm:$0xff]
      %v3051 = vld [vmem:[%s3035 + $0x78] sm:$0xff]
      %vm3052 = vcmask 1045504
      %v3053 = vrot.slane %v1003, 2
      %v3054 = vrot.slane %v1004, 2
      %v3055 = vsel %vm3052, %v3053, %v3054
      %v3056 = vrot.slane %v1005, 2
      %v3057 = vsel %vm3052, %v3054, %v3056
      %v3058 = vrot.slane %v1006, 2
      %v3059 = vsel %vm3052, %v3056, %v3058
      %v3060 = vrot.slane %v1007, 2
      %v3061 = vsel %vm3052, %v3058, %v3060
      %v3062 = vrot.slane %v1008, 2
      %v3063 = vsel %vm3052, %v3060, %v3062
      %v3064 = vrot.slane %v1009, 2
      %v3065 = vsel %vm3052, %v3062, %v3064
      %v3066 = vrot.slane %v1010, 2
      %v3067 = vsel %vm3052, %v3064, %v3066
      %v3068 = vrot.slane %v1011, 2
      %v3069 = vsel %vm3052, %v3066, %v3068
      %v3070 = vrot.slane %v1012, 2
      %v3071 = vsel %vm3052, %v3068, %v3070
      %v3072 = vrot.slane %v1013, 2
      %v3073 = vsel %vm3052, %v3070, %v3072
      %v3074 = vrot.slane %v1014, 2
      %v3075 = vsel %vm3052, %v3072, %v3074
      %v3076 = vrot.slane %v1015, 2
      %v3077 = vsel %vm3052, %v3074, %v3076
      %v3078 = vrot.slane %v1016, 2
      %v3079 = vsel %vm3052, %v3076, %v3078
      %v3080 = vrot.slane %v1017, 2
      %v3081 = vsel %vm3052, %v3078, %v3080
      %v3082 = vrot.slane %v1018, 2
      %v3083 = vsel %vm3052, %v3080, %v3082
      %v3084 = vrot.slane %v1019, 2
      %v3085 = vsel %vm3052, %v3082, %v3084
      %v3086 = vrot.slane %v2206, 2
      %v3087 = vsel %vm3052, %v3084, %v3086
      %v3088 = vrot.slane %v2207, 2
      %v3089 = vsel %vm3052, %v3086, %v3088
      %v3124 = vunpack.c.l.b16 %v3036
      %v3125 = vunpack.c.h.b16 %v3036
      %v3126 = vunpack.c.l.b16 %v3037
      %v3127 = vunpack.c.h.b16 %v3037
      %v3128 = vunpack.c.l.b16 %v3038
      %v3129 = vunpack.c.h.b16 %v3038
      %v3130 = vunpack.c.l.b16 %v3039
      %v3131 = vunpack.c.h.b16 %v3039
      %v3132 = vunpack.c.l.b16 %v3040
      %v3133 = vunpack.c.h.b16 %v3040
      %v3134 = vunpack.c.l.b16 %v3041
      %v3135 = vunpack.c.h.b16 %v3041
      %v3136 = vunpack.c.l.b16 %v3042
      %v3137 = vunpack.c.h.b16 %v3042
      %v3138 = vunpack.c.l.b16 %v3043
      %v3139 = vunpack.c.h.b16 %v3043
      %v3140 = vunpack.c.l.b16 %v3044
      %v3141 = vunpack.c.h.b16 %v3044
      %v3142 = vunpack.c.l.b16 %v3045
      %v3143 = vunpack.c.h.b16 %v3045
      %v3144 = vunpack.c.l.b16 %v3046
      %v3145 = vunpack.c.h.b16 %v3046
      %v3146 = vunpack.c.l.b16 %v3047
      %v3147 = vunpack.c.h.b16 %v3047
      %v3148 = vunpack.c.l.b16 %v3048
      %v3149 = vunpack.c.h.b16 %v3048
      %v3150 = vunpack.c.l.b16 %v3049
      %v3151 = vunpack.c.h.b16 %v3049
      %v3152 = vunpack.c.l.b16 %v3050
      %v3153 = vunpack.c.h.b16 %v3050
      %v3154 = vunpack.c.l.b16 %v3051
      %v3155 = vunpack.c.h.b16 %v3051
      %v3156 = vpack.c.b16 %v3126, %v3124
      %v3157 = vpack.c.b16 %v3127, %v3125
      %v3158 = vpack.c.b16 %v3130, %v3128
      %v3159 = vpack.c.b16 %v3131, %v3129
      %v3160 = vpack.c.b16 %v3134, %v3132
      %v3161 = vpack.c.b16 %v3135, %v3133
      %v3162 = vpack.c.b16 %v3138, %v3136
      %v3163 = vpack.c.b16 %v3139, %v3137
      %v3164 = vpack.c.b16 %v3142, %v3140
      %v3165 = vpack.c.b16 %v3143, %v3141
      %v3166 = vpack.c.b16 %v3146, %v3144
      %v3167 = vpack.c.b16 %v3147, %v3145
      %v3168 = vpack.c.b16 %v3150, %v3148
      %v3169 = vpack.c.b16 %v3151, %v3149
      %v3170 = vpack.c.b16 %v3154, %v3152
      %v3171 = vpack.c.b16 %v3155, %v3153
      %3188 = vmatpush.bf16.msra.mxu0 %v3170
      %3189 = vmatpush.bf16.msra.mxu0 %v3168
      %3190 = vmatpush.bf16.msra.mxu0 %v3166
      %3191 = vmatpush.bf16.msra.mxu0 %v3164
      %3192 = vmatpush.bf16.msra.mxu0 %v3162
      %3193 = vmatpush.bf16.msra.mxu0 %v3160
      %3194 = vmatpush.bf16.msra.mxu0 %v3158
      %3195 = vmatpush.bf16.msra.mxu0 %v3156
      %3196 = vmatmul.bf16.gmra.mxu0 %v3055
      %v3197 = vpop.f32.mrf.mxu0
      %v3198 = vadd.f32 0.0, %v3197
      %v3199 = vpop.f32.mrf.mxu0
      %v3200 = vadd.f32 0.0, %v3199
      %3201 = vmatmul.bf16.gmra.mxu0 %v3057
      %v3202 = vpop.f32.mrf.mxu0
      %v3203 = vadd.f32 0.0, %v3202
      %v3204 = vpop.f32.mrf.mxu0
      %v3205 = vadd.f32 0.0, %v3204
      %3206 = vmatmul.bf16.gmra.mxu0 %v3059
      %v3207 = vpop.f32.mrf.mxu0
      %v3208 = vadd.f32 0.0, %v3207
      %v3209 = vpop.f32.mrf.mxu0
      %v3210 = vadd.f32 0.0, %v3209
      %3211 = vmatmul.bf16.gmra.mxu0 %v3061
      %v3212 = vpop.f32.mrf.mxu0
      %v3213 = vadd.f32 0.0, %v3212
      %v3214 = vpop.f32.mrf.mxu0
      %v3215 = vadd.f32 0.0, %v3214
      %3216 = vmatmul.bf16.gmra.mxu0 %v3063
      %v3217 = vpop.f32.mrf.mxu0
      %v3218 = vadd.f32 0.0, %v3217
      %v3219 = vpop.f32.mrf.mxu0
      %v3220 = vadd.f32 0.0, %v3219
      %3221 = vmatmul.bf16.gmra.mxu0 %v3065
      %v3222 = vpop.f32.mrf.mxu0
      %v3223 = vadd.f32 0.0, %v3222
      %v3224 = vpop.f32.mrf.mxu0
      %v3225 = vadd.f32 0.0, %v3224
      %3226 = vmatmul.bf16.gmra.mxu0 %v3067
      %v3227 = vpop.f32.mrf.mxu0
      %v3228 = vadd.f32 0.0, %v3227
      %v3229 = vpop.f32.mrf.mxu0
      %v3230 = vadd.f32 0.0, %v3229
      %3231 = vmatmul.bf16.gmra.mxu0 %v3069
      %v3232 = vpop.f32.mrf.mxu0
      %v3233 = vadd.f32 0.0, %v3232
      %v3234 = vpop.f32.mrf.mxu0
      %v3235 = vadd.f32 0.0, %v3234
      %3236 = vmatmul.bf16.gmra.mxu0 %v3071
      %v3237 = vpop.f32.mrf.mxu0
      %v3238 = vadd.f32 0.0, %v3237
      %v3239 = vpop.f32.mrf.mxu0
      %v3240 = vadd.f32 0.0, %v3239
      %3241 = vmatmul.bf16.gmra.mxu0 %v3073
      %v3242 = vpop.f32.mrf.mxu0
      %v3243 = vadd.f32 0.0, %v3242
      %v3244 = vpop.f32.mrf.mxu0
      %v3245 = vadd.f32 0.0, %v3244
      %3246 = vmatmul.bf16.gmra.mxu0 %v3075
      %v3247 = vpop.f32.mrf.mxu0
      %v3248 = vadd.f32 0.0, %v3247
      %v3249 = vpop.f32.mrf.mxu0
      %v3250 = vadd.f32 0.0, %v3249
      %3251 = vmatmul.bf16.gmra.mxu0 %v3077
      %v3252 = vpop.f32.mrf.mxu0
      %v3253 = vadd.f32 0.0, %v3252
      %v3254 = vpop.f32.mrf.mxu0
      %v3255 = vadd.f32 0.0, %v3254
      %3256 = vmatmul.bf16.gmra.mxu0 %v3079
      %v3257 = vpop.f32.mrf.mxu0
      %v3258 = vadd.f32 0.0, %v3257
      %v3259 = vpop.f32.mrf.mxu0
      %v3260 = vadd.f32 0.0, %v3259
      %3261 = vmatmul.bf16.gmra.mxu0 %v3081
      %v3262 = vpop.f32.mrf.mxu0
      %v3263 = vadd.f32 0.0, %v3262
      %v3264 = vpop.f32.mrf.mxu0
      %v3265 = vadd.f32 0.0, %v3264
      %3266 = vmatmul.bf16.gmra.mxu0 %v3083
      %v3267 = vpop.f32.mrf.mxu0
      %v3268 = vadd.f32 0.0, %v3267
      %v3269 = vpop.f32.mrf.mxu0
      %v3270 = vadd.f32 0.0, %v3269
      %3271 = vmatmul.bf16.gmra.mxu0 %v3085
      %v3272 = vpop.f32.mrf.mxu0
      %v3273 = vadd.f32 0.0, %v3272
      %v3274 = vpop.f32.mrf.mxu0
      %v3275 = vadd.f32 0.0, %v3274
      %3276 = vmatmul.bf16.gmra.mxu0 %v3087
      %v3277 = vpop.f32.mrf.mxu0
      %v3278 = vadd.f32 0.0, %v3277
      %v3279 = vpop.f32.mrf.mxu0
      %v3280 = vadd.f32 0.0, %v3279
      %3281 = vmatmul.bf16.gmra.mxu0 %v3089
      %v3282 = vpop.f32.mrf.mxu0
      %v3283 = vadd.f32 0.0, %v3282
      %v3284 = vpop.f32.mrf.mxu0
      %v3285 = vadd.f32 0.0, %v3284
      %3286 = vdwg.mxu0
      %3287 = vmatpush.bf16.msra.mxu0 %v3171
      %3288 = vmatpush.bf16.msra.mxu0 %v3169
      %3289 = vmatpush.bf16.msra.mxu0 %v3167
      %3290 = vmatpush.bf16.msra.mxu0 %v3165
      %3291 = vmatpush.bf16.msra.mxu0 %v3163
      %3292 = vmatpush.bf16.msra.mxu0 %v3161
      %3293 = vmatpush.bf16.msra.mxu0 %v3159
      %3294 = vmatpush.bf16.msra.mxu0 %v3157
      %3295 = vmatmul.bf16.gmra.mxu0 %v3055
      %v3296 = vpop.f32.mrf.mxu0
      %v3297 = vadd.f32 0.0, %v3296
      %v3298 = vpop.f32.mrf.mxu0
      %v3299 = vadd.f32 0.0, %v3298
      %3300 = vmatmul.bf16.gmra.mxu0 %v3057
      %v3301 = vpop.f32.mrf.mxu0
      %v3302 = vadd.f32 0.0, %v3301
      %v3303 = vpop.f32.mrf.mxu0
      %v3304 = vadd.f32 0.0, %v3303
      %3305 = vmatmul.bf16.gmra.mxu0 %v3059
      %v3306 = vpop.f32.mrf.mxu0
      %v3307 = vadd.f32 0.0, %v3306
      %v3308 = vpop.f32.mrf.mxu0
      %v3309 = vadd.f32 0.0, %v3308
      %3310 = vmatmul.bf16.gmra.mxu0 %v3061
      %v3311 = vpop.f32.mrf.mxu0
      %v3312 = vadd.f32 0.0, %v3311
      %v3313 = vpop.f32.mrf.mxu0
      %v3314 = vadd.f32 0.0, %v3313
      %3315 = vmatmul.bf16.gmra.mxu0 %v3063
      %v3316 = vpop.f32.mrf.mxu0
      %v3317 = vadd.f32 0.0, %v3316
      %v3318 = vpop.f32.mrf.mxu0
      %v3319 = vadd.f32 0.0, %v3318
      %3320 = vmatmul.bf16.gmra.mxu0 %v3065
      %v3321 = vpop.f32.mrf.mxu0
      %v3322 = vadd.f32 0.0, %v3321
      %v3323 = vpop.f32.mrf.mxu0
      %v3324 = vadd.f32 0.0, %v3323
      %3325 = vmatmul.bf16.gmra.mxu0 %v3067
      %v3326 = vpop.f32.mrf.mxu0
      %v3327 = vadd.f32 0.0, %v3326
      %v3328 = vpop.f32.mrf.mxu0
      %v3329 = vadd.f32 0.0, %v3328
      %3330 = vmatmul.bf16.gmra.mxu0 %v3069
      %v3331 = vpop.f32.mrf.mxu0
      %v3332 = vadd.f32 0.0, %v3331
      %v3333 = vpop.f32.mrf.mxu0
      %v3334 = vadd.f32 0.0, %v3333
      %3335 = vmatmul.bf16.gmra.mxu0 %v3071
      %v3336 = vpop.f32.mrf.mxu0
      %v3337 = vadd.f32 0.0, %v3336
      %v3338 = vpop.f32.mrf.mxu0
      %v3339 = vadd.f32 0.0, %v3338
      %3340 = vmatmul.bf16.gmra.mxu0 %v3073
      %v3341 = vpop.f32.mrf.mxu0
      %v3342 = vadd.f32 0.0, %v3341
      %v3343 = vpop.f32.mrf.mxu0
      %v3344 = vadd.f32 0.0, %v3343
      %3345 = vmatmul.bf16.gmra.mxu0 %v3075
      %v3346 = vpop.f32.mrf.mxu0
      %v3347 = vadd.f32 0.0, %v3346
      %v3348 = vpop.f32.mrf.mxu0
      %v3349 = vadd.f32 0.0, %v3348
      %3350 = vmatmul.bf16.gmra.mxu0 %v3077
      %v3351 = vpop.f32.mrf.mxu0
      %v3352 = vadd.f32 0.0, %v3351
      %v3353 = vpop.f32.mrf.mxu0
      %v3354 = vadd.f32 0.0, %v3353
      %3355 = vmatmul.bf16.gmra.mxu0 %v3079
      %v3356 = vpop.f32.mrf.mxu0
      %v3357 = vadd.f32 0.0, %v3356
      %v3358 = vpop.f32.mrf.mxu0
      %v3359 = vadd.f32 0.0, %v3358
      %3360 = vmatmul.bf16.gmra.mxu0 %v3081
      %v3361 = vpop.f32.mrf.mxu0
      %v3362 = vadd.f32 0.0, %v3361
      %v3363 = vpop.f32.mrf.mxu0
      %v3364 = vadd.f32 0.0, %v3363
      %3365 = vmatmul.bf16.gmra.mxu0 %v3083
      %v3366 = vpop.f32.mrf.mxu0
      %v3367 = vadd.f32 0.0, %v3366
      %v3368 = vpop.f32.mrf.mxu0
      %v3369 = vadd.f32 0.0, %v3368
      %3370 = vmatmul.bf16.gmra.mxu0 %v3085
      %v3371 = vpop.f32.mrf.mxu0
      %v3372 = vadd.f32 0.0, %v3371
      %v3373 = vpop.f32.mrf.mxu0
      %v3374 = vadd.f32 0.0, %v3373
      %3375 = vmatmul.bf16.gmra.mxu0 %v3087
      %v3376 = vpop.f32.mrf.mxu0
      %v3377 = vadd.f32 0.0, %v3376
      %v3378 = vpop.f32.mrf.mxu0
      %v3379 = vadd.f32 0.0, %v3378
      %3380 = vmatmul.bf16.gmra.mxu0 %v3089
      %v3381 = vpop.f32.mrf.mxu0
      %v3382 = vadd.f32 0.0, %v3381
      %v3383 = vpop.f32.mrf.mxu0
      %v3384 = vadd.f32 0.0, %v3383
      %3385 = vdwg.mxu0
      %v3386 = vadd.f32 %v2963, %v3198
      %v3387 = vadd.f32 %v2964, %v3297
      %v3388 = vadd.f32 %v2965, %v3200
      %v3389 = vadd.f32 %v2966, %v3299
      %v3390 = vadd.f32 %v2967, %v3203
      %v3391 = vadd.f32 %v2968, %v3302
      %v3392 = vadd.f32 %v2969, %v3205
      %v3393 = vadd.f32 %v2970, %v3304
      %v3394 = vadd.f32 %v2971, %v3208
      %v3395 = vadd.f32 %v2972, %v3307
      %v3396 = vadd.f32 %v2973, %v3210
      %v3397 = vadd.f32 %v2974, %v3309
      %v3398 = vadd.f32 %v2975, %v3213
      %v3399 = vadd.f32 %v2976, %v3312
      %v3400 = vadd.f32 %v2977, %v3215
      %v3401 = vadd.f32 %v2978, %v3314
      %v3402 = vadd.f32 %v2979, %v3218
      %v3403 = vadd.f32 %v2980, %v3317
      %v3404 = vadd.f32 %v2981, %v3220
      %v3405 = vadd.f32 %v2982, %v3319
      %v3406 = vadd.f32 %v2983, %v3223
      %v3407 = vadd.f32 %v2984, %v3322
      %v3408 = vadd.f32 %v2985, %v3225
      %v3409 = vadd.f32 %v2986, %v3324
      %v3410 = vadd.f32 %v2987, %v3228
      %v3411 = vadd.f32 %v2988, %v3327
      %v3412 = vadd.f32 %v2989, %v3230
      %v3413 = vadd.f32 %v2990, %v3329
      %v3414 = vadd.f32 %v2991, %v3233
      %v3415 = vadd.f32 %v2992, %v3332
      %v3416 = vadd.f32 %v2993, %v3235
      %v3417 = vadd.f32 %v2994, %v3334
      %v3418 = vadd.f32 %v2995, %v3238
      %v3419 = vadd.f32 %v2996, %v3337
      %v3420 = vadd.f32 %v2997, %v3240
      %v3421 = vadd.f32 %v2998, %v3339
      %v3422 = vadd.f32 %v2999, %v3243
      %v3423 = vadd.f32 %v3000, %v3342
      %v3424 = vadd.f32 %v3001, %v3245
      %v3425 = vadd.f32 %v3002, %v3344
      %v3426 = vadd.f32 %v3003, %v3248
      %v3427 = vadd.f32 %v3004, %v3347
      %v3428 = vadd.f32 %v3005, %v3250
      %v3429 = vadd.f32 %v3006, %v3349
      %v3430 = vadd.f32 %v3007, %v3253
      %v3431 = vadd.f32 %v3008, %v3352
      %v3432 = vadd.f32 %v3009, %v3255
      %v3433 = vadd.f32 %v3010, %v3354
      %v3434 = vadd.f32 %v3011, %v3258
      %v3435 = vadd.f32 %v3012, %v3357
      %v3436 = vadd.f32 %v3013, %v3260
      %v3437 = vadd.f32 %v3014, %v3359
      %v3438 = vadd.f32 %v3015, %v3263
      %v3439 = vadd.f32 %v3016, %v3362
      %v3440 = vadd.f32 %v3017, %v3265
      %v3441 = vadd.f32 %v3018, %v3364
      %v3442 = vadd.f32 %v3019, %v3268
      %v3443 = vadd.f32 %v3020, %v3367
      %v3444 = vadd.f32 %v3021, %v3270
      %v3445 = vadd.f32 %v3022, %v3369
      %v3446 = vadd.f32 %v3023, %v3273
      %v3447 = vadd.f32 %v3024, %v3372
      %v3448 = vadd.f32 %v3025, %v3275
      %v3449 = vadd.f32 %v3026, %v3374
      %v3450 = vadd.f32 %v3027, %v3278
      %v3451 = vadd.f32 %v3028, %v3377
      %v3452 = vadd.f32 %v3029, %v3280
      %v3453 = vadd.f32 %v3030, %v3379
      %v3454 = vadd.f32 %v3031, %v3283
      %v3455 = vadd.f32 %v3032, %v3382
      %v3456 = vadd.f32 %v3033, %v3285
      %v3457 = vadd.f32 %v3034, %v3384
      %s3458 = scalar_lea.vmem %s4, 768
      %v3459 = vld [vmem:[%s3458] sm:$0xff]
      %v3460 = vld [vmem:[%s3458 + $0x8] sm:$0xff]
      %v3461 = vld [vmem:[%s3458 + $0x10] sm:$0xff]
      %v3462 = vld [vmem:[%s3458 + $0x18] sm:$0xff]
      %v3463 = vld [vmem:[%s3458 + $0x20] sm:$0xff]
      %v3464 = vld [vmem:[%s3458 + $0x28] sm:$0xff]
      %v3465 = vld [vmem:[%s3458 + $0x30] sm:$0xff]
      %v3466 = vld [vmem:[%s3458 + $0x38] sm:$0xff]
      %v3467 = vld [vmem:[%s3458 + $0x40] sm:$0xff]
      %v3468 = vld [vmem:[%s3458 + $0x48] sm:$0xff]
      %v3469 = vld [vmem:[%s3458 + $0x50] sm:$0xff]
      %v3470 = vld [vmem:[%s3458 + $0x58] sm:$0xff]
      %v3471 = vld [vmem:[%s3458 + $0x60] sm:$0xff]
      %v3472 = vld [vmem:[%s3458 + $0x68] sm:$0xff]
      %v3473 = vld [vmem:[%s3458 + $0x70] sm:$0xff]
      %v3474 = vld [vmem:[%s3458 + $0x78] sm:$0xff]
      %v3477 = vunpack.c.l.b16 %v893
      %v3478 = vunpack.c.l.b16 %v894
      %v3479 = vpack.c.b16 %v3477, %v2205
      %v3480 = vpack.c.b16 %v3478, %v3478
      %v3481 = vrot.slane %v3479, 2
      %v3482 = vsel %vm3052, %v3086, %v3481
      %v3483 = vrot.slane %v3480, 2
      %v3484 = vsel %vm3052, %v3481, %v3483
      %v3503 = vunpack.c.l.b16 %v3459
      %v3504 = vunpack.c.h.b16 %v3459
      %v3505 = vunpack.c.l.b16 %v3460
      %v3506 = vunpack.c.h.b16 %v3460
      %v3507 = vunpack.c.l.b16 %v3461
      %v3508 = vunpack.c.h.b16 %v3461
      %v3509 = vunpack.c.l.b16 %v3462
      %v3510 = vunpack.c.h.b16 %v3462
      %v3511 = vunpack.c.l.b16 %v3463
      %v3512 = vunpack.c.h.b16 %v3463
      %v3513 = vunpack.c.l.b16 %v3464
      %v3514 = vunpack.c.h.b16 %v3464
      %v3515 = vunpack.c.l.b16 %v3465
      %v3516 = vunpack.c.h.b16 %v3465
      %v3517 = vunpack.c.l.b16 %v3466
      %v3518 = vunpack.c.h.b16 %v3466
      %v3519 = vunpack.c.l.b16 %v3467
      %v3520 = vunpack.c.h.b16 %v3467
      %v3521 = vunpack.c.l.b16 %v3468
      %v3522 = vunpack.c.h.b16 %v3468
      %v3523 = vunpack.c.l.b16 %v3469
      %v3524 = vunpack.c.h.b16 %v3469
      %v3525 = vunpack.c.l.b16 %v3470
      %v3526 = vunpack.c.h.b16 %v3470
      %v3527 = vunpack.c.l.b16 %v3471
      %v3528 = vunpack.c.h.b16 %v3471
      %v3529 = vunpack.c.l.b16 %v3472
      %v3530 = vunpack.c.h.b16 %v3472
      %v3531 = vunpack.c.l.b16 %v3473
      %v3532 = vunpack.c.h.b16 %v3473
      %v3533 = vunpack.c.l.b16 %v3474
      %v3534 = vunpack.c.h.b16 %v3474
      %v3535 = vpack.c.b16 %v3505, %v3503
      %v3536 = vpack.c.b16 %v3506, %v3504
      %v3537 = vpack.c.b16 %v3509, %v3507
      %v3538 = vpack.c.b16 %v3510, %v3508
      %v3539 = vpack.c.b16 %v3513, %v3511
      %v3540 = vpack.c.b16 %v3514, %v3512
      %v3541 = vpack.c.b16 %v3517, %v3515
      %v3542 = vpack.c.b16 %v3518, %v3516
      %v3543 = vpack.c.b16 %v3521, %v3519
      %v3544 = vpack.c.b16 %v3522, %v3520
      %v3545 = vpack.c.b16 %v3525, %v3523
      %v3546 = vpack.c.b16 %v3526, %v3524
      %v3547 = vpack.c.b16 %v3529, %v3527
      %v3548 = vpack.c.b16 %v3530, %v3528
      %v3549 = vpack.c.b16 %v3533, %v3531
      %v3550 = vpack.c.b16 %v3534, %v3532
      %3567 = vmatpush.bf16.msra.mxu0 %v3549
      %3568 = vmatpush.bf16.msra.mxu0 %v3547
      %3569 = vmatpush.bf16.msra.mxu0 %v3545
      %3570 = vmatpush.bf16.msra.mxu0 %v3543
      %3571 = vmatpush.bf16.msra.mxu0 %v3541
      %3572 = vmatpush.bf16.msra.mxu0 %v3539
      %3573 = vmatpush.bf16.msra.mxu0 %v3537
      %3574 = vmatpush.bf16.msra.mxu0 %v3535
      %3575 = vmatmul.bf16.gmra.mxu0 %v3057
      %v3576 = vpop.f32.mrf.mxu0
      %v3577 = vadd.f32 0.0, %v3576
      %v3578 = vpop.f32.mrf.mxu0
      %v3579 = vadd.f32 0.0, %v3578
      %3580 = vmatmul.bf16.gmra.mxu0 %v3059
      %v3581 = vpop.f32.mrf.mxu0
      %v3582 = vadd.f32 0.0, %v3581
      %v3583 = vpop.f32.mrf.mxu0
      %v3584 = vadd.f32 0.0, %v3583
      %3585 = vmatmul.bf16.gmra.mxu0 %v3061
      %v3586 = vpop.f32.mrf.mxu0
      %v3587 = vadd.f32 0.0, %v3586
      %v3588 = vpop.f32.mrf.mxu0
      %v3589 = vadd.f32 0.0, %v3588
      %3590 = vmatmul.bf16.gmra.mxu0 %v3063
      %v3591 = vpop.f32.mrf.mxu0
      %v3592 = vadd.f32 0.0, %v3591
      %v3593 = vpop.f32.mrf.mxu0
      %v3594 = vadd.f32 0.0, %v3593
      %3595 = vmatmul.bf16.gmra.mxu0 %v3065
      %v3596 = vpop.f32.mrf.mxu0
      %v3597 = vadd.f32 0.0, %v3596
      %v3598 = vpop.f32.mrf.mxu0
      %v3599 = vadd.f32 0.0, %v3598
      %3600 = vmatmul.bf16.gmra.mxu0 %v3067
      %v3601 = vpop.f32.mrf.mxu0
      %v3602 = vadd.f32 0.0, %v3601
      %v3603 = vpop.f32.mrf.mxu0
      %v3604 = vadd.f32 0.0, %v3603
      %3605 = vmatmul.bf16.gmra.mxu0 %v3069
      %v3606 = vpop.f32.mrf.mxu0
      %v3607 = vadd.f32 0.0, %v3606
      %v3608 = vpop.f32.mrf.mxu0
      %v3609 = vadd.f32 0.0, %v3608
      %3610 = vmatmul.bf16.gmra.mxu0 %v3071
      %v3611 = vpop.f32.mrf.mxu0
      %v3612 = vadd.f32 0.0, %v3611
      %v3613 = vpop.f32.mrf.mxu0
      %v3614 = vadd.f32 0.0, %v3613
      %3615 = vmatmul.bf16.gmra.mxu0 %v3073
      %v3616 = vpop.f32.mrf.mxu0
      %v3617 = vadd.f32 0.0, %v3616
      %v3618 = vpop.f32.mrf.mxu0
      %v3619 = vadd.f32 0.0, %v3618
      %3620 = vmatmul.bf16.gmra.mxu0 %v3075
      %v3621 = vpop.f32.mrf.mxu0
      %v3622 = vadd.f32 0.0, %v3621
      %v3623 = vpop.f32.mrf.mxu0
      %v3624 = vadd.f32 0.0, %v3623
      %3625 = vmatmul.bf16.gmra.mxu0 %v3077
      %v3626 = vpop.f32.mrf.mxu0
      %v3627 = vadd.f32 0.0, %v3626
      %v3628 = vpop.f32.mrf.mxu0
      %v3629 = vadd.f32 0.0, %v3628
      %3630 = vmatmul.bf16.gmra.mxu0 %v3079
      %v3631 = vpop.f32.mrf.mxu0
      %v3632 = vadd.f32 0.0, %v3631
      %v3633 = vpop.f32.mrf.mxu0
      %v3634 = vadd.f32 0.0, %v3633
      %3635 = vmatmul.bf16.gmra.mxu0 %v3081
      %v3636 = vpop.f32.mrf.mxu0
      %v3637 = vadd.f32 0.0, %v3636
      %v3638 = vpop.f32.mrf.mxu0
      %v3639 = vadd.f32 0.0, %v3638
      %3640 = vmatmul.bf16.gmra.mxu0 %v3083
      %v3641 = vpop.f32.mrf.mxu0
      %v3642 = vadd.f32 0.0, %v3641
      %v3643 = vpop.f32.mrf.mxu0
      %v3644 = vadd.f32 0.0, %v3643
      %3645 = vmatmul.bf16.gmra.mxu0 %v3085
      %v3646 = vpop.f32.mrf.mxu0
      %v3647 = vadd.f32 0.0, %v3646
      %v3648 = vpop.f32.mrf.mxu0
      %v3649 = vadd.f32 0.0, %v3648
      %3650 = vmatmul.bf16.gmra.mxu0 %v3087
      %v3651 = vpop.f32.mrf.mxu0
      %v3652 = vadd.f32 0.0, %v3651
      %v3653 = vpop.f32.mrf.mxu0
      %v3654 = vadd.f32 0.0, %v3653
      %3655 = vmatmul.bf16.gmra.mxu0 %v3482
      %v3656 = vpop.f32.mrf.mxu0
      %v3657 = vadd.f32 0.0, %v3656
      %v3658 = vpop.f32.mrf.mxu0
      %v3659 = vadd.f32 0.0, %v3658
      %3660 = vmatmul.bf16.gmra.mxu0 %v3484
      %v3661 = vpop.f32.mrf.mxu0
      %v3662 = vadd.f32 0.0, %v3661
      %v3663 = vpop.f32.mrf.mxu0
      %v3664 = vadd.f32 0.0, %v3663
      %3665 = vdwg.mxu0
      %3666 = vmatpush.bf16.msra.mxu0 %v3550
      %3667 = vmatpush.bf16.msra.mxu0 %v3548
      %3668 = vmatpush.bf16.msra.mxu0 %v3546
      %3669 = vmatpush.bf16.msra.mxu0 %v3544
      %3670 = vmatpush.bf16.msra.mxu0 %v3542
      %3671 = vmatpush.bf16.msra.mxu0 %v3540
      %3672 = vmatpush.bf16.msra.mxu0 %v3538
      %3673 = vmatpush.bf16.msra.mxu0 %v3536
      %3674 = vmatmul.bf16.gmra.mxu0 %v3057
      %v3675 = vpop.f32.mrf.mxu0
      %v3676 = vadd.f32 0.0, %v3675
      %v3677 = vpop.f32.mrf.mxu0
      %v3678 = vadd.f32 0.0, %v3677
      %3679 = vmatmul.bf16.gmra.mxu0 %v3059
      %v3680 = vpop.f32.mrf.mxu0
      %v3681 = vadd.f32 0.0, %v3680
      %v3682 = vpop.f32.mrf.mxu0
      %v3683 = vadd.f32 0.0, %v3682
      %3684 = vmatmul.bf16.gmra.mxu0 %v3061
      %v3685 = vpop.f32.mrf.mxu0
      %v3686 = vadd.f32 0.0, %v3685
      %v3687 = vpop.f32.mrf.mxu0
      %v3688 = vadd.f32 0.0, %v3687
      %3689 = vmatmul.bf16.gmra.mxu0 %v3063
      %v3690 = vpop.f32.mrf.mxu0
      %v3691 = vadd.f32 0.0, %v3690
      %v3692 = vpop.f32.mrf.mxu0
      %v3693 = vadd.f32 0.0, %v3692
      %3694 = vmatmul.bf16.gmra.mxu0 %v3065
      %v3695 = vpop.f32.mrf.mxu0
      %v3696 = vadd.f32 0.0, %v3695
      %v3697 = vpop.f32.mrf.mxu0
      %v3698 = vadd.f32 0.0, %v3697
      %3699 = vmatmul.bf16.gmra.mxu0 %v3067
      %v3700 = vpop.f32.mrf.mxu0
      %v3701 = vadd.f32 0.0, %v3700
      %v3702 = vpop.f32.mrf.mxu0
      %v3703 = vadd.f32 0.0, %v3702
      %3704 = vmatmul.bf16.gmra.mxu0 %v3069
      %v3705 = vpop.f32.mrf.mxu0
      %v3706 = vadd.f32 0.0, %v3705
      %v3707 = vpop.f32.mrf.mxu0
      %v3708 = vadd.f32 0.0, %v3707
      %3709 = vmatmul.bf16.gmra.mxu0 %v3071
      %v3710 = vpop.f32.mrf.mxu0
      %v3711 = vadd.f32 0.0, %v3710
      %v3712 = vpop.f32.mrf.mxu0
      %v3713 = vadd.f32 0.0, %v3712
      %3714 = vmatmul.bf16.gmra.mxu0 %v3073
      %v3715 = vpop.f32.mrf.mxu0
      %v3716 = vadd.f32 0.0, %v3715
      %v3717 = vpop.f32.mrf.mxu0
      %v3718 = vadd.f32 0.0, %v3717
      %3719 = vmatmul.bf16.gmra.mxu0 %v3075
      %v3720 = vpop.f32.mrf.mxu0
      %v3721 = vadd.f32 0.0, %v3720
      %v3722 = vpop.f32.mrf.mxu0
      %v3723 = vadd.f32 0.0, %v3722
      %3724 = vmatmul.bf16.gmra.mxu0 %v3077
      %v3725 = vpop.f32.mrf.mxu0
      %v3726 = vadd.f32 0.0, %v3725
      %v3727 = vpop.f32.mrf.mxu0
      %v3728 = vadd.f32 0.0, %v3727
      %3729 = vmatmul.bf16.gmra.mxu0 %v3079
      %v3730 = vpop.f32.mrf.mxu0
      %v3731 = vadd.f32 0.0, %v3730
      %v3732 = vpop.f32.mrf.mxu0
      %v3733 = vadd.f32 0.0, %v3732
      %3734 = vmatmul.bf16.gmra.mxu0 %v3081
      %v3735 = vpop.f32.mrf.mxu0
      %v3736 = vadd.f32 0.0, %v3735
      %v3737 = vpop.f32.mrf.mxu0
      %v3738 = vadd.f32 0.0, %v3737
      %3739 = vmatmul.bf16.gmra.mxu0 %v3083
      %v3740 = vpop.f32.mrf.mxu0
      %v3741 = vadd.f32 0.0, %v3740
      %v3742 = vpop.f32.mrf.mxu0
      %v3743 = vadd.f32 0.0, %v3742
      %3744 = vmatmul.bf16.gmra.mxu0 %v3085
      %v3745 = vpop.f32.mrf.mxu0
      %v3746 = vadd.f32 0.0, %v3745
      %v3747 = vpop.f32.mrf.mxu0
      %v3748 = vadd.f32 0.0, %v3747
      %3749 = vmatmul.bf16.gmra.mxu0 %v3087
      %v3750 = vpop.f32.mrf.mxu0
      %v3751 = vadd.f32 0.0, %v3750
      %v3752 = vpop.f32.mrf.mxu0
      %v3753 = vadd.f32 0.0, %v3752
      %3754 = vmatmul.bf16.gmra.mxu0 %v3482
      %v3755 = vpop.f32.mrf.mxu0
      %v3756 = vadd.f32 0.0, %v3755
      %v3757 = vpop.f32.mrf.mxu0
      %v3758 = vadd.f32 0.0, %v3757
      %3759 = vmatmul.bf16.gmra.mxu0 %v3484
      %v3760 = vpop.f32.mrf.mxu0
      %v3761 = vadd.f32 0.0, %v3760
      %v3762 = vpop.f32.mrf.mxu0
      %v3763 = vadd.f32 0.0, %v3762
      %3764 = vdwg.mxu0
      %v3765 = vadd.f32 %v3386, %v3577
      %v3766 = vadd.f32 %v3387, %v3676
      %v3767 = vadd.f32 %v3388, %v3579
      %v3768 = vadd.f32 %v3389, %v3678
      %v3769 = vadd.f32 %v3390, %v3582
      %v3770 = vadd.f32 %v3391, %v3681
      %v3771 = vadd.f32 %v3392, %v3584
      %v3772 = vadd.f32 %v3393, %v3683
      %v3773 = vadd.f32 %v3394, %v3587
      %v3774 = vadd.f32 %v3395, %v3686
      %v3775 = vadd.f32 %v3396, %v3589
      %v3776 = vadd.f32 %v3397, %v3688
      %v3777 = vadd.f32 %v3398, %v3592
      %v3778 = vadd.f32 %v3399, %v3691
      %v3779 = vadd.f32 %v3400, %v3594
      %v3780 = vadd.f32 %v3401, %v3693
      %v3781 = vadd.f32 %v3402, %v3597
      %v3782 = vadd.f32 %v3403, %v3696
      %v3783 = vadd.f32 %v3404, %v3599
      %v3784 = vadd.f32 %v3405, %v3698
      %v3785 = vadd.f32 %v3406, %v3602
      %v3786 = vadd.f32 %v3407, %v3701
      %v3787 = vadd.f32 %v3408, %v3604
      %v3788 = vadd.f32 %v3409, %v3703
      %v3789 = vadd.f32 %v3410, %v3607
      %v3790 = vadd.f32 %v3411, %v3706
      %v3791 = vadd.f32 %v3412, %v3609
      %v3792 = vadd.f32 %v3413, %v3708
      %v3793 = vadd.f32 %v3414, %v3612
      %v3794 = vadd.f32 %v3415, %v3711
      %v3795 = vadd.f32 %v3416, %v3614
      %v3796 = vadd.f32 %v3417, %v3713
      %v3797 = vadd.f32 %v3418, %v3617
      %v3798 = vadd.f32 %v3419, %v3716
      %v3799 = vadd.f32 %v3420, %v3619
      %v3800 = vadd.f32 %v3421, %v3718
      %v3801 = vadd.f32 %v3422, %v3622
      %v3802 = vadd.f32 %v3423, %v3721
      %v3803 = vadd.f32 %v3424, %v3624
      %v3804 = vadd.f32 %v3425, %v3723
      %v3805 = vadd.f32 %v3426, %v3627
      %v3806 = vadd.f32 %v3427, %v3726
      %v3807 = vadd.f32 %v3428, %v3629
      %v3808 = vadd.f32 %v3429, %v3728
      %v3809 = vadd.f32 %v3430, %v3632
      %v3810 = vadd.f32 %v3431, %v3731
      %v3811 = vadd.f32 %v3432, %v3634
      %v3812 = vadd.f32 %v3433, %v3733
      %v3813 = vadd.f32 %v3434, %v3637
      %v3814 = vadd.f32 %v3435, %v3736
      %v3815 = vadd.f32 %v3436, %v3639
      %v3816 = vadd.f32 %v3437, %v3738
      %v3817 = vadd.f32 %v3438, %v3642
      %v3818 = vadd.f32 %v3439, %v3741
      %v3819 = vadd.f32 %v3440, %v3644
      %v3820 = vadd.f32 %v3441, %v3743
      %v3821 = vadd.f32 %v3442, %v3647
      %v3822 = vadd.f32 %v3443, %v3746
      %v3823 = vadd.f32 %v3444, %v3649
      %v3824 = vadd.f32 %v3445, %v3748
      %v3825 = vadd.f32 %v3446, %v3652
      %v3826 = vadd.f32 %v3447, %v3751
      %v3827 = vadd.f32 %v3448, %v3654
      %v3828 = vadd.f32 %v3449, %v3753
      %v3829 = vadd.f32 %v3450, %v3657
      %v3830 = vadd.f32 %v3451, %v3756
      %v3831 = vadd.f32 %v3452, %v3659
      %v3832 = vadd.f32 %v3453, %v3758
      %v3833 = vadd.f32 %v3454, %v3662
      %v3834 = vadd.f32 %v3455, %v3761
      %v3835 = vadd.f32 %v3456, %v3664
      %v3836 = vadd.f32 %v3457, %v3763
      %s3837 = scalar_lea.vmem %s4, 896
      %v3838 = vld [vmem:[%s3837] sm:$0xff]
      %v3839 = vld [vmem:[%s3837 + $0x8] sm:$0xff]
      %v3840 = vld [vmem:[%s3837 + $0x10] sm:$0xff]
      %v3841 = vld [vmem:[%s3837 + $0x18] sm:$0xff]
      %v3842 = vld [vmem:[%s3837 + $0x20] sm:$0xff]
      %v3843 = vld [vmem:[%s3837 + $0x28] sm:$0xff]
      %v3844 = vld [vmem:[%s3837 + $0x30] sm:$0xff]
      %v3845 = vld [vmem:[%s3837 + $0x38] sm:$0xff]
      %v3846 = vld [vmem:[%s3837 + $0x40] sm:$0xff]
      %v3847 = vld [vmem:[%s3837 + $0x48] sm:$0xff]
      %v3848 = vld [vmem:[%s3837 + $0x50] sm:$0xff]
      %v3849 = vld [vmem:[%s3837 + $0x58] sm:$0xff]
      %v3850 = vld [vmem:[%s3837 + $0x60] sm:$0xff]
      %v3851 = vld [vmem:[%s3837 + $0x68] sm:$0xff]
      %v3852 = vld [vmem:[%s3837 + $0x70] sm:$0xff]
      %v3853 = vld [vmem:[%s3837 + $0x78] sm:$0xff]
      %vm3854 = vsmask.f32 5376
      %v3855 = vrot.slane %v1042, 2
      %v3856 = vrot.slane %v1038, 3
      %v3857 = vor.u32 %v3855, %v3856
      %v3858 = vrot.slane %v1050, 2
      %v3859 = vrot.slane %v1046, 3
      %v3860 = vor.u32 %v3858, %v3859
      %v3861 = vsel %vm3854, %v3857, %v3860
      %v3862 = vrot.slane %v1058, 2
      %v3863 = vrot.slane %v1054, 3
      %v3864 = vor.u32 %v3862, %v3863
      %v3865 = vsel %vm3854, %v3860, %v3864
      %v3866 = vrot.slane %v1066, 2
      %v3867 = vrot.slane %v1062, 3
      %v3868 = vor.u32 %v3866, %v3867
      %v3869 = vsel %vm3854, %v3864, %v3868
      %v3870 = vrot.slane %v1074, 2
      %v3871 = vrot.slane %v1070, 3
      %v3872 = vor.u32 %v3870, %v3871
      %v3873 = vsel %vm3854, %v3868, %v3872
      %v3874 = vrot.slane %v1082, 2
      %v3875 = vrot.slane %v1078, 3
      %v3876 = vor.u32 %v3874, %v3875
      %v3877 = vsel %vm3854, %v3872, %v3876
      %v3878 = vrot.slane %v1090, 2
      %v3879 = vrot.slane %v1086, 3
      %v3880 = vor.u32 %v3878, %v3879
      %v3881 = vsel %vm3854, %v3876, %v3880
      %v3882 = vrot.slane %v1098, 2
      %v3883 = vrot.slane %v1094, 3
      %v3884 = vor.u32 %v3882, %v3883
      %v3885 = vsel %vm3854, %v3880, %v3884
      %v3886 = vrot.slane %v1106, 2
      %v3887 = vrot.slane %v1102, 3
      %v3888 = vor.u32 %v3886, %v3887
      %v3889 = vsel %vm3854, %v3884, %v3888
      %v3890 = vrot.slane %v1114, 2
      %v3891 = vrot.slane %v1110, 3
      %v3892 = vor.u32 %v3890, %v3891
      %v3893 = vsel %vm3854, %v3888, %v3892
      %v3894 = vrot.slane %v1122, 2
      %v3895 = vrot.slane %v1118, 3
      %v3896 = vor.u32 %v3894, %v3895
      %v3897 = vsel %vm3854, %v3892, %v3896
      %v3898 = vrot.slane %v1130, 2
      %v3899 = vrot.slane %v1126, 3
      %v3900 = vor.u32 %v3898, %v3899
      %v3901 = vsel %vm3854, %v3896, %v3900
      %v3902 = vrot.slane %v1138, 2
      %v3903 = vrot.slane %v1134, 3
      %v3904 = vor.u32 %v3902, %v3903
      %v3905 = vsel %vm3854, %v3900, %v3904
      %v3906 = vrot.slane %v1146, 2
      %v3907 = vrot.slane %v1142, 3
      %v3908 = vor.u32 %v3906, %v3907
      %v3909 = vsel %vm3854, %v3904, %v3908
      %v3910 = vrot.slane %v1154, 2
      %v3911 = vrot.slane %v1150, 3
      %v3912 = vor.u32 %v3910, %v3911
      %v3913 = vsel %vm3854, %v3908, %v3912
      %v3914 = vrot.slane %v1162, 2
      %v3915 = vrot.slane %v1158, 3
      %v3916 = vor.u32 %v3914, %v3915
      %v3917 = vsel %vm3854, %v3912, %v3916
      %v3918 = vrot.slane %v2650, 2
      %v3919 = vrot.slane %v2653, 3
      %v3920 = vor.u32 %v3918, %v3919
      %v3921 = vsel %vm3854, %v3916, %v3920
      %v3923 = vshrl.u32 %v3479, 16
      %v3925 = vrot.slane %v3923, 2
      %v3926 = vshll.u32 %v3479, 16
      %v3928 = vrot.slane %v3926, 3
      %v3929 = vor.u32 %v3925, %v3928
      %v3930 = vsel %vm3854, %v3920, %v3929
      %v3932 = vshrl.u32 %v3480, 16
      %v3934 = vrot.slane %v3932, 2
      %v3935 = vshll.u32 %v3480, 16
      %v3937 = vrot.slane %v3935, 3
      %v3938 = vor.u32 %v3934, %v3937
      %v3939 = vsel %vm3854, %v3929, %v3938
      %v3974 = vunpack.c.l.b16 %v3838
      %v3975 = vunpack.c.h.b16 %v3838
      %v3976 = vunpack.c.l.b16 %v3839
      %v3977 = vunpack.c.h.b16 %v3839
      %v3978 = vunpack.c.l.b16 %v3840
      %v3979 = vunpack.c.h.b16 %v3840
      %v3980 = vunpack.c.l.b16 %v3841
      %v3981 = vunpack.c.h.b16 %v3841
      %v3982 = vunpack.c.l.b16 %v3842
      %v3983 = vunpack.c.h.b16 %v3842
      %v3984 = vunpack.c.l.b16 %v3843
      %v3985 = vunpack.c.h.b16 %v3843
      %v3986 = vunpack.c.l.b16 %v3844
      %v3987 = vunpack.c.h.b16 %v3844
      %v3988 = vunpack.c.l.b16 %v3845
      %v3989 = vunpack.c.h.b16 %v3845
      %v3990 = vunpack.c.l.b16 %v3846
      %v3991 = vunpack.c.h.b16 %v3846
      %v3992 = vunpack.c.l.b16 %v3847
      %v3993 = vunpack.c.h.b16 %v3847
      %v3994 = vunpack.c.l.b16 %v3848
      %v3995 = vunpack.c.h.b16 %v3848
      %v3996 = vunpack.c.l.b16 %v3849
      %v3997 = vunpack.c.h.b16 %v3849
      %v3998 = vunpack.c.l.b16 %v3850
      %v3999 = vunpack.c.h.b16 %v3850
      %v4000 = vunpack.c.l.b16 %v3851
      %v4001 = vunpack.c.h.b16 %v3851
      %v4002 = vunpack.c.l.b16 %v3852
      %v4003 = vunpack.c.h.b16 %v3852
      %v4004 = vunpack.c.l.b16 %v3853
      %v4005 = vunpack.c.h.b16 %v3853
      %v4006 = vpack.c.b16 %v3976, %v3974
      %v4007 = vpack.c.b16 %v3977, %v3975
      %v4008 = vpack.c.b16 %v3980, %v3978
      %v4009 = vpack.c.b16 %v3981, %v3979
      %v4010 = vpack.c.b16 %v3984, %v3982
      %v4011 = vpack.c.b16 %v3985, %v3983
      %v4012 = vpack.c.b16 %v3988, %v3986
      %v4013 = vpack.c.b16 %v3989, %v3987
      %v4014 = vpack.c.b16 %v3992, %v3990
      %v4015 = vpack.c.b16 %v3993, %v3991
      %v4016 = vpack.c.b16 %v3996, %v3994
      %v4017 = vpack.c.b16 %v3997, %v3995
      %v4018 = vpack.c.b16 %v4000, %v3998
      %v4019 = vpack.c.b16 %v4001, %v3999
      %v4020 = vpack.c.b16 %v4004, %v4002
      %v4021 = vpack.c.b16 %v4005, %v4003
      %4038 = vmatpush.bf16.msra.mxu0 %v4020
      %4039 = vmatpush.bf16.msra.mxu0 %v4018
      %4040 = vmatpush.bf16.msra.mxu0 %v4016
      %4041 = vmatpush.bf16.msra.mxu0 %v4014
      %4042 = vmatpush.bf16.msra.mxu0 %v4012
      %4043 = vmatpush.bf16.msra.mxu0 %v4010
      %4044 = vmatpush.bf16.msra.mxu0 %v4008
      %4045 = vmatpush.bf16.msra.mxu0 %v4006
      %4046 = vmatmul.bf16.gmra.mxu0 %v3861
      %v4047 = vpop.f32.mrf.mxu0
      %v4048 = vadd.f32 0.0, %v4047
      %v4049 = vpop.f32.mrf.mxu0
      %v4050 = vadd.f32 0.0, %v4049
      %4051 = vmatmul.bf16.gmra.mxu0 %v3865
      %v4052 = vpop.f32.mrf.mxu0
      %v4053 = vadd.f32 0.0, %v4052
      %v4054 = vpop.f32.mrf.mxu0
      %v4055 = vadd.f32 0.0, %v4054
      %4056 = vmatmul.bf16.gmra.mxu0 %v3869
      %v4057 = vpop.f32.mrf.mxu0
      %v4058 = vadd.f32 0.0, %v4057
      %v4059 = vpop.f32.mrf.mxu0
      %v4060 = vadd.f32 0.0, %v4059
      %4061 = vmatmul.bf16.gmra.mxu0 %v3873
      %v4062 = vpop.f32.mrf.mxu0
      %v4063 = vadd.f32 0.0, %v4062
      %v4064 = vpop.f32.mrf.mxu0
      %v4065 = vadd.f32 0.0, %v4064
      %4066 = vmatmul.bf16.gmra.mxu0 %v3877
      %v4067 = vpop.f32.mrf.mxu0
      %v4068 = vadd.f32 0.0, %v4067
      %v4069 = vpop.f32.mrf.mxu0
      %v4070 = vadd.f32 0.0, %v4069
      %4071 = vmatmul.bf16.gmra.mxu0 %v3881
      %v4072 = vpop.f32.mrf.mxu0
      %v4073 = vadd.f32 0.0, %v4072
      %v4074 = vpop.f32.mrf.mxu0
      %v4075 = vadd.f32 0.0, %v4074
      %4076 = vmatmul.bf16.gmra.mxu0 %v3885
      %v4077 = vpop.f32.mrf.mxu0
      %v4078 = vadd.f32 0.0, %v4077
      %v4079 = vpop.f32.mrf.mxu0
      %v4080 = vadd.f32 0.0, %v4079
      %4081 = vmatmul.bf16.gmra.mxu0 %v3889
      %v4082 = vpop.f32.mrf.mxu0
      %v4083 = vadd.f32 0.0, %v4082
      %v4084 = vpop.f32.mrf.mxu0
      %v4085 = vadd.f32 0.0, %v4084
      %4086 = vmatmul.bf16.gmra.mxu0 %v3893
      %v4087 = vpop.f32.mrf.mxu0
      %v4088 = vadd.f32 0.0, %v4087
      %v4089 = vpop.f32.mrf.mxu0
      %v4090 = vadd.f32 0.0, %v4089
      %4091 = vmatmul.bf16.gmra.mxu0 %v3897
      %v4092 = vpop.f32.mrf.mxu0
      %v4093 = vadd.f32 0.0, %v4092
      %v4094 = vpop.f32.mrf.mxu0
      %v4095 = vadd.f32 0.0, %v4094
      %4096 = vmatmul.bf16.gmra.mxu0 %v3901
      %v4097 = vpop.f32.mrf.mxu0
      %v4098 = vadd.f32 0.0, %v4097
      %v4099 = vpop.f32.mrf.mxu0
      %v4100 = vadd.f32 0.0, %v4099
      %4101 = vmatmul.bf16.gmra.mxu0 %v3905
      %v4102 = vpop.f32.mrf.mxu0
      %v4103 = vadd.f32 0.0, %v4102
      %v4104 = vpop.f32.mrf.mxu0
      %v4105 = vadd.f32 0.0, %v4104
      %4106 = vmatmul.bf16.gmra.mxu0 %v3909
      %v4107 = vpop.f32.mrf.mxu0
      %v4108 = vadd.f32 0.0, %v4107
      %v4109 = vpop.f32.mrf.mxu0
      %v4110 = vadd.f32 0.0, %v4109
      %4111 = vmatmul.bf16.gmra.mxu0 %v3913
      %v4112 = vpop.f32.mrf.mxu0
      %v4113 = vadd.f32 0.0, %v4112
      %v4114 = vpop.f32.mrf.mxu0
      %v4115 = vadd.f32 0.0, %v4114
      %4116 = vmatmul.bf16.gmra.mxu0 %v3917
      %v4117 = vpop.f32.mrf.mxu0
      %v4118 = vadd.f32 0.0, %v4117
      %v4119 = vpop.f32.mrf.mxu0
      %v4120 = vadd.f32 0.0, %v4119
      %4121 = vmatmul.bf16.gmra.mxu0 %v3921
      %v4122 = vpop.f32.mrf.mxu0
      %v4123 = vadd.f32 0.0, %v4122
      %v4124 = vpop.f32.mrf.mxu0
      %v4125 = vadd.f32 0.0, %v4124
      %4126 = vmatmul.bf16.gmra.mxu0 %v3930
      %v4127 = vpop.f32.mrf.mxu0
      %v4128 = vadd.f32 0.0, %v4127
      %v4129 = vpop.f32.mrf.mxu0
      %v4130 = vadd.f32 0.0, %v4129
      %4131 = vmatmul.bf16.gmra.mxu0 %v3939
      %v4132 = vpop.f32.mrf.mxu0
      %v4133 = vadd.f32 0.0, %v4132
      %v4134 = vpop.f32.mrf.mxu0
      %v4135 = vadd.f32 0.0, %v4134
      %4136 = vdwg.mxu0
      %4137 = vmatpush.bf16.msra.mxu0 %v4021
      %4138 = vmatpush.bf16.msra.mxu0 %v4019
      %4139 = vmatpush.bf16.msra.mxu0 %v4017
      %4140 = vmatpush.bf16.msra.mxu0 %v4015
      %4141 = vmatpush.bf16.msra.mxu0 %v4013
      %4142 = vmatpush.bf16.msra.mxu0 %v4011
      %4143 = vmatpush.bf16.msra.mxu0 %v4009
      %4144 = vmatpush.bf16.msra.mxu0 %v4007
      %4145 = vmatmul.bf16.gmra.mxu0 %v3861
      %v4146 = vpop.f32.mrf.mxu0
      %v4147 = vadd.f32 0.0, %v4146
      %v4148 = vpop.f32.mrf.mxu0
      %v4149 = vadd.f32 0.0, %v4148
      %4150 = vmatmul.bf16.gmra.mxu0 %v3865
      %v4151 = vpop.f32.mrf.mxu0
      %v4152 = vadd.f32 0.0, %v4151
      %v4153 = vpop.f32.mrf.mxu0
      %v4154 = vadd.f32 0.0, %v4153
      %4155 = vmatmul.bf16.gmra.mxu0 %v3869
      %v4156 = vpop.f32.mrf.mxu0
      %v4157 = vadd.f32 0.0, %v4156
      %v4158 = vpop.f32.mrf.mxu0
      %v4159 = vadd.f32 0.0, %v4158
      %4160 = vmatmul.bf16.gmra.mxu0 %v3873
      %v4161 = vpop.f32.mrf.mxu0
      %v4162 = vadd.f32 0.0, %v4161
      %v4163 = vpop.f32.mrf.mxu0
      %v4164 = vadd.f32 0.0, %v4163
      %4165 = vmatmul.bf16.gmra.mxu0 %v3877
      %v4166 = vpop.f32.mrf.mxu0
      %v4167 = vadd.f32 0.0, %v4166
      %v4168 = vpop.f32.mrf.mxu0
      %v4169 = vadd.f32 0.0, %v4168
      %4170 = vmatmul.bf16.gmra.mxu0 %v3881
      %v4171 = vpop.f32.mrf.mxu0
      %v4172 = vadd.f32 0.0, %v4171
      %v4173 = vpop.f32.mrf.mxu0
      %v4174 = vadd.f32 0.0, %v4173
      %4175 = vmatmul.bf16.gmra.mxu0 %v3885
      %v4176 = vpop.f32.mrf.mxu0
      %v4177 = vadd.f32 0.0, %v4176
      %v4178 = vpop.f32.mrf.mxu0
      %v4179 = vadd.f32 0.0, %v4178
      %4180 = vmatmul.bf16.gmra.mxu0 %v3889
      %v4181 = vpop.f32.mrf.mxu0
      %v4182 = vadd.f32 0.0, %v4181
      %v4183 = vpop.f32.mrf.mxu0
      %v4184 = vadd.f32 0.0, %v4183
      %4185 = vmatmul.bf16.gmra.mxu0 %v3893
      %v4186 = vpop.f32.mrf.mxu0
      %v4187 = vadd.f32 0.0, %v4186
      %v4188 = vpop.f32.mrf.mxu0
      %v4189 = vadd.f32 0.0, %v4188
      %4190 = vmatmul.bf16.gmra.mxu0 %v3897
      %v4191 = vpop.f32.mrf.mxu0
      %v4192 = vadd.f32 0.0, %v4191
      %v4193 = vpop.f32.mrf.mxu0
      %v4194 = vadd.f32 0.0, %v4193
      %4195 = vmatmul.bf16.gmra.mxu0 %v3901
      %v4196 = vpop.f32.mrf.mxu0
      %v4197 = vadd.f32 0.0, %v4196
      %v4198 = vpop.f32.mrf.mxu0
      %v4199 = vadd.f32 0.0, %v4198
      %4200 = vmatmul.bf16.gmra.mxu0 %v3905
      %v4201 = vpop.f32.mrf.mxu0
      %v4202 = vadd.f32 0.0, %v4201
      %v4203 = vpop.f32.mrf.mxu0
      %v4204 = vadd.f32 0.0, %v4203
      %4205 = vmatmul.bf16.gmra.mxu0 %v3909
      %v4206 = vpop.f32.mrf.mxu0
      %v4207 = vadd.f32 0.0, %v4206
      %v4208 = vpop.f32.mrf.mxu0
      %v4209 = vadd.f32 0.0, %v4208
      %4210 = vmatmul.bf16.gmra.mxu0 %v3913
      %v4211 = vpop.f32.mrf.mxu0
      %v4212 = vadd.f32 0.0, %v4211
      %v4213 = vpop.f32.mrf.mxu0
      %v4214 = vadd.f32 0.0, %v4213
      %4215 = vmatmul.bf16.gmra.mxu0 %v3917
      %v4216 = vpop.f32.mrf.mxu0
      %v4217 = vadd.f32 0.0, %v4216
      %v4218 = vpop.f32.mrf.mxu0
      %v4219 = vadd.f32 0.0, %v4218
      %4220 = vmatmul.bf16.gmra.mxu0 %v3921
      %v4221 = vpop.f32.mrf.mxu0
      %v4222 = vadd.f32 0.0, %v4221
      %v4223 = vpop.f32.mrf.mxu0
      %v4224 = vadd.f32 0.0, %v4223
      %4225 = vmatmul.bf16.gmra.mxu0 %v3930
      %v4226 = vpop.f32.mrf.mxu0
      %v4227 = vadd.f32 0.0, %v4226
      %v4228 = vpop.f32.mrf.mxu0
      %v4229 = vadd.f32 0.0, %v4228
      %4230 = vmatmul.bf16.gmra.mxu0 %v3939
      %v4231 = vpop.f32.mrf.mxu0
      %v4232 = vadd.f32 0.0, %v4231
      %v4233 = vpop.f32.mrf.mxu0
      %v4234 = vadd.f32 0.0, %v4233
      %4235 = vdwg.mxu0
      %v4236 = vadd.f32 %v3765, %v4048
      %v4237 = vadd.f32 %v3766, %v4147
      %v4238 = vadd.f32 %v3767, %v4050
      %v4239 = vadd.f32 %v3768, %v4149
      %v4240 = vadd.f32 %v3769, %v4053
      %v4241 = vadd.f32 %v3770, %v4152
      %v4242 = vadd.f32 %v3771, %v4055
      %v4243 = vadd.f32 %v3772, %v4154
      %v4244 = vadd.f32 %v3773, %v4058
      %v4245 = vadd.f32 %v3774, %v4157
      %v4246 = vadd.f32 %v3775, %v4060
      %v4247 = vadd.f32 %v3776, %v4159
      %v4248 = vadd.f32 %v3777, %v4063
      %v4249 = vadd.f32 %v3778, %v4162
      %v4250 = vadd.f32 %v3779, %v4065
      %v4251 = vadd.f32 %v3780, %v4164
      %v4252 = vadd.f32 %v3781, %v4068
      %v4253 = vadd.f32 %v3782, %v4167
      %v4254 = vadd.f32 %v3783, %v4070
      %v4255 = vadd.f32 %v3784, %v4169
      %v4256 = vadd.f32 %v3785, %v4073
      %v4257 = vadd.f32 %v3786, %v4172
      %v4258 = vadd.f32 %v3787, %v4075
      %v4259 = vadd.f32 %v3788, %v4174
      %v4260 = vadd.f32 %v3789, %v4078
      %v4261 = vadd.f32 %v3790, %v4177
      %v4262 = vadd.f32 %v3791, %v4080
      %v4263 = vadd.f32 %v3792, %v4179
      %v4264 = vadd.f32 %v3793, %v4083
      %v4265 = vadd.f32 %v3794, %v4182
      %v4266 = vadd.f32 %v3795, %v4085
      %v4267 = vadd.f32 %v3796, %v4184
      %v4268 = vadd.f32 %v3797, %v4088
      %v4269 = vadd.f32 %v3798, %v4187
      %v4270 = vadd.f32 %v3799, %v4090
      %v4271 = vadd.f32 %v3800, %v4189
      %v4272 = vadd.f32 %v3801, %v4093
      %v4273 = vadd.f32 %v3802, %v4192
      %v4274 = vadd.f32 %v3803, %v4095
      %v4275 = vadd.f32 %v3804, %v4194
      %v4276 = vadd.f32 %v3805, %v4098
      %v4277 = vadd.f32 %v3806, %v4197
      %v4278 = vadd.f32 %v3807, %v4100
      %v4279 = vadd.f32 %v3808, %v4199
      %v4280 = vadd.f32 %v3809, %v4103
      %v4281 = vadd.f32 %v3810, %v4202
      %v4282 = vadd.f32 %v3811, %v4105
      %v4283 = vadd.f32 %v3812, %v4204
      %v4284 = vadd.f32 %v3813, %v4108
      %v4285 = vadd.f32 %v3814, %v4207
      %v4286 = vadd.f32 %v3815, %v4110
      %v4287 = vadd.f32 %v3816, %v4209
      %v4288 = vadd.f32 %v3817, %v4113
      %v4289 = vadd.f32 %v3818, %v4212
      %v4290 = vadd.f32 %v3819, %v4115
      %v4291 = vadd.f32 %v3820, %v4214
      %v4292 = vadd.f32 %v3821, %v4118
      %v4293 = vadd.f32 %v3822, %v4217
      %v4294 = vadd.f32 %v3823, %v4120
      %v4295 = vadd.f32 %v3824, %v4219
      %v4296 = vadd.f32 %v3825, %v4123
      %v4297 = vadd.f32 %v3826, %v4222
      %v4298 = vadd.f32 %v3827, %v4125
      %v4299 = vadd.f32 %v3828, %v4224
      %v4300 = vadd.f32 %v3829, %v4128
      %v4301 = vadd.f32 %v3830, %v4227
      %v4302 = vadd.f32 %v3831, %v4130
      %v4303 = vadd.f32 %v3832, %v4229
      %v4304 = vadd.f32 %v3833, %v4133
      %v4305 = vadd.f32 %v3834, %v4232
      %v4306 = vadd.f32 %v3835, %v4135
      %v4307 = vadd.f32 %v3836, %v4234
      %s4308 = scalar_lea.vmem %s4, 1024
      %v4309 = vld [vmem:[%s4308] sm:$0xff]
      %v4310 = vld [vmem:[%s4308 + $0x8] sm:$0xff]
      %v4311 = vld [vmem:[%s4308 + $0x10] sm:$0xff]
      %v4312 = vld [vmem:[%s4308 + $0x18] sm:$0xff]
      %v4313 = vld [vmem:[%s4308 + $0x20] sm:$0xff]
      %v4314 = vld [vmem:[%s4308 + $0x28] sm:$0xff]
      %v4315 = vld [vmem:[%s4308 + $0x30] sm:$0xff]
      %v4316 = vld [vmem:[%s4308 + $0x38] sm:$0xff]
      %v4317 = vld [vmem:[%s4308 + $0x40] sm:$0xff]
      %v4318 = vld [vmem:[%s4308 + $0x48] sm:$0xff]
      %v4319 = vld [vmem:[%s4308 + $0x50] sm:$0xff]
      %v4320 = vld [vmem:[%s4308 + $0x58] sm:$0xff]
      %v4321 = vld [vmem:[%s4308 + $0x60] sm:$0xff]
      %v4322 = vld [vmem:[%s4308 + $0x68] sm:$0xff]
      %v4323 = vld [vmem:[%s4308 + $0x70] sm:$0xff]
      %v4324 = vld [vmem:[%s4308 + $0x78] sm:$0xff]
      %vm4325 = vcmask 1044480
      %v4326 = vrot.slane %v1004, 3
      %v4327 = vrot.slane %v1005, 3
      %v4328 = vsel %vm4325, %v4326, %v4327
      %v4329 = vrot.slane %v1006, 3
      %v4330 = vsel %vm4325, %v4327, %v4329
      %v4331 = vrot.slane %v1007, 3
      %v4332 = vsel %vm4325, %v4329, %v4331
      %v4333 = vrot.slane %v1008, 3
      %v4334 = vsel %vm4325, %v4331, %v4333
      %v4335 = vrot.slane %v1009, 3
      %v4336 = vsel %vm4325, %v4333, %v4335
      %v4337 = vrot.slane %v1010, 3
      %v4338 = vsel %vm4325, %v4335, %v4337
      %v4339 = vrot.slane %v1011, 3
      %v4340 = vsel %vm4325, %v4337, %v4339
      %v4341 = vrot.slane %v1012, 3
      %v4342 = vsel %vm4325, %v4339, %v4341
      %v4343 = vrot.slane %v1013, 3
      %v4344 = vsel %vm4325, %v4341, %v4343
      %v4345 = vrot.slane %v1014, 3
      %v4346 = vsel %vm4325, %v4343, %v4345
      %v4347 = vrot.slane %v1015, 3
      %v4348 = vsel %vm4325, %v4345, %v4347
      %v4349 = vrot.slane %v1016, 3
      %v4350 = vsel %vm4325, %v4347, %v4349
      %v4351 = vrot.slane %v1017, 3
      %v4352 = vsel %vm4325, %v4349, %v4351
      %v4353 = vrot.slane %v1018, 3
      %v4354 = vsel %vm4325, %v4351, %v4353
      %v4355 = vrot.slane %v1019, 3
      %v4356 = vsel %vm4325, %v4353, %v4355
      %v4357 = vrot.slane %v2206, 3
      %v4358 = vsel %vm4325, %v4355, %v4357
      %v4359 = vrot.slane %v3479, 3
      %v4360 = vsel %vm4325, %v4357, %v4359
      %v4361 = vrot.slane %v3480, 3
      %v4362 = vsel %vm4325, %v4359, %v4361
      %v4397 = vunpack.c.l.b16 %v4309
      %v4398 = vunpack.c.h.b16 %v4309
      %v4399 = vunpack.c.l.b16 %v4310
      %v4400 = vunpack.c.h.b16 %v4310
      %v4401 = vunpack.c.l.b16 %v4311
      %v4402 = vunpack.c.h.b16 %v4311
      %v4403 = vunpack.c.l.b16 %v4312
      %v4404 = vunpack.c.h.b16 %v4312
      %v4405 = vunpack.c.l.b16 %v4313
      %v4406 = vunpack.c.h.b16 %v4313
      %v4407 = vunpack.c.l.b16 %v4314
      %v4408 = vunpack.c.h.b16 %v4314
      %v4409 = vunpack.c.l.b16 %v4315
      %v4410 = vunpack.c.h.b16 %v4315
      %v4411 = vunpack.c.l.b16 %v4316
      %v4412 = vunpack.c.h.b16 %v4316
      %v4413 = vunpack.c.l.b16 %v4317
      %v4414 = vunpack.c.h.b16 %v4317
      %v4415 = vunpack.c.l.b16 %v4318
      %v4416 = vunpack.c.h.b16 %v4318
      %v4417 = vunpack.c.l.b16 %v4319
      %v4418 = vunpack.c.h.b16 %v4319
      %v4419 = vunpack.c.l.b16 %v4320
      %v4420 = vunpack.c.h.b16 %v4320
      %v4421 = vunpack.c.l.b16 %v4321
      %v4422 = vunpack.c.h.b16 %v4321
      %v4423 = vunpack.c.l.b16 %v4322
      %v4424 = vunpack.c.h.b16 %v4322
      %v4425 = vunpack.c.l.b16 %v4323
      %v4426 = vunpack.c.h.b16 %v4323
      %v4427 = vunpack.c.l.b16 %v4324
      %v4428 = vunpack.c.h.b16 %v4324
      %v4429 = vpack.c.b16 %v4399, %v4397
      %v4430 = vpack.c.b16 %v4400, %v4398
      %v4431 = vpack.c.b16 %v4403, %v4401
      %v4432 = vpack.c.b16 %v4404, %v4402
      %v4433 = vpack.c.b16 %v4407, %v4405
      %v4434 = vpack.c.b16 %v4408, %v4406
      %v4435 = vpack.c.b16 %v4411, %v4409
      %v4436 = vpack.c.b16 %v4412, %v4410
      %v4437 = vpack.c.b16 %v4415, %v4413
      %v4438 = vpack.c.b16 %v4416, %v4414
      %v4439 = vpack.c.b16 %v4419, %v4417
      %v4440 = vpack.c.b16 %v4420, %v4418
      %v4441 = vpack.c.b16 %v4423, %v4421
      %v4442 = vpack.c.b16 %v4424, %v4422
      %v4443 = vpack.c.b16 %v4427, %v4425
      %v4444 = vpack.c.b16 %v4428, %v4426
      %4461 = vmatpush.bf16.msra.mxu0 %v4443
      %4462 = vmatpush.bf16.msra.mxu0 %v4441
      %4463 = vmatpush.bf16.msra.mxu0 %v4439
      %4464 = vmatpush.bf16.msra.mxu0 %v4437
      %4465 = vmatpush.bf16.msra.mxu0 %v4435
      %4466 = vmatpush.bf16.msra.mxu0 %v4433
      %4467 = vmatpush.bf16.msra.mxu0 %v4431
      %4468 = vmatpush.bf16.msra.mxu0 %v4429
      %4469 = vmatmul.bf16.gmra.mxu0 %v4328
      %v4470 = vpop.f32.mrf.mxu0
      %v4471 = vadd.f32 0.0, %v4470
      %v4472 = vpop.f32.mrf.mxu0
      %v4473 = vadd.f32 0.0, %v4472
      %4474 = vmatmul.bf16.gmra.mxu0 %v4330
      %v4475 = vpop.f32.mrf.mxu0
      %v4476 = vadd.f32 0.0, %v4475
      %v4477 = vpop.f32.mrf.mxu0
      %v4478 = vadd.f32 0.0, %v4477
      %4479 = vmatmul.bf16.gmra.mxu0 %v4332
      %v4480 = vpop.f32.mrf.mxu0
      %v4481 = vadd.f32 0.0, %v4480
      %v4482 = vpop.f32.mrf.mxu0
      %v4483 = vadd.f32 0.0, %v4482
      %4484 = vmatmul.bf16.gmra.mxu0 %v4334
      %v4485 = vpop.f32.mrf.mxu0
      %v4486 = vadd.f32 0.0, %v4485
      %v4487 = vpop.f32.mrf.mxu0
      %v4488 = vadd.f32 0.0, %v4487
      %4489 = vmatmul.bf16.gmra.mxu0 %v4336
      %v4490 = vpop.f32.mrf.mxu0
      %v4491 = vadd.f32 0.0, %v4490
      %v4492 = vpop.f32.mrf.mxu0
      %v4493 = vadd.f32 0.0, %v4492
      %4494 = vmatmul.bf16.gmra.mxu0 %v4338
      %v4495 = vpop.f32.mrf.mxu0
      %v4496 = vadd.f32 0.0, %v4495
      %v4497 = vpop.f32.mrf.mxu0
      %v4498 = vadd.f32 0.0, %v4497
      %4499 = vmatmul.bf16.gmra.mxu0 %v4340
      %v4500 = vpop.f32.mrf.mxu0
      %v4501 = vadd.f32 0.0, %v4500
      %v4502 = vpop.f32.mrf.mxu0
      %v4503 = vadd.f32 0.0, %v4502
      %4504 = vmatmul.bf16.gmra.mxu0 %v4342
      %v4505 = vpop.f32.mrf.mxu0
      %v4506 = vadd.f32 0.0, %v4505
      %v4507 = vpop.f32.mrf.mxu0
      %v4508 = vadd.f32 0.0, %v4507
      %4509 = vmatmul.bf16.gmra.mxu0 %v4344
      %v4510 = vpop.f32.mrf.mxu0
      %v4511 = vadd.f32 0.0, %v4510
      %v4512 = vpop.f32.mrf.mxu0
      %v4513 = vadd.f32 0.0, %v4512
      %4514 = vmatmul.bf16.gmra.mxu0 %v4346
      %v4515 = vpop.f32.mrf.mxu0
      %v4516 = vadd.f32 0.0, %v4515
      %v4517 = vpop.f32.mrf.mxu0
      %v4518 = vadd.f32 0.0, %v4517
      %4519 = vmatmul.bf16.gmra.mxu0 %v4348
      %v4520 = vpop.f32.mrf.mxu0
      %v4521 = vadd.f32 0.0, %v4520
      %v4522 = vpop.f32.mrf.mxu0
      %v4523 = vadd.f32 0.0, %v4522
      %4524 = vmatmul.bf16.gmra.mxu0 %v4350
      %v4525 = vpop.f32.mrf.mxu0
      %v4526 = vadd.f32 0.0, %v4525
      %v4527 = vpop.f32.mrf.mxu0
      %v4528 = vadd.f32 0.0, %v4527
      %4529 = vmatmul.bf16.gmra.mxu0 %v4352
      %v4530 = vpop.f32.mrf.mxu0
      %v4531 = vadd.f32 0.0, %v4530
      %v4532 = vpop.f32.mrf.mxu0
      %v4533 = vadd.f32 0.0, %v4532
      %4534 = vmatmul.bf16.gmra.mxu0 %v4354
      %v4535 = vpop.f32.mrf.mxu0
      %v4536 = vadd.f32 0.0, %v4535
      %v4537 = vpop.f32.mrf.mxu0
      %v4538 = vadd.f32 0.0, %v4537
      %4539 = vmatmul.bf16.gmra.mxu0 %v4356
      %v4540 = vpop.f32.mrf.mxu0
      %v4541 = vadd.f32 0.0, %v4540
      %v4542 = vpop.f32.mrf.mxu0
      %v4543 = vadd.f32 0.0, %v4542
      %4544 = vmatmul.bf16.gmra.mxu0 %v4358
      %v4545 = vpop.f32.mrf.mxu0
      %v4546 = vadd.f32 0.0, %v4545
      %v4547 = vpop.f32.mrf.mxu0
      %v4548 = vadd.f32 0.0, %v4547
      %4549 = vmatmul.bf16.gmra.mxu0 %v4360
      %v4550 = vpop.f32.mrf.mxu0
      %v4551 = vadd.f32 0.0, %v4550
      %v4552 = vpop.f32.mrf.mxu0
      %v4553 = vadd.f32 0.0, %v4552
      %4554 = vmatmul.bf16.gmra.mxu0 %v4362
      %v4555 = vpop.f32.mrf.mxu0
      %v4556 = vadd.f32 0.0, %v4555
      %v4557 = vpop.f32.mrf.mxu0
      %v4558 = vadd.f32 0.0, %v4557
      %4559 = vdwg.mxu0
      %4560 = vmatpush.bf16.msra.mxu0 %v4444
      %4561 = vmatpush.bf16.msra.mxu0 %v4442
      %4562 = vmatpush.bf16.msra.mxu0 %v4440
      %4563 = vmatpush.bf16.msra.mxu0 %v4438
      %4564 = vmatpush.bf16.msra.mxu0 %v4436
      %4565 = vmatpush.bf16.msra.mxu0 %v4434
      %4566 = vmatpush.bf16.msra.mxu0 %v4432
      %4567 = vmatpush.bf16.msra.mxu0 %v4430
      %4568 = vmatmul.bf16.gmra.mxu0 %v4328
      %v4569 = vpop.f32.mrf.mxu0
      %v4570 = vadd.f32 0.0, %v4569
      %v4571 = vpop.f32.mrf.mxu0
      %v4572 = vadd.f32 0.0, %v4571
      %4573 = vmatmul.bf16.gmra.mxu0 %v4330
      %v4574 = vpop.f32.mrf.mxu0
      %v4575 = vadd.f32 0.0, %v4574
      %v4576 = vpop.f32.mrf.mxu0
      %v4577 = vadd.f32 0.0, %v4576
      %4578 = vmatmul.bf16.gmra.mxu0 %v4332
      %v4579 = vpop.f32.mrf.mxu0
      %v4580 = vadd.f32 0.0, %v4579
      %v4581 = vpop.f32.mrf.mxu0
      %v4582 = vadd.f32 0.0, %v4581
      %4583 = vmatmul.bf16.gmra.mxu0 %v4334
      %v4584 = vpop.f32.mrf.mxu0
      %v4585 = vadd.f32 0.0, %v4584
      %v4586 = vpop.f32.mrf.mxu0
      %v4587 = vadd.f32 0.0, %v4586
      %4588 = vmatmul.bf16.gmra.mxu0 %v4336
      %v4589 = vpop.f32.mrf.mxu0
      %v4590 = vadd.f32 0.0, %v4589
      %v4591 = vpop.f32.mrf.mxu0
      %v4592 = vadd.f32 0.0, %v4591
      %4593 = vmatmul.bf16.gmra.mxu0 %v4338
      %v4594 = vpop.f32.mrf.mxu0
      %v4595 = vadd.f32 0.0, %v4594
      %v4596 = vpop.f32.mrf.mxu0
      %v4597 = vadd.f32 0.0, %v4596
      %4598 = vmatmul.bf16.gmra.mxu0 %v4340
      %v4599 = vpop.f32.mrf.mxu0
      %v4600 = vadd.f32 0.0, %v4599
      %v4601 = vpop.f32.mrf.mxu0
      %v4602 = vadd.f32 0.0, %v4601
      %4603 = vmatmul.bf16.gmra.mxu0 %v4342
      %v4604 = vpop.f32.mrf.mxu0
      %v4605 = vadd.f32 0.0, %v4604
      %v4606 = vpop.f32.mrf.mxu0
      %v4607 = vadd.f32 0.0, %v4606
      %4608 = vmatmul.bf16.gmra.mxu0 %v4344
      %v4609 = vpop.f32.mrf.mxu0
      %v4610 = vadd.f32 0.0, %v4609
      %v4611 = vpop.f32.mrf.mxu0
      %v4612 = vadd.f32 0.0, %v4611
      %4613 = vmatmul.bf16.gmra.mxu0 %v4346
      %v4614 = vpop.f32.mrf.mxu0
      %v4615 = vadd.f32 0.0, %v4614
      %v4616 = vpop.f32.mrf.mxu0
      %v4617 = vadd.f32 0.0, %v4616
      %4618 = vmatmul.bf16.gmra.mxu0 %v4348
      %v4619 = vpop.f32.mrf.mxu0
      %v4620 = vadd.f32 0.0, %v4619
      %v4621 = vpop.f32.mrf.mxu0
      %v4622 = vadd.f32 0.0, %v4621
      %4623 = vmatmul.bf16.gmra.mxu0 %v4350
      %v4624 = vpop.f32.mrf.mxu0
      %v4625 = vadd.f32 0.0, %v4624
      %v4626 = vpop.f32.mrf.mxu0
      %v4627 = vadd.f32 0.0, %v4626
      %4628 = vmatmul.bf16.gmra.mxu0 %v4352
      %v4629 = vpop.f32.mrf.mxu0
      %v4630 = vadd.f32 0.0, %v4629
      %v4631 = vpop.f32.mrf.mxu0
      %v4632 = vadd.f32 0.0, %v4631
      %4633 = vmatmul.bf16.gmra.mxu0 %v4354
      %v4634 = vpop.f32.mrf.mxu0
      %v4635 = vadd.f32 0.0, %v4634
      %v4636 = vpop.f32.mrf.mxu0
      %v4637 = vadd.f32 0.0, %v4636
      %4638 = vmatmul.bf16.gmra.mxu0 %v4356
      %v4639 = vpop.f32.mrf.mxu0
      %v4640 = vadd.f32 0.0, %v4639
      %v4641 = vpop.f32.mrf.mxu0
      %v4642 = vadd.f32 0.0, %v4641
      %4643 = vmatmul.bf16.gmra.mxu0 %v4358
      %v4644 = vpop.f32.mrf.mxu0
      %v4645 = vadd.f32 0.0, %v4644
      %v4646 = vpop.f32.mrf.mxu0
      %v4647 = vadd.f32 0.0, %v4646
      %4648 = vmatmul.bf16.gmra.mxu0 %v4360
      %v4649 = vpop.f32.mrf.mxu0
      %v4650 = vadd.f32 0.0, %v4649
      %v4651 = vpop.f32.mrf.mxu0
      %v4652 = vadd.f32 0.0, %v4651
      %4653 = vmatmul.bf16.gmra.mxu0 %v4362
      %v4654 = vpop.f32.mrf.mxu0
      %v4655 = vadd.f32 0.0, %v4654
      %v4656 = vpop.f32.mrf.mxu0
      %v4657 = vadd.f32 0.0, %v4656
      %4658 = vdwg.mxu0
      %v4659 = vadd.f32 %v4236, %v4471
      %v4660 = vadd.f32 %v4237, %v4570
      %v4661 = vadd.f32 %v4238, %v4473
      %v4662 = vadd.f32 %v4239, %v4572
      %v4663 = vadd.f32 %v4240, %v4476
      %v4664 = vadd.f32 %v4241, %v4575
      %v4665 = vadd.f32 %v4242, %v4478
      %v4666 = vadd.f32 %v4243, %v4577
      %v4667 = vadd.f32 %v4244, %v4481
      %v4668 = vadd.f32 %v4245, %v4580
      %v4669 = vadd.f32 %v4246, %v4483
      %v4670 = vadd.f32 %v4247, %v4582
      %v4671 = vadd.f32 %v4248, %v4486
      %v4672 = vadd.f32 %v4249, %v4585
      %v4673 = vadd.f32 %v4250, %v4488
      %v4674 = vadd.f32 %v4251, %v4587
      %v4675 = vadd.f32 %v4252, %v4491
      %v4676 = vadd.f32 %v4253, %v4590
      %v4677 = vadd.f32 %v4254, %v4493
      %v4678 = vadd.f32 %v4255, %v4592
      %v4679 = vadd.f32 %v4256, %v4496
      %v4680 = vadd.f32 %v4257, %v4595
      %v4681 = vadd.f32 %v4258, %v4498
      %v4682 = vadd.f32 %v4259, %v4597
      %v4683 = vadd.f32 %v4260, %v4501
      %v4684 = vadd.f32 %v4261, %v4600
      %v4685 = vadd.f32 %v4262, %v4503
      %v4686 = vadd.f32 %v4263, %v4602
      %v4687 = vadd.f32 %v4264, %v4506
      %v4688 = vadd.f32 %v4265, %v4605
      %v4689 = vadd.f32 %v4266, %v4508
      %v4690 = vadd.f32 %v4267, %v4607
      %v4691 = vadd.f32 %v4268, %v4511
      %v4692 = vadd.f32 %v4269, %v4610
      %v4693 = vadd.f32 %v4270, %v4513
      %v4694 = vadd.f32 %v4271, %v4612
      %v4695 = vadd.f32 %v4272, %v4516
      %v4696 = vadd.f32 %v4273, %v4615
      %v4697 = vadd.f32 %v4274, %v4518
      %v4698 = vadd.f32 %v4275, %v4617
      %v4699 = vadd.f32 %v4276, %v4521
      %v4700 = vadd.f32 %v4277, %v4620
      %v4701 = vadd.f32 %v4278, %v4523
      %v4702 = vadd.f32 %v4279, %v4622
      %v4703 = vadd.f32 %v4280, %v4526
      %v4704 = vadd.f32 %v4281, %v4625
      %v4705 = vadd.f32 %v4282, %v4528
      %v4706 = vadd.f32 %v4283, %v4627
      %v4707 = vadd.f32 %v4284, %v4531
      %v4708 = vadd.f32 %v4285, %v4630
      %v4709 = vadd.f32 %v4286, %v4533
      %v4710 = vadd.f32 %v4287, %v4632
      %v4711 = vadd.f32 %v4288, %v4536
      %v4712 = vadd.f32 %v4289, %v4635
      %v4713 = vadd.f32 %v4290, %v4538
      %v4714 = vadd.f32 %v4291, %v4637
      %v4715 = vadd.f32 %v4292, %v4541
      %v4716 = vadd.f32 %v4293, %v4640
      %v4717 = vadd.f32 %v4294, %v4543
      %v4718 = vadd.f32 %v4295, %v4642
      %v4719 = vadd.f32 %v4296, %v4546
      %v4720 = vadd.f32 %v4297, %v4645
      %v4721 = vadd.f32 %v4298, %v4548
      %v4722 = vadd.f32 %v4299, %v4647
      %v4723 = vadd.f32 %v4300, %v4551
      %v4724 = vadd.f32 %v4301, %v4650
      %v4725 = vadd.f32 %v4302, %v4553
      %v4726 = vadd.f32 %v4303, %v4652
      %v4727 = vadd.f32 %v4304, %v4556
      %v4728 = vadd.f32 %v4305, %v4655
      %v4729 = vadd.f32 %v4306, %v4558
      %v4730 = vadd.f32 %v4307, %v4657
      %v4731 = vld [vmem:[%s5] sm:$0x3]
      %v4733 = vperm.slane %v4731, 0
      %v4734 = vperm.slane %v4731, 1
      %v4737 = vadd.f32 %v4659, %v4733
      %v4738 = vadd.f32 %v4660, %v4734
      %v4739 = vadd.f32 %v4661, %v4733
      %v4740 = vadd.f32 %v4662, %v4734
      %v4741 = vadd.f32 %v4663, %v4733
      %v4742 = vadd.f32 %v4664, %v4734
      %v4743 = vadd.f32 %v4665, %v4733
      %v4744 = vadd.f32 %v4666, %v4734
      %v4745 = vadd.f32 %v4667, %v4733
      %v4746 = vadd.f32 %v4668, %v4734
      %v4747 = vadd.f32 %v4669, %v4733
      %v4748 = vadd.f32 %v4670, %v4734
      %v4749 = vadd.f32 %v4671, %v4733
      %v4750 = vadd.f32 %v4672, %v4734
      %v4751 = vadd.f32 %v4673, %v4733
      %v4752 = vadd.f32 %v4674, %v4734
      %v4753 = vadd.f32 %v4675, %v4733
      %v4754 = vadd.f32 %v4676, %v4734
      %v4755 = vadd.f32 %v4677, %v4733
      %v4756 = vadd.f32 %v4678, %v4734
      %v4757 = vadd.f32 %v4679, %v4733
      %v4758 = vadd.f32 %v4680, %v4734
      %v4759 = vadd.f32 %v4681, %v4733
      %v4760 = vadd.f32 %v4682, %v4734
      %v4761 = vadd.f32 %v4683, %v4733
      %v4762 = vadd.f32 %v4684, %v4734
      %v4763 = vadd.f32 %v4685, %v4733
      %v4764 = vadd.f32 %v4686, %v4734
      %v4765 = vadd.f32 %v4687, %v4733
      %v4766 = vadd.f32 %v4688, %v4734
      %v4767 = vadd.f32 %v4689, %v4733
      %v4768 = vadd.f32 %v4690, %v4734
      %v4769 = vadd.f32 %v4691, %v4733
      %v4770 = vadd.f32 %v4692, %v4734
      %v4771 = vadd.f32 %v4693, %v4733
      %v4772 = vadd.f32 %v4694, %v4734
      %v4773 = vadd.f32 %v4695, %v4733
      %v4774 = vadd.f32 %v4696, %v4734
      %v4775 = vadd.f32 %v4697, %v4733
      %v4776 = vadd.f32 %v4698, %v4734
      %v4777 = vadd.f32 %v4699, %v4733
      %v4778 = vadd.f32 %v4700, %v4734
      %v4779 = vadd.f32 %v4701, %v4733
      %v4780 = vadd.f32 %v4702, %v4734
      %v4781 = vadd.f32 %v4703, %v4733
      %v4782 = vadd.f32 %v4704, %v4734
      %v4783 = vadd.f32 %v4705, %v4733
      %v4784 = vadd.f32 %v4706, %v4734
      %v4785 = vadd.f32 %v4707, %v4733
      %v4786 = vadd.f32 %v4708, %v4734
      %v4787 = vadd.f32 %v4709, %v4733
      %v4788 = vadd.f32 %v4710, %v4734
      %v4789 = vadd.f32 %v4711, %v4733
      %v4790 = vadd.f32 %v4712, %v4734
      %v4791 = vadd.f32 %v4713, %v4733
      %v4792 = vadd.f32 %v4714, %v4734
      %v4793 = vadd.f32 %v4715, %v4733
      %v4794 = vadd.f32 %v4716, %v4734
      %v4795 = vadd.f32 %v4717, %v4733
      %v4796 = vadd.f32 %v4718, %v4734
      %v4797 = vadd.f32 %v4719, %v4733
      %v4798 = vadd.f32 %v4720, %v4734
      %v4799 = vadd.f32 %v4721, %v4733
      %v4800 = vadd.f32 %v4722, %v4734
      %v4801 = vadd.f32 %v4723, %v4733
      %v4802 = vadd.f32 %v4724, %v4734
      %v4803 = vadd.f32 %v4725, %v4733
      %v4804 = vadd.f32 %v4726, %v4734
      %v4805 = vadd.f32 %v4727, %v4733
      %v4806 = vadd.f32 %v4728, %v4734
      %v4807 = vadd.f32 %v4729, %v4733
      %v4808 = vadd.f32 %v4730, %v4734
      %4809 = vst [vmem:[%s345] sm:$0xff] %v4737
      %4810 = vst [vmem:[%s345 + $0x8] sm:$0xff] %v4738
      %4811 = vst [vmem:[%s345 + $0x10] sm:$0xff] %v4739
      %4812 = vst [vmem:[%s345 + $0x18] sm:$0xff] %v4740
      %4813 = vst [vmem:[%s345 + $0x20] sm:$0xff] %v4741
      %4814 = vst [vmem:[%s345 + $0x28] sm:$0xff] %v4742
      %4815 = vst [vmem:[%s345 + $0x30] sm:$0xff] %v4743
      %4816 = vst [vmem:[%s345 + $0x38] sm:$0xff] %v4744
      %4817 = vst [vmem:[%s345 + $0x40] sm:$0xff] %v4745
      %4818 = vst [vmem:[%s345 + $0x48] sm:$0xff] %v4746
      %4819 = vst [vmem:[%s345 + $0x50] sm:$0xff] %v4747
      %4820 = vst [vmem:[%s345 + $0x58] sm:$0xff] %v4748
      %4821 = vst [vmem:[%s345 + $0x60] sm:$0xff] %v4749
      %4822 = vst [vmem:[%s345 + $0x68] sm:$0xff] %v4750
      %4823 = vst [vmem:[%s345 + $0x70] sm:$0xff] %v4751
      %4824 = vst [vmem:[%s345 + $0x78] sm:$0xff] %v4752
      %4825 = vst [vmem:[%s345 + $0x80] sm:$0xff] %v4753
      %4826 = vst [vmem:[%s345 + $0x88] sm:$0xff] %v4754
      %4827 = vst [vmem:[%s345 + $0x90] sm:$0xff] %v4755
      %4828 = vst [vmem:[%s345 + $0x98] sm:$0xff] %v4756
      %4829 = vst [vmem:[%s345 + $0xa0] sm:$0xff] %v4757
      %4830 = vst [vmem:[%s345 + $0xa8] sm:$0xff] %v4758
      %4831 = vst [vmem:[%s345 + $0xb0] sm:$0xff] %v4759
      %4832 = vst [vmem:[%s345 + $0xb8] sm:$0xff] %v4760
      %4833 = vst [vmem:[%s345 + $0xc0] sm:$0xff] %v4761
      %4834 = vst [vmem:[%s345 + $0xc8] sm:$0xff] %v4762
      %4835 = vst [vmem:[%s345 + $0xd0] sm:$0xff] %v4763
      %4836 = vst [vmem:[%s345 + $0xd8] sm:$0xff] %v4764
      %4837 = vst [vmem:[%s345 + $0xe0] sm:$0xff] %v4765
      %4838 = vst [vmem:[%s345 + $0xe8] sm:$0xff] %v4766
      %4839 = vst [vmem:[%s345 + $0xf0] sm:$0xff] %v4767
      %4840 = vst [vmem:[%s345 + $0xf8] sm:$0xff] %v4768
      %4841 = vst [vmem:[%s345 + $0x100] sm:$0xff] %v4769
      %4842 = vst [vmem:[%s345 + $0x108] sm:$0xff] %v4770
      %4843 = vst [vmem:[%s345 + $0x110] sm:$0xff] %v4771
      %4844 = vst [vmem:[%s345 + $0x118] sm:$0xff] %v4772
      %4845 = vst [vmem:[%s345 + $0x120] sm:$0xff] %v4773
      %4846 = vst [vmem:[%s345 + $0x128] sm:$0xff] %v4774
      %4847 = vst [vmem:[%s345 + $0x130] sm:$0xff] %v4775
      %4848 = vst [vmem:[%s345 + $0x138] sm:$0xff] %v4776
      %4849 = vst [vmem:[%s345 + $0x140] sm:$0xff] %v4777
      %4850 = vst [vmem:[%s345 + $0x148] sm:$0xff] %v4778
      %4851 = vst [vmem:[%s345 + $0x150] sm:$0xff] %v4779
      %4852 = vst [vmem:[%s345 + $0x158] sm:$0xff] %v4780
      %4853 = vst [vmem:[%s345 + $0x160] sm:$0xff] %v4781
      %4854 = vst [vmem:[%s345 + $0x168] sm:$0xff] %v4782
      %4855 = vst [vmem:[%s345 + $0x170] sm:$0xff] %v4783
      %4856 = vst [vmem:[%s345 + $0x178] sm:$0xff] %v4784
      %4857 = vst [vmem:[%s345 + $0x180] sm:$0xff] %v4785
      %4858 = vst [vmem:[%s345 + $0x188] sm:$0xff] %v4786
      %4859 = vst [vmem:[%s345 + $0x190] sm:$0xff] %v4787
      %4860 = vst [vmem:[%s345 + $0x198] sm:$0xff] %v4788
      %4861 = vst [vmem:[%s345 + $0x1a0] sm:$0xff] %v4789
      %4862 = vst [vmem:[%s345 + $0x1a8] sm:$0xff] %v4790
      %4863 = vst [vmem:[%s345 + $0x1b0] sm:$0xff] %v4791
      %4864 = vst [vmem:[%s345 + $0x1b8] sm:$0xff] %v4792
      %4865 = vst [vmem:[%s345 + $0x1c0] sm:$0xff] %v4793
      %4866 = vst [vmem:[%s345 + $0x1c8] sm:$0xff] %v4794
      %4867 = vst [vmem:[%s345 + $0x1d0] sm:$0xff] %v4795
      %4868 = vst [vmem:[%s345 + $0x1d8] sm:$0xff] %v4796
      %4869 = vst [vmem:[%s345 + $0x1e0] sm:$0xff] %v4797
      %4870 = vst [vmem:[%s345 + $0x1e8] sm:$0xff] %v4798
      %4871 = vst [vmem:[%s345 + $0x1f0] sm:$0xff] %v4799
      %4872 = vst [vmem:[%s345 + $0x1f8] sm:$0xff] %v4800
      %4873 = vst [vmem:[%s345 + $0x200] sm:$0xff] %v4801
      %4874 = vst [vmem:[%s345 + $0x208] sm:$0xff] %v4802
      %4875 = vst [vmem:[%s345 + $0x210] sm:$0xff] %v4803
      %4876 = vst [vmem:[%s345 + $0x218] sm:$0xff] %v4804
      %4877 = vst [vmem:[%s345 + $0x220] sm:$0xff] %v4805
      %4878 = vst [vmem:[%s345 + $0x228] sm:$0xff] %v4806
      %4879 = vst [vmem:[%s345 + $0x230] sm:$0xff] %v4807
      %4880 = vst [vmem:[%s345 + $0x238] sm:$0xff] %v4808
      %v4881 = vld [vmem:[%s6] sm:$0xff]
      %v4882 = vld [vmem:[%s6 + $0x8] sm:$0xff]
      %v4883 = vld [vmem:[%s6 + $0x10] sm:$0xff]
      %v4884 = vld [vmem:[%s6 + $0x18] sm:$0xff]
      %v4885 = vld [vmem:[%s6 + $0x20] sm:$0xff]
      %v4886 = vld [vmem:[%s6 + $0x28] sm:$0xff]
      %v4887 = vld [vmem:[%s6 + $0x30] sm:$0xff]
      %v4888 = vld [vmem:[%s6 + $0x38] sm:$0xff]
      %v4889 = vld [vmem:[%s6 + $0x40] sm:$0xff]
      %v4890 = vld [vmem:[%s6 + $0x48] sm:$0xff]
      %v4891 = vld [vmem:[%s6 + $0x50] sm:$0xff]
      %v4892 = vld [vmem:[%s6 + $0x58] sm:$0xff]
      %v4893 = vld [vmem:[%s6 + $0x60] sm:$0xff]
      %v4894 = vld [vmem:[%s6 + $0x68] sm:$0xff]
      %v4895 = vld [vmem:[%s6 + $0x70] sm:$0xff]
      %v4896 = vld [vmem:[%s6 + $0x78] sm:$0xff]
      %v4897 = vld [vmem:[%s6 + $0x80] sm:$0xff]
      %v4898 = vld [vmem:[%s6 + $0x88] sm:$0xff]
      %v4899 = vld [vmem:[%s6 + $0x90] sm:$0xff]
      %v4900 = vld [vmem:[%s6 + $0x98] sm:$0xff]
      %v4901 = vld [vmem:[%s6 + $0xa0] sm:$0xff]
      %v4902 = vld [vmem:[%s6 + $0xa8] sm:$0xff]
      %v4903 = vld [vmem:[%s6 + $0xb0] sm:$0xff]
      %v4904 = vld [vmem:[%s6 + $0xb8] sm:$0xff]
      %v4905 = vld [vmem:[%s6 + $0xc0] sm:$0xff]
      %v4906 = vld [vmem:[%s6 + $0xc8] sm:$0xff]
      %v4907 = vld [vmem:[%s6 + $0xd0] sm:$0xff]
      %v4908 = vld [vmem:[%s6 + $0xd8] sm:$0xff]
      %v4909 = vld [vmem:[%s6 + $0xe0] sm:$0xff]
      %v4910 = vld [vmem:[%s6 + $0xe8] sm:$0xff]
      %v4911 = vld [vmem:[%s6 + $0xf0] sm:$0xff]
      %v4912 = vld [vmem:[%s6 + $0xf8] sm:$0xff]
      %v4913 = vld [vmem:[%s6 + $0x100] sm:$0xff]
      %v4914 = vld [vmem:[%s6 + $0x108] sm:$0xff]
      %v4915 = vld [vmem:[%s6 + $0x110] sm:$0xff]
      %v4916 = vld [vmem:[%s6 + $0x118] sm:$0xff]
      %4918 = vset.pattern.permute.xlu0 0
      %4919 = vperm.xlu0 %4918, %v4881
      %v4920 = vpop.permute.xlu0 %4919
      %4923 = vset.pattern.permute.xlu0 0
      %4924 = vperm.xlu0 %4923, %v4882
      %v4925 = vpop.permute.xlu0 %4924
      %4928 = vset.pattern.permute.xlu0 0
      %4929 = vperm.xlu0 %4928, %v4883
      %v4930 = vpop.permute.xlu0 %4929
      %4933 = vset.pattern.permute.xlu0 0
      %4934 = vperm.xlu0 %4933, %v4884
      %v4935 = vpop.permute.xlu0 %4934
      %4938 = vset.pattern.permute.xlu0 0
      %4939 = vperm.xlu0 %4938, %v4885
      %v4940 = vpop.permute.xlu0 %4939
      %4943 = vset.pattern.permute.xlu0 0
      %4944 = vperm.xlu0 %4943, %v4886
      %v4945 = vpop.permute.xlu0 %4944
      %4948 = vset.pattern.permute.xlu0 0
      %4949 = vperm.xlu0 %4948, %v4887
      %v4950 = vpop.permute.xlu0 %4949
      %4953 = vset.pattern.permute.xlu0 0
      %4954 = vperm.xlu0 %4953, %v4888
      %v4955 = vpop.permute.xlu0 %4954
      %4958 = vset.pattern.permute.xlu0 0
      %4959 = vperm.xlu0 %4958, %v4889
      %v4960 = vpop.permute.xlu0 %4959
      %4963 = vset.pattern.permute.xlu0 0
      %4964 = vperm.xlu0 %4963, %v4890
      %v4965 = vpop.permute.xlu0 %4964
      %4968 = vset.pattern.permute.xlu0 0
      %4969 = vperm.xlu0 %4968, %v4891
      %v4970 = vpop.permute.xlu0 %4969
      %4973 = vset.pattern.permute.xlu0 0
      %4974 = vperm.xlu0 %4973, %v4892
      %v4975 = vpop.permute.xlu0 %4974
      %4978 = vset.pattern.permute.xlu0 0
      %4979 = vperm.xlu0 %4978, %v4893
      %v4980 = vpop.permute.xlu0 %4979
      %4983 = vset.pattern.permute.xlu0 0
      %4984 = vperm.xlu0 %4983, %v4894
      %v4985 = vpop.permute.xlu0 %4984
      %4988 = vset.pattern.permute.xlu0 0
      %4989 = vperm.xlu0 %4988, %v4895
      %v4990 = vpop.permute.xlu0 %4989
      %4993 = vset.pattern.permute.xlu0 0
      %4994 = vperm.xlu0 %4993, %v4896
      %v4995 = vpop.permute.xlu0 %4994
      %4998 = vset.pattern.permute.xlu0 0
      %4999 = vperm.xlu0 %4998, %v4897
      %v5000 = vpop.permute.xlu0 %4999
      %5003 = vset.pattern.permute.xlu0 0
      %5004 = vperm.xlu0 %5003, %v4898
      %v5005 = vpop.permute.xlu0 %5004
      %5008 = vset.pattern.permute.xlu0 0
      %5009 = vperm.xlu0 %5008, %v4899
      %v5010 = vpop.permute.xlu0 %5009
      %5013 = vset.pattern.permute.xlu0 0
      %5014 = vperm.xlu0 %5013, %v4900
      %v5015 = vpop.permute.xlu0 %5014
      %5018 = vset.pattern.permute.xlu0 0
      %5019 = vperm.xlu0 %5018, %v4901
      %v5020 = vpop.permute.xlu0 %5019
      %5023 = vset.pattern.permute.xlu0 0
      %5024 = vperm.xlu0 %5023, %v4902
      %v5025 = vpop.permute.xlu0 %5024
      %5028 = vset.pattern.permute.xlu0 0
      %5029 = vperm.xlu0 %5028, %v4903
      %v5030 = vpop.permute.xlu0 %5029
      %5033 = vset.pattern.permute.xlu0 0
      %5034 = vperm.xlu0 %5033, %v4904
      %v5035 = vpop.permute.xlu0 %5034
      %5038 = vset.pattern.permute.xlu0 0
      %5039 = vperm.xlu0 %5038, %v4905
      %v5040 = vpop.permute.xlu0 %5039
      %5043 = vset.pattern.permute.xlu0 0
      %5044 = vperm.xlu0 %5043, %v4906
      %v5045 = vpop.permute.xlu0 %5044
      %5048 = vset.pattern.permute.xlu0 0
      %5049 = vperm.xlu0 %5048, %v4907
      %v5050 = vpop.permute.xlu0 %5049
      %5053 = vset.pattern.permute.xlu0 0
      %5054 = vperm.xlu0 %5053, %v4908
      %v5055 = vpop.permute.xlu0 %5054
      %5058 = vset.pattern.permute.xlu0 0
      %5059 = vperm.xlu0 %5058, %v4909
      %v5060 = vpop.permute.xlu0 %5059
      %5063 = vset.pattern.permute.xlu0 0
      %5064 = vperm.xlu0 %5063, %v4910
      %v5065 = vpop.permute.xlu0 %5064
      %5068 = vset.pattern.permute.xlu0 0
      %5069 = vperm.xlu0 %5068, %v4911
      %v5070 = vpop.permute.xlu0 %5069
      %5073 = vset.pattern.permute.xlu0 0
      %5074 = vperm.xlu0 %5073, %v4912
      %v5075 = vpop.permute.xlu0 %5074
      %5078 = vset.pattern.permute.xlu0 0
      %5079 = vperm.xlu0 %5078, %v4913
      %v5080 = vpop.permute.xlu0 %5079
      %5083 = vset.pattern.permute.xlu0 0
      %5084 = vperm.xlu0 %5083, %v4914
      %v5085 = vpop.permute.xlu0 %5084
      %5088 = vset.pattern.permute.xlu0 0
      %5089 = vperm.xlu0 %5088, %v4915
      %v5090 = vpop.permute.xlu0 %5089
      %5093 = vset.pattern.permute.xlu0 0
      %5094 = vperm.xlu0 %5093, %v4916
      %v5095 = vpop.permute.xlu0 %5094
      %v5097 = vmul.f32 %v4737, %v4920
      %v5098 = vmul.f32 %v4738, %v4920
      %v5099 = vmul.f32 %v4739, %v4925
      %v5100 = vmul.f32 %v4740, %v4925
      %v5101 = vmul.f32 %v4741, %v4930
      %v5102 = vmul.f32 %v4742, %v4930
      %v5103 = vmul.f32 %v4743, %v4935
      %v5104 = vmul.f32 %v4744, %v4935
      %v5105 = vmul.f32 %v4745, %v4940
      %v5106 = vmul.f32 %v4746, %v4940
      %v5107 = vmul.f32 %v4747, %v4945
      %v5108 = vmul.f32 %v4748, %v4945
      %v5109 = vmul.f32 %v4749, %v4950
      %v5110 = vmul.f32 %v4750, %v4950
      %v5111 = vmul.f32 %v4751, %v4955
      %v5112 = vmul.f32 %v4752, %v4955
      %v5113 = vmul.f32 %v4753, %v4960
      %v5114 = vmul.f32 %v4754, %v4960
      %v5115 = vmul.f32 %v4755, %v4965
      %v5116 = vmul.f32 %v4756, %v4965
      %v5117 = vmul.f32 %v4757, %v4970
      %v5118 = vmul.f32 %v4758, %v4970
      %v5119 = vmul.f32 %v4759, %v4975
      %v5120 = vmul.f32 %v4760, %v4975
      %v5121 = vmul.f32 %v4761, %v4980
      %v5122 = vmul.f32 %v4762, %v4980
      %v5123 = vmul.f32 %v4763, %v4985
      %v5124 = vmul.f32 %v4764, %v4985
      %v5125 = vmul.f32 %v4765, %v4990
      %v5126 = vmul.f32 %v4766, %v4990
      %v5127 = vmul.f32 %v4767, %v4995
      %v5128 = vmul.f32 %v4768, %v4995
      %v5129 = vmul.f32 %v4769, %v5000
      %v5130 = vmul.f32 %v4770, %v5000
      %v5131 = vmul.f32 %v4771, %v5005
      %v5132 = vmul.f32 %v4772, %v5005
      %v5133 = vmul.f32 %v4773, %v5010
      %v5134 = vmul.f32 %v4774, %v5010
      %v5135 = vmul.f32 %v4775, %v5015
      %v5136 = vmul.f32 %v4776, %v5015
      %v5137 = vmul.f32 %v4777, %v5020
      %v5138 = vmul.f32 %v4778, %v5020
      %v5139 = vmul.f32 %v4779, %v5025
      %v5140 = vmul.f32 %v4780, %v5025
      %v5141 = vmul.f32 %v4781, %v5030
      %v5142 = vmul.f32 %v4782, %v5030
      %v5143 = vmul.f32 %v4783, %v5035
      %v5144 = vmul.f32 %v4784, %v5035
      %v5145 = vmul.f32 %v4785, %v5040
      %v5146 = vmul.f32 %v4786, %v5040
      %v5147 = vmul.f32 %v4787, %v5045
      %v5148 = vmul.f32 %v4788, %v5045
      %v5149 = vmul.f32 %v4789, %v5050
      %v5150 = vmul.f32 %v4790, %v5050
      %v5151 = vmul.f32 %v4791, %v5055
      %v5152 = vmul.f32 %v4792, %v5055
      %v5153 = vmul.f32 %v4793, %v5060
      %v5154 = vmul.f32 %v4794, %v5060
      %v5155 = vmul.f32 %v4795, %v5065
      %v5156 = vmul.f32 %v4796, %v5065
      %v5157 = vmul.f32 %v4797, %v5070
      %v5158 = vmul.f32 %v4798, %v5070
      %v5159 = vmul.f32 %v4799, %v5075
      %v5160 = vmul.f32 %v4800, %v5075
      %v5161 = vmul.f32 %v4801, %v5080
      %v5162 = vmul.f32 %v4802, %v5080
      %v5163 = vmul.f32 %v4803, %v5085
      %v5164 = vmul.f32 %v4804, %v5085
      %v5165 = vmul.f32 %v4805, %v5090
      %v5166 = vmul.f32 %v4806, %v5090
      %v5167 = vmul.f32 %v4807, %v5095
      %v5168 = vmul.f32 %v4808, %v5095
      %v5169 = vadd.f32 %v5097, %v5099
      %v5170 = vadd.f32 %v5169, %v5101
      %v5171 = vadd.f32 %v5170, %v5103
      %v5172 = vadd.f32 %v5171, %v5105
      %v5173 = vadd.f32 %v5172, %v5107
      %v5174 = vadd.f32 %v5173, %v5109
      %v5175 = vadd.f32 %v5174, %v5111
      %v5176 = vadd.f32 %v5175, %v5113
      %v5177 = vadd.f32 %v5176, %v5115
      %v5178 = vadd.f32 %v5177, %v5117
      %v5179 = vadd.f32 %v5178, %v5119
      %v5180 = vadd.f32 %v5179, %v5121
      %v5181 = vadd.f32 %v5180, %v5123
      %v5182 = vadd.f32 %v5181, %v5125
      %v5183 = vadd.f32 %v5182, %v5127
      %v5184 = vadd.f32 %v5183, %v5129
      %v5185 = vadd.f32 %v5184, %v5131
      %v5186 = vadd.f32 %v5185, %v5133
      %v5187 = vadd.f32 %v5186, %v5135
      %v5188 = vadd.f32 %v5187, %v5137
      %v5189 = vadd.f32 %v5188, %v5139
      %v5190 = vadd.f32 %v5189, %v5141
      %v5191 = vadd.f32 %v5190, %v5143
      %v5192 = vadd.f32 %v5191, %v5145
      %v5193 = vadd.f32 %v5192, %v5147
      %v5194 = vadd.f32 %v5193, %v5149
      %v5195 = vadd.f32 %v5194, %v5151
      %v5196 = vadd.f32 %v5195, %v5153
      %v5197 = vadd.f32 %v5196, %v5155
      %v5198 = vadd.f32 %v5197, %v5157
      %v5199 = vadd.f32 %v5198, %v5159
      %v5200 = vadd.f32 %v5199, %v5161
      %v5201 = vadd.f32 %v5200, %v5163
      %v5202 = vadd.f32 %v5201, %v5165
      %v5203 = vadd.f32 %v5202, %v5167
      %v5204 = vrot.slane %v5203, 4
      %v5205 = vadd.f32 %v5203, %v5204
      %v5206 = vrot.slane %v5205, 2
      %v5207 = vadd.f32 %v5205, %v5206
      %v5208 = vrot.slane %v5207, 1
      %v5209 = vadd.f32 %v5207, %v5208
      %v5210 = vadd.f32 %v5098, %v5100
      %v5211 = vadd.f32 %v5210, %v5102
      %v5212 = vadd.f32 %v5211, %v5104
      %v5213 = vadd.f32 %v5212, %v5106
      %v5214 = vadd.f32 %v5213, %v5108
      %v5215 = vadd.f32 %v5214, %v5110
      %v5216 = vadd.f32 %v5215, %v5112
      %v5217 = vadd.f32 %v5216, %v5114
      %v5218 = vadd.f32 %v5217, %v5116
      %v5219 = vadd.f32 %v5218, %v5118
      %v5220 = vadd.f32 %v5219, %v5120
      %v5221 = vadd.f32 %v5220, %v5122
      %v5222 = vadd.f32 %v5221, %v5124
      %v5223 = vadd.f32 %v5222, %v5126
      %v5224 = vadd.f32 %v5223, %v5128
      %v5225 = vadd.f32 %v5224, %v5130
      %v5226 = vadd.f32 %v5225, %v5132
      %v5227 = vadd.f32 %v5226, %v5134
      %v5228 = vadd.f32 %v5227, %v5136
      %v5229 = vadd.f32 %v5228, %v5138
      %v5230 = vadd.f32 %v5229, %v5140
      %v5231 = vadd.f32 %v5230, %v5142
      %v5232 = vadd.f32 %v5231, %v5144
      %v5233 = vadd.f32 %v5232, %v5146
      %v5234 = vadd.f32 %v5233, %v5148
      %v5235 = vadd.f32 %v5234, %v5150
      %v5236 = vadd.f32 %v5235, %v5152
      %v5237 = vadd.f32 %v5236, %v5154
      %v5238 = vadd.f32 %v5237, %v5156
      %v5239 = vadd.f32 %v5238, %v5158
      %v5240 = vadd.f32 %v5239, %v5160
      %v5241 = vadd.f32 %v5240, %v5162
      %v5242 = vadd.f32 %v5241, %v5164
      %v5243 = vadd.f32 %v5242, %v5166
      %v5244 = vadd.f32 %v5243, %v5168
      %v5245 = vrot.slane %v5244, 4
      %v5246 = vadd.f32 %v5244, %v5245
      %v5247 = vrot.slane %v5246, 2
      %v5248 = vadd.f32 %v5246, %v5247
      %v5249 = vrot.slane %v5248, 1
      %v5250 = vadd.f32 %v5248, %v5249
      %v5253 = vrot.slane %v5250, 7
      %vm5254 = vcmask 1040384
      %v5255 = vsel %vm5254, %v5209, %v5253
      %v5257 = vlaneseq
      %vm5258 = vcmp.ge.s32.totalorder %v5257, 0
      %vm5259 = vcmp.lt.s32.totalorder %v5257, 256
      %vm5260 = vmand %vm5258, %vm5259
      %5261 = vst.msk [vmem:[%s349] sm:$0x3] %vm5260, %v5255
      %v5262 = vmul.f32 %v5097, %v5097
      %v5263 = vmul.f32 %v5098, %v5098
      %v5264 = vmul.f32 %v5099, %v5099
      %v5265 = vmul.f32 %v5100, %v5100
      %v5266 = vmul.f32 %v5101, %v5101
      %v5267 = vmul.f32 %v5102, %v5102
      %v5268 = vmul.f32 %v5103, %v5103
      %v5269 = vmul.f32 %v5104, %v5104
      %v5270 = vmul.f32 %v5105, %v5105
      %v5271 = vmul.f32 %v5106, %v5106
      %v5272 = vmul.f32 %v5107, %v5107
      %v5273 = vmul.f32 %v5108, %v5108
      %v5274 = vmul.f32 %v5109, %v5109
      %v5275 = vmul.f32 %v5110, %v5110
      %v5276 = vmul.f32 %v5111, %v5111
      %v5277 = vmul.f32 %v5112, %v5112
      %v5278 = vmul.f32 %v5113, %v5113
      %v5279 = vmul.f32 %v5114, %v5114
      %v5280 = vmul.f32 %v5115, %v5115
      %v5281 = vmul.f32 %v5116, %v5116
      %v5282 = vmul.f32 %v5117, %v5117
      %v5283 = vmul.f32 %v5118, %v5118
      %v5284 = vmul.f32 %v5119, %v5119
      %v5285 = vmul.f32 %v5120, %v5120
      %v5286 = vmul.f32 %v5121, %v5121
      %v5287 = vmul.f32 %v5122, %v5122
      %v5288 = vmul.f32 %v5123, %v5123
      %v5289 = vmul.f32 %v5124, %v5124
      %v5290 = vmul.f32 %v5125, %v5125
      %v5291 = vmul.f32 %v5126, %v5126
      %v5292 = vmul.f32 %v5127, %v5127
      %v5293 = vmul.f32 %v5128, %v5128
      %v5294 = vmul.f32 %v5129, %v5129
      %v5295 = vmul.f32 %v5130, %v5130
      %v5296 = vmul.f32 %v5131, %v5131
      %v5297 = vmul.f32 %v5132, %v5132
      %v5298 = vmul.f32 %v5133, %v5133
      %v5299 = vmul.f32 %v5134, %v5134
      %v5300 = vmul.f32 %v5135, %v5135
      %v5301 = vmul.f32 %v5136, %v5136
      %v5302 = vmul.f32 %v5137, %v5137
      %v5303 = vmul.f32 %v5138, %v5138
      %v5304 = vmul.f32 %v5139, %v5139
      %v5305 = vmul.f32 %v5140, %v5140
      %v5306 = vmul.f32 %v5141, %v5141
      %v5307 = vmul.f32 %v5142, %v5142
      %v5308 = vmul.f32 %v5143, %v5143
      %v5309 = vmul.f32 %v5144, %v5144
      %v5310 = vmul.f32 %v5145, %v5145
      %v5311 = vmul.f32 %v5146, %v5146
      %v5312 = vmul.f32 %v5147, %v5147
      %v5313 = vmul.f32 %v5148, %v5148
      %v5314 = vmul.f32 %v5149, %v5149
      %v5315 = vmul.f32 %v5150, %v5150
      %v5316 = vmul.f32 %v5151, %v5151
      %v5317 = vmul.f32 %v5152, %v5152
      %v5318 = vmul.f32 %v5153, %v5153
      %v5319 = vmul.f32 %v5154, %v5154
      %v5320 = vmul.f32 %v5155, %v5155
      %v5321 = vmul.f32 %v5156, %v5156
      %v5322 = vmul.f32 %v5157, %v5157
      %v5323 = vmul.f32 %v5158, %v5158
      %v5324 = vmul.f32 %v5159, %v5159
      %v5325 = vmul.f32 %v5160, %v5160
      %v5326 = vmul.f32 %v5161, %v5161
      %v5327 = vmul.f32 %v5162, %v5162
      %v5328 = vmul.f32 %v5163, %v5163
      %v5329 = vmul.f32 %v5164, %v5164
      %v5330 = vmul.f32 %v5165, %v5165
      %v5331 = vmul.f32 %v5166, %v5166
      %v5332 = vmul.f32 %v5167, %v5167
      %v5333 = vmul.f32 %v5168, %v5168
      %v5334 = vadd.f32 %v5262, %v5264
      %v5335 = vadd.f32 %v5334, %v5266
      %v5336 = vadd.f32 %v5335, %v5268
      %v5337 = vadd.f32 %v5336, %v5270
      %v5338 = vadd.f32 %v5337, %v5272
      %v5339 = vadd.f32 %v5338, %v5274
      %v5340 = vadd.f32 %v5339, %v5276
      %v5341 = vadd.f32 %v5340, %v5278
      %v5342 = vadd.f32 %v5341, %v5280
      %v5343 = vadd.f32 %v5342, %v5282
      %v5344 = vadd.f32 %v5343, %v5284
      %v5345 = vadd.f32 %v5344, %v5286
      %v5346 = vadd.f32 %v5345, %v5288
      %v5347 = vadd.f32 %v5346, %v5290
      %v5348 = vadd.f32 %v5347, %v5292
      %v5349 = vadd.f32 %v5348, %v5294
      %v5350 = vadd.f32 %v5349, %v5296
      %v5351 = vadd.f32 %v5350, %v5298
      %v5352 = vadd.f32 %v5351, %v5300
      %v5353 = vadd.f32 %v5352, %v5302
      %v5354 = vadd.f32 %v5353, %v5304
      %v5355 = vadd.f32 %v5354, %v5306
      %v5356 = vadd.f32 %v5355, %v5308
      %v5357 = vadd.f32 %v5356, %v5310
      %v5358 = vadd.f32 %v5357, %v5312
      %v5359 = vadd.f32 %v5358, %v5314
      %v5360 = vadd.f32 %v5359, %v5316
      %v5361 = vadd.f32 %v5360, %v5318
      %v5362 = vadd.f32 %v5361, %v5320
      %v5363 = vadd.f32 %v5362, %v5322
      %v5364 = vadd.f32 %v5363, %v5324
      %v5365 = vadd.f32 %v5364, %v5326
      %v5366 = vadd.f32 %v5365, %v5328
      %v5367 = vadd.f32 %v5366, %v5330
      %v5368 = vadd.f32 %v5367, %v5332
      %v5369 = vrot.slane %v5368, 4
      %v5370 = vadd.f32 %v5368, %v5369
      %v5371 = vrot.slane %v5370, 2
      %v5372 = vadd.f32 %v5370, %v5371
      %v5373 = vrot.slane %v5372, 1
      %v5374 = vadd.f32 %v5372, %v5373
      %v5375 = vadd.f32 %v5263, %v5265
      %v5376 = vadd.f32 %v5375, %v5267
      %v5377 = vadd.f32 %v5376, %v5269
      %v5378 = vadd.f32 %v5377, %v5271
      %v5379 = vadd.f32 %v5378, %v5273
      %v5380 = vadd.f32 %v5379, %v5275
      %v5381 = vadd.f32 %v5380, %v5277
      %v5382 = vadd.f32 %v5381, %v5279
      %v5383 = vadd.f32 %v5382, %v5281
      %v5384 = vadd.f32 %v5383, %v5283
      %v5385 = vadd.f32 %v5384, %v5285
      %v5386 = vadd.f32 %v5385, %v5287
      %v5387 = vadd.f32 %v5386, %v5289
      %v5388 = vadd.f32 %v5387, %v5291
      %v5389 = vadd.f32 %v5388, %v5293
      %v5390 = vadd.f32 %v5389, %v5295
      %v5391 = vadd.f32 %v5390, %v5297
      %v5392 = vadd.f32 %v5391, %v5299
      %v5393 = vadd.f32 %v5392, %v5301
      %v5394 = vadd.f32 %v5393, %v5303
      %v5395 = vadd.f32 %v5394, %v5305
      %v5396 = vadd.f32 %v5395, %v5307
      %v5397 = vadd.f32 %v5396, %v5309
      %v5398 = vadd.f32 %v5397, %v5311
      %v5399 = vadd.f32 %v5398, %v5313
      %v5400 = vadd.f32 %v5399, %v5315
      %v5401 = vadd.f32 %v5400, %v5317
      %v5402 = vadd.f32 %v5401, %v5319
      %v5403 = vadd.f32 %v5402, %v5321
      %v5404 = vadd.f32 %v5403, %v5323
      %v5405 = vadd.f32 %v5404, %v5325
      %v5406 = vadd.f32 %v5405, %v5327
      %v5407 = vadd.f32 %v5406, %v5329
      %v5408 = vadd.f32 %v5407, %v5331
      %v5409 = vadd.f32 %v5408, %v5333
      %v5410 = vrot.slane %v5409, 4
      %v5411 = vadd.f32 %v5409, %v5410
      %v5412 = vrot.slane %v5411, 2
      %v5413 = vadd.f32 %v5411, %v5412
      %v5414 = vrot.slane %v5413, 1
      %v5415 = vadd.f32 %v5413, %v5414
      %v5418 = vrot.slane %v5415, 7
      %v5419 = vsel %vm5254, %v5374, %v5418
      %5421 = vst.msk [vmem:[%s353] sm:$0x3] %vm5260, %v5419
      %p5422 = scmp.lt.s32.totalorder %s21, 1
      %s5423 = scalar_select %p5422, %s21, 1
      %s5424 = smul.addr %s5423, 72
      %s5425 = smul.addr %s5424, 8
      %s5426 = scalar_lea.vmem %s7, %s5425
      %p5427 = scmp.lt.s32.totalorder %s21, 1
      %s5428 = scalar_select %p5427, %s21, 1
      %s5429 = smul.addr %s5428, 2
      %s5430 = scalar_lea.vmem %s8, %s5429
      %p5431 = scmp.lt.s32.totalorder %s21, 1
      %s5432 = scalar_select %p5431, %s21, 1
      %s5433 = smul.addr %s5432, 2
      %s5434 = scalar_lea.vmem %s9, %s5433
      // Predicated region
      $region49: #{decoder_block_forward.6} parent=47 // pred_check
        %p5435 = pneg %p191
      $region50: #{decoder_block_forward.6} parent=47 // pred_check_branch
        %5437 = sbr.rel (%p5435) target = $region52
      $region51: #{decoder_block_forward.6} parent=47 // pred_region
        _
      $region52: #{decoder_block_forward.6} parent=47 // pred_fallthru
        _
      // Predicated region
      $region53: #{decoder_block_forward.6} parent=47 // pred_check
        %p5438 = pneg %p217
      $region54: #{decoder_block_forward.6} parent=47 // pred_check_branch
        %5440 = sbr.rel (%p5438) target = $region56
      $region55: #{decoder_block_forward.6} parent=47 // pred_region
        _
      $region56: #{decoder_block_forward.6} parent=47 // pred_fallthru
        _
      // Predicated region
      $region57: #{decoder_block_forward.6} parent=47 // pred_check
        %p5441 = pneg %p243
      $region58: #{decoder_block_forward.6} parent=47 // pred_check_branch
        %5443 = sbr.rel (%p5441) target = $region60
      $region59: #{decoder_block_forward.6} parent=47 // pred_region
        _
      $region60: #{decoder_block_forward.6} parent=47 // pred_fallthru
        _
    $region48: #{decoder_block_forward.6} parent=5 // pred_fallthru
      _
    %p5444 = scmp.le.s32.totalorder 2, %s16
    // Predicated region
    $region61: #{decoder_block_forward.6} parent=5 // pred_check
      %p5445 = pneg %p5444
    $region62: #{decoder_block_forward.6} parent=5 // pred_check_branch
      %5447 = sbr.rel (%p5445) target = $region64
    $region63: #{decoder_block_forward.6} parent=5 // pred_region
      %s5448 = ssub.s32 %s16, 2
      // Predicated region
      $region65: #{decoder_block_forward.6} parent=63 // pred_check
        %p5449 = pneg %p197
      $region66: #{decoder_block_forward.6} parent=63 // pred_check_branch
        %5451 = sbr.rel (%p5449) target = $region68
      $region67: #{decoder_block_forward.6} parent=63 // pred_region
        %p5452 = scmp.lt.s32.totalorder %s22, 1
        %s5453 = scalar_select %p5452, %s22, 1
        %s5454 = smul.addr %s5453, 72
        %s5455 = smul.addr %s5454, 8
        %s5456 = scalar_lea.vmem %s7, %s5455
      $region68: #{decoder_block_forward.6} parent=63 // pred_fallthru
        _
      // Predicated region
      $region69: #{decoder_block_forward.6} parent=63 // pred_check
        %p5457 = pneg %p223
      $region70: #{decoder_block_forward.6} parent=63 // pred_check_branch
        %5459 = sbr.rel (%p5457) target = $region72
      $region71: #{decoder_block_forward.6} parent=63 // pred_region
        %p5460 = scmp.lt.s32.totalorder %s22, 1
        %s5461 = scalar_select %p5460, %s22, 1
        %s5462 = smul.addr %s5461, 2
        %s5463 = scalar_lea.vmem %s8, %s5462
      $region72: #{decoder_block_forward.6} parent=63 // pred_fallthru
        _
      // Predicated region
      $region73: #{decoder_block_forward.6} parent=63 // pred_check
        %p5464 = pneg %p249
      $region74: #{decoder_block_forward.6} parent=63 // pred_check_branch
        %5466 = sbr.rel (%p5464) target = $region76
      $region75: #{decoder_block_forward.6} parent=63 // pred_region
        %p5467 = scmp.lt.s32.totalorder %s22, 1
        %s5468 = scalar_select %p5467, %s22, 1
        %s5469 = smul.addr %s5468, 2
        %s5470 = scalar_lea.vmem %s9, %s5469
      $region76: #{decoder_block_forward.6} parent=63 // pred_fallthru
        _
    $region64: #{decoder_block_forward.6} parent=5 // pred_fallthru
      _
  $region6: #{decoder_block_forward.6} parent=0 // loop_footer
    %s20 = sadd.s32 1, %s16
  $region7: #{decoder_block_forward.6} parent=0 // loop_footer_branch
    %15 = sbr.rel target = $region3
  $region8: #{decoder_block_forward.6} parent=0 // loop_exit
    _

</llo_original>
